<compile_context>
chip_gen: v7x
topology: tpu7x:2x2x1
jax: 0.10.0
libtpu: 0.0.40
codegen_flags: <defaults>
</compile_context>

<pallas_src>
import functools

import jax
import jax.numpy as jnp
from jax.experimental import pallas as pl
from jax.experimental.pallas import tpu as pltpu


_PADW = 8  # aligned zero border width (columns) inside the VMEM stencil scratch


# ----------------------------------------------------------------------------
# Fused conv3x3 (stride 1, zero pad 1) [+ normalize] + bias + ReLU [+ 2x2 pool]
# ----------------------------------------------------------------------------
def _conv3x3_kernel(*args, n_tiles, TH, W, Cin, Cout, pool, norm):
    if norm:
        (x_ref, xprev_ref, xnext_ref, w_ref, b_ref, sc_ref, sh_ref,
         o_ref, xpad_ref, acc_ref) = args
    else:
        (x_ref, xprev_ref, xnext_ref, w_ref, b_ref,
         o_ref, xpad_ref, acc_ref) = args
        sc_ref = sh_ref = None

    i = pl.program_id(1)  # row-tile index

    def load(ref, row_slice):
        v = ref[0, row_slice].astype(jnp.float32)
        if norm:  # fused normalize: x*scale + shift  (== ((x+1)/2 - mean)/std)
            v = (v * sc_ref[...].reshape(1, 1, Cin)
                 + sh_ref[...].reshape(1, 1, Cin))
        return v

    # Row tile plus one halo row above/below (taken from the neighbouring
    # row-tile blocks; zeroed at image borders == torch zero padding).
    mid = x_ref[0].astype(jnp.float32)
    if norm:
        mid = (mid * sc_ref[...].reshape(1, 1, Cin)
               + sh_ref[...].reshape(1, 1, Cin))
    top = load(xprev_ref, pl.ds(TH - 1, 1))   # last row of tile i-1
    bot = load(xnext_ref, pl.ds(0, 1))        # first row of tile i+1
    top = top * jnp.where(i > 0, 1.0, 0.0)
    bot = bot * jnp.where(i < n_tiles - 1, 1.0, 0.0)
    xf = jnp.concatenate([top, mid, bot], axis=0)       # (TH+2, W, Cin) f32

    # Stencil scratch with aligned 8-wide zero borders along W (column halo).
    zpad = jnp.zeros((TH + 2, _PADW, Cin), jnp.float32)
    xpad_ref[:, pl.ds(0, _PADW), :] = zpad
    xpad_ref[:, pl.ds(_PADW + W, _PADW), :] = zpad
    xpad_ref[:, pl.ds(_PADW, W), :] = xf
    xp = xpad_ref[...]                                   # (TH+2, W+16, Cin)

    # Three kx-shifted copies built once; per-tap slicing below is only along
    # the cheap leading (row) axis.
    shifted = [xp[:, _PADW - 1 + kx:_PADW - 1 + kx + W, :] for kx in range(3)]

    # Bias-initialized f32 accumulator in VMEM; 9 bf16 MXU matmuls.
    acc_ref[...] = jnp.broadcast_to(b_ref[...].astype(jnp.float32),
                                    (TH * W, Cout))
    for ky in range(3):
        for kx in range(3):
            patch = shifted[kx][ky:ky + TH].reshape(TH * W, Cin)
            acc_ref[...] += jnp.dot(patch.astype(jnp.bfloat16),
                                    w_ref[ky, kx],
                                    preferred_element_type=jnp.float32)

    if not pool:
        out = jnp.maximum(acc_ref[...], 0.0)
        o_ref[0] = out.reshape(TH, W, Cout).astype(o_ref.dtype)
    else:
        # Fused 2x2 max-pool (stride 2).  ReLU commutes with max, so pool the
        # pre-ReLU accumulator and apply ReLU once at the end.
        THo, Wo = TH // 2, W // 2
        even_w = acc_ref[pl.ds(0, TH * Wo, 2), :]   # rows (h, even w)
        odd_w = acc_ref[pl.ds(1, TH * Wo, 2), :]    # rows (h, odd  w)
        m = jnp.maximum(even_w, odd_w)              # (TH*Wo, Cout), row = h*Wo+wo
        g = m.reshape(THo, 2 * Wo, Cout)            # rows 2*ho and 2*ho+1 stacked
        p = jnp.maximum(g[:, :Wo, :], g[:, Wo:, :]) # (THo, Wo, Cout)
        o_ref[0] = jnp.maximum(p, 0.0).astype(o_ref.dtype)


def conv3x3(x, w_bf16, b, *, tile_h, pool=False, scale=None, shift=None,
            out_dtype=jnp.bfloat16):
    """x: (N,H,W,Cin) NHWC; w: (3,3,Cin,Cout) HWIO bf16; b: (Cout,) f32."""
    N, H, W, Cin = x.shape
    Cout = w_bf16.shape[-1]
    assert H % tile_h == 0 and W % 8 == 0
    nt = H // tile_h
    norm = scale is not None
    if pool:
        assert tile_h % 2 == 0 and W % 2 == 0
        out_shape = (N, H // 2, W // 2, Cout)
        out_block = (1, tile_h // 2, W // 2, Cout)
    else:
        out_shape = (N, H, W, Cout)
        out_block = (1, tile_h, W, Cout)

    def xmap(d):
        def index_map(n, i):
            j = jnp.minimum(jnp.maximum(i + d, 0), nt - 1)  # clamped neighbour
            return (n, j, 0, 0)
        return index_map

    in_specs = [
        pl.BlockSpec((1, tile_h, W, Cin), xmap(0)),    # this row tile
        pl.BlockSpec((1, tile_h, W, Cin), xmap(-1)),   # tile above (top halo)
        pl.BlockSpec((1, tile_h, W, Cin), xmap(+1)),   # tile below (bottom halo)
        pl.BlockSpec((3, 3, Cin, Cout), lambda n, i: (0, 0, 0, 0)),
        pl.BlockSpec((1, Cout), lambda n, i: (0, 0)),
    ]
    inputs = [x, x, x, w_bf16, b.reshape(1, Cout).astype(jnp.float32)]
    if norm:
        in_specs += [pl.BlockSpec((1, Cin), lambda n, i: (0, 0))] * 2
        inputs += [scale.reshape(1, Cin).astype(jnp.float32),
                   shift.reshape(1, Cin).astype(jnp.float32)]

    kern = functools.partial(_conv3x3_kernel, n_tiles=nt, TH=tile_h, W=W,
                             Cin=Cin, Cout=Cout, pool=pool, norm=norm)
    return pl.pallas_call(
        kern,
        out_shape=jax.ShapeDtypeStruct(out_shape, out_dtype),
        grid=(N, nt),
        in_specs=in_specs,
        out_specs=pl.BlockSpec(out_block, lambda n, i: (n, i, 0, 0)),
        scratch_shapes=[
            pltpu.VMEM((tile_h + 2, W + 2 * _PADW, Cin), jnp.float32),  # stencil
            pltpu.VMEM((tile_h * W, Cout), jnp.float32),                # f32 acc
        ],
        compiler_params=pltpu.CompilerParams(
            dimension_semantics=("parallel", "parallel")),
    )(*inputs)


# ----------------------------------------------------------------------------
# Parameter init (deterministic, synthetic) and full forward
# ----------------------------------------------------------------------------
_VGG9_CFG = [(3, 64), (64, 64), (64, 128), (128, 128)]  # the 4 convs in [:9]

_MEAN = jnp.array([0.485, 0.456, 0.406], jnp.float32)
_STD = jnp.array([0.229, 0.224, 0.225], jnp.float32)


def init_vgg_params(key):
    # TODO(synk): pretrained torchvision VGG16 weights cannot be loaded here
    # (no file/network I/O); deterministic He-init weights are used instead.
    params = []
    for cin, cout in _VGG9_CFG:
        key, kw, kb = jax.random.split(key, 3)
        w_oihw = jax.random.normal(kw, (cout, cin, 3, 3), jnp.float32)
        w_oihw = w_oihw * jnp.sqrt(2.0 / (9.0 * cin))
        w_hwio = jnp.transpose(w_oihw, (2, 3, 1, 0))
        b = jax.random.normal(kb, (cout,), jnp.float32) * 0.01
        params.append((w_hwio, b))
    return params


def vgg_feature_extractor(x_nchw, params):
    """Pallas implementation of VGGFeatureExtractor.forward (NCHW in/out)."""
    scale = 1.0 / (2.0 * _STD)            # ((x+1)/2 - mean)/std == x*scale+shift
    shift = (0.5 - _MEAN) / _STD
    x = jnp.transpose(x_nchw, (0, 2, 3, 1)).astype(jnp.float32)  # NCHW -> NHWC
    H = x.shape[1]
    th1 = 8 if H % 8 == 0 else H          # row-tile heights (tunable per chip)
    th2 = 4 if (H // 2) % 4 == 0 else H // 2
    wb = [(w.astype(jnp.bfloat16), b) for (w, b) in params]  # bf16 MXU weights

    x = conv3x3(x, *wb[0], tile_h=th1, scale=scale, shift=shift)  # norm+conv1+ReLU
    x = conv3x3(x, *wb[1], tile_h=th1, pool=True)                 # conv2+ReLU+pool
    x = conv3x3(x, *wb[2], tile_h=th2)                            # conv3+ReLU
    x = conv3x3(x, *wb[3], tile_h=th2, out_dtype=jnp.float32)     # conv4+ReLU
    return jnp.transpose(x, (0, 3, 1, 2))  # NHWC -> NCHW


# ----------------------------------------------------------------------------
# Pure-JAX f32 reference for correctness checking
# ----------------------------------------------------------------------------
def vgg_feature_extractor_ref(x_nchw, params):
    x = (x_nchw.astype(jnp.float32) + 1.0) / 2.0
    x = (x - _MEAN[None, :, None, None]) / _STD[None, :, None, None]

    def conv(x, w_hwio, b):
        y = jax.lax.conv_general_dilated(
            x, w_hwio, window_strides=(1, 1), padding=((1, 1), (1, 1)),
            dimension_numbers=("NCHW", "HWIO", "NCHW"))
        return jnp.maximum(y + b[None, :, None, None], 0.0)

    x = conv(x, *params[0])
    x = conv(x, *params[1])
    x = jax.lax.reduce_window(x, -jnp.inf, jax.lax.max,
                              (1, 1, 2, 2), (1, 1, 2, 2), "VALID")
    x = conv(x, *params[2])
    x = conv(x, *params[3])
    return x


if __name__ == "__main__":
    key = jax.random.PRNGKey(0)
    key, kx = jax.random.split(key)
    # Small shapes consistent with the module: NCHW, C must be 3 for VGG.
    x = jax.random.uniform(kx, (2, 3, 16, 16), jnp.float32, -1.0, 1.0)
    params = init_vgg_params(key)

    fwd = jax.jit(vgg_feature_extractor)
    out = jax.block_until_ready(fwd(x, params))
    ref = jax.block_until_ready(vgg_feature_extractor_ref(x, params))

    assert out.shape == (2, 128, 8, 8), out.shape
    # bf16 MXU matmuls vs f32 reference -> compare with a relative-L2 metric.
    rel = float(jnp.linalg.norm(out - ref) / (jnp.linalg.norm(ref) + 1e-12))
    assert rel < 3e-2, rel
    print("KERNEL_OK")
</pallas_src>

<mosaic_0001>
module attributes {stable_mosaic.version = 11 : i64} {
  func.func @_conv3x3_kernel(%arg0: i32, %arg1: i32, %arg2: memref<1x8x16x3xf32, #tpu.memory_space<vmem>>, %arg3: memref<1x8x16x3xf32, #tpu.memory_space<vmem>>, %arg4: memref<1x8x16x3xf32, #tpu.memory_space<vmem>>, %arg5: memref<3x3x3x64xbf16, #tpu.memory_space<vmem>>, %arg6: memref<1x64xf32, #tpu.memory_space<vmem>>, %arg7: memref<1x3xf32, #tpu.memory_space<vmem>>, %arg8: memref<1x3xf32, #tpu.memory_space<vmem>>, %arg9: memref<1x8x16x64xbf16, #tpu.memory_space<vmem>>, %arg10: memref<10x32x3xf32, #tpu.memory_space<vmem>>, %arg11: memref<128x64xf32, #tpu.memory_space<vmem>>) attributes {dimension_semantics = [#tpu.dimension_semantics<parallel>, #tpu.dimension_semantics<parallel>], iteration_bounds = array<i64: 2, 2>, scalar_prefetch = 0 : i64, scratch_operands = 2 : i64, tpu.core_type = #tpu.core_type<tc>, window_params = [{transform_indices = @transform_0, window_bounds = array<i64: 1, 8, 16, 3>}, {transform_indices = @transform_1, window_bounds = array<i64: 1, 8, 16, 3>}, {transform_indices = @transform_2, window_bounds = array<i64: 1, 8, 16, 3>}, {pipeline_mode = #tpu.pipeline_mode<synchronous>, transform_indices = @transform_3, window_bounds = array<i64: 3, 3, 3, 64>}, {pipeline_mode = #tpu.pipeline_mode<synchronous>, transform_indices = @transform_4, window_bounds = array<i64: 1, 64>}, {pipeline_mode = #tpu.pipeline_mode<synchronous>, transform_indices = @transform_5, window_bounds = array<i64: 1, 3>}, {pipeline_mode = #tpu.pipeline_mode<synchronous>, transform_indices = @transform_6, window_bounds = array<i64: 1, 3>}, {transform_indices = @transform_7, window_bounds = array<i64: 1, 8, 16, 64>}]} {
    %c0 = arith.constant 0 : index
    %c0_0 = arith.constant 0 : index
    %c0_1 = arith.constant 0 : index
    %c0_2 = arith.constant 0 : index
    %0 = vector.load %arg2[%c0, %c0_0, %c0_1, %c0_2] : memref<1x8x16x3xf32, #tpu.memory_space<vmem>>, vector<1x8x16x3xf32>
    %1 = vector.shape_cast %0 : vector<1x8x16x3xf32> to vector<8x16x3xf32>
    %c0_3 = arith.constant 0 : index
    %c0_4 = arith.constant 0 : index
    %2 = vector.load %arg7[%c0_3, %c0_4] : memref<1x3xf32, #tpu.memory_space<vmem>>, vector<1x3xf32>
    %3 = vector.shape_cast %2 : vector<1x3xf32> to vector<1x1x3xf32>
    %4 = vector.broadcast %3 : vector<1x1x3xf32> to vector<8x16x3xf32>
    %5 = arith.mulf %1, %4 : vector<8x16x3xf32>
    %c0_5 = arith.constant 0 : index
    %c0_6 = arith.constant 0 : index
    %6 = vector.load %arg8[%c0_5, %c0_6] : memref<1x3xf32, #tpu.memory_space<vmem>>, vector<1x3xf32>
    %7 = vector.shape_cast %6 : vector<1x3xf32> to vector<1x1x3xf32>
    %8 = vector.broadcast %7 : vector<1x1x3xf32> to vector<8x16x3xf32>
    %9 = arith.addf %5, %8 : vector<8x16x3xf32>
    %c0_7 = arith.constant 0 : index
    %c7 = arith.constant 7 : index
    %c0_8 = arith.constant 0 : index
    %c0_9 = arith.constant 0 : index
    %10 = vector.load %arg3[%c0_7, %c7, %c0_8, %c0_9] : memref<1x8x16x3xf32, #tpu.memory_space<vmem>>, vector<1x1x16x3xf32>
    %11 = vector.shape_cast %10 : vector<1x1x16x3xf32> to vector<1x16x3xf32>
    %c0_10 = arith.constant 0 : index
    %c0_11 = arith.constant 0 : index
    %12 = vector.load %arg7[%c0_10, %c0_11] : memref<1x3xf32, #tpu.memory_space<vmem>>, vector<1x3xf32>
    %13 = vector.shape_cast %12 : vector<1x3xf32> to vector<1x1x3xf32>
    %14 = vector.broadcast %13 : vector<1x1x3xf32> to vector<1x16x3xf32>
    %15 = arith.mulf %11, %14 : vector<1x16x3xf32>
    %c0_12 = arith.constant 0 : index
    %c0_13 = arith.constant 0 : index
    %16 = vector.load %arg8[%c0_12, %c0_13] : memref<1x3xf32, #tpu.memory_space<vmem>>, vector<1x3xf32>
    %17 = vector.shape_cast %16 : vector<1x3xf32> to vector<1x1x3xf32>
    %18 = vector.broadcast %17 : vector<1x1x3xf32> to vector<1x16x3xf32>
    %19 = arith.addf %15, %18 : vector<1x16x3xf32>
    %c0_14 = arith.constant 0 : index
    %c0_15 = arith.constant 0 : index
    %c0_16 = arith.constant 0 : index
    %c0_17 = arith.constant 0 : index
    %20 = vector.load %arg4[%c0_14, %c0_15, %c0_16, %c0_17] : memref<1x8x16x3xf32, #tpu.memory_space<vmem>>, vector<1x1x16x3xf32>
    %21 = vector.shape_cast %20 : vector<1x1x16x3xf32> to vector<1x16x3xf32>
    %c0_18 = arith.constant 0 : index
    %c0_19 = arith.constant 0 : index
    %22 = vector.load %arg7[%c0_18, %c0_19] : memref<1x3xf32, #tpu.memory_space<vmem>>, vector<1x3xf32>
    %23 = vector.shape_cast %22 : vector<1x3xf32> to vector<1x1x3xf32>
    %24 = vector.broadcast %23 : vector<1x1x3xf32> to vector<1x16x3xf32>
    %25 = arith.mulf %21, %24 : vector<1x16x3xf32>
    %c0_20 = arith.constant 0 : index
    %c0_21 = arith.constant 0 : index
    %26 = vector.load %arg8[%c0_20, %c0_21] : memref<1x3xf32, #tpu.memory_space<vmem>>, vector<1x3xf32>
    %27 = vector.shape_cast %26 : vector<1x3xf32> to vector<1x1x3xf32>
    %28 = vector.broadcast %27 : vector<1x1x3xf32> to vector<1x16x3xf32>
    %29 = arith.addf %25, %28 : vector<1x16x3xf32>
    %c0_i32 = arith.constant 0 : i32
    %30 = arith.cmpi sgt, %arg1, %c0_i32 : i32
    %cst = arith.constant 1.000000e+00 : f32
    %cst_22 = arith.constant 0.000000e+00 : f32
    %31 = arith.select %30, %cst, %cst_22 : f32
    %32 = vector.broadcast %31 : f32 to vector<1x16x3xf32>
    %33 = arith.mulf %19, %32 : vector<1x16x3xf32>
    %c1_i32 = arith.constant 1 : i32
    %34 = arith.cmpi slt, %arg1, %c1_i32 : i32
    %cst_23 = arith.constant 1.000000e+00 : f32
    %cst_24 = arith.constant 0.000000e+00 : f32
    %35 = arith.select %34, %cst_23, %cst_24 : f32
    %36 = vector.broadcast %35 : f32 to vector<1x16x3xf32>
    %37 = arith.mulf %29, %36 : vector<1x16x3xf32>
    %38 = tpu.concatenate %33, %9, %37 in 0 : vector<1x16x3xf32>, vector<8x16x3xf32>, vector<1x16x3xf32> -> vector<10x16x3xf32>
    %cst_25 = arith.constant 0.000000e+00 : f32
    %39 = vector.broadcast %cst_25 : f32 to vector<10x8x3xf32>
    %c0_26 = arith.constant 0 : index
    %c0_27 = arith.constant 0 : index
    %c0_28 = arith.constant 0 : index
    %40 = vector.load %arg10[%c0_26, %c0_27, %c0_28] : memref<10x32x3xf32, #tpu.memory_space<vmem>>, vector<10x8x3xf32>
    tpu.vector_store %arg10[%c0_26, %c0_27, %c0_28], %39 {strides = array<i32>} : memref<10x32x3xf32, #tpu.memory_space<vmem>>, vector<10x8x3xf32>,
    %c0_29 = arith.constant 0 : index
    %c24 = arith.constant 24 : index
    %c0_30 = arith.constant 0 : index
    %41 = vector.load %arg10[%c0_29, %c24, %c0_30] : memref<10x32x3xf32, #tpu.memory_space<vmem>>, vector<10x8x3xf32>
    tpu.vector_store %arg10[%c0_29, %c24, %c0_30], %39 {strides = array<i32>} : memref<10x32x3xf32, #tpu.memory_space<vmem>>, vector<10x8x3xf32>,
    %c0_31 = arith.constant 0 : index
    %c8 = arith.constant 8 : index
    %c0_32 = arith.constant 0 : index
    %42 = vector.load %arg10[%c0_31, %c8, %c0_32] : memref<10x32x3xf32, #tpu.memory_space<vmem>>, vector<10x16x3xf32>
    tpu.vector_store %arg10[%c0_31, %c8, %c0_32], %38 {strides = array<i32>} : memref<10x32x3xf32, #tpu.memory_space<vmem>>, vector<10x16x3xf32>,
    %c0_33 = arith.constant 0 : index
    %c0_34 = arith.constant 0 : index
    %c0_35 = arith.constant 0 : index
    %43 = vector.load %arg10[%c0_33, %c0_34, %c0_35] : memref<10x32x3xf32, #tpu.memory_space<vmem>>, vector<10x32x3xf32>
    %44 = vector.extract_strided_slice %43 {offsets = [0, 7, 0], sizes = [10, 16, 3], strides = [1, 1, 1]} : vector<10x32x3xf32> to vector<10x16x3xf32>
    %45 = vector.extract_strided_slice %43 {offsets = [0, 8, 0], sizes = [10, 16, 3], strides = [1, 1, 1]} : vector<10x32x3xf32> to vector<10x16x3xf32>
    %46 = vector.extract_strided_slice %43 {offsets = [0, 9, 0], sizes = [10, 16, 3], strides = [1, 1, 1]} : vector<10x32x3xf32> to vector<10x16x3xf32>
    %c0_36 = arith.constant 0 : index
    %c0_37 = arith.constant 0 : index
    %47 = vector.load %arg6[%c0_36, %c0_37] : memref<1x64xf32, #tpu.memory_space<vmem>>, vector<1x64xf32>
    %48 = vector.shape_cast %47 : vector<1x64xf32> to vector<1x64xf32>
    %49 = vector.broadcast %48 : vector<1x64xf32> to vector<128x64xf32>
    %c0_38 = arith.constant 0 : index
    %c0_39 = arith.constant 0 : index
    %50 = vector.load %arg11[%c0_38, %c0_39] : memref<128x64xf32, #tpu.memory_space<vmem>>, vector<128x64xf32>
    tpu.vector_store %arg11[%c0_38, %c0_39], %49 {strides = array<i32>} : memref<128x64xf32, #tpu.memory_space<vmem>>, vector<128x64xf32>,
    %51 = vector.extract_strided_slice %44 {offsets = [0, 0, 0], sizes = [8, 16, 3], strides = [1, 1, 1]} : vector<10x16x3xf32> to vector<8x16x3xf32>
    %52 = vector.shape_cast %51 : vector<8x16x3xf32> to vector<128x3xf32>
    %c0_40 = arith.constant 0 : index
    %c0_41 = arith.constant 0 : index
    %53 = vector.load %arg11[%c0_40, %c0_41] : memref<128x64xf32, #tpu.memory_space<vmem>>, vector<128x64xf32>
    %54 = arith.truncf %52 : vector<128x3xf32> to vector<128x3xbf16>
    %c0_42 = arith.constant 0 : index
    %c0_43 = arith.constant 0 : index
    %c0_44 = arith.constant 0 : index
    %c0_45 = arith.constant 0 : index
    %55 = vector.load %arg5[%c0_42, %c0_43, %c0_44, %c0_45] : memref<3x3x3x64xbf16, #tpu.memory_space<vmem>>, vector<1x1x3x64xbf16>
    %56 = vector.shape_cast %55 : vector<1x1x3x64xbf16> to vector<3x64xbf16>
    %cst_46 = arith.constant dense<0.000000e+00> : vector<128x64xf32>
    %57 = tpu.matmul %54, %56, %cst_46 {dimension_numbers = #tpu.dot_dimension_numbers<[1], [0], [0], [1], [0, 0, 1, 1], [], []>} : vector<128x3xbf16>, vector<3x64xbf16>, vector<128x64xf32> -> vector<128x64xf32>
    %58 = arith.addf %53, %57 : vector<128x64xf32>
    %c0_47 = arith.constant 0 : index
    %c0_48 = arith.constant 0 : index
    %59 = vector.load %arg11[%c0_47, %c0_48] : memref<128x64xf32, #tpu.memory_space<vmem>>, vector<128x64xf32>
    tpu.vector_store %arg11[%c0_47, %c0_48], %58 {strides = array<i32>} : memref<128x64xf32, #tpu.memory_space<vmem>>, vector<128x64xf32>,
    %60 = vector.extract_strided_slice %45 {offsets = [0, 0, 0], sizes = [8, 16, 3], strides = [1, 1, 1]} : vector<10x16x3xf32> to vector<8x16x3xf32>
    %61 = vector.shape_cast %60 : vector<8x16x3xf32> to vector<128x3xf32>
    %c0_49 = arith.constant 0 : index
    %c0_50 = arith.constant 0 : index
    %62 = vector.load %arg11[%c0_49, %c0_50] : memref<128x64xf32, #tpu.memory_space<vmem>>, vector<128x64xf32>
    %63 = arith.truncf %61 : vector<128x3xf32> to vector<128x3xbf16>
    %c0_51 = arith.constant 0 : index
    %c1 = arith.constant 1 : index
    %c0_52 = arith.constant 0 : index
    %c0_53 = arith.constant 0 : index
    %64 = vector.load %arg5[%c0_51, %c1, %c0_52, %c0_53] : memref<3x3x3x64xbf16, #tpu.memory_space<vmem>>, vector<1x1x3x64xbf16>
    %65 = vector.shape_cast %64 : vector<1x1x3x64xbf16> to vector<3x64xbf16>
    %cst_54 = arith.constant dense<0.000000e+00> : vector<128x64xf32>
    %66 = tpu.matmul %63, %65, %cst_54 {dimension_numbers = #tpu.dot_dimension_numbers<[1], [0], [0], [1], [0, 0, 1, 1], [], []>} : vector<128x3xbf16>, vector<3x64xbf16>, vector<128x64xf32> -> vector<128x64xf32>
    %67 = arith.addf %62, %66 : vector<128x64xf32>
    %c0_55 = arith.constant 0 : index
    %c0_56 = arith.constant 0 : index
    %68 = vector.load %arg11[%c0_55, %c0_56] : memref<128x64xf32, #tpu.memory_space<vmem>>, vector<128x64xf32>
    tpu.vector_store %arg11[%c0_55, %c0_56], %67 {strides = array<i32>} : memref<128x64xf32, #tpu.memory_space<vmem>>, vector<128x64xf32>,
    %69 = vector.extract_strided_slice %46 {offsets = [0, 0, 0], sizes = [8, 16, 3], strides = [1, 1, 1]} : vector<10x16x3xf32> to vector<8x16x3xf32>
    %70 = vector.shape_cast %69 : vector<8x16x3xf32> to vector<128x3xf32>
    %c0_57 = arith.constant 0 : index
    %c0_58 = arith.constant 0 : index
    %71 = vector.load %arg11[%c0_57, %c0_58] : memref<128x64xf32, #tpu.memory_space<vmem>>, vector<128x64xf32>
    %72 = arith.truncf %70 : vector<128x3xf32> to vector<128x3xbf16>
    %c0_59 = arith.constant 0 : index
    %c2 = arith.constant 2 : index
    %c0_60 = arith.constant 0 : index
    %c0_61 = arith.constant 0 : index
    %73 = vector.load %arg5[%c0_59, %c2, %c0_60, %c0_61] : memref<3x3x3x64xbf16, #tpu.memory_space<vmem>>, vector<1x1x3x64xbf16>
    %74 = vector.shape_cast %73 : vector<1x1x3x64xbf16> to vector<3x64xbf16>
    %cst_62 = arith.constant dense<0.000000e+00> : vector<128x64xf32>
    %75 = tpu.matmul %72, %74, %cst_62 {dimension_numbers = #tpu.dot_dimension_numbers<[1], [0], [0], [1], [0, 0, 1, 1], [], []>} : vector<128x3xbf16>, vector<3x64xbf16>, vector<128x64xf32> -> vector<128x64xf32>
    %76 = arith.addf %71, %75 : vector<128x64xf32>
    %c0_63 = arith.constant 0 : index
    %c0_64 = arith.constant 0 : index
    %77 = vector.load %arg11[%c0_63, %c0_64] : memref<128x64xf32, #tpu.memory_space<vmem>>, vector<128x64xf32>
    tpu.vector_store %arg11[%c0_63, %c0_64], %76 {strides = array<i32>} : memref<128x64xf32, #tpu.memory_space<vmem>>, vector<128x64xf32>,
    %78 = vector.extract_strided_slice %44 {offsets = [1, 0, 0], sizes = [8, 16, 3], strides = [1, 1, 1]} : vector<10x16x3xf32> to vector<8x16x3xf32>
    %79 = vector.shape_cast %78 : vector<8x16x3xf32> to vector<128x3xf32>
    %c0_65 = arith.constant 0 : index
    %c0_66 = arith.constant 0 : index
    %80 = vector.load %arg11[%c0_65, %c0_66] : memref<128x64xf32, #tpu.memory_space<vmem>>, vector<128x64xf32>
    %81 = arith.truncf %79 : vector<128x3xf32> to vector<128x3xbf16>
    %c1_67 = arith.constant 1 : index
    %c0_68 = arith.constant 0 : index
    %c0_69 = arith.constant 0 : index
    %c0_70 = arith.constant 0 : index
    %82 = vector.load %arg5[%c1_67, %c0_68, %c0_69, %c0_70] : memref<3x3x3x64xbf16, #tpu.memory_space<vmem>>, vector<1x1x3x64xbf16>
    %83 = vector.shape_cast %82 : vector<1x1x3x64xbf16> to vector<3x64xbf16>
    %cst_71 = arith.constant dense<0.000000e+00> : vector<128x64xf32>
    %84 = tpu.matmul %81, %83, %cst_71 {dimension_numbers = #tpu.dot_dimension_numbers<[1], [0], [0], [1], [0, 0, 1, 1], [], []>} : vector<128x3xbf16>, vector<3x64xbf16>, vector<128x64xf32> -> vector<128x64xf32>
    %85 = arith.addf %80, %84 : vector<128x64xf32>
    %c0_72 = arith.constant 0 : index
    %c0_73 = arith.constant 0 : index
    %86 = vector.load %arg11[%c0_72, %c0_73] : memref<128x64xf32, #tpu.memory_space<vmem>>, vector<128x64xf32>
    tpu.vector_store %arg11[%c0_72, %c0_73], %85 {strides = array<i32>} : memref<128x64xf32, #tpu.memory_space<vmem>>, vector<128x64xf32>,
    %87 = vector.extract_strided_slice %45 {offsets = [1, 0, 0], sizes = [8, 16, 3], strides = [1, 1, 1]} : vector<10x16x3xf32> to vector<8x16x3xf32>
    %88 = vector.shape_cast %87 : vector<8x16x3xf32> to vector<128x3xf32>
    %c0_74 = arith.constant 0 : index
    %c0_75 = arith.constant 0 : index
    %89 = vector.load %arg11[%c0_74, %c0_75] : memref<128x64xf32, #tpu.memory_space<vmem>>, vector<128x64xf32>
    %90 = arith.truncf %88 : vector<128x3xf32> to vector<128x3xbf16>
    %c1_76 = arith.constant 1 : index
    %c1_77 = arith.constant 1 : index
    %c0_78 = arith.constant 0 : index
    %c0_79 = arith.constant 0 : index
    %91 = vector.load %arg5[%c1_76, %c1_77, %c0_78, %c0_79] : memref<3x3x3x64xbf16, #tpu.memory_space<vmem>>, vector<1x1x3x64xbf16>
    %92 = vector.shape_cast %91 : vector<1x1x3x64xbf16> to vector<3x64xbf16>
    %cst_80 = arith.constant dense<0.000000e+00> : vector<128x64xf32>
    %93 = tpu.matmul %90, %92, %cst_80 {dimension_numbers = #tpu.dot_dimension_numbers<[1], [0], [0], [1], [0, 0, 1, 1], [], []>} : vector<128x3xbf16>, vector<3x64xbf16>, vector<128x64xf32> -> vector<128x64xf32>
    %94 = arith.addf %89, %93 : vector<128x64xf32>
    %c0_81 = arith.constant 0 : index
    %c0_82 = arith.constant 0 : index
    %95 = vector.load %arg11[%c0_81, %c0_82] : memref<128x64xf32, #tpu.memory_space<vmem>>, vector<128x64xf32>
    tpu.vector_store %arg11[%c0_81, %c0_82], %94 {strides = array<i32>} : memref<128x64xf32, #tpu.memory_space<vmem>>, vector<128x64xf32>,
    %96 = vector.extract_strided_slice %46 {offsets = [1, 0, 0], sizes = [8, 16, 3], strides = [1, 1, 1]} : vector<10x16x3xf32> to vector<8x16x3xf32>
    %97 = vector.shape_cast %96 : vector<8x16x3xf32> to vector<128x3xf32>
    %c0_83 = arith.constant 0 : index
    %c0_84 = arith.constant 0 : index
    %98 = vector.load %arg11[%c0_83, %c0_84] : memref<128x64xf32, #tpu.memory_space<vmem>>, vector<128x64xf32>
    %99 = arith.truncf %97 : vector<128x3xf32> to vector<128x3xbf16>
    %c1_85 = arith.constant 1 : index
    %c2_86 = arith.constant 2 : index
    %c0_87 = arith.constant 0 : index
    %c0_88 = arith.constant 0 : index
    %100 = vector.load %arg5[%c1_85, %c2_86, %c0_87, %c0_88] : memref<3x3x3x64xbf16, #tpu.memory_space<vmem>>, vector<1x1x3x64xbf16>
    %101 = vector.shape_cast %100 : vector<1x1x3x64xbf16> to vector<3x64xbf16>
    %cst_89 = arith.constant dense<0.000000e+00> : vector<128x64xf32>
    %102 = tpu.matmul %99, %101, %cst_89 {dimension_numbers = #tpu.dot_dimension_numbers<[1], [0], [0], [1], [0, 0, 1, 1], [], []>} : vector<128x3xbf16>, vector<3x64xbf16>, vector<128x64xf32> -> vector<128x64xf32>
    %103 = arith.addf %98, %102 : vector<128x64xf32>
    %c0_90 = arith.constant 0 : index
    %c0_91 = arith.constant 0 : index
    %104 = vector.load %arg11[%c0_90, %c0_91] : memref<128x64xf32, #tpu.memory_space<vmem>>, vector<128x64xf32>
    tpu.vector_store %arg11[%c0_90, %c0_91], %103 {strides = array<i32>} : memref<128x64xf32, #tpu.memory_space<vmem>>, vector<128x64xf32>,
    %105 = vector.extract_strided_slice %44 {offsets = [2, 0, 0], sizes = [8, 16, 3], strides = [1, 1, 1]} : vector<10x16x3xf32> to vector<8x16x3xf32>
    %106 = vector.shape_cast %105 : vector<8x16x3xf32> to vector<128x3xf32>
    %c0_92 = arith.constant 0 : index
    %c0_93 = arith.constant 0 : index
    %107 = vector.load %arg11[%c0_92, %c0_93] : memref<128x64xf32, #tpu.memory_space<vmem>>, vector<128x64xf32>
    %108 = arith.truncf %106 : vector<128x3xf32> to vector<128x3xbf16>
    %c2_94 = arith.constant 2 : index
    %c0_95 = arith.constant 0 : index
    %c0_96 = arith.constant 0 : index
    %c0_97 = arith.constant 0 : index
    %109 = vector.load %arg5[%c2_94, %c0_95, %c0_96, %c0_97] : memref<3x3x3x64xbf16, #tpu.memory_space<vmem>>, vector<1x1x3x64xbf16>
    %110 = vector.shape_cast %109 : vector<1x1x3x64xbf16> to vector<3x64xbf16>
    %cst_98 = arith.constant dense<0.000000e+00> : vector<128x64xf32>
    %111 = tpu.matmul %108, %110, %cst_98 {dimension_numbers = #tpu.dot_dimension_numbers<[1], [0], [0], [1], [0, 0, 1, 1], [], []>} : vector<128x3xbf16>, vector<3x64xbf16>, vector<128x64xf32> -> vector<128x64xf32>
    %112 = arith.addf %107, %111 : vector<128x64xf32>
    %c0_99 = arith.constant 0 : index
    %c0_100 = arith.constant 0 : index
    %113 = vector.load %arg11[%c0_99, %c0_100] : memref<128x64xf32, #tpu.memory_space<vmem>>, vector<128x64xf32>
    tpu.vector_store %arg11[%c0_99, %c0_100], %112 {strides = array<i32>} : memref<128x64xf32, #tpu.memory_space<vmem>>, vector<128x64xf32>,
    %114 = vector.extract_strided_slice %45 {offsets = [2, 0, 0], sizes = [8, 16, 3], strides = [1, 1, 1]} : vector<10x16x3xf32> to vector<8x16x3xf32>
    %115 = vector.shape_cast %114 : vector<8x16x3xf32> to vector<128x3xf32>
    %c0_101 = arith.constant 0 : index
    %c0_102 = arith.constant 0 : index
    %116 = vector.load %arg11[%c0_101, %c0_102] : memref<128x64xf32, #tpu.memory_space<vmem>>, vector<128x64xf32>
    %117 = arith.truncf %115 : vector<128x3xf32> to vector<128x3xbf16>
    %c2_103 = arith.constant 2 : index
    %c1_104 = arith.constant 1 : index
    %c0_105 = arith.constant 0 : index
    %c0_106 = arith.constant 0 : index
    %118 = vector.load %arg5[%c2_103, %c1_104, %c0_105, %c0_106] : memref<3x3x3x64xbf16, #tpu.memory_space<vmem>>, vector<1x1x3x64xbf16>
    %119 = vector.shape_cast %118 : vector<1x1x3x64xbf16> to vector<3x64xbf16>
    %cst_107 = arith.constant dense<0.000000e+00> : vector<128x64xf32>
    %120 = tpu.matmul %117, %119, %cst_107 {dimension_numbers = #tpu.dot_dimension_numbers<[1], [0], [0], [1], [0, 0, 1, 1], [], []>} : vector<128x3xbf16>, vector<3x64xbf16>, vector<128x64xf32> -> vector<128x64xf32>
    %121 = arith.addf %116, %120 : vector<128x64xf32>
    %c0_108 = arith.constant 0 : index
    %c0_109 = arith.constant 0 : index
    %122 = vector.load %arg11[%c0_108, %c0_109] : memref<128x64xf32, #tpu.memory_space<vmem>>, vector<128x64xf32>
    tpu.vector_store %arg11[%c0_108, %c0_109], %121 {strides = array<i32>} : memref<128x64xf32, #tpu.memory_space<vmem>>, vector<128x64xf32>,
    %123 = vector.extract_strided_slice %46 {offsets = [2, 0, 0], sizes = [8, 16, 3], strides = [1, 1, 1]} : vector<10x16x3xf32> to vector<8x16x3xf32>
    %124 = vector.shape_cast %123 : vector<8x16x3xf32> to vector<128x3xf32>
    %c0_110 = arith.constant 0 : index
    %c0_111 = arith.constant 0 : index
    %125 = vector.load %arg11[%c0_110, %c0_111] : memref<128x64xf32, #tpu.memory_space<vmem>>, vector<128x64xf32>
    %126 = arith.truncf %124 : vector<128x3xf32> to vector<128x3xbf16>
    %c2_112 = arith.constant 2 : index
    %c2_113 = arith.constant 2 : index
    %c0_114 = arith.constant 0 : index
    %c0_115 = arith.constant 0 : index
    %127 = vector.load %arg5[%c2_112, %c2_113, %c0_114, %c0_115] : memref<3x3x3x64xbf16, #tpu.memory_space<vmem>>, vector<1x1x3x64xbf16>
    %128 = vector.shape_cast %127 : vector<1x1x3x64xbf16> to vector<3x64xbf16>
    %cst_116 = arith.constant dense<0.000000e+00> : vector<128x64xf32>
    %129 = tpu.matmul %126, %128, %cst_116 {dimension_numbers = #tpu.dot_dimension_numbers<[1], [0], [0], [1], [0, 0, 1, 1], [], []>} : vector<128x3xbf16>, vector<3x64xbf16>, vector<128x64xf32> -> vector<128x64xf32>
    %130 = arith.addf %125, %129 : vector<128x64xf32>
    %c0_117 = arith.constant 0 : index
    %c0_118 = arith.constant 0 : index
    %131 = vector.load %arg11[%c0_117, %c0_118] : memref<128x64xf32, #tpu.memory_space<vmem>>, vector<128x64xf32>
    tpu.vector_store %arg11[%c0_117, %c0_118], %130 {strides = array<i32>} : memref<128x64xf32, #tpu.memory_space<vmem>>, vector<128x64xf32>,
    %c0_119 = arith.constant 0 : index
    %c0_120 = arith.constant 0 : index
    %132 = vector.load %arg11[%c0_119, %c0_120] : memref<128x64xf32, #tpu.memory_space<vmem>>, vector<128x64xf32>
    %cst_121 = arith.constant 0.000000e+00 : f32
    %133 = vector.broadcast %cst_121 : f32 to vector<128x64xf32>
    %134 = arith.maximumf %132, %133 : vector<128x64xf32>
    %135 = vector.shape_cast %134 : vector<128x64xf32> to vector<8x16x64xf32>
    %136 = arith.truncf %135 : vector<8x16x64xf32> to vector<8x16x64xbf16>
    %c0_122 = arith.constant 0 : index
    %c0_123 = arith.constant 0 : index
    %c0_124 = arith.constant 0 : index
    %c0_125 = arith.constant 0 : index
    %137 = vector.load %arg9[%c0_122, %c0_123, %c0_124, %c0_125] : memref<1x8x16x64xbf16, #tpu.memory_space<vmem>>, vector<1x8x16x64xbf16>
    %138 = vector.shape_cast %137 : vector<1x8x16x64xbf16> to vector<8x16x64xbf16>
    %139 = vector.shape_cast %136 : vector<8x16x64xbf16> to vector<1x8x16x64xbf16>
    tpu.vector_store %arg9[%c0_122, %c0_123, %c0_124, %c0_125], %139 {strides = array<i32>} : memref<1x8x16x64xbf16, #tpu.memory_space<vmem>>, vector<1x8x16x64xbf16>,
    return
  }
  func.func @transform_0(%arg0: i32, %arg1: i32) -> (i32, i32, i32, i32) {
    %c0_i32 = arith.constant 0 : i32
    %0 = arith.addi %arg1, %c0_i32 : i32
    %c0_i32_0 = arith.constant 0 : i32
    %1 = arith.maxsi %0, %c0_i32_0 : i32
    %c1_i32 = arith.constant 1 : i32
    %2 = arith.minsi %1, %c1_i32 : i32
    %c0_i32_1 = arith.constant 0 : i32
    %c0_i32_2 = arith.constant 0 : i32
    %c0_i32_3 = arith.constant 0 : i32
    return %arg0, %2, %c0_i32_1, %c0_i32_2 : i32, i32, i32, i32
  }
  func.func @transform_1(%arg0: i32, %arg1: i32) -> (i32, i32, i32, i32) {
    %c-1_i32 = arith.constant -1 : i32
    %0 = arith.addi %arg1, %c-1_i32 : i32
    %c0_i32 = arith.constant 0 : i32
    %1 = arith.maxsi %0, %c0_i32 : i32
    %c1_i32 = arith.constant 1 : i32
    %2 = arith.minsi %1, %c1_i32 : i32
    %c0_i32_0 = arith.constant 0 : i32
    %c0_i32_1 = arith.constant 0 : i32
    %c0_i32_2 = arith.constant 0 : i32
    return %arg0, %2, %c0_i32_0, %c0_i32_1 : i32, i32, i32, i32
  }
  func.func @transform_2(%arg0: i32, %arg1: i32) -> (i32, i32, i32, i32) {
    %c1_i32 = arith.constant 1 : i32
    %0 = arith.addi %arg1, %c1_i32 : i32
    %c0_i32 = arith.constant 0 : i32
    %1 = arith.maxsi %0, %c0_i32 : i32
    %c1_i32_0 = arith.constant 1 : i32
    %2 = arith.minsi %1, %c1_i32_0 : i32
    %c0_i32_1 = arith.constant 0 : i32
    %c0_i32_2 = arith.constant 0 : i32
    %c0_i32_3 = arith.constant 0 : i32
    return %arg0, %2, %c0_i32_1, %c0_i32_2 : i32, i32, i32, i32
  }
  func.func @transform_3(%arg0: i32, %arg1: i32) -> (i32, i32, i32, i32) {
    %c0_i32 = arith.constant 0 : i32
    %c0_i32_0 = arith.constant 0 : i32
    %c0_i32_1 = arith.constant 0 : i32
    %c0_i32_2 = arith.constant 0 : i32
    %c0_i32_3 = arith.constant 0 : i32
    return %c0_i32, %c0_i32_0, %c0_i32_1, %c0_i32_2 : i32, i32, i32, i32
  }
  func.func @transform_4(%arg0: i32, %arg1: i32) -> (i32, i32) {
    %c0_i32 = arith.constant 0 : i32
    %c0_i32_0 = arith.constant 0 : i32
    %c0_i32_1 = arith.constant 0 : i32
    return %c0_i32, %c0_i32_0 : i32, i32
  }
  func.func @transform_5(%arg0: i32, %arg1: i32) -> (i32, i32) {
    %c0_i32 = arith.constant 0 : i32
    %c0_i32_0 = arith.constant 0 : i32
    %c0_i32_1 = arith.constant 0 : i32
    return %c0_i32, %c0_i32_0 : i32, i32
  }
  func.func @transform_6(%arg0: i32, %arg1: i32) -> (i32, i32) {
    %c0_i32 = arith.constant 0 : i32
    %c0_i32_0 = arith.constant 0 : i32
    %c0_i32_1 = arith.constant 0 : i32
    return %c0_i32, %c0_i32_0 : i32, i32
  }
  func.func @transform_7(%arg0: i32, %arg1: i32) -> (i32, i32, i32, i32) {
    %c0_i32 = arith.constant 0 : i32
    %c0_i32_0 = arith.constant 0 : i32
    %c0_i32_1 = arith.constant 0 : i32
    return %arg0, %arg1, %c0_i32, %c0_i32_0 : i32, i32, i32, i32
  }
}

module attributes {stable_mosaic.version = 11 : i64} {
  func.func @_conv3x3_kernel(%arg0: i32, %arg1: i32, %arg2: memref<1x8x16x64xbf16, #tpu.memory_space<vmem>>, %arg3: memref<1x8x16x64xbf16, #tpu.memory_space<vmem>>, %arg4: memref<1x8x16x64xbf16, #tpu.memory_space<vmem>>, %arg5: memref<3x3x64x64xbf16, #tpu.memory_space<vmem>>, %arg6: memref<1x64xf32, #tpu.memory_space<vmem>>, %arg7: memref<1x4x8x64xbf16, #tpu.memory_space<vmem>>, %arg8: memref<10x32x64xf32, #tpu.memory_space<vmem>>, %arg9: memref<128x64xf32, #tpu.memory_space<vmem>>) attributes {dimension_semantics = [#tpu.dimension_semantics<parallel>, #tpu.dimension_semantics<parallel>], iteration_bounds = array<i64: 2, 2>, scalar_prefetch = 0 : i64, scratch_operands = 2 : i64, tpu.core_type = #tpu.core_type<tc>, window_params = [{transform_indices = @transform_0, window_bounds = array<i64: 1, 8, 16, 64>}, {transform_indices = @transform_1, window_bounds = array<i64: 1, 8, 16, 64>}, {transform_indices = @transform_2, window_bounds = array<i64: 1, 8, 16, 64>}, {pipeline_mode = #tpu.pipeline_mode<synchronous>, transform_indices = @transform_3, window_bounds = array<i64: 3, 3, 64, 64>}, {pipeline_mode = #tpu.pipeline_mode<synchronous>, transform_indices = @transform_4, window_bounds = array<i64: 1, 64>}, {transform_indices = @transform_5, window_bounds = array<i64: 1, 4, 8, 64>}]} {
    %c0 = arith.constant 0 : index
    %c0_0 = arith.constant 0 : index
    %c0_1 = arith.constant 0 : index
    %c0_2 = arith.constant 0 : index
    %0 = vector.load %arg2[%c0, %c0_0, %c0_1, %c0_2] : memref<1x8x16x64xbf16, #tpu.memory_space<vmem>>, vector<1x8x16x64xbf16>
    %1 = vector.shape_cast %0 : vector<1x8x16x64xbf16> to vector<8x16x64xbf16>
    %2 = arith.extf %1 : vector<8x16x64xbf16> to vector<8x16x64xf32>
    %c0_3 = arith.constant 0 : index
    %c7 = arith.constant 7 : index
    %c0_4 = arith.constant 0 : index
    %c0_5 = arith.constant 0 : index
    %3 = vector.load %arg3[%c0_3, %c7, %c0_4, %c0_5] : memref<1x8x16x64xbf16, #tpu.memory_space<vmem>>, vector<1x1x16x64xbf16>
    %4 = vector.shape_cast %3 : vector<1x1x16x64xbf16> to vector<1x16x64xbf16>
    %5 = arith.extf %4 : vector<1x16x64xbf16> to vector<1x16x64xf32>
    %c0_6 = arith.constant 0 : index
    %c0_7 = arith.constant 0 : index
    %c0_8 = arith.constant 0 : index
    %c0_9 = arith.constant 0 : index
    %6 = vector.load %arg4[%c0_6, %c0_7, %c0_8, %c0_9] : memref<1x8x16x64xbf16, #tpu.memory_space<vmem>>, vector<1x1x16x64xbf16>
    %7 = vector.shape_cast %6 : vector<1x1x16x64xbf16> to vector<1x16x64xbf16>
    %8 = arith.extf %7 : vector<1x16x64xbf16> to vector<1x16x64xf32>
    %c0_i32 = arith.constant 0 : i32
    %9 = arith.cmpi sgt, %arg1, %c0_i32 : i32
    %cst = arith.constant 1.000000e+00 : f32
    %cst_10 = arith.constant 0.000000e+00 : f32
    %10 = arith.select %9, %cst, %cst_10 : f32
    %11 = vector.broadcast %10 : f32 to vector<1x16x64xf32>
    %12 = arith.mulf %5, %11 : vector<1x16x64xf32>
    %c1_i32 = arith.constant 1 : i32
    %13 = arith.cmpi slt, %arg1, %c1_i32 : i32
    %cst_11 = arith.constant 1.000000e+00 : f32
    %cst_12 = arith.constant 0.000000e+00 : f32
    %14 = arith.select %13, %cst_11, %cst_12 : f32
    %15 = vector.broadcast %14 : f32 to vector<1x16x64xf32>
    %16 = arith.mulf %8, %15 : vector<1x16x64xf32>
    %17 = tpu.concatenate %12, %2, %16 in 0 : vector<1x16x64xf32>, vector<8x16x64xf32>, vector<1x16x64xf32> -> vector<10x16x64xf32>
    %cst_13 = arith.constant 0.000000e+00 : f32
    %18 = vector.broadcast %cst_13 : f32 to vector<10x8x64xf32>
    %c0_14 = arith.constant 0 : index
    %c0_15 = arith.constant 0 : index
    %c0_16 = arith.constant 0 : index
    %19 = vector.load %arg8[%c0_14, %c0_15, %c0_16] : memref<10x32x64xf32, #tpu.memory_space<vmem>>, vector<10x8x64xf32>
    tpu.vector_store %arg8[%c0_14, %c0_15, %c0_16], %18 {strides = array<i32>} : memref<10x32x64xf32, #tpu.memory_space<vmem>>, vector<10x8x64xf32>,
    %c0_17 = arith.constant 0 : index
    %c24 = arith.constant 24 : index
    %c0_18 = arith.constant 0 : index
    %20 = vector.load %arg8[%c0_17, %c24, %c0_18] : memref<10x32x64xf32, #tpu.memory_space<vmem>>, vector<10x8x64xf32>
    tpu.vector_store %arg8[%c0_17, %c24, %c0_18], %18 {strides = array<i32>} : memref<10x32x64xf32, #tpu.memory_space<vmem>>, vector<10x8x64xf32>,
    %c0_19 = arith.constant 0 : index
    %c8 = arith.constant 8 : index
    %c0_20 = arith.constant 0 : index
    %21 = vector.load %arg8[%c0_19, %c8, %c0_20] : memref<10x32x64xf32, #tpu.memory_space<vmem>>, vector<10x16x64xf32>
    tpu.vector_store %arg8[%c0_19, %c8, %c0_20], %17 {strides = array<i32>} : memref<10x32x64xf32, #tpu.memory_space<vmem>>, vector<10x16x64xf32>,
    %c0_21 = arith.constant 0 : index
    %c0_22 = arith.constant 0 : index
    %c0_23 = arith.constant 0 : index
    %22 = vector.load %arg8[%c0_21, %c0_22, %c0_23] : memref<10x32x64xf32, #tpu.memory_space<vmem>>, vector<10x32x64xf32>
    %23 = vector.extract_strided_slice %22 {offsets = [0, 7, 0], sizes = [10, 16, 64], strides = [1, 1, 1]} : vector<10x32x64xf32> to vector<10x16x64xf32>
    %24 = vector.extract_strided_slice %22 {offsets = [0, 8, 0], sizes = [10, 16, 64], strides = [1, 1, 1]} : vector<10x32x64xf32> to vector<10x16x64xf32>
    %25 = vector.extract_strided_slice %22 {offsets = [0, 9, 0], sizes = [10, 16, 64], strides = [1, 1, 1]} : vector<10x32x64xf32> to vector<10x16x64xf32>
    %c0_24 = arith.constant 0 : index
    %c0_25 = arith.constant 0 : index
    %26 = vector.load %arg6[%c0_24, %c0_25] : memref<1x64xf32, #tpu.memory_space<vmem>>, vector<1x64xf32>
    %27 = vector.shape_cast %26 : vector<1x64xf32> to vector<1x64xf32>
    %28 = vector.broadcast %27 : vector<1x64xf32> to vector<128x64xf32>
    %c0_26 = arith.constant 0 : index
    %c0_27 = arith.constant 0 : index
    %29 = vector.load %arg9[%c0_26, %c0_27] : memref<128x64xf32, #tpu.memory_space<vmem>>, vector<128x64xf32>
    tpu.vector_store %arg9[%c0_26, %c0_27], %28 {strides = array<i32>} : memref<128x64xf32, #tpu.memory_space<vmem>>, vector<128x64xf32>,
    %30 = vector.extract_strided_slice %23 {offsets = [0, 0, 0], sizes = [8, 16, 64], strides = [1, 1, 1]} : vector<10x16x64xf32> to vector<8x16x64xf32>
    %31 = vector.shape_cast %30 : vector<8x16x64xf32> to vector<128x64xf32>
    %c0_28 = arith.constant 0 : index
    %c0_29 = arith.constant 0 : index
    %32 = vector.load %arg9[%c0_28, %c0_29] : memref<128x64xf32, #tpu.memory_space<vmem>>, vector<128x64xf32>
    %33 = arith.truncf %31 : vector<128x64xf32> to vector<128x64xbf16>
    %c0_30 = arith.constant 0 : index
    %c0_31 = arith.constant 0 : index
    %c0_32 = arith.constant 0 : index
    %c0_33 = arith.constant 0 : index
    %34 = vector.load %arg5[%c0_30, %c0_31, %c0_32, %c0_33] : memref<3x3x64x64xbf16, #tpu.memory_space<vmem>>, vector<1x1x64x64xbf16>
    %35 = vector.shape_cast %34 : vector<1x1x64x64xbf16> to vector<64x64xbf16>
    %cst_34 = arith.constant dense<0.000000e+00> : vector<128x64xf32>
    %36 = tpu.matmul %33, %35, %cst_34 {dimension_numbers = #tpu.dot_dimension_numbers<[1], [0], [0], [1], [0, 0, 1, 1], [], []>} : vector<128x64xbf16>, vector<64x64xbf16>, vector<128x64xf32> -> vector<128x64xf32>
    %37 = arith.addf %32, %36 : vector<128x64xf32>
    %c0_35 = arith.constant 0 : index
    %c0_36 = arith.constant 0 : index
    %38 = vector.load %arg9[%c0_35, %c0_36] : memref<128x64xf32, #tpu.memory_space<vmem>>, vector<128x64xf32>
    tpu.vector_store %arg9[%c0_35, %c0_36], %37 {strides = array<i32>} : memref<128x64xf32, #tpu.memory_space<vmem>>, vector<128x64xf32>,
    %39 = vector.extract_strided_slice %24 {offsets = [0, 0, 0], sizes = [8, 16, 64], strides = [1, 1, 1]} : vector<10x16x64xf32> to vector<8x16x64xf32>
    %40 = vector.shape_cast %39 : vector<8x16x64xf32> to vector<128x64xf32>
    %c0_37 = arith.constant 0 : index
    %c0_38 = arith.constant 0 : index
    %41 = vector.load %arg9[%c0_37, %c0_38] : memref<128x64xf32, #tpu.memory_space<vmem>>, vector<128x64xf32>
    %42 = arith.truncf %40 : vector<128x64xf32> to vector<128x64xbf16>
    %c0_39 = arith.constant 0 : index
    %c1 = arith.constant 1 : index
    %c0_40 = arith.constant 0 : index
    %c0_41 = arith.constant 0 : index
    %43 = vector.load %arg5[%c0_39, %c1, %c0_40, %c0_41] : memref<3x3x64x64xbf16, #tpu.memory_space<vmem>>, vector<1x1x64x64xbf16>
    %44 = vector.shape_cast %43 : vector<1x1x64x64xbf16> to vector<64x64xbf16>
    %cst_42 = arith.constant dense<0.000000e+00> : vector<128x64xf32>
    %45 = tpu.matmul %42, %44, %cst_42 {dimension_numbers = #tpu.dot_dimension_numbers<[1], [0], [0], [1], [0, 0, 1, 1], [], []>} : vector<128x64xbf16>, vector<64x64xbf16>, vector<128x64xf32> -> vector<128x64xf32>
    %46 = arith.addf %41, %45 : vector<128x64xf32>
    %c0_43 = arith.constant 0 : index
    %c0_44 = arith.constant 0 : index
    %47 = vector.load %arg9[%c0_43, %c0_44] : memref<128x64xf32, #tpu.memory_space<vmem>>, vector<128x64xf32>
    tpu.vector_store %arg9[%c0_43, %c0_44], %46 {strides = array<i32>} : memref<128x64xf32, #tpu.memory_space<vmem>>, vector<128x64xf32>,
    %48 = vector.extract_strided_slice %25 {offsets = [0, 0, 0], sizes = [8, 16, 64], strides = [1, 1, 1]} : vector<10x16x64xf32> to vector<8x16x64xf32>
    %49 = vector.shape_cast %48 : vector<8x16x64xf32> to vector<128x64xf32>
    %c0_45 = arith.constant 0 : index
    %c0_46 = arith.constant 0 : index
    %50 = vector.load %arg9[%c0_45, %c0_46] : memref<128x64xf32, #tpu.memory_space<vmem>>, vector<128x64xf32>
    %51 = arith.truncf %49 : vector<128x64xf32> to vector<128x64xbf16>
    %c0_47 = arith.constant 0 : index
    %c2 = arith.constant 2 : index
    %c0_48 = arith.constant 0 : index
    %c0_49 = arith.constant 0 : index
    %52 = vector.load %arg5[%c0_47, %c2, %c0_48, %c0_49] : memref<3x3x64x64xbf16, #tpu.memory_space<vmem>>, vector<1x1x64x64xbf16>
    %53 = vector.shape_cast %52 : vector<1x1x64x64xbf16> to vector<64x64xbf16>
    %cst_50 = arith.constant dense<0.000000e+00> : vector<128x64xf32>
    %54 = tpu.matmul %51, %53, %cst_50 {dimension_numbers = #tpu.dot_dimension_numbers<[1], [0], [0], [1], [0, 0, 1, 1], [], []>} : vector<128x64xbf16>, vector<64x64xbf16>, vector<128x64xf32> -> vector<128x64xf32>
    %55 = arith.addf %50, %54 : vector<128x64xf32>
    %c0_51 = arith.constant 0 : index
    %c0_52 = arith.constant 0 : index
    %56 = vector.load %arg9[%c0_51, %c0_52] : memref<128x64xf32, #tpu.memory_space<vmem>>, vector<128x64xf32>
    tpu.vector_store %arg9[%c0_51, %c0_52], %55 {strides = array<i32>} : memref<128x64xf32, #tpu.memory_space<vmem>>, vector<128x64xf32>,
    %57 = vector.extract_strided_slice %23 {offsets = [1, 0, 0], sizes = [8, 16, 64], strides = [1, 1, 1]} : vector<10x16x64xf32> to vector<8x16x64xf32>
    %58 = vector.shape_cast %57 : vector<8x16x64xf32> to vector<128x64xf32>
    %c0_53 = arith.constant 0 : index
    %c0_54 = arith.constant 0 : index
    %59 = vector.load %arg9[%c0_53, %c0_54] : memref<128x64xf32, #tpu.memory_space<vmem>>, vector<128x64xf32>
    %60 = arith.truncf %58 : vector<128x64xf32> to vector<128x64xbf16>
    %c1_55 = arith.constant 1 : index
    %c0_56 = arith.constant 0 : index
    %c0_57 = arith.constant 0 : index
    %c0_58 = arith.constant 0 : index
    %61 = vector.load %arg5[%c1_55, %c0_56, %c0_57, %c0_58] : memref<3x3x64x64xbf16, #tpu.memory_space<vmem>>, vector<1x1x64x64xbf16>
    %62 = vector.shape_cast %61 : vector<1x1x64x64xbf16> to vector<64x64xbf16>
    %cst_59 = arith.constant dense<0.000000e+00> : vector<128x64xf32>
    %63 = tpu.matmul %60, %62, %cst_59 {dimension_numbers = #tpu.dot_dimension_numbers<[1], [0], [0], [1], [0, 0, 1, 1], [], []>} : vector<128x64xbf16>, vector<64x64xbf16>, vector<128x64xf32> -> vector<128x64xf32>
    %64 = arith.addf %59, %63 : vector<128x64xf32>
    %c0_60 = arith.constant 0 : index
    %c0_61 = arith.constant 0 : index
    %65 = vector.load %arg9[%c0_60, %c0_61] : memref<128x64xf32, #tpu.memory_space<vmem>>, vector<128x64xf32>
    tpu.vector_store %arg9[%c0_60, %c0_61], %64 {strides = array<i32>} : memref<128x64xf32, #tpu.memory_space<vmem>>, vector<128x64xf32>,
    %66 = vector.extract_strided_slice %24 {offsets = [1, 0, 0], sizes = [8, 16, 64], strides = [1, 1, 1]} : vector<10x16x64xf32> to vector<8x16x64xf32>
    %67 = vector.shape_cast %66 : vector<8x16x64xf32> to vector<128x64xf32>
    %c0_62 = arith.constant 0 : index
    %c0_63 = arith.constant 0 : index
    %68 = vector.load %arg9[%c0_62, %c0_63] : memref<128x64xf32, #tpu.memory_space<vmem>>, vector<128x64xf32>
    %69 = arith.truncf %67 : vector<128x64xf32> to vector<128x64xbf16>
    %c1_64 = arith.constant 1 : index
    %c1_65 = arith.constant 1 : index
    %c0_66 = arith.constant 0 : index
    %c0_67 = arith.constant 0 : index
    %70 = vector.load %arg5[%c1_64, %c1_65, %c0_66, %c0_67] : memref<3x3x64x64xbf16, #tpu.memory_space<vmem>>, vector<1x1x64x64xbf16>
    %71 = vector.shape_cast %70 : vector<1x1x64x64xbf16> to vector<64x64xbf16>
    %cst_68 = arith.constant dense<0.000000e+00> : vector<128x64xf32>
    %72 = tpu.matmul %69, %71, %cst_68 {dimension_numbers = #tpu.dot_dimension_numbers<[1], [0], [0], [1], [0, 0, 1, 1], [], []>} : vector<128x64xbf16>, vector<64x64xbf16>, vector<128x64xf32> -> vector<128x64xf32>
    %73 = arith.addf %68, %72 : vector<128x64xf32>
    %c0_69 = arith.constant 0 : index
    %c0_70 = arith.constant 0 : index
    %74 = vector.load %arg9[%c0_69, %c0_70] : memref<128x64xf32, #tpu.memory_space<vmem>>, vector<128x64xf32>
    tpu.vector_store %arg9[%c0_69, %c0_70], %73 {strides = array<i32>} : memref<128x64xf32, #tpu.memory_space<vmem>>, vector<128x64xf32>,
    %75 = vector.extract_strided_slice %25 {offsets = [1, 0, 0], sizes = [8, 16, 64], strides = [1, 1, 1]} : vector<10x16x64xf32> to vector<8x16x64xf32>
    %76 = vector.shape_cast %75 : vector<8x16x64xf32> to vector<128x64xf32>
    %c0_71 = arith.constant 0 : index
    %c0_72 = arith.constant 0 : index
    %77 = vector.load %arg9[%c0_71, %c0_72] : memref<128x64xf32, #tpu.memory_space<vmem>>, vector<128x64xf32>
    %78 = arith.truncf %76 : vector<128x64xf32> to vector<128x64xbf16>
    %c1_73 = arith.constant 1 : index
    %c2_74 = arith.constant 2 : index
    %c0_75 = arith.constant 0 : index
    %c0_76 = arith.constant 0 : index
    %79 = vector.load %arg5[%c1_73, %c2_74, %c0_75, %c0_76] : memref<3x3x64x64xbf16, #tpu.memory_space<vmem>>, vector<1x1x64x64xbf16>
    %80 = vector.shape_cast %79 : vector<1x1x64x64xbf16> to vector<64x64xbf16>
    %cst_77 = arith.constant dense<0.000000e+00> : vector<128x64xf32>
    %81 = tpu.matmul %78, %80, %cst_77 {dimension_numbers = #tpu.dot_dimension_numbers<[1], [0], [0], [1], [0, 0, 1, 1], [], []>} : vector<128x64xbf16>, vector<64x64xbf16>, vector<128x64xf32> -> vector<128x64xf32>
    %82 = arith.addf %77, %81 : vector<128x64xf32>
    %c0_78 = arith.constant 0 : index
    %c0_79 = arith.constant 0 : index
    %83 = vector.load %arg9[%c0_78, %c0_79] : memref<128x64xf32, #tpu.memory_space<vmem>>, vector<128x64xf32>
    tpu.vector_store %arg9[%c0_78, %c0_79], %82 {strides = array<i32>} : memref<128x64xf32, #tpu.memory_space<vmem>>, vector<128x64xf32>,
    %84 = vector.extract_strided_slice %23 {offsets = [2, 0, 0], sizes = [8, 16, 64], strides = [1, 1, 1]} : vector<10x16x64xf32> to vector<8x16x64xf32>
    %85 = vector.shape_cast %84 : vector<8x16x64xf32> to vector<128x64xf32>
    %c0_80 = arith.constant 0 : index
    %c0_81 = arith.constant 0 : index
    %86 = vector.load %arg9[%c0_80, %c0_81] : memref<128x64xf32, #tpu.memory_space<vmem>>, vector<128x64xf32>
    %87 = arith.truncf %85 : vector<128x64xf32> to vector<128x64xbf16>
    %c2_82 = arith.constant 2 : index
    %c0_83 = arith.constant 0 : index
    %c0_84 = arith.constant 0 : index
    %c0_85 = arith.constant 0 : index
    %88 = vector.load %arg5[%c2_82, %c0_83, %c0_84, %c0_85] : memref<3x3x64x64xbf16, #tpu.memory_space<vmem>>, vector<1x1x64x64xbf16>
    %89 = vector.shape_cast %88 : vector<1x1x64x64xbf16> to vector<64x64xbf16>
    %cst_86 = arith.constant dense<0.000000e+00> : vector<128x64xf32>
    %90 = tpu.matmul %87, %89, %cst_86 {dimension_numbers = #tpu.dot_dimension_numbers<[1], [0], [0], [1], [0, 0, 1, 1], [], []>} : vector<128x64xbf16>, vector<64x64xbf16>, vector<128x64xf32> -> vector<128x64xf32>
    %91 = arith.addf %86, %90 : vector<128x64xf32>
    %c0_87 = arith.constant 0 : index
    %c0_88 = arith.constant 0 : index
    %92 = vector.load %arg9[%c0_87, %c0_88] : memref<128x64xf32, #tpu.memory_space<vmem>>, vector<128x64xf32>
    tpu.vector_store %arg9[%c0_87, %c0_88], %91 {strides = array<i32>} : memref<128x64xf32, #tpu.memory_space<vmem>>, vector<128x64xf32>,
    %93 = vector.extract_strided_slice %24 {offsets = [2, 0, 0], sizes = [8, 16, 64], strides = [1, 1, 1]} : vector<10x16x64xf32> to vector<8x16x64xf32>
    %94 = vector.shape_cast %93 : vector<8x16x64xf32> to vector<128x64xf32>
    %c0_89 = arith.constant 0 : index
    %c0_90 = arith.constant 0 : index
    %95 = vector.load %arg9[%c0_89, %c0_90] : memref<128x64xf32, #tpu.memory_space<vmem>>, vector<128x64xf32>
    %96 = arith.truncf %94 : vector<128x64xf32> to vector<128x64xbf16>
    %c2_91 = arith.constant 2 : index
    %c1_92 = arith.constant 1 : index
    %c0_93 = arith.constant 0 : index
    %c0_94 = arith.constant 0 : index
    %97 = vector.load %arg5[%c2_91, %c1_92, %c0_93, %c0_94] : memref<3x3x64x64xbf16, #tpu.memory_space<vmem>>, vector<1x1x64x64xbf16>
    %98 = vector.shape_cast %97 : vector<1x1x64x64xbf16> to vector<64x64xbf16>
    %cst_95 = arith.constant dense<0.000000e+00> : vector<128x64xf32>
    %99 = tpu.matmul %96, %98, %cst_95 {dimension_numbers = #tpu.dot_dimension_numbers<[1], [0], [0], [1], [0, 0, 1, 1], [], []>} : vector<128x64xbf16>, vector<64x64xbf16>, vector<128x64xf32> -> vector<128x64xf32>
    %100 = arith.addf %95, %99 : vector<128x64xf32>
    %c0_96 = arith.constant 0 : index
    %c0_97 = arith.constant 0 : index
    %101 = vector.load %arg9[%c0_96, %c0_97] : memref<128x64xf32, #tpu.memory_space<vmem>>, vector<128x64xf32>
    tpu.vector_store %arg9[%c0_96, %c0_97], %100 {strides = array<i32>} : memref<128x64xf32, #tpu.memory_space<vmem>>, vector<128x64xf32>,
    %102 = vector.extract_strided_slice %25 {offsets = [2, 0, 0], sizes = [8, 16, 64], strides = [1, 1, 1]} : vector<10x16x64xf32> to vector<8x16x64xf32>
    %103 = vector.shape_cast %102 : vector<8x16x64xf32> to vector<128x64xf32>
    %c0_98 = arith.constant 0 : index
    %c0_99 = arith.constant 0 : index
    %104 = vector.load %arg9[%c0_98, %c0_99] : memref<128x64xf32, #tpu.memory_space<vmem>>, vector<128x64xf32>
    %105 = arith.truncf %103 : vector<128x64xf32> to vector<128x64xbf16>
    %c2_100 = arith.constant 2 : index
    %c2_101 = arith.constant 2 : index
    %c0_102 = arith.constant 0 : index
    %c0_103 = arith.constant 0 : index
    %106 = vector.load %arg5[%c2_100, %c2_101, %c0_102, %c0_103] : memref<3x3x64x64xbf16, #tpu.memory_space<vmem>>, vector<1x1x64x64xbf16>
    %107 = vector.shape_cast %106 : vector<1x1x64x64xbf16> to vector<64x64xbf16>
    %cst_104 = arith.constant dense<0.000000e+00> : vector<128x64xf32>
    %108 = tpu.matmul %105, %107, %cst_104 {dimension_numbers = #tpu.dot_dimension_numbers<[1], [0], [0], [1], [0, 0, 1, 1], [], []>} : vector<128x64xbf16>, vector<64x64xbf16>, vector<128x64xf32> -> vector<128x64xf32>
    %109 = arith.addf %104, %108 : vector<128x64xf32>
    %c0_105 = arith.constant 0 : index
    %c0_106 = arith.constant 0 : index
    %110 = vector.load %arg9[%c0_105, %c0_106] : memref<128x64xf32, #tpu.memory_space<vmem>>, vector<128x64xf32>
    tpu.vector_store %arg9[%c0_105, %c0_106], %109 {strides = array<i32>} : memref<128x64xf32, #tpu.memory_space<vmem>>, vector<128x64xf32>,
    %c0_107 = arith.constant 0 : index
    %c0_108 = arith.constant 0 : index
    %111 = tpu.strided_load %arg9[%c0_107, %c0_108] {strides = array<i32: 2, 1>} : memref<128x64xf32, #tpu.memory_space<vmem>>, vector<64x64xf32>
    %c1_109 = arith.constant 1 : index
    %c0_110 = arith.constant 0 : index
    %112 = tpu.strided_load %arg9[%c1_109, %c0_110] {strides = array<i32: 2, 1>} : memref<128x64xf32, #tpu.memory_space<vmem>>, vector<64x64xf32>
    %113 = arith.maximumf %111, %112 : vector<64x64xf32>
    %114 = vector.shape_cast %113 : vector<64x64xf32> to vector<4x16x64xf32>
    %115 = vector.extract_strided_slice %114 {offsets = [0, 0, 0], sizes = [4, 8, 64], strides = [1, 1, 1]} : vector<4x16x64xf32> to vector<4x8x64xf32>
    %116 = vector.extract_strided_slice %114 {offsets = [0, 8, 0], sizes = [4, 8, 64], strides = [1, 1, 1]} : vector<4x16x64xf32> to vector<4x8x64xf32>
    %117 = arith.maximumf %115, %116 : vector<4x8x64xf32>
    %cst_111 = arith.constant 0.000000e+00 : f32
    %118 = vector.broadcast %cst_111 : f32 to vector<4x8x64xf32>
    %119 = arith.maximumf %117, %118 : vector<4x8x64xf32>
    %120 = arith.truncf %119 : vector<4x8x64xf32> to vector<4x8x64xbf16>
    %c0_112 = arith.constant 0 : index
    %c0_113 = arith.constant 0 : index
    %c0_114 = arith.constant 0 : index
    %c0_115 = arith.constant 0 : index
    %121 = vector.load %arg7[%c0_112, %c0_113, %c0_114, %c0_115] : memref<1x4x8x64xbf16, #tpu.memory_space<vmem>>, vector<1x4x8x64xbf16>
    %122 = vector.shape_cast %121 : vector<1x4x8x64xbf16> to vector<4x8x64xbf16>
    %123 = vector.shape_cast %120 : vector<4x8x64xbf16> to vector<1x4x8x64xbf16>
    tpu.vector_store %arg7[%c0_112, %c0_113, %c0_114, %c0_115], %123 {strides = array<i32>} : memref<1x4x8x64xbf16, #tpu.memory_space<vmem>>, vector<1x4x8x64xbf16>,
    return
  }
  func.func @transform_0(%arg0: i32, %arg1: i32) -> (i32, i32, i32, i32) {
    %c0_i32 = arith.constant 0 : i32
    %0 = arith.addi %arg1, %c0_i32 : i32
    %c0_i32_0 = arith.constant 0 : i32
    %1 = arith.maxsi %0, %c0_i32_0 : i32
    %c1_i32 = arith.constant 1 : i32
    %2 = arith.minsi %1, %c1_i32 : i32
    %c0_i32_1 = arith.constant 0 : i32
    %c0_i32_2 = arith.constant 0 : i32
    %c0_i32_3 = arith.constant 0 : i32
    return %arg0, %2, %c0_i32_1, %c0_i32_2 : i32, i32, i32, i32
  }
  func.func @transform_1(%arg0: i32, %arg1: i32) -> (i32, i32, i32, i32) {
    %c-1_i32 = arith.constant -1 : i32
    %0 = arith.addi %arg1, %c-1_i32 : i32
    %c0_i32 = arith.constant 0 : i32
    %1 = arith.maxsi %0, %c0_i32 : i32
    %c1_i32 = arith.constant 1 : i32
    %2 = arith.minsi %1, %c1_i32 : i32
    %c0_i32_0 = arith.constant 0 : i32
    %c0_i32_1 = arith.constant 0 : i32
    %c0_i32_2 = arith.constant 0 : i32
    return %arg0, %2, %c0_i32_0, %c0_i32_1 : i32, i32, i32, i32
  }
  func.func @transform_2(%arg0: i32, %arg1: i32) -> (i32, i32, i32, i32) {
    %c1_i32 = arith.constant 1 : i32
    %0 = arith.addi %arg1, %c1_i32 : i32
    %c0_i32 = arith.constant 0 : i32
    %1 = arith.maxsi %0, %c0_i32 : i32
    %c1_i32_0 = arith.constant 1 : i32
    %2 = arith.minsi %1, %c1_i32_0 : i32
    %c0_i32_1 = arith.constant 0 : i32
    %c0_i32_2 = arith.constant 0 : i32
    %c0_i32_3 = arith.constant 0 : i32
    return %arg0, %2, %c0_i32_1, %c0_i32_2 : i32, i32, i32, i32
  }
  func.func @transform_3(%arg0: i32, %arg1: i32) -> (i32, i32, i32, i32) {
    %c0_i32 = arith.constant 0 : i32
    %c0_i32_0 = arith.constant 0 : i32
    %c0_i32_1 = arith.constant 0 : i32
    %c0_i32_2 = arith.constant 0 : i32
    %c0_i32_3 = arith.constant 0 : i32
    return %c0_i32, %c0_i32_0, %c0_i32_1, %c0_i32_2 : i32, i32, i32, i32
  }
  func.func @transform_4(%arg0: i32, %arg1: i32) -> (i32, i32) {
    %c0_i32 = arith.constant 0 : i32
    %c0_i32_0 = arith.constant 0 : i32
    %c0_i32_1 = arith.constant 0 : i32
    return %c0_i32, %c0_i32_0 : i32, i32
  }
  func.func @transform_5(%arg0: i32, %arg1: i32) -> (i32, i32, i32, i32) {
    %c0_i32 = arith.constant 0 : i32
    %c0_i32_0 = arith.constant 0 : i32
    %c0_i32_1 = arith.constant 0 : i32
    return %arg0, %arg1, %c0_i32, %c0_i32_0 : i32, i32, i32, i32
  }
}

module attributes {stable_mosaic.version = 11 : i64} {
  func.func @_conv3x3_kernel(%arg0: i32, %arg1: i32, %arg2: memref<1x4x8x64xbf16, #tpu.memory_space<vmem>>, %arg3: memref<1x4x8x64xbf16, #tpu.memory_space<vmem>>, %arg4: memref<1x4x8x64xbf16, #tpu.memory_space<vmem>>, %arg5: memref<3x3x64x128xbf16, #tpu.memory_space<vmem>>, %arg6: memref<1x128xf32, #tpu.memory_space<vmem>>, %arg7: memref<1x4x8x128xbf16, #tpu.memory_space<vmem>>, %arg8: memref<6x24x64xf32, #tpu.memory_space<vmem>>, %arg9: memref<32x128xf32, #tpu.memory_space<vmem>>) attributes {dimension_semantics = [#tpu.dimension_semantics<parallel>, #tpu.dimension_semantics<parallel>], iteration_bounds = array<i64: 2, 2>, scalar_prefetch = 0 : i64, scratch_operands = 2 : i64, tpu.core_type = #tpu.core_type<tc>, window_params = [{transform_indices = @transform_0, window_bounds = array<i64: 1, 4, 8, 64>}, {transform_indices = @transform_1, window_bounds = array<i64: 1, 4, 8, 64>}, {transform_indices = @transform_2, window_bounds = array<i64: 1, 4, 8, 64>}, {pipeline_mode = #tpu.pipeline_mode<synchronous>, transform_indices = @transform_3, window_bounds = array<i64: 3, 3, 64, 128>}, {pipeline_mode = #tpu.pipeline_mode<synchronous>, transform_indices = @transform_4, window_bounds = array<i64: 1, 128>}, {transform_indices = @transform_5, window_bounds = array<i64: 1, 4, 8, 128>}]} {
    %c0 = arith.constant 0 : index
    %c0_0 = arith.constant 0 : index
    %c0_1 = arith.constant 0 : index
    %c0_2 = arith.constant 0 : index
    %0 = vector.load %arg2[%c0, %c0_0, %c0_1, %c0_2] : memref<1x4x8x64xbf16, #tpu.memory_space<vmem>>, vector<1x4x8x64xbf16>
    %1 = vector.shape_cast %0 : vector<1x4x8x64xbf16> to vector<4x8x64xbf16>
    %2 = arith.extf %1 : vector<4x8x64xbf16> to vector<4x8x64xf32>
    %c0_3 = arith.constant 0 : index
    %c3 = arith.constant 3 : index
    %c0_4 = arith.constant 0 : index
    %c0_5 = arith.constant 0 : index
    %3 = vector.load %arg3[%c0_3, %c3, %c0_4, %c0_5] : memref<1x4x8x64xbf16, #tpu.memory_space<vmem>>, vector<1x1x8x64xbf16>
    %4 = vector.shape_cast %3 : vector<1x1x8x64xbf16> to vector<1x8x64xbf16>
    %5 = arith.extf %4 : vector<1x8x64xbf16> to vector<1x8x64xf32>
    %c0_6 = arith.constant 0 : index
    %c0_7 = arith.constant 0 : index
    %c0_8 = arith.constant 0 : index
    %c0_9 = arith.constant 0 : index
    %6 = vector.load %arg4[%c0_6, %c0_7, %c0_8, %c0_9] : memref<1x4x8x64xbf16, #tpu.memory_space<vmem>>, vector<1x1x8x64xbf16>
    %7 = vector.shape_cast %6 : vector<1x1x8x64xbf16> to vector<1x8x64xbf16>
    %8 = arith.extf %7 : vector<1x8x64xbf16> to vector<1x8x64xf32>
    %c0_i32 = arith.constant 0 : i32
    %9 = arith.cmpi sgt, %arg1, %c0_i32 : i32
    %cst = arith.constant 1.000000e+00 : f32
    %cst_10 = arith.constant 0.000000e+00 : f32
    %10 = arith.select %9, %cst, %cst_10 : f32
    %11 = vector.broadcast %10 : f32 to vector<1x8x64xf32>
    %12 = arith.mulf %5, %11 : vector<1x8x64xf32>
    %c1_i32 = arith.constant 1 : i32
    %13 = arith.cmpi slt, %arg1, %c1_i32 : i32
    %cst_11 = arith.constant 1.000000e+00 : f32
    %cst_12 = arith.constant 0.000000e+00 : f32
    %14 = arith.select %13, %cst_11, %cst_12 : f32
    %15 = vector.broadcast %14 : f32 to vector<1x8x64xf32>
    %16 = arith.mulf %8, %15 : vector<1x8x64xf32>
    %17 = tpu.concatenate %12, %2, %16 in 0 : vector<1x8x64xf32>, vector<4x8x64xf32>, vector<1x8x64xf32> -> vector<6x8x64xf32>
    %cst_13 = arith.constant 0.000000e+00 : f32
    %18 = vector.broadcast %cst_13 : f32 to vector<6x8x64xf32>
    %c0_14 = arith.constant 0 : index
    %c0_15 = arith.constant 0 : index
    %c0_16 = arith.constant 0 : index
    %19 = vector.load %arg8[%c0_14, %c0_15, %c0_16] : memref<6x24x64xf32, #tpu.memory_space<vmem>>, vector<6x8x64xf32>
    tpu.vector_store %arg8[%c0_14, %c0_15, %c0_16], %18 {strides = array<i32>} : memref<6x24x64xf32, #tpu.memory_space<vmem>>, vector<6x8x64xf32>,
    %c0_17 = arith.constant 0 : index
    %c16 = arith.constant 16 : index
    %c0_18 = arith.constant 0 : index
    %20 = vector.load %arg8[%c0_17, %c16, %c0_18] : memref<6x24x64xf32, #tpu.memory_space<vmem>>, vector<6x8x64xf32>
    tpu.vector_store %arg8[%c0_17, %c16, %c0_18], %18 {strides = array<i32>} : memref<6x24x64xf32, #tpu.memory_space<vmem>>, vector<6x8x64xf32>,
    %c0_19 = arith.constant 0 : index
    %c8 = arith.constant 8 : index
    %c0_20 = arith.constant 0 : index
    %21 = vector.load %arg8[%c0_19, %c8, %c0_20] : memref<6x24x64xf32, #tpu.memory_space<vmem>>, vector<6x8x64xf32>
    tpu.vector_store %arg8[%c0_19, %c8, %c0_20], %17 {strides = array<i32>} : memref<6x24x64xf32, #tpu.memory_space<vmem>>, vector<6x8x64xf32>,
    %c0_21 = arith.constant 0 : index
    %c0_22 = arith.constant 0 : index
    %c0_23 = arith.constant 0 : index
    %22 = vector.load %arg8[%c0_21, %c0_22, %c0_23] : memref<6x24x64xf32, #tpu.memory_space<vmem>>, vector<6x24x64xf32>
    %23 = vector.extract_strided_slice %22 {offsets = [0, 7, 0], sizes = [6, 8, 64], strides = [1, 1, 1]} : vector<6x24x64xf32> to vector<6x8x64xf32>
    %24 = vector.extract_strided_slice %22 {offsets = [0, 8, 0], sizes = [6, 8, 64], strides = [1, 1, 1]} : vector<6x24x64xf32> to vector<6x8x64xf32>
    %25 = vector.extract_strided_slice %22 {offsets = [0, 9, 0], sizes = [6, 8, 64], strides = [1, 1, 1]} : vector<6x24x64xf32> to vector<6x8x64xf32>
    %c0_24 = arith.constant 0 : index
    %c0_25 = arith.constant 0 : index
    %26 = vector.load %arg6[%c0_24, %c0_25] : memref<1x128xf32, #tpu.memory_space<vmem>>, vector<1x128xf32>
    %27 = vector.shape_cast %26 : vector<1x128xf32> to vector<1x128xf32>
    %28 = vector.broadcast %27 : vector<1x128xf32> to vector<32x128xf32>
    %c0_26 = arith.constant 0 : index
    %c0_27 = arith.constant 0 : index
    %29 = vector.load %arg9[%c0_26, %c0_27] : memref<32x128xf32, #tpu.memory_space<vmem>>, vector<32x128xf32>
    tpu.vector_store %arg9[%c0_26, %c0_27], %28 {strides = array<i32>} : memref<32x128xf32, #tpu.memory_space<vmem>>, vector<32x128xf32>,
    %30 = vector.extract_strided_slice %23 {offsets = [0, 0, 0], sizes = [4, 8, 64], strides = [1, 1, 1]} : vector<6x8x64xf32> to vector<4x8x64xf32>
    %31 = vector.shape_cast %30 : vector<4x8x64xf32> to vector<32x64xf32>
    %c0_28 = arith.constant 0 : index
    %c0_29 = arith.constant 0 : index
    %32 = vector.load %arg9[%c0_28, %c0_29] : memref<32x128xf32, #tpu.memory_space<vmem>>, vector<32x128xf32>
    %33 = arith.truncf %31 : vector<32x64xf32> to vector<32x64xbf16>
    %c0_30 = arith.constant 0 : index
    %c0_31 = arith.constant 0 : index
    %c0_32 = arith.constant 0 : index
    %c0_33 = arith.constant 0 : index
    %34 = vector.load %arg5[%c0_30, %c0_31, %c0_32, %c0_33] : memref<3x3x64x128xbf16, #tpu.memory_space<vmem>>, vector<1x1x64x128xbf16>
    %35 = vector.shape_cast %34 : vector<1x1x64x128xbf16> to vector<64x128xbf16>
    %cst_34 = arith.constant dense<0.000000e+00> : vector<32x128xf32>
    %36 = tpu.matmul %33, %35, %cst_34 {dimension_numbers = #tpu.dot_dimension_numbers<[1], [0], [0], [1], [0, 0, 1, 1], [], []>} : vector<32x64xbf16>, vector<64x128xbf16>, vector<32x128xf32> -> vector<32x128xf32>
    %37 = arith.addf %32, %36 : vector<32x128xf32>
    %c0_35 = arith.constant 0 : index
    %c0_36 = arith.constant 0 : index
    %38 = vector.load %arg9[%c0_35, %c0_36] : memref<32x128xf32, #tpu.memory_space<vmem>>, vector<32x128xf32>
    tpu.vector_store %arg9[%c0_35, %c0_36], %37 {strides = array<i32>} : memref<32x128xf32, #tpu.memory_space<vmem>>, vector<32x128xf32>,
    %39 = vector.extract_strided_slice %24 {offsets = [0, 0, 0], sizes = [4, 8, 64], strides = [1, 1, 1]} : vector<6x8x64xf32> to vector<4x8x64xf32>
    %40 = vector.shape_cast %39 : vector<4x8x64xf32> to vector<32x64xf32>
    %c0_37 = arith.constant 0 : index
    %c0_38 = arith.constant 0 : index
    %41 = vector.load %arg9[%c0_37, %c0_38] : memref<32x128xf32, #tpu.memory_space<vmem>>, vector<32x128xf32>
    %42 = arith.truncf %40 : vector<32x64xf32> to vector<32x64xbf16>
    %c0_39 = arith.constant 0 : index
    %c1 = arith.constant 1 : index
    %c0_40 = arith.constant 0 : index
    %c0_41 = arith.constant 0 : index
    %43 = vector.load %arg5[%c0_39, %c1, %c0_40, %c0_41] : memref<3x3x64x128xbf16, #tpu.memory_space<vmem>>, vector<1x1x64x128xbf16>
    %44 = vector.shape_cast %43 : vector<1x1x64x128xbf16> to vector<64x128xbf16>
    %cst_42 = arith.constant dense<0.000000e+00> : vector<32x128xf32>
    %45 = tpu.matmul %42, %44, %cst_42 {dimension_numbers = #tpu.dot_dimension_numbers<[1], [0], [0], [1], [0, 0, 1, 1], [], []>} : vector<32x64xbf16>, vector<64x128xbf16>, vector<32x128xf32> -> vector<32x128xf32>
    %46 = arith.addf %41, %45 : vector<32x128xf32>
    %c0_43 = arith.constant 0 : index
    %c0_44 = arith.constant 0 : index
    %47 = vector.load %arg9[%c0_43, %c0_44] : memref<32x128xf32, #tpu.memory_space<vmem>>, vector<32x128xf32>
    tpu.vector_store %arg9[%c0_43, %c0_44], %46 {strides = array<i32>} : memref<32x128xf32, #tpu.memory_space<vmem>>, vector<32x128xf32>,
    %48 = vector.extract_strided_slice %25 {offsets = [0, 0, 0], sizes = [4, 8, 64], strides = [1, 1, 1]} : vector<6x8x64xf32> to vector<4x8x64xf32>
    %49 = vector.shape_cast %48 : vector<4x8x64xf32> to vector<32x64xf32>
    %c0_45 = arith.constant 0 : index
    %c0_46 = arith.constant 0 : index
    %50 = vector.load %arg9[%c0_45, %c0_46] : memref<32x128xf32, #tpu.memory_space<vmem>>, vector<32x128xf32>
    %51 = arith.truncf %49 : vector<32x64xf32> to vector<32x64xbf16>
    %c0_47 = arith.constant 0 : index
    %c2 = arith.constant 2 : index
    %c0_48 = arith.constant 0 : index
    %c0_49 = arith.constant 0 : index
    %52 = vector.load %arg5[%c0_47, %c2, %c0_48, %c0_49] : memref<3x3x64x128xbf16, #tpu.memory_space<vmem>>, vector<1x1x64x128xbf16>
    %53 = vector.shape_cast %52 : vector<1x1x64x128xbf16> to vector<64x128xbf16>
    %cst_50 = arith.constant dense<0.000000e+00> : vector<32x128xf32>
    %54 = tpu.matmul %51, %53, %cst_50 {dimension_numbers = #tpu.dot_dimension_numbers<[1], [0], [0], [1], [0, 0, 1, 1], [], []>} : vector<32x64xbf16>, vector<64x128xbf16>, vector<32x128xf32> -> vector<32x128xf32>
    %55 = arith.addf %50, %54 : vector<32x128xf32>
    %c0_51 = arith.constant 0 : index
    %c0_52 = arith.constant 0 : index
    %56 = vector.load %arg9[%c0_51, %c0_52] : memref<32x128xf32, #tpu.memory_space<vmem>>, vector<32x128xf32>
    tpu.vector_store %arg9[%c0_51, %c0_52], %55 {strides = array<i32>} : memref<32x128xf32, #tpu.memory_space<vmem>>, vector<32x128xf32>,
    %57 = vector.extract_strided_slice %23 {offsets = [1, 0, 0], sizes = [4, 8, 64], strides = [1, 1, 1]} : vector<6x8x64xf32> to vector<4x8x64xf32>
    %58 = vector.shape_cast %57 : vector<4x8x64xf32> to vector<32x64xf32>
    %c0_53 = arith.constant 0 : index
    %c0_54 = arith.constant 0 : index
    %59 = vector.load %arg9[%c0_53, %c0_54] : memref<32x128xf32, #tpu.memory_space<vmem>>, vector<32x128xf32>
    %60 = arith.truncf %58 : vector<32x64xf32> to vector<32x64xbf16>
    %c1_55 = arith.constant 1 : index
    %c0_56 = arith.constant 0 : index
    %c0_57 = arith.constant 0 : index
    %c0_58 = arith.constant 0 : index
    %61 = vector.load %arg5[%c1_55, %c0_56, %c0_57, %c0_58] : memref<3x3x64x128xbf16, #tpu.memory_space<vmem>>, vector<1x1x64x128xbf16>
    %62 = vector.shape_cast %61 : vector<1x1x64x128xbf16> to vector<64x128xbf16>
    %cst_59 = arith.constant dense<0.000000e+00> : vector<32x128xf32>
    %63 = tpu.matmul %60, %62, %cst_59 {dimension_numbers = #tpu.dot_dimension_numbers<[1], [0], [0], [1], [0, 0, 1, 1], [], []>} : vector<32x64xbf16>, vector<64x128xbf16>, vector<32x128xf32> -> vector<32x128xf32>
    %64 = arith.addf %59, %63 : vector<32x128xf32>
    %c0_60 = arith.constant 0 : index
    %c0_61 = arith.constant 0 : index
    %65 = vector.load %arg9[%c0_60, %c0_61] : memref<32x128xf32, #tpu.memory_space<vmem>>, vector<32x128xf32>
    tpu.vector_store %arg9[%c0_60, %c0_61], %64 {strides = array<i32>} : memref<32x128xf32, #tpu.memory_space<vmem>>, vector<32x128xf32>,
    %66 = vector.extract_strided_slice %24 {offsets = [1, 0, 0], sizes = [4, 8, 64], strides = [1, 1, 1]} : vector<6x8x64xf32> to vector<4x8x64xf32>
    %67 = vector.shape_cast %66 : vector<4x8x64xf32> to vector<32x64xf32>
    %c0_62 = arith.constant 0 : index
    %c0_63 = arith.constant 0 : index
    %68 = vector.load %arg9[%c0_62, %c0_63] : memref<32x128xf32, #tpu.memory_space<vmem>>, vector<32x128xf32>
    %69 = arith.truncf %67 : vector<32x64xf32> to vector<32x64xbf16>
    %c1_64 = arith.constant 1 : index
    %c1_65 = arith.constant 1 : index
    %c0_66 = arith.constant 0 : index
    %c0_67 = arith.constant 0 : index
    %70 = vector.load %arg5[%c1_64, %c1_65, %c0_66, %c0_67] : memref<3x3x64x128xbf16, #tpu.memory_space<vmem>>, vector<1x1x64x128xbf16>
    %71 = vector.shape_cast %70 : vector<1x1x64x128xbf16> to vector<64x128xbf16>
    %cst_68 = arith.constant dense<0.000000e+00> : vector<32x128xf32>
    %72 = tpu.matmul %69, %71, %cst_68 {dimension_numbers = #tpu.dot_dimension_numbers<[1], [0], [0], [1], [0, 0, 1, 1], [], []>} : vector<32x64xbf16>, vector<64x128xbf16>, vector<32x128xf32> -> vector<32x128xf32>
    %73 = arith.addf %68, %72 : vector<32x128xf32>
    %c0_69 = arith.constant 0 : index
    %c0_70 = arith.constant 0 : index
    %74 = vector.load %arg9[%c0_69, %c0_70] : memref<32x128xf32, #tpu.memory_space<vmem>>, vector<32x128xf32>
    tpu.vector_store %arg9[%c0_69, %c0_70], %73 {strides = array<i32>} : memref<32x128xf32, #tpu.memory_space<vmem>>, vector<32x128xf32>,
    %75 = vector.extract_strided_slice %25 {offsets = [1, 0, 0], sizes = [4, 8, 64], strides = [1, 1, 1]} : vector<6x8x64xf32> to vector<4x8x64xf32>
    %76 = vector.shape_cast %75 : vector<4x8x64xf32> to vector<32x64xf32>
    %c0_71 = arith.constant 0 : index
    %c0_72 = arith.constant 0 : index
    %77 = vector.load %arg9[%c0_71, %c0_72] : memref<32x128xf32, #tpu.memory_space<vmem>>, vector<32x128xf32>
    %78 = arith.truncf %76 : vector<32x64xf32> to vector<32x64xbf16>
    %c1_73 = arith.constant 1 : index
    %c2_74 = arith.constant 2 : index
    %c0_75 = arith.constant 0 : index
    %c0_76 = arith.constant 0 : index
    %79 = vector.load %arg5[%c1_73, %c2_74, %c0_75, %c0_76] : memref<3x3x64x128xbf16, #tpu.memory_space<vmem>>, vector<1x1x64x128xbf16>
    %80 = vector.shape_cast %79 : vector<1x1x64x128xbf16> to vector<64x128xbf16>
    %cst_77 = arith.constant dense<0.000000e+00> : vector<32x128xf32>
    %81 = tpu.matmul %78, %80, %cst_77 {dimension_numbers = #tpu.dot_dimension_numbers<[1], [0], [0], [1], [0, 0, 1, 1], [], []>} : vector<32x64xbf16>, vector<64x128xbf16>, vector<32x128xf32> -> vector<32x128xf32>
    %82 = arith.addf %77, %81 : vector<32x128xf32>
    %c0_78 = arith.constant 0 : index
    %c0_79 = arith.constant 0 : index
    %83 = vector.load %arg9[%c0_78, %c0_79] : memref<32x128xf32, #tpu.memory_space<vmem>>, vector<32x128xf32>
    tpu.vector_store %arg9[%c0_78, %c0_79], %82 {strides = array<i32>} : memref<32x128xf32, #tpu.memory_space<vmem>>, vector<32x128xf32>,
    %84 = vector.extract_strided_slice %23 {offsets = [2, 0, 0], sizes = [4, 8, 64], strides = [1, 1, 1]} : vector<6x8x64xf32> to vector<4x8x64xf32>
    %85 = vector.shape_cast %84 : vector<4x8x64xf32> to vector<32x64xf32>
    %c0_80 = arith.constant 0 : index
    %c0_81 = arith.constant 0 : index
    %86 = vector.load %arg9[%c0_80, %c0_81] : memref<32x128xf32, #tpu.memory_space<vmem>>, vector<32x128xf32>
    %87 = arith.truncf %85 : vector<32x64xf32> to vector<32x64xbf16>
    %c2_82 = arith.constant 2 : index
    %c0_83 = arith.constant 0 : index
    %c0_84 = arith.constant 0 : index
    %c0_85 = arith.constant 0 : index
    %88 = vector.load %arg5[%c2_82, %c0_83, %c0_84, %c0_85] : memref<3x3x64x128xbf16, #tpu.memory_space<vmem>>, vector<1x1x64x128xbf16>
    %89 = vector.shape_cast %88 : vector<1x1x64x128xbf16> to vector<64x128xbf16>
    %cst_86 = arith.constant dense<0.000000e+00> : vector<32x128xf32>
    %90 = tpu.matmul %87, %89, %cst_86 {dimension_numbers = #tpu.dot_dimension_numbers<[1], [0], [0], [1], [0, 0, 1, 1], [], []>} : vector<32x64xbf16>, vector<64x128xbf16>, vector<32x128xf32> -> vector<32x128xf32>
    %91 = arith.addf %86, %90 : vector<32x128xf32>
    %c0_87 = arith.constant 0 : index
    %c0_88 = arith.constant 0 : index
    %92 = vector.load %arg9[%c0_87, %c0_88] : memref<32x128xf32, #tpu.memory_space<vmem>>, vector<32x128xf32>
    tpu.vector_store %arg9[%c0_87, %c0_88], %91 {strides = array<i32>} : memref<32x128xf32, #tpu.memory_space<vmem>>, vector<32x128xf32>,
    %93 = vector.extract_strided_slice %24 {offsets = [2, 0, 0], sizes = [4, 8, 64], strides = [1, 1, 1]} : vector<6x8x64xf32> to vector<4x8x64xf32>
    %94 = vector.shape_cast %93 : vector<4x8x64xf32> to vector<32x64xf32>
    %c0_89 = arith.constant 0 : index
    %c0_90 = arith.constant 0 : index
    %95 = vector.load %arg9[%c0_89, %c0_90] : memref<32x128xf32, #tpu.memory_space<vmem>>, vector<32x128xf32>
    %96 = arith.truncf %94 : vector<32x64xf32> to vector<32x64xbf16>
    %c2_91 = arith.constant 2 : index
    %c1_92 = arith.constant 1 : index
    %c0_93 = arith.constant 0 : index
    %c0_94 = arith.constant 0 : index
    %97 = vector.load %arg5[%c2_91, %c1_92, %c0_93, %c0_94] : memref<3x3x64x128xbf16, #tpu.memory_space<vmem>>, vector<1x1x64x128xbf16>
    %98 = vector.shape_cast %97 : vector<1x1x64x128xbf16> to vector<64x128xbf16>
    %cst_95 = arith.constant dense<0.000000e+00> : vector<32x128xf32>
    %99 = tpu.matmul %96, %98, %cst_95 {dimension_numbers = #tpu.dot_dimension_numbers<[1], [0], [0], [1], [0, 0, 1, 1], [], []>} : vector<32x64xbf16>, vector<64x128xbf16>, vector<32x128xf32> -> vector<32x128xf32>
    %100 = arith.addf %95, %99 : vector<32x128xf32>
    %c0_96 = arith.constant 0 : index
    %c0_97 = arith.constant 0 : index
    %101 = vector.load %arg9[%c0_96, %c0_97] : memref<32x128xf32, #tpu.memory_space<vmem>>, vector<32x128xf32>
    tpu.vector_store %arg9[%c0_96, %c0_97], %100 {strides = array<i32>} : memref<32x128xf32, #tpu.memory_space<vmem>>, vector<32x128xf32>,
    %102 = vector.extract_strided_slice %25 {offsets = [2, 0, 0], sizes = [4, 8, 64], strides = [1, 1, 1]} : vector<6x8x64xf32> to vector<4x8x64xf32>
    %103 = vector.shape_cast %102 : vector<4x8x64xf32> to vector<32x64xf32>
    %c0_98 = arith.constant 0 : index
    %c0_99 = arith.constant 0 : index
    %104 = vector.load %arg9[%c0_98, %c0_99] : memref<32x128xf32, #tpu.memory_space<vmem>>, vector<32x128xf32>
    %105 = arith.truncf %103 : vector<32x64xf32> to vector<32x64xbf16>
    %c2_100 = arith.constant 2 : index
    %c2_101 = arith.constant 2 : index
    %c0_102 = arith.constant 0 : index
    %c0_103 = arith.constant 0 : index
    %106 = vector.load %arg5[%c2_100, %c2_101, %c0_102, %c0_103] : memref<3x3x64x128xbf16, #tpu.memory_space<vmem>>, vector<1x1x64x128xbf16>
    %107 = vector.shape_cast %106 : vector<1x1x64x128xbf16> to vector<64x128xbf16>
    %cst_104 = arith.constant dense<0.000000e+00> : vector<32x128xf32>
    %108 = tpu.matmul %105, %107, %cst_104 {dimension_numbers = #tpu.dot_dimension_numbers<[1], [0], [0], [1], [0, 0, 1, 1], [], []>} : vector<32x64xbf16>, vector<64x128xbf16>, vector<32x128xf32> -> vector<32x128xf32>
    %109 = arith.addf %104, %108 : vector<32x128xf32>
    %c0_105 = arith.constant 0 : index
    %c0_106 = arith.constant 0 : index
    %110 = vector.load %arg9[%c0_105, %c0_106] : memref<32x128xf32, #tpu.memory_space<vmem>>, vector<32x128xf32>
    tpu.vector_store %arg9[%c0_105, %c0_106], %109 {strides = array<i32>} : memref<32x128xf32, #tpu.memory_space<vmem>>, vector<32x128xf32>,
    %c0_107 = arith.constant 0 : index
    %c0_108 = arith.constant 0 : index
    %111 = vector.load %arg9[%c0_107, %c0_108] : memref<32x128xf32, #tpu.memory_space<vmem>>, vector<32x128xf32>
    %cst_109 = arith.constant 0.000000e+00 : f32
    %112 = vector.broadcast %cst_109 : f32 to vector<32x128xf32>
    %113 = arith.maximumf %111, %112 : vector<32x128xf32>
    %114 = vector.shape_cast %113 : vector<32x128xf32> to vector<4x8x128xf32>
    %115 = arith.truncf %114 : vector<4x8x128xf32> to vector<4x8x128xbf16>
    %c0_110 = arith.constant 0 : index
    %c0_111 = arith.constant 0 : index
    %c0_112 = arith.constant 0 : index
    %c0_113 = arith.constant 0 : index
    %116 = vector.load %arg7[%c0_110, %c0_111, %c0_112, %c0_113] : memref<1x4x8x128xbf16, #tpu.memory_space<vmem>>, vector<1x4x8x128xbf16>
    %117 = vector.shape_cast %116 : vector<1x4x8x128xbf16> to vector<4x8x128xbf16>
    %118 = vector.shape_cast %115 : vector<4x8x128xbf16> to vector<1x4x8x128xbf16>
    tpu.vector_store %arg7[%c0_110, %c0_111, %c0_112, %c0_113], %118 {strides = array<i32>} : memref<1x4x8x128xbf16, #tpu.memory_space<vmem>>, vector<1x4x8x128xbf16>,
    return
  }
  func.func @transform_0(%arg0: i32, %arg1: i32) -> (i32, i32, i32, i32) {
    %c0_i32 = arith.constant 0 : i32
    %0 = arith.addi %arg1, %c0_i32 : i32
    %c0_i32_0 = arith.constant 0 : i32
    %1 = arith.maxsi %0, %c0_i32_0 : i32
    %c1_i32 = arith.constant 1 : i32
    %2 = arith.minsi %1, %c1_i32 : i32
    %c0_i32_1 = arith.constant 0 : i32
    %c0_i32_2 = arith.constant 0 : i32
    %c0_i32_3 = arith.constant 0 : i32
    return %arg0, %2, %c0_i32_1, %c0_i32_2 : i32, i32, i32, i32
  }
  func.func @transform_1(%arg0: i32, %arg1: i32) -> (i32, i32, i32, i32) {
    %c-1_i32 = arith.constant -1 : i32
    %0 = arith.addi %arg1, %c-1_i32 : i32
    %c0_i32 = arith.constant 0 : i32
    %1 = arith.maxsi %0, %c0_i32 : i32
    %c1_i32 = arith.constant 1 : i32
    %2 = arith.minsi %1, %c1_i32 : i32
    %c0_i32_0 = arith.constant 0 : i32
    %c0_i32_1 = arith.constant 0 : i32
    %c0_i32_2 = arith.constant 0 : i32
    return %arg0, %2, %c0_i32_0, %c0_i32_1 : i32, i32, i32, i32
  }
  func.func @transform_2(%arg0: i32, %arg1: i32) -> (i32, i32, i32, i32) {
    %c1_i32 = arith.constant 1 : i32
    %0 = arith.addi %arg1, %c1_i32 : i32
    %c0_i32 = arith.constant 0 : i32
    %1 = arith.maxsi %0, %c0_i32 : i32
    %c1_i32_0 = arith.constant 1 : i32
    %2 = arith.minsi %1, %c1_i32_0 : i32
    %c0_i32_1 = arith.constant 0 : i32
    %c0_i32_2 = arith.constant 0 : i32
    %c0_i32_3 = arith.constant 0 : i32
    return %arg0, %2, %c0_i32_1, %c0_i32_2 : i32, i32, i32, i32
  }
  func.func @transform_3(%arg0: i32, %arg1: i32) -> (i32, i32, i32, i32) {
    %c0_i32 = arith.constant 0 : i32
    %c0_i32_0 = arith.constant 0 : i32
    %c0_i32_1 = arith.constant 0 : i32
    %c0_i32_2 = arith.constant 0 : i32
    %c0_i32_3 = arith.constant 0 : i32
    return %c0_i32, %c0_i32_0, %c0_i32_1, %c0_i32_2 : i32, i32, i32, i32
  }
  func.func @transform_4(%arg0: i32, %arg1: i32) -> (i32, i32) {
    %c0_i32 = arith.constant 0 : i32
    %c0_i32_0 = arith.constant 0 : i32
    %c0_i32_1 = arith.constant 0 : i32
    return %c0_i32, %c0_i32_0 : i32, i32
  }
  func.func @transform_5(%arg0: i32, %arg1: i32) -> (i32, i32, i32, i32) {
    %c0_i32 = arith.constant 0 : i32
    %c0_i32_0 = arith.constant 0 : i32
    %c0_i32_1 = arith.constant 0 : i32
    return %arg0, %arg1, %c0_i32, %c0_i32_0 : i32, i32, i32, i32
  }
}

module attributes {stable_mosaic.version = 11 : i64} {
  func.func @_conv3x3_kernel(%arg0: i32, %arg1: i32, %arg2: memref<1x4x8x128xbf16, #tpu.memory_space<vmem>>, %arg3: memref<1x4x8x128xbf16, #tpu.memory_space<vmem>>, %arg4: memref<1x4x8x128xbf16, #tpu.memory_space<vmem>>, %arg5: memref<3x3x128x128xbf16, #tpu.memory_space<vmem>>, %arg6: memref<1x128xf32, #tpu.memory_space<vmem>>, %arg7: memref<1x4x8x128xf32, #tpu.memory_space<vmem>>, %arg8: memref<6x24x128xf32, #tpu.memory_space<vmem>>, %arg9: memref<32x128xf32, #tpu.memory_space<vmem>>) attributes {dimension_semantics = [#tpu.dimension_semantics<parallel>, #tpu.dimension_semantics<parallel>], iteration_bounds = array<i64: 2, 2>, scalar_prefetch = 0 : i64, scratch_operands = 2 : i64, tpu.core_type = #tpu.core_type<tc>, window_params = [{transform_indices = @transform_0, window_bounds = array<i64: 1, 4, 8, 128>}, {transform_indices = @transform_1, window_bounds = array<i64: 1, 4, 8, 128>}, {transform_indices = @transform_2, window_bounds = array<i64: 1, 4, 8, 128>}, {pipeline_mode = #tpu.pipeline_mode<synchronous>, transform_indices = @transform_3, window_bounds = array<i64: 3, 3, 128, 128>}, {pipeline_mode = #tpu.pipeline_mode<synchronous>, transform_indices = @transform_4, window_bounds = array<i64: 1, 128>}, {transform_indices = @transform_5, window_bounds = array<i64: 1, 4, 8, 128>}]} {
    %c0 = arith.constant 0 : index
    %c0_0 = arith.constant 0 : index
    %c0_1 = arith.constant 0 : index
    %c0_2 = arith.constant 0 : index
    %0 = vector.load %arg2[%c0, %c0_0, %c0_1, %c0_2] : memref<1x4x8x128xbf16, #tpu.memory_space<vmem>>, vector<1x4x8x128xbf16>
    %1 = vector.shape_cast %0 : vector<1x4x8x128xbf16> to vector<4x8x128xbf16>
    %2 = arith.extf %1 : vector<4x8x128xbf16> to vector<4x8x128xf32>
    %c0_3 = arith.constant 0 : index
    %c3 = arith.constant 3 : index
    %c0_4 = arith.constant 0 : index
    %c0_5 = arith.constant 0 : index
    %3 = vector.load %arg3[%c0_3, %c3, %c0_4, %c0_5] : memref<1x4x8x128xbf16, #tpu.memory_space<vmem>>, vector<1x1x8x128xbf16>
    %4 = vector.shape_cast %3 : vector<1x1x8x128xbf16> to vector<1x8x128xbf16>
    %5 = arith.extf %4 : vector<1x8x128xbf16> to vector<1x8x128xf32>
    %c0_6 = arith.constant 0 : index
    %c0_7 = arith.constant 0 : index
    %c0_8 = arith.constant 0 : index
    %c0_9 = arith.constant 0 : index
    %6 = vector.load %arg4[%c0_6, %c0_7, %c0_8, %c0_9] : memref<1x4x8x128xbf16, #tpu.memory_space<vmem>>, vector<1x1x8x128xbf16>
    %7 = vector.shape_cast %6 : vector<1x1x8x128xbf16> to vector<1x8x128xbf16>
    %8 = arith.extf %7 : vector<1x8x128xbf16> to vector<1x8x128xf32>
    %c0_i32 = arith.constant 0 : i32
    %9 = arith.cmpi sgt, %arg1, %c0_i32 : i32
    %cst = arith.constant 1.000000e+00 : f32
    %cst_10 = arith.constant 0.000000e+00 : f32
    %10 = arith.select %9, %cst, %cst_10 : f32
    %11 = vector.broadcast %10 : f32 to vector<1x8x128xf32>
    %12 = arith.mulf %5, %11 : vector<1x8x128xf32>
    %c1_i32 = arith.constant 1 : i32
    %13 = arith.cmpi slt, %arg1, %c1_i32 : i32
    %cst_11 = arith.constant 1.000000e+00 : f32
    %cst_12 = arith.constant 0.000000e+00 : f32
    %14 = arith.select %13, %cst_11, %cst_12 : f32
    %15 = vector.broadcast %14 : f32 to vector<1x8x128xf32>
    %16 = arith.mulf %8, %15 : vector<1x8x128xf32>
    %17 = tpu.concatenate %12, %2, %16 in 0 : vector<1x8x128xf32>, vector<4x8x128xf32>, vector<1x8x128xf32> -> vector<6x8x128xf32>
    %cst_13 = arith.constant 0.000000e+00 : f32
    %18 = vector.broadcast %cst_13 : f32 to vector<6x8x128xf32>
    %c0_14 = arith.constant 0 : index
    %c0_15 = arith.constant 0 : index
    %c0_16 = arith.constant 0 : index
    %19 = vector.load %arg8[%c0_14, %c0_15, %c0_16] : memref<6x24x128xf32, #tpu.memory_space<vmem>>, vector<6x8x128xf32>
    tpu.vector_store %arg8[%c0_14, %c0_15, %c0_16], %18 {strides = array<i32>} : memref<6x24x128xf32, #tpu.memory_space<vmem>>, vector<6x8x128xf32>,
    %c0_17 = arith.constant 0 : index
    %c16 = arith.constant 16 : index
    %c0_18 = arith.constant 0 : index
    %20 = vector.load %arg8[%c0_17, %c16, %c0_18] : memref<6x24x128xf32, #tpu.memory_space<vmem>>, vector<6x8x128xf32>
    tpu.vector_store %arg8[%c0_17, %c16, %c0_18], %18 {strides = array<i32>} : memref<6x24x128xf32, #tpu.memory_space<vmem>>, vector<6x8x128xf32>,
    %c0_19 = arith.constant 0 : index
    %c8 = arith.constant 8 : index
    %c0_20 = arith.constant 0 : index
    %21 = vector.load %arg8[%c0_19, %c8, %c0_20] : memref<6x24x128xf32, #tpu.memory_space<vmem>>, vector<6x8x128xf32>
    tpu.vector_store %arg8[%c0_19, %c8, %c0_20], %17 {strides = array<i32>} : memref<6x24x128xf32, #tpu.memory_space<vmem>>, vector<6x8x128xf32>,
    %c0_21 = arith.constant 0 : index
    %c0_22 = arith.constant 0 : index
    %c0_23 = arith.constant 0 : index
    %22 = vector.load %arg8[%c0_21, %c0_22, %c0_23] : memref<6x24x128xf32, #tpu.memory_space<vmem>>, vector<6x24x128xf32>
    %23 = vector.extract_strided_slice %22 {offsets = [0, 7, 0], sizes = [6, 8, 128], strides = [1, 1, 1]} : vector<6x24x128xf32> to vector<6x8x128xf32>
    %24 = vector.extract_strided_slice %22 {offsets = [0, 8, 0], sizes = [6, 8, 128], strides = [1, 1, 1]} : vector<6x24x128xf32> to vector<6x8x128xf32>
    %25 = vector.extract_strided_slice %22 {offsets = [0, 9, 0], sizes = [6, 8, 128], strides = [1, 1, 1]} : vector<6x24x128xf32> to vector<6x8x128xf32>
    %c0_24 = arith.constant 0 : index
    %c0_25 = arith.constant 0 : index
    %26 = vector.load %arg6[%c0_24, %c0_25] : memref<1x128xf32, #tpu.memory_space<vmem>>, vector<1x128xf32>
    %27 = vector.shape_cast %26 : vector<1x128xf32> to vector<1x128xf32>
    %28 = vector.broadcast %27 : vector<1x128xf32> to vector<32x128xf32>
    %c0_26 = arith.constant 0 : index
    %c0_27 = arith.constant 0 : index
    %29 = vector.load %arg9[%c0_26, %c0_27] : memref<32x128xf32, #tpu.memory_space<vmem>>, vector<32x128xf32>
    tpu.vector_store %arg9[%c0_26, %c0_27], %28 {strides = array<i32>} : memref<32x128xf32, #tpu.memory_space<vmem>>, vector<32x128xf32>,
    %30 = vector.extract_strided_slice %23 {offsets = [0, 0, 0], sizes = [4, 8, 128], strides = [1, 1, 1]} : vector<6x8x128xf32> to vector<4x8x128xf32>
    %31 = vector.shape_cast %30 : vector<4x8x128xf32> to vector<32x128xf32>
    %c0_28 = arith.constant 0 : index
    %c0_29 = arith.constant 0 : index
    %32 = vector.load %arg9[%c0_28, %c0_29] : memref<32x128xf32, #tpu.memory_space<vmem>>, vector<32x128xf32>
    %33 = arith.truncf %31 : vector<32x128xf32> to vector<32x128xbf16>
    %c0_30 = arith.constant 0 : index
    %c0_31 = arith.constant 0 : index
    %c0_32 = arith.constant 0 : index
    %c0_33 = arith.constant 0 : index
    %34 = vector.load %arg5[%c0_30, %c0_31, %c0_32, %c0_33] : memref<3x3x128x128xbf16, #tpu.memory_space<vmem>>, vector<1x1x128x128xbf16>
    %35 = vector.shape_cast %34 : vector<1x1x128x128xbf16> to vector<128x128xbf16>
    %cst_34 = arith.constant dense<0.000000e+00> : vector<32x128xf32>
    %36 = tpu.matmul %33, %35, %cst_34 {dimension_numbers = #tpu.dot_dimension_numbers<[1], [0], [0], [1], [0, 0, 1, 1], [], []>} : vector<32x128xbf16>, vector<128x128xbf16>, vector<32x128xf32> -> vector<32x128xf32>
    %37 = arith.addf %32, %36 : vector<32x128xf32>
    %c0_35 = arith.constant 0 : index
    %c0_36 = arith.constant 0 : index
    %38 = vector.load %arg9[%c0_35, %c0_36] : memref<32x128xf32, #tpu.memory_space<vmem>>, vector<32x128xf32>
    tpu.vector_store %arg9[%c0_35, %c0_36], %37 {strides = array<i32>} : memref<32x128xf32, #tpu.memory_space<vmem>>, vector<32x128xf32>,
    %39 = vector.extract_strided_slice %24 {offsets = [0, 0, 0], sizes = [4, 8, 128], strides = [1, 1, 1]} : vector<6x8x128xf32> to vector<4x8x128xf32>
    %40 = vector.shape_cast %39 : vector<4x8x128xf32> to vector<32x128xf32>
    %c0_37 = arith.constant 0 : index
    %c0_38 = arith.constant 0 : index
    %41 = vector.load %arg9[%c0_37, %c0_38] : memref<32x128xf32, #tpu.memory_space<vmem>>, vector<32x128xf32>
    %42 = arith.truncf %40 : vector<32x128xf32> to vector<32x128xbf16>
    %c0_39 = arith.constant 0 : index
    %c1 = arith.constant 1 : index
    %c0_40 = arith.constant 0 : index
    %c0_41 = arith.constant 0 : index
    %43 = vector.load %arg5[%c0_39, %c1, %c0_40, %c0_41] : memref<3x3x128x128xbf16, #tpu.memory_space<vmem>>, vector<1x1x128x128xbf16>
    %44 = vector.shape_cast %43 : vector<1x1x128x128xbf16> to vector<128x128xbf16>
    %cst_42 = arith.constant dense<0.000000e+00> : vector<32x128xf32>
    %45 = tpu.matmul %42, %44, %cst_42 {dimension_numbers = #tpu.dot_dimension_numbers<[1], [0], [0], [1], [0, 0, 1, 1], [], []>} : vector<32x128xbf16>, vector<128x128xbf16>, vector<32x128xf32> -> vector<32x128xf32>
    %46 = arith.addf %41, %45 : vector<32x128xf32>
    %c0_43 = arith.constant 0 : index
    %c0_44 = arith.constant 0 : index
    %47 = vector.load %arg9[%c0_43, %c0_44] : memref<32x128xf32, #tpu.memory_space<vmem>>, vector<32x128xf32>
    tpu.vector_store %arg9[%c0_43, %c0_44], %46 {strides = array<i32>} : memref<32x128xf32, #tpu.memory_space<vmem>>, vector<32x128xf32>,
    %48 = vector.extract_strided_slice %25 {offsets = [0, 0, 0], sizes = [4, 8, 128], strides = [1, 1, 1]} : vector<6x8x128xf32> to vector<4x8x128xf32>
    %49 = vector.shape_cast %48 : vector<4x8x128xf32> to vector<32x128xf32>
    %c0_45 = arith.constant 0 : index
    %c0_46 = arith.constant 0 : index
    %50 = vector.load %arg9[%c0_45, %c0_46] : memref<32x128xf32, #tpu.memory_space<vmem>>, vector<32x128xf32>
    %51 = arith.truncf %49 : vector<32x128xf32> to vector<32x128xbf16>
    %c0_47 = arith.constant 0 : index
    %c2 = arith.constant 2 : index
    %c0_48 = arith.constant 0 : index
    %c0_49 = arith.constant 0 : index
    %52 = vector.load %arg5[%c0_47, %c2, %c0_48, %c0_49] : memref<3x3x128x128xbf16, #tpu.memory_space<vmem>>, vector<1x1x128x128xbf16>
    %53 = vector.shape_cast %52 : vector<1x1x128x128xbf16> to vector<128x128xbf16>
    %cst_50 = arith.constant dense<0.000000e+00> : vector<32x128xf32>
    %54 = tpu.matmul %51, %53, %cst_50 {dimension_numbers = #tpu.dot_dimension_numbers<[1], [0], [0], [1], [0, 0, 1, 1], [], []>} : vector<32x128xbf16>, vector<128x128xbf16>, vector<32x128xf32> -> vector<32x128xf32>
    %55 = arith.addf %50, %54 : vector<32x128xf32>
    %c0_51 = arith.constant 0 : index
    %c0_52 = arith.constant 0 : index
    %56 = vector.load %arg9[%c0_51, %c0_52] : memref<32x128xf32, #tpu.memory_space<vmem>>, vector<32x128xf32>
    tpu.vector_store %arg9[%c0_51, %c0_52], %55 {strides = array<i32>} : memref<32x128xf32, #tpu.memory_space<vmem>>, vector<32x128xf32>,
    %57 = vector.extract_strided_slice %23 {offsets = [1, 0, 0], sizes = [4, 8, 128], strides = [1, 1, 1]} : vector<6x8x128xf32> to vector<4x8x128xf32>
    %58 = vector.shape_cast %57 : vector<4x8x128xf32> to vector<32x128xf32>
    %c0_53 = arith.constant 0 : index
    %c0_54 = arith.constant 0 : index
    %59 = vector.load %arg9[%c0_53, %c0_54] : memref<32x128xf32, #tpu.memory_space<vmem>>, vector<32x128xf32>
    %60 = arith.truncf %58 : vector<32x128xf32> to vector<32x128xbf16>
    %c1_55 = arith.constant 1 : index
    %c0_56 = arith.constant 0 : index
    %c0_57 = arith.constant 0 : index
    %c0_58 = arith.constant 0 : index
    %61 = vector.load %arg5[%c1_55, %c0_56, %c0_57, %c0_58] : memref<3x3x128x128xbf16, #tpu.memory_space<vmem>>, vector<1x1x128x128xbf16>
    %62 = vector.shape_cast %61 : vector<1x1x128x128xbf16> to vector<128x128xbf16>
    %cst_59 = arith.constant dense<0.000000e+00> : vector<32x128xf32>
    %63 = tpu.matmul %60, %62, %cst_59 {dimension_numbers = #tpu.dot_dimension_numbers<[1], [0], [0], [1], [0, 0, 1, 1], [], []>} : vector<32x128xbf16>, vector<128x128xbf16>, vector<32x128xf32> -> vector<32x128xf32>
    %64 = arith.addf %59, %63 : vector<32x128xf32>
    %c0_60 = arith.constant 0 : index
    %c0_61 = arith.constant 0 : index
    %65 = vector.load %arg9[%c0_60, %c0_61] : memref<32x128xf32, #tpu.memory_space<vmem>>, vector<32x128xf32>
    tpu.vector_store %arg9[%c0_60, %c0_61], %64 {strides = array<i32>} : memref<32x128xf32, #tpu.memory_space<vmem>>, vector<32x128xf32>,
    %66 = vector.extract_strided_slice %24 {offsets = [1, 0, 0], sizes = [4, 8, 128], strides = [1, 1, 1]} : vector<6x8x128xf32> to vector<4x8x128xf32>
    %67 = vector.shape_cast %66 : vector<4x8x128xf32> to vector<32x128xf32>
    %c0_62 = arith.constant 0 : index
    %c0_63 = arith.constant 0 : index
    %68 = vector.load %arg9[%c0_62, %c0_63] : memref<32x128xf32, #tpu.memory_space<vmem>>, vector<32x128xf32>
    %69 = arith.truncf %67 : vector<32x128xf32> to vector<32x128xbf16>
    %c1_64 = arith.constant 1 : index
    %c1_65 = arith.constant 1 : index
    %c0_66 = arith.constant 0 : index
    %c0_67 = arith.constant 0 : index
    %70 = vector.load %arg5[%c1_64, %c1_65, %c0_66, %c0_67] : memref<3x3x128x128xbf16, #tpu.memory_space<vmem>>, vector<1x1x128x128xbf16>
    %71 = vector.shape_cast %70 : vector<1x1x128x128xbf16> to vector<128x128xbf16>
    %cst_68 = arith.constant dense<0.000000e+00> : vector<32x128xf32>
    %72 = tpu.matmul %69, %71, %cst_68 {dimension_numbers = #tpu.dot_dimension_numbers<[1], [0], [0], [1], [0, 0, 1, 1], [], []>} : vector<32x128xbf16>, vector<128x128xbf16>, vector<32x128xf32> -> vector<32x128xf32>
    %73 = arith.addf %68, %72 : vector<32x128xf32>
    %c0_69 = arith.constant 0 : index
    %c0_70 = arith.constant 0 : index
    %74 = vector.load %arg9[%c0_69, %c0_70] : memref<32x128xf32, #tpu.memory_space<vmem>>, vector<32x128xf32>
    tpu.vector_store %arg9[%c0_69, %c0_70], %73 {strides = array<i32>} : memref<32x128xf32, #tpu.memory_space<vmem>>, vector<32x128xf32>,
    %75 = vector.extract_strided_slice %25 {offsets = [1, 0, 0], sizes = [4, 8, 128], strides = [1, 1, 1]} : vector<6x8x128xf32> to vector<4x8x128xf32>
    %76 = vector.shape_cast %75 : vector<4x8x128xf32> to vector<32x128xf32>
    %c0_71 = arith.constant 0 : index
    %c0_72 = arith.constant 0 : index
    %77 = vector.load %arg9[%c0_71, %c0_72] : memref<32x128xf32, #tpu.memory_space<vmem>>, vector<32x128xf32>
    %78 = arith.truncf %76 : vector<32x128xf32> to vector<32x128xbf16>
    %c1_73 = arith.constant 1 : index
    %c2_74 = arith.constant 2 : index
    %c0_75 = arith.constant 0 : index
    %c0_76 = arith.constant 0 : index
    %79 = vector.load %arg5[%c1_73, %c2_74, %c0_75, %c0_76] : memref<3x3x128x128xbf16, #tpu.memory_space<vmem>>, vector<1x1x128x128xbf16>
    %80 = vector.shape_cast %79 : vector<1x1x128x128xbf16> to vector<128x128xbf16>
    %cst_77 = arith.constant dense<0.000000e+00> : vector<32x128xf32>
    %81 = tpu.matmul %78, %80, %cst_77 {dimension_numbers = #tpu.dot_dimension_numbers<[1], [0], [0], [1], [0, 0, 1, 1], [], []>} : vector<32x128xbf16>, vector<128x128xbf16>, vector<32x128xf32> -> vector<32x128xf32>
    %82 = arith.addf %77, %81 : vector<32x128xf32>
    %c0_78 = arith.constant 0 : index
    %c0_79 = arith.constant 0 : index
    %83 = vector.load %arg9[%c0_78, %c0_79] : memref<32x128xf32, #tpu.memory_space<vmem>>, vector<32x128xf32>
    tpu.vector_store %arg9[%c0_78, %c0_79], %82 {strides = array<i32>} : memref<32x128xf32, #tpu.memory_space<vmem>>, vector<32x128xf32>,
    %84 = vector.extract_strided_slice %23 {offsets = [2, 0, 0], sizes = [4, 8, 128], strides = [1, 1, 1]} : vector<6x8x128xf32> to vector<4x8x128xf32>
    %85 = vector.shape_cast %84 : vector<4x8x128xf32> to vector<32x128xf32>
    %c0_80 = arith.constant 0 : index
    %c0_81 = arith.constant 0 : index
    %86 = vector.load %arg9[%c0_80, %c0_81] : memref<32x128xf32, #tpu.memory_space<vmem>>, vector<32x128xf32>
    %87 = arith.truncf %85 : vector<32x128xf32> to vector<32x128xbf16>
    %c2_82 = arith.constant 2 : index
    %c0_83 = arith.constant 0 : index
    %c0_84 = arith.constant 0 : index
    %c0_85 = arith.constant 0 : index
    %88 = vector.load %arg5[%c2_82, %c0_83, %c0_84, %c0_85] : memref<3x3x128x128xbf16, #tpu.memory_space<vmem>>, vector<1x1x128x128xbf16>
    %89 = vector.shape_cast %88 : vector<1x1x128x128xbf16> to vector<128x128xbf16>
    %cst_86 = arith.constant dense<0.000000e+00> : vector<32x128xf32>
    %90 = tpu.matmul %87, %89, %cst_86 {dimension_numbers = #tpu.dot_dimension_numbers<[1], [0], [0], [1], [0, 0, 1, 1], [], []>} : vector<32x128xbf16>, vector<128x128xbf16>, vector<32x128xf32> -> vector<32x128xf32>
    %91 = arith.addf %86, %90 : vector<32x128xf32>
    %c0_87 = arith.constant 0 : index
    %c0_88 = arith.constant 0 : index
    %92 = vector.load %arg9[%c0_87, %c0_88] : memref<32x128xf32, #tpu.memory_space<vmem>>, vector<32x128xf32>
    tpu.vector_store %arg9[%c0_87, %c0_88], %91 {strides = array<i32>} : memref<32x128xf32, #tpu.memory_space<vmem>>, vector<32x128xf32>,
    %93 = vector.extract_strided_slice %24 {offsets = [2, 0, 0], sizes = [4, 8, 128], strides = [1, 1, 1]} : vector<6x8x128xf32> to vector<4x8x128xf32>
    %94 = vector.shape_cast %93 : vector<4x8x128xf32> to vector<32x128xf32>
    %c0_89 = arith.constant 0 : index
    %c0_90 = arith.constant 0 : index
    %95 = vector.load %arg9[%c0_89, %c0_90] : memref<32x128xf32, #tpu.memory_space<vmem>>, vector<32x128xf32>
    %96 = arith.truncf %94 : vector<32x128xf32> to vector<32x128xbf16>
    %c2_91 = arith.constant 2 : index
    %c1_92 = arith.constant 1 : index
    %c0_93 = arith.constant 0 : index
    %c0_94 = arith.constant 0 : index
    %97 = vector.load %arg5[%c2_91, %c1_92, %c0_93, %c0_94] : memref<3x3x128x128xbf16, #tpu.memory_space<vmem>>, vector<1x1x128x128xbf16>
    %98 = vector.shape_cast %97 : vector<1x1x128x128xbf16> to vector<128x128xbf16>
    %cst_95 = arith.constant dense<0.000000e+00> : vector<32x128xf32>
    %99 = tpu.matmul %96, %98, %cst_95 {dimension_numbers = #tpu.dot_dimension_numbers<[1], [0], [0], [1], [0, 0, 1, 1], [], []>} : vector<32x128xbf16>, vector<128x128xbf16>, vector<32x128xf32> -> vector<32x128xf32>
    %100 = arith.addf %95, %99 : vector<32x128xf32>
    %c0_96 = arith.constant 0 : index
    %c0_97 = arith.constant 0 : index
    %101 = vector.load %arg9[%c0_96, %c0_97] : memref<32x128xf32, #tpu.memory_space<vmem>>, vector<32x128xf32>
    tpu.vector_store %arg9[%c0_96, %c0_97], %100 {strides = array<i32>} : memref<32x128xf32, #tpu.memory_space<vmem>>, vector<32x128xf32>,
    %102 = vector.extract_strided_slice %25 {offsets = [2, 0, 0], sizes = [4, 8, 128], strides = [1, 1, 1]} : vector<6x8x128xf32> to vector<4x8x128xf32>
    %103 = vector.shape_cast %102 : vector<4x8x128xf32> to vector<32x128xf32>
    %c0_98 = arith.constant 0 : index
    %c0_99 = arith.constant 0 : index
    %104 = vector.load %arg9[%c0_98, %c0_99] : memref<32x128xf32, #tpu.memory_space<vmem>>, vector<32x128xf32>
    %105 = arith.truncf %103 : vector<32x128xf32> to vector<32x128xbf16>
    %c2_100 = arith.constant 2 : index
    %c2_101 = arith.constant 2 : index
    %c0_102 = arith.constant 0 : index
    %c0_103 = arith.constant 0 : index
    %106 = vector.load %arg5[%c2_100, %c2_101, %c0_102, %c0_103] : memref<3x3x128x128xbf16, #tpu.memory_space<vmem>>, vector<1x1x128x128xbf16>
    %107 = vector.shape_cast %106 : vector<1x1x128x128xbf16> to vector<128x128xbf16>
    %cst_104 = arith.constant dense<0.000000e+00> : vector<32x128xf32>
    %108 = tpu.matmul %105, %107, %cst_104 {dimension_numbers = #tpu.dot_dimension_numbers<[1], [0], [0], [1], [0, 0, 1, 1], [], []>} : vector<32x128xbf16>, vector<128x128xbf16>, vector<32x128xf32> -> vector<32x128xf32>
    %109 = arith.addf %104, %108 : vector<32x128xf32>
    %c0_105 = arith.constant 0 : index
    %c0_106 = arith.constant 0 : index
    %110 = vector.load %arg9[%c0_105, %c0_106] : memref<32x128xf32, #tpu.memory_space<vmem>>, vector<32x128xf32>
    tpu.vector_store %arg9[%c0_105, %c0_106], %109 {strides = array<i32>} : memref<32x128xf32, #tpu.memory_space<vmem>>, vector<32x128xf32>,
    %c0_107 = arith.constant 0 : index
    %c0_108 = arith.constant 0 : index
    %111 = vector.load %arg9[%c0_107, %c0_108] : memref<32x128xf32, #tpu.memory_space<vmem>>, vector<32x128xf32>
    %cst_109 = arith.constant 0.000000e+00 : f32
    %112 = vector.broadcast %cst_109 : f32 to vector<32x128xf32>
    %113 = arith.maximumf %111, %112 : vector<32x128xf32>
    %114 = vector.shape_cast %113 : vector<32x128xf32> to vector<4x8x128xf32>
    %c0_110 = arith.constant 0 : index
    %c0_111 = arith.constant 0 : index
    %c0_112 = arith.constant 0 : index
    %c0_113 = arith.constant 0 : index
    %115 = vector.load %arg7[%c0_110, %c0_111, %c0_112, %c0_113] : memref<1x4x8x128xf32, #tpu.memory_space<vmem>>, vector<1x4x8x128xf32>
    %116 = vector.shape_cast %115 : vector<1x4x8x128xf32> to vector<4x8x128xf32>
    %117 = vector.shape_cast %114 : vector<4x8x128xf32> to vector<1x4x8x128xf32>
    tpu.vector_store %arg7[%c0_110, %c0_111, %c0_112, %c0_113], %117 {strides = array<i32>} : memref<1x4x8x128xf32, #tpu.memory_space<vmem>>, vector<1x4x8x128xf32>,
    return
  }
  func.func @transform_0(%arg0: i32, %arg1: i32) -> (i32, i32, i32, i32) {
    %c0_i32 = arith.constant 0 : i32
    %0 = arith.addi %arg1, %c0_i32 : i32
    %c0_i32_0 = arith.constant 0 : i32
    %1 = arith.maxsi %0, %c0_i32_0 : i32
    %c1_i32 = arith.constant 1 : i32
    %2 = arith.minsi %1, %c1_i32 : i32
    %c0_i32_1 = arith.constant 0 : i32
    %c0_i32_2 = arith.constant 0 : i32
    %c0_i32_3 = arith.constant 0 : i32
    return %arg0, %2, %c0_i32_1, %c0_i32_2 : i32, i32, i32, i32
  }
  func.func @transform_1(%arg0: i32, %arg1: i32) -> (i32, i32, i32, i32) {
    %c-1_i32 = arith.constant -1 : i32
    %0 = arith.addi %arg1, %c-1_i32 : i32
    %c0_i32 = arith.constant 0 : i32
    %1 = arith.maxsi %0, %c0_i32 : i32
    %c1_i32 = arith.constant 1 : i32
    %2 = arith.minsi %1, %c1_i32 : i32
    %c0_i32_0 = arith.constant 0 : i32
    %c0_i32_1 = arith.constant 0 : i32
    %c0_i32_2 = arith.constant 0 : i32
    return %arg0, %2, %c0_i32_0, %c0_i32_1 : i32, i32, i32, i32
  }
  func.func @transform_2(%arg0: i32, %arg1: i32) -> (i32, i32, i32, i32) {
    %c1_i32 = arith.constant 1 : i32
    %0 = arith.addi %arg1, %c1_i32 : i32
    %c0_i32 = arith.constant 0 : i32
    %1 = arith.maxsi %0, %c0_i32 : i32
    %c1_i32_0 = arith.constant 1 : i32
    %2 = arith.minsi %1, %c1_i32_0 : i32
    %c0_i32_1 = arith.constant 0 : i32
    %c0_i32_2 = arith.constant 0 : i32
    %c0_i32_3 = arith.constant 0 : i32
    return %arg0, %2, %c0_i32_1, %c0_i32_2 : i32, i32, i32, i32
  }
  func.func @transform_3(%arg0: i32, %arg1: i32) -> (i32, i32, i32, i32) {
    %c0_i32 = arith.constant 0 : i32
    %c0_i32_0 = arith.constant 0 : i32
    %c0_i32_1 = arith.constant 0 : i32
    %c0_i32_2 = arith.constant 0 : i32
    %c0_i32_3 = arith.constant 0 : i32
    return %c0_i32, %c0_i32_0, %c0_i32_1, %c0_i32_2 : i32, i32, i32, i32
  }
  func.func @transform_4(%arg0: i32, %arg1: i32) -> (i32, i32) {
    %c0_i32 = arith.constant 0 : i32
    %c0_i32_0 = arith.constant 0 : i32
    %c0_i32_1 = arith.constant 0 : i32
    return %c0_i32, %c0_i32_0 : i32, i32
  }
  func.func @transform_5(%arg0: i32, %arg1: i32) -> (i32, i32, i32, i32) {
    %c0_i32 = arith.constant 0 : i32
    %c0_i32_0 = arith.constant 0 : i32
    %c0_i32_1 = arith.constant 0 : i32
    return %arg0, %arg1, %c0_i32, %c0_i32_0 : i32, i32, i32, i32
  }
}

</mosaic_0001>

<llo_original>
// kernel: vgg_feature_extractor.6
$region0: #{vgg_feature_extractor.6}
  #allocation0 [shape = 'u32[]', space=smem, size = 0x4, offset = 0x4, fixed_abs, tag = 'smem constant byte address 0x4 - core index']
  #allocation1 [shape = 'u32[144,128]{1,0:T(1,128)}', space=vmem, size = 0x12000, scoped, tag = 'internal scratch']
  #allocation2 [shape = 'f32[6,24,64]{2,1,0:T(8,128)}', space=vmem, size = 0x12000, scoped, tag = 'scratch operand']
  #allocation3 [shape = 'f32[32,128]{1,0:T(8,128)}', space=vmem, size = 0x4000, scoped, tag = 'scratch operand']
  %s0 = inlined_call_operand.vmem [shape: bf16[2,8,8,64], index: 0, kind: input, shape index: {}, may-alias: {0,1,2}]
  %s1 = inlined_call_operand.vmem [shape: bf16[2,8,8,64], index: 1, kind: input, shape index: {}, may-alias: {0,1,2}]
  %s2 = inlined_call_operand.vmem [shape: bf16[2,8,8,64], index: 2, kind: input, shape index: {}, may-alias: {0,1,2}]
  %s3 = inlined_call_operand.vmem [shape: bf16[3,3,64,128], index: 3, kind: input, shape index: {}]
  %s4 = inlined_call_operand.vmem [shape: f32[1,128], index: 4, kind: input, shape index: {}]
  %s5 = inlined_call_operand.vmem [shape: bf16[2,8,8,128], index: 5, kind: output, shape index: {}]
  %s6 = sld [smem:[#allocation0]]
  $region53: #{vgg_feature_extractor.6} parent=0
    _
  %s8 = ssub.s32 1, %s6
  %s9 = scalar_select 0, %s8, %s6
  loop: start=0, step=1, limit=6
  $region2: #{vgg_feature_extractor.6} parent=0 // loop_pre_header
    _
  $region3: #{vgg_feature_extractor.6} parent=0 // loop_header
    %s11 = sphi 0, %s15
    %p12 = scmp.ge.s32.totalorder %s11, 6
    %s18 = sphi 0, %s30
    %s19 = sphi 0, %s26
    %s20 = sphi 0, %s18
    %s21 = sphi 0, %s19
    %s22 = sphi 0, %s20
    %s23 = sphi 0, %s21
    %s43 = sphi 0, %s45
    %s46 = sphi 0, %s43
    %s47 = sphi 0, %s46
    %s63 = sphi 0, %s47
    %s81 = sphi 0, %s83
    %s84 = sphi 0, %s81
    %s85 = sphi 0, %s84
    %s101 = sphi 0, %s85
    %s119 = sphi 0, %s121
    %s122 = sphi 0, %s119
    %s123 = sphi 0, %s122
    %s139 = sphi 0, %s123
    %s143 = sphi 0, %s143
    %s145 = sphi 0, %s143
    %s146 = sphi 0, %s145
    %s160 = sphi 0, %s146
    %s164 = sphi 0, %s164
    %s166 = sphi 0, %s164
    %s167 = sphi 0, %s166
    %s181 = sphi 0, %s167
    %s189 = sphi 0, %s191
    %s192 = sphi 0, %s189
    %s193 = sphi 0, %s192
    %s209 = sphi 0, %s193
  $region4: #{vgg_feature_extractor.6} parent=0 // loop_header_branch
    %14 = sbr.rel (%p12) target = $region8
  $region5: #{vgg_feature_extractor.6} parent=0 // loop_body
    %s16 = ssub.s32 %s11, 1
    %s17 = ssub.s32 %s11, 2
    %s24 = sadd.s32 1, %s19
    %p25 = scmp.ge.s32.totalorder %s24, 2
    %s26 = scalar_select %p25, 0, %s24
    %s27 = sadd.s32 1, %s18
    %s28 = scalar_select %p25, %s27, %s18
    %p29 = scmp.ge.s32.totalorder %s28, 2
    %s30 = scalar_select %p29, 0, %s28
    %p31 = scmp.gt.s32.totalorder %s19, 0
    %s32 = scalar_select %p31, %s19, 0
    %p33 = scmp.lt.s32.totalorder %s32, 1
    %s34 = scalar_select %p33, %s32, 1
    %p35 = scmp.gt.s32.totalorder %s26, 0
    %s36 = scalar_select %p35, %s26, 0
    %p37 = scmp.lt.s32.totalorder %s36, 1
    %s38 = scalar_select %p37, %s36, 1
    %s39 = ssub.s32 %s18, %s30
    %s40 = ssub.s32 %s34, %s38
    %s41 = sor.u32 %s39, %s40
    %p42 = scmp.eq.s32.totalorder %s41, 0
    %s44 = sadd.s32 %s43, 1
    %s45 = scalar_select %p42, %s43, %s44
    %p48 = pneg %p42
    %p49 = scmp.eq.s32.totalorder %s11, 3
    %p50 = por %p48, %p49
    %p51 = scmp.ne.s32.totalorder %s43, %s46
    %p52 = scmp.eq.s32.totalorder %s11, 0
    %p53 = por %p51, %p52
    %p54 = scmp.ne.s32.totalorder %s43, %s46
    %p55 = scmp.eq.s32.totalorder %s16, 3
    %p56 = por %p54, %p55
    %p57 = scmp.ne.s32.totalorder %s46, %s47
    %p58 = scmp.eq.s32.totalorder %s16, 0
    %p59 = por %p57, %p58
    %p60 = scmp.ne.s32.totalorder %s46, %s47
    %p61 = scmp.eq.s32.totalorder %s17, 3
    %p62 = por %p60, %p61
    %p64 = scmp.ne.s32.totalorder %s47, %s63
    %p65 = scmp.eq.s32.totalorder %s17, 0
    %p66 = por %p64, %p65
    %s67 = sadd.s32 %s19, 4294967295
    %p68 = scmp.gt.s32.totalorder %s67, 0
    %s69 = scalar_select %p68, %s67, 0
    %p70 = scmp.lt.s32.totalorder %s69, 1
    %s71 = scalar_select %p70, %s69, 1
    %s72 = sadd.s32 %s26, 4294967295
    %p73 = scmp.gt.s32.totalorder %s72, 0
    %s74 = scalar_select %p73, %s72, 0
    %p75 = scmp.lt.s32.totalorder %s74, 1
    %s76 = scalar_select %p75, %s74, 1
    %s77 = ssub.s32 %s18, %s30
    %s78 = ssub.s32 %s71, %s76
    %s79 = sor.u32 %s77, %s78
    %p80 = scmp.eq.s32.totalorder %s79, 0
    %s82 = sadd.s32 %s81, 1
    %s83 = scalar_select %p80, %s81, %s82
    %p86 = pneg %p80
    %p87 = scmp.eq.s32.totalorder %s11, 3
    %p88 = por %p86, %p87
    %p89 = scmp.ne.s32.totalorder %s81, %s84
    %p90 = scmp.eq.s32.totalorder %s11, 0
    %p91 = por %p89, %p90
    %p92 = scmp.ne.s32.totalorder %s81, %s84
    %p93 = scmp.eq.s32.totalorder %s16, 3
    %p94 = por %p92, %p93
    %p95 = scmp.ne.s32.totalorder %s84, %s85
    %p96 = scmp.eq.s32.totalorder %s16, 0
    %p97 = por %p95, %p96
    %p98 = scmp.ne.s32.totalorder %s84, %s85
    %p99 = scmp.eq.s32.totalorder %s17, 3
    %p100 = por %p98, %p99
    %p102 = scmp.ne.s32.totalorder %s85, %s101
    %p103 = scmp.eq.s32.totalorder %s17, 0
    %p104 = por %p102, %p103
    %s105 = sadd.s32 %s19, 1
    %p106 = scmp.gt.s32.totalorder %s105, 0
    %s107 = scalar_select %p106, %s105, 0
    %p108 = scmp.lt.s32.totalorder %s107, 1
    %s109 = scalar_select %p108, %s107, 1
    %s110 = sadd.s32 %s26, 1
    %p111 = scmp.gt.s32.totalorder %s110, 0
    %s112 = scalar_select %p111, %s110, 0
    %p113 = scmp.lt.s32.totalorder %s112, 1
    %s114 = scalar_select %p113, %s112, 1
    %s115 = ssub.s32 %s18, %s30
    %s116 = ssub.s32 %s109, %s114
    %s117 = sor.u32 %s115, %s116
    %p118 = scmp.eq.s32.totalorder %s117, 0
    %s120 = sadd.s32 %s119, 1
    %s121 = scalar_select %p118, %s119, %s120
    %p124 = pneg %p118
    %p125 = scmp.eq.s32.totalorder %s11, 3
    %p126 = por %p124, %p125
    %p127 = scmp.ne.s32.totalorder %s119, %s122
    %p128 = scmp.eq.s32.totalorder %s11, 0
    %p129 = por %p127, %p128
    %p130 = scmp.ne.s32.totalorder %s119, %s122
    %p131 = scmp.eq.s32.totalorder %s16, 3
    %p132 = por %p130, %p131
    %p133 = scmp.ne.s32.totalorder %s122, %s123
    %p134 = scmp.eq.s32.totalorder %s16, 0
    %p135 = por %p133, %p134
    %p136 = scmp.ne.s32.totalorder %s122, %s123
    %p137 = scmp.eq.s32.totalorder %s17, 3
    %p138 = por %p136, %p137
    %p140 = scmp.ne.s32.totalorder %s123, %s139
    %p141 = scmp.eq.s32.totalorder %s17, 0
    %p142 = por %p140, %p141
    %s144 = sadd.s32 %s143, 1
    %p147 = scmp.eq.s32.totalorder %s11, 3
    %p148 = scmp.ne.s32.totalorder %s143, %s145
    %p149 = scmp.eq.s32.totalorder %s11, 0
    %p150 = por %p148, %p149
    %p151 = scmp.ne.s32.totalorder %s143, %s145
    %p152 = scmp.eq.s32.totalorder %s16, 3
    %p153 = por %p151, %p152
    %p154 = scmp.ne.s32.totalorder %s145, %s146
    %p155 = scmp.eq.s32.totalorder %s16, 0
    %p156 = por %p154, %p155
    %p157 = scmp.ne.s32.totalorder %s145, %s146
    %p158 = scmp.eq.s32.totalorder %s17, 3
    %p159 = por %p157, %p158
    %p161 = scmp.ne.s32.totalorder %s146, %s160
    %p162 = scmp.eq.s32.totalorder %s17, 0
    %p163 = por %p161, %p162
    %s165 = sadd.s32 %s164, 1
    %p168 = scmp.eq.s32.totalorder %s11, 3
    %p169 = scmp.ne.s32.totalorder %s164, %s166
    %p170 = scmp.eq.s32.totalorder %s11, 0
    %p171 = por %p169, %p170
    %p172 = scmp.ne.s32.totalorder %s164, %s166
    %p173 = scmp.eq.s32.totalorder %s16, 3
    %p174 = por %p172, %p173
    %p175 = scmp.ne.s32.totalorder %s166, %s167
    %p176 = scmp.eq.s32.totalorder %s16, 0
    %p177 = por %p175, %p176
    %p178 = scmp.ne.s32.totalorder %s166, %s167
    %p179 = scmp.eq.s32.totalorder %s17, 3
    %p180 = por %p178, %p179
    %p182 = scmp.ne.s32.totalorder %s167, %s181
    %p183 = scmp.eq.s32.totalorder %s17, 0
    %p184 = por %p182, %p183
    %s185 = ssub.s32 %s18, %s30
    %s186 = ssub.s32 %s19, %s26
    %s187 = sor.u32 %s185, %s186
    %p188 = scmp.eq.s32.totalorder %s187, 0
    %s190 = sadd.s32 %s189, 1
    %s191 = scalar_select %p188, %s189, %s190
    %p194 = pneg %p188
    %p195 = scmp.eq.s32.totalorder %s11, 3
    %p196 = por %p194, %p195
    %p197 = scmp.ne.s32.totalorder %s189, %s192
    %p198 = scmp.eq.s32.totalorder %s11, 0
    %p199 = por %p197, %p198
    %p200 = scmp.ne.s32.totalorder %s189, %s192
    %p201 = scmp.eq.s32.totalorder %s16, 3
    %p202 = por %p200, %p201
    %p203 = scmp.ne.s32.totalorder %s192, %s193
    %p204 = scmp.eq.s32.totalorder %s16, 0
    %p205 = por %p203, %p204
    %p206 = scmp.ne.s32.totalorder %s192, %s193
    %p207 = scmp.eq.s32.totalorder %s17, 3
    %p208 = por %p206, %p207
    %p210 = scmp.ne.s32.totalorder %s193, %s209
    %p211 = scmp.eq.s32.totalorder %s17, 0
    %p212 = por %p210, %p211
    %p213 = scmp.le.s32.totalorder 1, %s11
    %p214 = scmp.lt.s32.totalorder %s11, 5
    %p215 = pnand %p213, %p214
    %p216 = pneg %p215
    // Predicated region
    $region9: #{vgg_feature_extractor.6} parent=5 // pred_check
      _
    $region10: #{vgg_feature_extractor.6} parent=5 // pred_check_branch
      %218 = sbr.rel (%p215) target = $region12
    $region11: #{vgg_feature_extractor.6} parent=5 // pred_region
      %s219 = ssub.s32 %s11, 1
      // Predicated region
      $region13: #{vgg_feature_extractor.6} parent=11 // pred_check
        %p220 = pneg %p156
      $region14: #{vgg_feature_extractor.6} parent=11 // pred_check_branch
        %222 = sbr.rel (%p220) target = $region16
      $region15: #{vgg_feature_extractor.6} parent=11 // pred_region
        _
      $region16: #{vgg_feature_extractor.6} parent=11 // pred_fallthru
        _
      // Predicated region
      $region17: #{vgg_feature_extractor.6} parent=11 // pred_check
        %p223 = pneg %p177
      $region18: #{vgg_feature_extractor.6} parent=11 // pred_check_branch
        %225 = sbr.rel (%p223) target = $region20
      $region19: #{vgg_feature_extractor.6} parent=11 // pred_region
        _
      $region20: #{vgg_feature_extractor.6} parent=11 // pred_fallthru
        _
    $region12: #{vgg_feature_extractor.6} parent=5 // pred_fallthru
      _
    %p226 = scmp.lt.s32.totalorder %s11, 4
    // Predicated region
    $region21: #{vgg_feature_extractor.6} parent=5 // pred_check
      %p227 = pneg %p226
    $region22: #{vgg_feature_extractor.6} parent=5 // pred_check_branch
      %229 = sbr.rel (%p227) target = $region24
    $region23: #{vgg_feature_extractor.6} parent=5 // pred_region
      // Predicated region
      $region25: #{vgg_feature_extractor.6} parent=23 // pred_check
        %p230 = pneg %p53
      $region26: #{vgg_feature_extractor.6} parent=23 // pred_check_branch
        %232 = sbr.rel (%p230) target = $region28
      $region27: #{vgg_feature_extractor.6} parent=23 // pred_region
        %p233 = scmp.gt.s32.totalorder %s19, 0
        %s234 = scalar_select %p233, %s19, 0
        %p235 = scmp.lt.s32.totalorder %s234, 1
        %s236 = scalar_select %p235, %s234, 1
        %s237 = smul.u32 4, %s236
        %p238 = scmp.lt.s32.totalorder %s18, 1
        %s239 = scalar_select %p238, %s18, 1
        %p240 = scmp.lt.s32.totalorder %s237, 7
        %s241 = scalar_select %p240, %s237, 7
        %s242 = smul.addr %s239, 8
        %s243 = sadd.s32 %s241, %s242
        %s244 = smul.addr %s243, 4
        %s245 = scalar_lea.vmem %s0, %s244
        %p246 = scmp.gt.s32.totalorder %s19, 0
        %s247 = scalar_select %p246, %s19, 0
        %p248 = scmp.lt.s32.totalorder %s247, 1
        %s249 = scalar_select %p248, %s247, 1
        %s250 = smul.u32 4, %s249
      $region28: #{vgg_feature_extractor.6} parent=23 // pred_fallthru
        _
      // Predicated region
      $region29: #{vgg_feature_extractor.6} parent=23 // pred_check
        %p251 = pneg %p91
      $region30: #{vgg_feature_extractor.6} parent=23 // pred_check_branch
        %253 = sbr.rel (%p251) target = $region32
      $region31: #{vgg_feature_extractor.6} parent=23 // pred_region
        %s254 = sadd.s32 %s19, 4294967295
        %p255 = scmp.gt.s32.totalorder %s254, 0
        %s256 = scalar_select %p255, %s254, 0
        %p257 = scmp.lt.s32.totalorder %s256, 1
        %s258 = scalar_select %p257, %s256, 1
        %s259 = smul.u32 4, %s258
        %p260 = scmp.lt.s32.totalorder %s18, 1
        %s261 = scalar_select %p260, %s18, 1
        %p262 = scmp.lt.s32.totalorder %s259, 7
        %s263 = scalar_select %p262, %s259, 7
        %s264 = smul.addr %s261, 8
        %s265 = sadd.s32 %s263, %s264
        %s266 = smul.addr %s265, 4
        %s267 = scalar_lea.vmem %s1, %s266
        %s268 = sadd.s32 %s19, 4294967295
        %p269 = scmp.gt.s32.totalorder %s268, 0
        %s270 = scalar_select %p269, %s268, 0
        %p271 = scmp.lt.s32.totalorder %s270, 1
        %s272 = scalar_select %p271, %s270, 1
        %s273 = smul.u32 4, %s272
      $region32: #{vgg_feature_extractor.6} parent=23 // pred_fallthru
        _
      // Predicated region
      $region33: #{vgg_feature_extractor.6} parent=23 // pred_check
        %p274 = pneg %p129
      $region34: #{vgg_feature_extractor.6} parent=23 // pred_check_branch
        %276 = sbr.rel (%p274) target = $region36
      $region35: #{vgg_feature_extractor.6} parent=23 // pred_region
        %s277 = sadd.s32 %s19, 1
        %p278 = scmp.gt.s32.totalorder %s277, 0
        %s279 = scalar_select %p278, %s277, 0
        %p280 = scmp.lt.s32.totalorder %s279, 1
        %s281 = scalar_select %p280, %s279, 1
        %s282 = smul.u32 4, %s281
        %p283 = scmp.lt.s32.totalorder %s18, 1
        %s284 = scalar_select %p283, %s18, 1
        %p285 = scmp.lt.s32.totalorder %s282, 7
        %s286 = scalar_select %p285, %s282, 7
        %s287 = smul.addr %s284, 8
        %s288 = sadd.s32 %s286, %s287
        %s289 = smul.addr %s288, 4
        %s290 = scalar_lea.vmem %s2, %s289
        %s291 = sadd.s32 %s19, 1
        %p292 = scmp.gt.s32.totalorder %s291, 0
        %s293 = scalar_select %p292, %s291, 0
        %p294 = scmp.lt.s32.totalorder %s293, 1
        %s295 = scalar_select %p294, %s293, 1
        %s296 = smul.u32 4, %s295
      $region36: #{vgg_feature_extractor.6} parent=23 // pred_fallthru
        _
    $region24: #{vgg_feature_extractor.6} parent=5 // pred_fallthru
      _
    %p297 = scmp.le.s32.totalorder 1, %s11
    %p298 = scmp.lt.s32.totalorder %s11, 5
    %p299 = pnand %p297, %p298
    %p300 = pneg %p299
    // Predicated region
    $region37: #{vgg_feature_extractor.6} parent=5 // pred_check
      _
    $region38: #{vgg_feature_extractor.6} parent=5 // pred_check_branch
      %302 = sbr.rel (%p299) target = $region40
    $region39: #{vgg_feature_extractor.6} parent=5 // pred_region
      %s303 = ssub.s32 %s11, 1
      %p304 = scmp.gt.s32.totalorder %s21, 0
      %s305 = scalar_select %p304, %s21, 0
      %p306 = scmp.lt.s32.totalorder %s305, 1
      %s307 = scalar_select %p306, %s305, 1
      %s308 = smul.u32 4, %s307
      %p309 = scmp.lt.s32.totalorder %s20, 1
      %s310 = scalar_select %p309, %s20, 1
      %p311 = scmp.lt.s32.totalorder %s308, 7
      %s312 = scalar_select %p311, %s308, 7
      %s313 = smul.addr %s310, 8
      %s314 = sadd.s32 %s312, %s313
      %s315 = smul.addr %s314, 4
      %s316 = scalar_lea.vmem %s0, %s315
      %p317 = pneg %p59
      %p318 = pneg %p56
      %s319 = sadd.s32 %s21, 4294967295
      %p320 = scmp.gt.s32.totalorder %s319, 0
      %s321 = scalar_select %p320, %s319, 0
      %p322 = scmp.lt.s32.totalorder %s321, 1
      %s323 = scalar_select %p322, %s321, 1
      %s324 = smul.u32 4, %s323
      %p325 = scmp.lt.s32.totalorder %s20, 1
      %s326 = scalar_select %p325, %s20, 1
      %p327 = scmp.lt.s32.totalorder %s324, 7
      %s328 = scalar_select %p327, %s324, 7
      %s329 = smul.addr %s326, 8
      %s330 = sadd.s32 %s328, %s329
      %s331 = smul.addr %s330, 4
      %s332 = scalar_lea.vmem %s1, %s331
      %p333 = pneg %p97
      %p334 = pneg %p94
      %s335 = sadd.s32 %s21, 1
      %p336 = scmp.gt.s32.totalorder %s335, 0
      %s337 = scalar_select %p336, %s335, 0
      %p338 = scmp.lt.s32.totalorder %s337, 1
      %s339 = scalar_select %p338, %s337, 1
      %s340 = smul.u32 4, %s339
      %p341 = scmp.lt.s32.totalorder %s20, 1
      %s342 = scalar_select %p341, %s20, 1
      %p343 = scmp.lt.s32.totalorder %s340, 7
      %s344 = scalar_select %p343, %s340, 7
      %s345 = smul.addr %s342, 8
      %s346 = sadd.s32 %s344, %s345
      %s347 = smul.addr %s346, 4
      %s348 = scalar_lea.vmem %s2, %s347
      %p349 = pneg %p135
      %p350 = pneg %p132
      %p351 = pneg %p156
      %p352 = pneg %p153
      %p353 = pneg %p177
      %p354 = pneg %p174
      %p355 = pneg %p205
      %p356 = pneg %p202
      %s357 = smul.u32 4, %s21
      %p358 = scmp.lt.s32.totalorder %s20, 1
      %s359 = scalar_select %p358, %s20, 1
      %p360 = scmp.lt.s32.totalorder %s357, 7
      %s361 = scalar_select %p360, %s357, 7
      %s362 = smul.addr %s359, 8
      %s363 = sadd.s32 %s361, %s362
      %s364 = smul.addr %s363, 4
      %s365 = scalar_lea.vmem %s5, %s364
      %p366 = scmp.gt.s32.totalorder %s21, 0
      %s367 = scalar_select %p366, %s21, 0
      %p368 = scmp.lt.s32.totalorder %s367, 1
      %s369 = scalar_select %p368, %s367, 1
      %s370 = smul.u32 4, %s369
      %p371 = scmp.lt.s32.totalorder %s20, 1
      %s372 = scalar_select %p371, %s20, 1
      %p373 = scmp.lt.s32.totalorder %s370, 7
      %s374 = scalar_select %p373, %s370, 7
      %s375 = smul.addr %s372, 8
      %s376 = sadd.s32 %s374, %s375
      %s377 = smul.addr %s376, 4
      %s378 = scalar_lea.vmem %s0, %s377
      %p379 = scmp.gt.s32.totalorder %s21, 0
      %s380 = scalar_select %p379, %s21, 0
      %p381 = scmp.lt.s32.totalorder %s380, 1
      %s382 = scalar_select %p381, %s380, 1
      %s383 = smul.u32 4, %s382
      %s384 = sadd.s32 %s21, 4294967295
      %p385 = scmp.gt.s32.totalorder %s384, 0
      %s386 = scalar_select %p385, %s384, 0
      %p387 = scmp.lt.s32.totalorder %s386, 1
      %s388 = scalar_select %p387, %s386, 1
      %s389 = smul.u32 4, %s388
      %p390 = scmp.lt.s32.totalorder %s20, 1
      %s391 = scalar_select %p390, %s20, 1
      %p392 = scmp.lt.s32.totalorder %s389, 7
      %s393 = scalar_select %p392, %s389, 7
      %s394 = smul.addr %s391, 8
      %s395 = sadd.s32 %s393, %s394
      %s396 = smul.addr %s395, 4
      %s397 = scalar_lea.vmem %s1, %s396
      %s398 = sadd.s32 %s21, 4294967295
      %p399 = scmp.gt.s32.totalorder %s398, 0
      %s400 = scalar_select %p399, %s398, 0
      %p401 = scmp.lt.s32.totalorder %s400, 1
      %s402 = scalar_select %p401, %s400, 1
      %s403 = smul.u32 4, %s402
      %s404 = sadd.s32 %s21, 1
      %p405 = scmp.gt.s32.totalorder %s404, 0
      %s406 = scalar_select %p405, %s404, 0
      %p407 = scmp.lt.s32.totalorder %s406, 1
      %s408 = scalar_select %p407, %s406, 1
      %s409 = smul.u32 4, %s408
      %p410 = scmp.lt.s32.totalorder %s20, 1
      %s411 = scalar_select %p410, %s20, 1
      %p412 = scmp.lt.s32.totalorder %s409, 7
      %s413 = scalar_select %p412, %s409, 7
      %s414 = smul.addr %s411, 8
      %s415 = sadd.s32 %s413, %s414
      %s416 = smul.addr %s415, 4
      %s417 = scalar_lea.vmem %s2, %s416
      %s418 = sadd.s32 %s21, 1
      %p419 = scmp.gt.s32.totalorder %s418, 0
      %s420 = scalar_select %p419, %s418, 0
      %p421 = scmp.lt.s32.totalorder %s420, 1
      %s422 = scalar_select %p421, %s420, 1
      %s423 = smul.u32 4, %s422
      %s424 = smul.u32 4, %s21
      %p425 = scmp.lt.s32.totalorder %s20, 1
      %s426 = scalar_select %p425, %s20, 1
      %p427 = scmp.lt.s32.totalorder %s424, 7
      %s428 = scalar_select %p427, %s424, 7
      %s429 = smul.addr %s426, 8
      %s430 = sadd.s32 %s428, %s429
      %s431 = smul.addr %s430, 4
      %s432 = scalar_lea.vmem %s5, %s431
      %s433 = smul.u32 4, %s21
      %v435 = vld [vmem:[%s378] sm:$0xf]
      %v436 = vld [vmem:[%s378 + $0x4] sm:$0xf]
      %v437 = vld [vmem:[%s378 + $0x8] sm:$0xf]
      %v438 = vld [vmem:[%s378 + $0xc] sm:$0xf]
      %v439 = vunpack.c.l.bf16 %v435
      %v440 = vunpack.c.l.bf16 %v436
      %v441 = vunpack.c.l.bf16 %v437
      %v442 = vunpack.c.l.bf16 %v438
      %s443 = scalar_lea.vmem %s397, 12
      %v444 = vld [vmem:[%s443] sm:$0xf]
      %v445 = vunpack.c.l.bf16 %v444
      %v446 = vld [vmem:[%s417] sm:$0xf]
      %v447 = vunpack.c.l.bf16 %v446
      %p448 = scmp.gt.s32.totalorder %s21, 0
      %s449 = scalar_select %p448, 1.0, 0.0
      %v450 = vstv %s449
      %v451 = vmul.f32 %v445, %v450
      %p452 = scmp.lt.s32.totalorder %s21, 1
      %s453 = scalar_select %p452, 1.0, 0.0
      %v454 = vstv %s453
      %v455 = vmul.f32 %v447, %v454
      %vm456 = vcmask 523264
      %457 = vst.msk [vmem:[#allocation2] sm:$0xff] %vm456, 0.0
      %458 = vst.msk [vmem:[#allocation2 + $0x18] sm:$0xff] %vm456, 0.0
      %459 = vst.msk [vmem:[#allocation2 + $0x30] sm:$0xff] %vm456, 0.0
      %460 = vst.msk [vmem:[#allocation2 + $0x48] sm:$0xff] %vm456, 0.0
      %461 = vst.msk [vmem:[#allocation2 + $0x60] sm:$0xff] %vm456, 0.0
      %462 = vst.msk [vmem:[#allocation2 + $0x78] sm:$0xff] %vm456, 0.0
      %463 = vst.msk [vmem:[#allocation2 + $0x10] sm:$0xff] %vm456, 0.0
      %464 = vst.msk [vmem:[#allocation2 + $0x28] sm:$0xff] %vm456, 0.0
      %465 = vst.msk [vmem:[#allocation2 + $0x40] sm:$0xff] %vm456, 0.0
      %466 = vst.msk [vmem:[#allocation2 + $0x58] sm:$0xff] %vm456, 0.0
      %467 = vst.msk [vmem:[#allocation2 + $0x70] sm:$0xff] %vm456, 0.0
      %468 = vst.msk [vmem:[#allocation2 + $0x88] sm:$0xff] %vm456, 0.0
      %469 = vst.msk [vmem:[#allocation2 + $0x8] sm:$0xff] %vm456, %v451
      %470 = vst.msk [vmem:[#allocation2 + $0x20] sm:$0xff] %vm456, %v439
      %471 = vst.msk [vmem:[#allocation2 + $0x38] sm:$0xff] %vm456, %v440
      %472 = vst.msk [vmem:[#allocation2 + $0x50] sm:$0xff] %vm456, %v441
      %473 = vst.msk [vmem:[#allocation2 + $0x68] sm:$0xff] %vm456, %v442
      %474 = vst.msk [vmem:[#allocation2 + $0x80] sm:$0xff] %vm456, %v455
      %v475 = vld [vmem:[#allocation2] sm:$0xff]
      %v476 = vld [vmem:[#allocation2 + $0x8] sm:$0xff]
      %v477 = vld [vmem:[#allocation2 + $0x10] sm:$0xff]
      %v478 = vld [vmem:[#allocation2 + $0x18] sm:$0xff]
      %v479 = vld [vmem:[#allocation2 + $0x20] sm:$0xff]
      %v480 = vld [vmem:[#allocation2 + $0x28] sm:$0xff]
      %v481 = vld [vmem:[#allocation2 + $0x30] sm:$0xff]
      %v482 = vld [vmem:[#allocation2 + $0x38] sm:$0xff]
      %v483 = vld [vmem:[#allocation2 + $0x40] sm:$0xff]
      %v484 = vld [vmem:[#allocation2 + $0x48] sm:$0xff]
      %v485 = vld [vmem:[#allocation2 + $0x50] sm:$0xff]
      %v486 = vld [vmem:[#allocation2 + $0x58] sm:$0xff]
      %v487 = vld [vmem:[#allocation2 + $0x60] sm:$0xff]
      %v488 = vld [vmem:[#allocation2 + $0x68] sm:$0xff]
      %v489 = vld [vmem:[#allocation2 + $0x70] sm:$0xff]
      %v490 = vld [vmem:[#allocation2 + $0x78] sm:$0xff]
      %v491 = vld [vmem:[#allocation2 + $0x80] sm:$0xff]
      %v492 = vld [vmem:[#allocation2 + $0x88] sm:$0xff]
      %v493 = vld [vmem:[%s4] sm:$0x1]
      %v495 = vlaneseq
      %v496 = vshrl.u32 %v495, 7
      %v497 = vsub.s32 0, %v496
      %v498 = vrot.slane %v493, %v497
      %500 = vst [vmem:[#allocation3] sm:$0xff] %v498
      %501 = vst [vmem:[#allocation3 + $0x8] sm:$0xff] %v498
      %502 = vst [vmem:[#allocation3 + $0x10] sm:$0xff] %v498
      %503 = vst [vmem:[#allocation3 + $0x18] sm:$0xff] %v498
      %vm512 = vcmask 1040384
      %v513 = vrot.slane %v475, 7
      %v514 = vrot.slane %v476, 7
      %v515 = vsel %vm512, %v513, %v514
      %v516 = vrot.slane %v478, 7
      %v517 = vrot.slane %v479, 7
      %v518 = vsel %vm512, %v516, %v517
      %v519 = vrot.slane %v481, 7
      %v520 = vrot.slane %v482, 7
      %v521 = vsel %vm512, %v519, %v520
      %v522 = vrot.slane %v484, 7
      %v523 = vrot.slane %v485, 7
      %v524 = vsel %vm512, %v522, %v523
      %v529 = vld [vmem:[#allocation3] sm:$0xff]
      %v530 = vld [vmem:[#allocation3 + $0x8] sm:$0xff]
      %v531 = vld [vmem:[#allocation3 + $0x10] sm:$0xff]
      %v532 = vld [vmem:[#allocation3 + $0x18] sm:$0xff]
      %v533 = vpack.c.bf16 %v518, %v515
      %v534 = vpack.c.bf16 %v524, %v521
      %v535 = vld [vmem:[%s3] sm:$0xf]
      %v536 = vld [vmem:[%s3 + $0x4] sm:$0xf]
      %v537 = vld [vmem:[%s3 + $0x8] sm:$0xf]
      %v538 = vld [vmem:[%s3 + $0xc] sm:$0xf]
      %v539 = vld [vmem:[%s3 + $0x10] sm:$0xf]
      %v540 = vld [vmem:[%s3 + $0x14] sm:$0xf]
      %v541 = vld [vmem:[%s3 + $0x18] sm:$0xf]
      %v542 = vld [vmem:[%s3 + $0x1c] sm:$0xf]
      %v551 = vunpack.c.l.b16 %v535
      %v552 = vunpack.c.l.b16 %v536
      %v553 = vunpack.c.l.b16 %v537
      %v554 = vunpack.c.l.b16 %v538
      %v555 = vunpack.c.l.b16 %v539
      %v556 = vunpack.c.l.b16 %v540
      %v557 = vunpack.c.l.b16 %v541
      %v558 = vunpack.c.l.b16 %v542
      %v559 = vpack.c.b16 %v552, %v551
      %v560 = vpack.c.b16 %v554, %v553
      %v561 = vpack.c.b16 %v556, %v555
      %v562 = vpack.c.b16 %v558, %v557
      %v568 = vsel %vm456, %v533, 0
      %v571 = vsel %vm456, %v534, 0
      %573 = vmatprep.subr.bf16.mxu0 0
      %574 = vmatpush1.bf16.msra.mxu0 %v559
      %575 = vmatprep.subr.bf16.mxu0 0
      %576 = vmatpush1.bf16.msra.mxu0 %v560
      %577 = vmatprep.subr.bf16.mxu0 0
      %578 = vmatpush1.bf16.msra.mxu0 %v561
      %579 = vmatprep.subr.bf16.mxu0 0
      %580 = vmatpush1.bf16.msra.mxu0 %v562
      %581 = vmatprep.subr.bf16.mxu0 0
      %582 = vmatpush1.bf16.msra.mxu0 0
      %583 = vmatprep.subr.bf16.mxu0 0
      %584 = vmatpush1.bf16.msra.mxu0 0
      %585 = vmatprep.subr.bf16.mxu0 0
      %586 = vmatpush1.bf16.msra.mxu0 0
      %587 = vmatprep.subr.bf16.mxu0 0
      %588 = vmatpush1.bf16.msra.mxu0 0
      %589 = vmatprep.subr.bf16.mxu0 0
      %590 = vmatpush1.bf16.msra.mxu0 0
      %591 = vmatprep.subr.bf16.mxu0 0
      %592 = vmatpush1.bf16.msra.mxu0 0
      %593 = vmatprep.subr.bf16.mxu0 0
      %594 = vmatpush1.bf16.msra.mxu0 0
      %595 = vmatprep.subr.bf16.mxu0 0
      %596 = vmatpush1.bf16.msra.mxu0 0
      %597 = vmatprep.subr.bf16.mxu0 0
      %598 = vmatpush1.bf16.msra.mxu0 0
      %599 = vmatprep.subr.bf16.mxu0 0
      %600 = vmatpush1.bf16.msra.mxu0 0
      %601 = vmatprep.subr.bf16.mxu0 0
      %602 = vmatpush1.bf16.msra.mxu0 0
      %603 = vmatprep.subr.bf16.mxu0 0
      %604 = vmatpush1.bf16.msra.mxu0 0
      %605 = vmatprep.mubr.bf16.mxu0 0
      %606 = vmatmul.mubr.bf16.gmra.mrb[0].mxu0 %v568
      %v607 = vpop.f32.mrb[0].mxu0
      %v608 = vadd.f32 0.0, %v607
      %v609 = vpop.f32.mrb[0].mxu0
      %v610 = vpop.f32.mrb[0].mxu0
      %v611 = vadd.f32 0.0, %v610
      %v612 = vpop.f32.mrb[0].mxu0
      %613 = vmatprep.mubr.bf16.mxu0 0
      %614 = vmatmul.mubr.bf16.gmra.mrb[0].mxu0 %v571
      %v615 = vpop.f32.mrb[0].mxu0
      %v616 = vadd.f32 0.0, %v615
      %v617 = vpop.f32.mrb[0].mxu0
      %v618 = vpop.f32.mrb[0].mxu0
      %v619 = vadd.f32 0.0, %v618
      %v620 = vpop.f32.mrb[0].mxu0
      %621 = vdwg.mxu0
      %v622 = vadd.f32 %v529, %v608
      %v623 = vadd.f32 %v530, %v611
      %v624 = vadd.f32 %v531, %v616
      %v625 = vadd.f32 %v532, %v619
      %626 = vst [vmem:[#allocation3] sm:$0xff] %v622
      %627 = vst [vmem:[#allocation3 + $0x8] sm:$0xff] %v623
      %628 = vst [vmem:[#allocation3 + $0x10] sm:$0xff] %v624
      %629 = vst [vmem:[#allocation3 + $0x18] sm:$0xff] %v625
      %v630 = vld [vmem:[#allocation3] sm:$0xff]
      %v631 = vld [vmem:[#allocation3 + $0x8] sm:$0xff]
      %v632 = vld [vmem:[#allocation3 + $0x10] sm:$0xff]
      %v633 = vld [vmem:[#allocation3 + $0x18] sm:$0xff]
      %v634 = vpack.c.bf16 %v479, %v476
      %v635 = vpack.c.bf16 %v485, %v482
      %s636 = scalar_lea.vmem %s3, 32
      %v637 = vld [vmem:[%s636] sm:$0xf]
      %v638 = vld [vmem:[%s636 + $0x4] sm:$0xf]
      %v639 = vld [vmem:[%s636 + $0x8] sm:$0xf]
      %v640 = vld [vmem:[%s636 + $0xc] sm:$0xf]
      %v641 = vld [vmem:[%s636 + $0x10] sm:$0xf]
      %v642 = vld [vmem:[%s636 + $0x14] sm:$0xf]
      %v643 = vld [vmem:[%s636 + $0x18] sm:$0xf]
      %v644 = vld [vmem:[%s636 + $0x1c] sm:$0xf]
      %v653 = vunpack.c.l.b16 %v637
      %v654 = vunpack.c.l.b16 %v638
      %v655 = vunpack.c.l.b16 %v639
      %v656 = vunpack.c.l.b16 %v640
      %v657 = vunpack.c.l.b16 %v641
      %v658 = vunpack.c.l.b16 %v642
      %v659 = vunpack.c.l.b16 %v643
      %v660 = vunpack.c.l.b16 %v644
      %v661 = vpack.c.b16 %v654, %v653
      %v662 = vpack.c.b16 %v656, %v655
      %v663 = vpack.c.b16 %v658, %v657
      %v664 = vpack.c.b16 %v660, %v659
      %v670 = vsel %vm456, %v634, 0
      %v673 = vsel %vm456, %v635, 0
      %675 = vmatprep.subr.bf16.mxu0 0
      %676 = vmatpush1.bf16.msra.mxu0 %v661
      %677 = vmatprep.subr.bf16.mxu0 0
      %678 = vmatpush1.bf16.msra.mxu0 %v662
      %679 = vmatprep.subr.bf16.mxu0 0
      %680 = vmatpush1.bf16.msra.mxu0 %v663
      %681 = vmatprep.subr.bf16.mxu0 0
      %682 = vmatpush1.bf16.msra.mxu0 %v664
      %683 = vmatprep.subr.bf16.mxu0 0
      %684 = vmatpush1.bf16.msra.mxu0 0
      %685 = vmatprep.subr.bf16.mxu0 0
      %686 = vmatpush1.bf16.msra.mxu0 0
      %687 = vmatprep.subr.bf16.mxu0 0
      %688 = vmatpush1.bf16.msra.mxu0 0
      %689 = vmatprep.subr.bf16.mxu0 0
      %690 = vmatpush1.bf16.msra.mxu0 0
      %691 = vmatprep.subr.bf16.mxu0 0
      %692 = vmatpush1.bf16.msra.mxu0 0
      %693 = vmatprep.subr.bf16.mxu0 0
      %694 = vmatpush1.bf16.msra.mxu0 0
      %695 = vmatprep.subr.bf16.mxu0 0
      %696 = vmatpush1.bf16.msra.mxu0 0
      %697 = vmatprep.subr.bf16.mxu0 0
      %698 = vmatpush1.bf16.msra.mxu0 0
      %699 = vmatprep.subr.bf16.mxu0 0
      %700 = vmatpush1.bf16.msra.mxu0 0
      %701 = vmatprep.subr.bf16.mxu0 0
      %702 = vmatpush1.bf16.msra.mxu0 0
      %703 = vmatprep.subr.bf16.mxu0 0
      %704 = vmatpush1.bf16.msra.mxu0 0
      %705 = vmatprep.subr.bf16.mxu0 0
      %706 = vmatpush1.bf16.msra.mxu0 0
      %707 = vmatprep.mubr.bf16.mxu0 0
      %708 = vmatmul.mubr.bf16.gmra.mrb[0].mxu0 %v670
      %v709 = vpop.f32.mrb[0].mxu0
      %v710 = vadd.f32 0.0, %v709
      %v711 = vpop.f32.mrb[0].mxu0
      %v712 = vpop.f32.mrb[0].mxu0
      %v713 = vadd.f32 0.0, %v712
      %v714 = vpop.f32.mrb[0].mxu0
      %715 = vmatprep.mubr.bf16.mxu0 0
      %716 = vmatmul.mubr.bf16.gmra.mrb[0].mxu0 %v673
      %v717 = vpop.f32.mrb[0].mxu0
      %v718 = vadd.f32 0.0, %v717
      %v719 = vpop.f32.mrb[0].mxu0
      %v720 = vpop.f32.mrb[0].mxu0
      %v721 = vadd.f32 0.0, %v720
      %v722 = vpop.f32.mrb[0].mxu0
      %723 = vdwg.mxu0
      %v724 = vadd.f32 %v630, %v710
      %v725 = vadd.f32 %v631, %v713
      %v726 = vadd.f32 %v632, %v718
      %v727 = vadd.f32 %v633, %v721
      %728 = vst [vmem:[#allocation3] sm:$0xff] %v724
      %729 = vst [vmem:[#allocation3 + $0x8] sm:$0xff] %v725
      %730 = vst [vmem:[#allocation3 + $0x10] sm:$0xff] %v726
      %731 = vst [vmem:[#allocation3 + $0x18] sm:$0xff] %v727
      %vm736 = vcmask 1046528
      %v737 = vrot.slane %v476, 1
      %v738 = vrot.slane %v477, 1
      %v739 = vsel %vm736, %v737, %v738
      %v740 = vrot.slane %v479, 1
      %v741 = vrot.slane %v480, 1
      %v742 = vsel %vm736, %v740, %v741
      %v743 = vrot.slane %v482, 1
      %v744 = vrot.slane %v483, 1
      %v745 = vsel %vm736, %v743, %v744
      %v746 = vrot.slane %v485, 1
      %v747 = vrot.slane %v486, 1
      %v748 = vsel %vm736, %v746, %v747
      %v753 = vld [vmem:[#allocation3] sm:$0xff]
      %v754 = vld [vmem:[#allocation3 + $0x8] sm:$0xff]
      %v755 = vld [vmem:[#allocation3 + $0x10] sm:$0xff]
      %v756 = vld [vmem:[#allocation3 + $0x18] sm:$0xff]
      %v757 = vpack.c.bf16 %v742, %v739
      %v758 = vpack.c.bf16 %v748, %v745
      %s759 = scalar_lea.vmem %s3, 64
      %v760 = vld [vmem:[%s759] sm:$0xf]
      %v761 = vld [vmem:[%s759 + $0x4] sm:$0xf]
      %v762 = vld [vmem:[%s759 + $0x8] sm:$0xf]
      %v763 = vld [vmem:[%s759 + $0xc] sm:$0xf]
      %v764 = vld [vmem:[%s759 + $0x10] sm:$0xf]
      %v765 = vld [vmem:[%s759 + $0x14] sm:$0xf]
      %v766 = vld [vmem:[%s759 + $0x18] sm:$0xf]
      %v767 = vld [vmem:[%s759 + $0x1c] sm:$0xf]
      %v776 = vunpack.c.l.b16 %v760
      %v777 = vunpack.c.l.b16 %v761
      %v778 = vunpack.c.l.b16 %v762
      %v779 = vunpack.c.l.b16 %v763
      %v780 = vunpack.c.l.b16 %v764
      %v781 = vunpack.c.l.b16 %v765
      %v782 = vunpack.c.l.b16 %v766
      %v783 = vunpack.c.l.b16 %v767
      %v784 = vpack.c.b16 %v777, %v776
      %v785 = vpack.c.b16 %v779, %v778
      %v786 = vpack.c.b16 %v781, %v780
      %v787 = vpack.c.b16 %v783, %v782
      %v793 = vsel %vm456, %v757, 0
      %v796 = vsel %vm456, %v758, 0
      %798 = vmatprep.subr.bf16.mxu0 0
      %799 = vmatpush1.bf16.msra.mxu0 %v784
      %800 = vmatprep.subr.bf16.mxu0 0
      %801 = vmatpush1.bf16.msra.mxu0 %v785
      %802 = vmatprep.subr.bf16.mxu0 0
      %803 = vmatpush1.bf16.msra.mxu0 %v786
      %804 = vmatprep.subr.bf16.mxu0 0
      %805 = vmatpush1.bf16.msra.mxu0 %v787
      %806 = vmatprep.subr.bf16.mxu0 0
      %807 = vmatpush1.bf16.msra.mxu0 0
      %808 = vmatprep.subr.bf16.mxu0 0
      %809 = vmatpush1.bf16.msra.mxu0 0
      %810 = vmatprep.subr.bf16.mxu0 0
      %811 = vmatpush1.bf16.msra.mxu0 0
      %812 = vmatprep.subr.bf16.mxu0 0
      %813 = vmatpush1.bf16.msra.mxu0 0
      %814 = vmatprep.subr.bf16.mxu0 0
      %815 = vmatpush1.bf16.msra.mxu0 0
      %816 = vmatprep.subr.bf16.mxu0 0
      %817 = vmatpush1.bf16.msra.mxu0 0
      %818 = vmatprep.subr.bf16.mxu0 0
      %819 = vmatpush1.bf16.msra.mxu0 0
      %820 = vmatprep.subr.bf16.mxu0 0
      %821 = vmatpush1.bf16.msra.mxu0 0
      %822 = vmatprep.subr.bf16.mxu0 0
      %823 = vmatpush1.bf16.msra.mxu0 0
      %824 = vmatprep.subr.bf16.mxu0 0
      %825 = vmatpush1.bf16.msra.mxu0 0
      %826 = vmatprep.subr.bf16.mxu0 0
      %827 = vmatpush1.bf16.msra.mxu0 0
      %828 = vmatprep.subr.bf16.mxu0 0
      %829 = vmatpush1.bf16.msra.mxu0 0
      %830 = vmatprep.mubr.bf16.mxu0 0
      %831 = vmatmul.mubr.bf16.gmra.mrb[0].mxu0 %v793
      %v832 = vpop.f32.mrb[0].mxu0
      %v833 = vadd.f32 0.0, %v832
      %v834 = vpop.f32.mrb[0].mxu0
      %v835 = vpop.f32.mrb[0].mxu0
      %v836 = vadd.f32 0.0, %v835
      %v837 = vpop.f32.mrb[0].mxu0
      %838 = vmatprep.mubr.bf16.mxu0 0
      %839 = vmatmul.mubr.bf16.gmra.mrb[0].mxu0 %v796
      %v840 = vpop.f32.mrb[0].mxu0
      %v841 = vadd.f32 0.0, %v840
      %v842 = vpop.f32.mrb[0].mxu0
      %v843 = vpop.f32.mrb[0].mxu0
      %v844 = vadd.f32 0.0, %v843
      %v845 = vpop.f32.mrb[0].mxu0
      %846 = vdwg.mxu0
      %v847 = vadd.f32 %v753, %v833
      %v848 = vadd.f32 %v754, %v836
      %v849 = vadd.f32 %v755, %v841
      %v850 = vadd.f32 %v756, %v844
      %851 = vst [vmem:[#allocation3] sm:$0xff] %v847
      %852 = vst [vmem:[#allocation3 + $0x8] sm:$0xff] %v848
      %853 = vst [vmem:[#allocation3 + $0x10] sm:$0xff] %v849
      %854 = vst [vmem:[#allocation3 + $0x18] sm:$0xff] %v850
      %v857 = vrot.slane %v487, 7
      %v858 = vrot.slane %v488, 7
      %v859 = vsel %vm512, %v857, %v858
      %v861 = vld [vmem:[#allocation3] sm:$0xff]
      %v862 = vld [vmem:[#allocation3 + $0x8] sm:$0xff]
      %v863 = vld [vmem:[#allocation3 + $0x10] sm:$0xff]
      %v864 = vld [vmem:[#allocation3 + $0x18] sm:$0xff]
      %v865 = vpack.c.bf16 %v521, %v518
      %v866 = vpack.c.bf16 %v859, %v524
      %s867 = scalar_lea.vmem %s3, 96
      %v868 = vld [vmem:[%s867] sm:$0xf]
      %v869 = vld [vmem:[%s867 + $0x4] sm:$0xf]
      %v870 = vld [vmem:[%s867 + $0x8] sm:$0xf]
      %v871 = vld [vmem:[%s867 + $0xc] sm:$0xf]
      %v872 = vld [vmem:[%s867 + $0x10] sm:$0xf]
      %v873 = vld [vmem:[%s867 + $0x14] sm:$0xf]
      %v874 = vld [vmem:[%s867 + $0x18] sm:$0xf]
      %v875 = vld [vmem:[%s867 + $0x1c] sm:$0xf]
      %v884 = vunpack.c.l.b16 %v868
      %v885 = vunpack.c.l.b16 %v869
      %v886 = vunpack.c.l.b16 %v870
      %v887 = vunpack.c.l.b16 %v871
      %v888 = vunpack.c.l.b16 %v872
      %v889 = vunpack.c.l.b16 %v873
      %v890 = vunpack.c.l.b16 %v874
      %v891 = vunpack.c.l.b16 %v875
      %v892 = vpack.c.b16 %v885, %v884
      %v893 = vpack.c.b16 %v887, %v886
      %v894 = vpack.c.b16 %v889, %v888
      %v895 = vpack.c.b16 %v891, %v890
      %v901 = vsel %vm456, %v865, 0
      %v904 = vsel %vm456, %v866, 0
      %906 = vmatprep.subr.bf16.mxu0 0
      %907 = vmatpush1.bf16.msra.mxu0 %v892
      %908 = vmatprep.subr.bf16.mxu0 0
      %909 = vmatpush1.bf16.msra.mxu0 %v893
      %910 = vmatprep.subr.bf16.mxu0 0
      %911 = vmatpush1.bf16.msra.mxu0 %v894
      %912 = vmatprep.subr.bf16.mxu0 0
      %913 = vmatpush1.bf16.msra.mxu0 %v895
      %914 = vmatprep.subr.bf16.mxu0 0
      %915 = vmatpush1.bf16.msra.mxu0 0
      %916 = vmatprep.subr.bf16.mxu0 0
      %917 = vmatpush1.bf16.msra.mxu0 0
      %918 = vmatprep.subr.bf16.mxu0 0
      %919 = vmatpush1.bf16.msra.mxu0 0
      %920 = vmatprep.subr.bf16.mxu0 0
      %921 = vmatpush1.bf16.msra.mxu0 0
      %922 = vmatprep.subr.bf16.mxu0 0
      %923 = vmatpush1.bf16.msra.mxu0 0
      %924 = vmatprep.subr.bf16.mxu0 0
      %925 = vmatpush1.bf16.msra.mxu0 0
      %926 = vmatprep.subr.bf16.mxu0 0
      %927 = vmatpush1.bf16.msra.mxu0 0
      %928 = vmatprep.subr.bf16.mxu0 0
      %929 = vmatpush1.bf16.msra.mxu0 0
      %930 = vmatprep.subr.bf16.mxu0 0
      %931 = vmatpush1.bf16.msra.mxu0 0
      %932 = vmatprep.subr.bf16.mxu0 0
      %933 = vmatpush1.bf16.msra.mxu0 0
      %934 = vmatprep.subr.bf16.mxu0 0
      %935 = vmatpush1.bf16.msra.mxu0 0
      %936 = vmatprep.subr.bf16.mxu0 0
      %937 = vmatpush1.bf16.msra.mxu0 0
      %938 = vmatprep.mubr.bf16.mxu0 0
      %939 = vmatmul.mubr.bf16.gmra.mrb[0].mxu0 %v901
      %v940 = vpop.f32.mrb[0].mxu0
      %v941 = vadd.f32 0.0, %v940
      %v942 = vpop.f32.mrb[0].mxu0
      %v943 = vpop.f32.mrb[0].mxu0
      %v944 = vadd.f32 0.0, %v943
      %v945 = vpop.f32.mrb[0].mxu0
      %946 = vmatprep.mubr.bf16.mxu0 0
      %947 = vmatmul.mubr.bf16.gmra.mrb[0].mxu0 %v904
      %v948 = vpop.f32.mrb[0].mxu0
      %v949 = vadd.f32 0.0, %v948
      %v950 = vpop.f32.mrb[0].mxu0
      %v951 = vpop.f32.mrb[0].mxu0
      %v952 = vadd.f32 0.0, %v951
      %v953 = vpop.f32.mrb[0].mxu0
      %954 = vdwg.mxu0
      %v955 = vadd.f32 %v861, %v941
      %v956 = vadd.f32 %v862, %v944
      %v957 = vadd.f32 %v863, %v949
      %v958 = vadd.f32 %v864, %v952
      %959 = vst [vmem:[#allocation3] sm:$0xff] %v955
      %960 = vst [vmem:[#allocation3 + $0x8] sm:$0xff] %v956
      %961 = vst [vmem:[#allocation3 + $0x10] sm:$0xff] %v957
      %962 = vst [vmem:[#allocation3 + $0x18] sm:$0xff] %v958
      %v963 = vld [vmem:[#allocation3] sm:$0xff]
      %v964 = vld [vmem:[#allocation3 + $0x8] sm:$0xff]
      %v965 = vld [vmem:[#allocation3 + $0x10] sm:$0xff]
      %v966 = vld [vmem:[#allocation3 + $0x18] sm:$0xff]
      %v967 = vpack.c.bf16 %v482, %v479
      %v968 = vpack.c.bf16 %v488, %v485
      %s969 = scalar_lea.vmem %s3, 128
      %v970 = vld [vmem:[%s969] sm:$0xf]
      %v971 = vld [vmem:[%s969 + $0x4] sm:$0xf]
      %v972 = vld [vmem:[%s969 + $0x8] sm:$0xf]
      %v973 = vld [vmem:[%s969 + $0xc] sm:$0xf]
      %v974 = vld [vmem:[%s969 + $0x10] sm:$0xf]
      %v975 = vld [vmem:[%s969 + $0x14] sm:$0xf]
      %v976 = vld [vmem:[%s969 + $0x18] sm:$0xf]
      %v977 = vld [vmem:[%s969 + $0x1c] sm:$0xf]
      %v986 = vunpack.c.l.b16 %v970
      %v987 = vunpack.c.l.b16 %v971
      %v988 = vunpack.c.l.b16 %v972
      %v989 = vunpack.c.l.b16 %v973
      %v990 = vunpack.c.l.b16 %v974
      %v991 = vunpack.c.l.b16 %v975
      %v992 = vunpack.c.l.b16 %v976
      %v993 = vunpack.c.l.b16 %v977
      %v994 = vpack.c.b16 %v987, %v986
      %v995 = vpack.c.b16 %v989, %v988
      %v996 = vpack.c.b16 %v991, %v990
      %v997 = vpack.c.b16 %v993, %v992
      %v1003 = vsel %vm456, %v967, 0
      %v1006 = vsel %vm456, %v968, 0
      %1008 = vmatprep.subr.bf16.mxu0 0
      %1009 = vmatpush1.bf16.msra.mxu0 %v994
      %1010 = vmatprep.subr.bf16.mxu0 0
      %1011 = vmatpush1.bf16.msra.mxu0 %v995
      %1012 = vmatprep.subr.bf16.mxu0 0
      %1013 = vmatpush1.bf16.msra.mxu0 %v996
      %1014 = vmatprep.subr.bf16.mxu0 0
      %1015 = vmatpush1.bf16.msra.mxu0 %v997
      %1016 = vmatprep.subr.bf16.mxu0 0
      %1017 = vmatpush1.bf16.msra.mxu0 0
      %1018 = vmatprep.subr.bf16.mxu0 0
      %1019 = vmatpush1.bf16.msra.mxu0 0
      %1020 = vmatprep.subr.bf16.mxu0 0
      %1021 = vmatpush1.bf16.msra.mxu0 0
      %1022 = vmatprep.subr.bf16.mxu0 0
      %1023 = vmatpush1.bf16.msra.mxu0 0
      %1024 = vmatprep.subr.bf16.mxu0 0
      %1025 = vmatpush1.bf16.msra.mxu0 0
      %1026 = vmatprep.subr.bf16.mxu0 0
      %1027 = vmatpush1.bf16.msra.mxu0 0
      %1028 = vmatprep.subr.bf16.mxu0 0
      %1029 = vmatpush1.bf16.msra.mxu0 0
      %1030 = vmatprep.subr.bf16.mxu0 0
      %1031 = vmatpush1.bf16.msra.mxu0 0
      %1032 = vmatprep.subr.bf16.mxu0 0
      %1033 = vmatpush1.bf16.msra.mxu0 0
      %1034 = vmatprep.subr.bf16.mxu0 0
      %1035 = vmatpush1.bf16.msra.mxu0 0
      %1036 = vmatprep.subr.bf16.mxu0 0
      %1037 = vmatpush1.bf16.msra.mxu0 0
      %1038 = vmatprep.subr.bf16.mxu0 0
      %1039 = vmatpush1.bf16.msra.mxu0 0
      %1040 = vmatprep.mubr.bf16.mxu0 0
      %1041 = vmatmul.mubr.bf16.gmra.mrb[0].mxu0 %v1003
      %v1042 = vpop.f32.mrb[0].mxu0
      %v1043 = vadd.f32 0.0, %v1042
      %v1044 = vpop.f32.mrb[0].mxu0
      %v1045 = vpop.f32.mrb[0].mxu0
      %v1046 = vadd.f32 0.0, %v1045
      %v1047 = vpop.f32.mrb[0].mxu0
      %1048 = vmatprep.mubr.bf16.mxu0 0
      %1049 = vmatmul.mubr.bf16.gmra.mrb[0].mxu0 %v1006
      %v1050 = vpop.f32.mrb[0].mxu0
      %v1051 = vadd.f32 0.0, %v1050
      %v1052 = vpop.f32.mrb[0].mxu0
      %v1053 = vpop.f32.mrb[0].mxu0
      %v1054 = vadd.f32 0.0, %v1053
      %v1055 = vpop.f32.mrb[0].mxu0
      %1056 = vdwg.mxu0
      %v1057 = vadd.f32 %v963, %v1043
      %v1058 = vadd.f32 %v964, %v1046
      %v1059 = vadd.f32 %v965, %v1051
      %v1060 = vadd.f32 %v966, %v1054
      %1061 = vst [vmem:[#allocation3] sm:$0xff] %v1057
      %1062 = vst [vmem:[#allocation3 + $0x8] sm:$0xff] %v1058
      %1063 = vst [vmem:[#allocation3 + $0x10] sm:$0xff] %v1059
      %1064 = vst [vmem:[#allocation3 + $0x18] sm:$0xff] %v1060
      %v1066 = vrot.slane %v488, 1
      %v1067 = vrot.slane %v489, 1
      %v1068 = vsel %vm736, %v1066, %v1067
      %v1070 = vld [vmem:[#allocation3] sm:$0xff]
      %v1071 = vld [vmem:[#allocation3 + $0x8] sm:$0xff]
      %v1072 = vld [vmem:[#allocation3 + $0x10] sm:$0xff]
      %v1073 = vld [vmem:[#allocation3 + $0x18] sm:$0xff]
      %v1074 = vpack.c.bf16 %v745, %v742
      %v1075 = vpack.c.bf16 %v1068, %v748
      %s1076 = scalar_lea.vmem %s3, 160
      %v1077 = vld [vmem:[%s1076] sm:$0xf]
      %v1078 = vld [vmem:[%s1076 + $0x4] sm:$0xf]
      %v1079 = vld [vmem:[%s1076 + $0x8] sm:$0xf]
      %v1080 = vld [vmem:[%s1076 + $0xc] sm:$0xf]
      %v1081 = vld [vmem:[%s1076 + $0x10] sm:$0xf]
      %v1082 = vld [vmem:[%s1076 + $0x14] sm:$0xf]
      %v1083 = vld [vmem:[%s1076 + $0x18] sm:$0xf]
      %v1084 = vld [vmem:[%s1076 + $0x1c] sm:$0xf]
      %v1093 = vunpack.c.l.b16 %v1077
      %v1094 = vunpack.c.l.b16 %v1078
      %v1095 = vunpack.c.l.b16 %v1079
      %v1096 = vunpack.c.l.b16 %v1080
      %v1097 = vunpack.c.l.b16 %v1081
      %v1098 = vunpack.c.l.b16 %v1082
      %v1099 = vunpack.c.l.b16 %v1083
      %v1100 = vunpack.c.l.b16 %v1084
      %v1101 = vpack.c.b16 %v1094, %v1093
      %v1102 = vpack.c.b16 %v1096, %v1095
      %v1103 = vpack.c.b16 %v1098, %v1097
      %v1104 = vpack.c.b16 %v1100, %v1099
      %v1110 = vsel %vm456, %v1074, 0
      %v1113 = vsel %vm456, %v1075, 0
      %1115 = vmatprep.subr.bf16.mxu0 0
      %1116 = vmatpush1.bf16.msra.mxu0 %v1101
      %1117 = vmatprep.subr.bf16.mxu0 0
      %1118 = vmatpush1.bf16.msra.mxu0 %v1102
      %1119 = vmatprep.subr.bf16.mxu0 0
      %1120 = vmatpush1.bf16.msra.mxu0 %v1103
      %1121 = vmatprep.subr.bf16.mxu0 0
      %1122 = vmatpush1.bf16.msra.mxu0 %v1104
      %1123 = vmatprep.subr.bf16.mxu0 0
      %1124 = vmatpush1.bf16.msra.mxu0 0
      %1125 = vmatprep.subr.bf16.mxu0 0
      %1126 = vmatpush1.bf16.msra.mxu0 0
      %1127 = vmatprep.subr.bf16.mxu0 0
      %1128 = vmatpush1.bf16.msra.mxu0 0
      %1129 = vmatprep.subr.bf16.mxu0 0
      %1130 = vmatpush1.bf16.msra.mxu0 0
      %1131 = vmatprep.subr.bf16.mxu0 0
      %1132 = vmatpush1.bf16.msra.mxu0 0
      %1133 = vmatprep.subr.bf16.mxu0 0
      %1134 = vmatpush1.bf16.msra.mxu0 0
      %1135 = vmatprep.subr.bf16.mxu0 0
      %1136 = vmatpush1.bf16.msra.mxu0 0
      %1137 = vmatprep.subr.bf16.mxu0 0
      %1138 = vmatpush1.bf16.msra.mxu0 0
      %1139 = vmatprep.subr.bf16.mxu0 0
      %1140 = vmatpush1.bf16.msra.mxu0 0
      %1141 = vmatprep.subr.bf16.mxu0 0
      %1142 = vmatpush1.bf16.msra.mxu0 0
      %1143 = vmatprep.subr.bf16.mxu0 0
      %1144 = vmatpush1.bf16.msra.mxu0 0
      %1145 = vmatprep.subr.bf16.mxu0 0
      %1146 = vmatpush1.bf16.msra.mxu0 0
      %1147 = vmatprep.mubr.bf16.mxu0 0
      %1148 = vmatmul.mubr.bf16.gmra.mrb[0].mxu0 %v1110
      %v1149 = vpop.f32.mrb[0].mxu0
      %v1150 = vadd.f32 0.0, %v1149
      %v1151 = vpop.f32.mrb[0].mxu0
      %v1152 = vpop.f32.mrb[0].mxu0
      %v1153 = vadd.f32 0.0, %v1152
      %v1154 = vpop.f32.mrb[0].mxu0
      %1155 = vmatprep.mubr.bf16.mxu0 0
      %1156 = vmatmul.mubr.bf16.gmra.mrb[0].mxu0 %v1113
      %v1157 = vpop.f32.mrb[0].mxu0
      %v1158 = vadd.f32 0.0, %v1157
      %v1159 = vpop.f32.mrb[0].mxu0
      %v1160 = vpop.f32.mrb[0].mxu0
      %v1161 = vadd.f32 0.0, %v1160
      %v1162 = vpop.f32.mrb[0].mxu0
      %1163 = vdwg.mxu0
      %v1164 = vadd.f32 %v1070, %v1150
      %v1165 = vadd.f32 %v1071, %v1153
      %v1166 = vadd.f32 %v1072, %v1158
      %v1167 = vadd.f32 %v1073, %v1161
      %1168 = vst [vmem:[#allocation3] sm:$0xff] %v1164
      %1169 = vst [vmem:[#allocation3 + $0x8] sm:$0xff] %v1165
      %1170 = vst [vmem:[#allocation3 + $0x10] sm:$0xff] %v1166
      %1171 = vst [vmem:[#allocation3 + $0x18] sm:$0xff] %v1167
      %v1174 = vrot.slane %v490, 7
      %v1175 = vrot.slane %v491, 7
      %v1176 = vsel %vm512, %v1174, %v1175
      %v1178 = vld [vmem:[#allocation3] sm:$0xff]
      %v1179 = vld [vmem:[#allocation3 + $0x8] sm:$0xff]
      %v1180 = vld [vmem:[#allocation3 + $0x10] sm:$0xff]
      %v1181 = vld [vmem:[#allocation3 + $0x18] sm:$0xff]
      %v1182 = vpack.c.bf16 %v1176, %v859
      %s1183 = scalar_lea.vmem %s3, 192
      %v1184 = vld [vmem:[%s1183] sm:$0xf]
      %v1185 = vld [vmem:[%s1183 + $0x4] sm:$0xf]
      %v1186 = vld [vmem:[%s1183 + $0x8] sm:$0xf]
      %v1187 = vld [vmem:[%s1183 + $0xc] sm:$0xf]
      %v1188 = vld [vmem:[%s1183 + $0x10] sm:$0xf]
      %v1189 = vld [vmem:[%s1183 + $0x14] sm:$0xf]
      %v1190 = vld [vmem:[%s1183 + $0x18] sm:$0xf]
      %v1191 = vld [vmem:[%s1183 + $0x1c] sm:$0xf]
      %v1200 = vunpack.c.l.b16 %v1184
      %v1201 = vunpack.c.l.b16 %v1185
      %v1202 = vunpack.c.l.b16 %v1186
      %v1203 = vunpack.c.l.b16 %v1187
      %v1204 = vunpack.c.l.b16 %v1188
      %v1205 = vunpack.c.l.b16 %v1189
      %v1206 = vunpack.c.l.b16 %v1190
      %v1207 = vunpack.c.l.b16 %v1191
      %v1208 = vpack.c.b16 %v1201, %v1200
      %v1209 = vpack.c.b16 %v1203, %v1202
      %v1210 = vpack.c.b16 %v1205, %v1204
      %v1211 = vpack.c.b16 %v1207, %v1206
      %v1217 = vsel %vm456, %v1182, 0
      %1219 = vmatprep.subr.bf16.mxu0 0
      %1220 = vmatpush1.bf16.msra.mxu0 %v1208
      %1221 = vmatprep.subr.bf16.mxu0 0
      %1222 = vmatpush1.bf16.msra.mxu0 %v1209
      %1223 = vmatprep.subr.bf16.mxu0 0
      %1224 = vmatpush1.bf16.msra.mxu0 %v1210
      %1225 = vmatprep.subr.bf16.mxu0 0
      %1226 = vmatpush1.bf16.msra.mxu0 %v1211
      %1227 = vmatprep.subr.bf16.mxu0 0
      %1228 = vmatpush1.bf16.msra.mxu0 0
      %1229 = vmatprep.subr.bf16.mxu0 0
      %1230 = vmatpush1.bf16.msra.mxu0 0
      %1231 = vmatprep.subr.bf16.mxu0 0
      %1232 = vmatpush1.bf16.msra.mxu0 0
      %1233 = vmatprep.subr.bf16.mxu0 0
      %1234 = vmatpush1.bf16.msra.mxu0 0
      %1235 = vmatprep.subr.bf16.mxu0 0
      %1236 = vmatpush1.bf16.msra.mxu0 0
      %1237 = vmatprep.subr.bf16.mxu0 0
      %1238 = vmatpush1.bf16.msra.mxu0 0
      %1239 = vmatprep.subr.bf16.mxu0 0
      %1240 = vmatpush1.bf16.msra.mxu0 0
      %1241 = vmatprep.subr.bf16.mxu0 0
      %1242 = vmatpush1.bf16.msra.mxu0 0
      %1243 = vmatprep.subr.bf16.mxu0 0
      %1244 = vmatpush1.bf16.msra.mxu0 0
      %1245 = vmatprep.subr.bf16.mxu0 0
      %1246 = vmatpush1.bf16.msra.mxu0 0
      %1247 = vmatprep.subr.bf16.mxu0 0
      %1248 = vmatpush1.bf16.msra.mxu0 0
      %1249 = vmatprep.subr.bf16.mxu0 0
      %1250 = vmatpush1.bf16.msra.mxu0 0
      %1251 = vmatprep.mubr.bf16.mxu0 0
      %1252 = vmatmul.mubr.bf16.gmra.mrb[0].mxu0 %v571
      %v1253 = vpop.f32.mrb[0].mxu0
      %v1254 = vadd.f32 0.0, %v1253
      %v1255 = vpop.f32.mrb[0].mxu0
      %v1256 = vpop.f32.mrb[0].mxu0
      %v1257 = vadd.f32 0.0, %v1256
      %v1258 = vpop.f32.mrb[0].mxu0
      %1259 = vmatprep.mubr.bf16.mxu0 0
      %1260 = vmatmul.mubr.bf16.gmra.mrb[0].mxu0 %v1217
      %v1261 = vpop.f32.mrb[0].mxu0
      %v1262 = vadd.f32 0.0, %v1261
      %v1263 = vpop.f32.mrb[0].mxu0
      %v1264 = vpop.f32.mrb[0].mxu0
      %v1265 = vadd.f32 0.0, %v1264
      %v1266 = vpop.f32.mrb[0].mxu0
      %1267 = vdwg.mxu0
      %v1268 = vadd.f32 %v1178, %v1254
      %v1269 = vadd.f32 %v1179, %v1257
      %v1270 = vadd.f32 %v1180, %v1262
      %v1271 = vadd.f32 %v1181, %v1265
      %1272 = vst [vmem:[#allocation3] sm:$0xff] %v1268
      %1273 = vst [vmem:[#allocation3 + $0x8] sm:$0xff] %v1269
      %1274 = vst [vmem:[#allocation3 + $0x10] sm:$0xff] %v1270
      %1275 = vst [vmem:[#allocation3 + $0x18] sm:$0xff] %v1271
      %v1276 = vld [vmem:[#allocation3] sm:$0xff]
      %v1277 = vld [vmem:[#allocation3 + $0x8] sm:$0xff]
      %v1278 = vld [vmem:[#allocation3 + $0x10] sm:$0xff]
      %v1279 = vld [vmem:[#allocation3 + $0x18] sm:$0xff]
      %v1280 = vpack.c.bf16 %v491, %v488
      %s1281 = scalar_lea.vmem %s3, 224
      %v1282 = vld [vmem:[%s1281] sm:$0xf]
      %v1283 = vld [vmem:[%s1281 + $0x4] sm:$0xf]
      %v1284 = vld [vmem:[%s1281 + $0x8] sm:$0xf]
      %v1285 = vld [vmem:[%s1281 + $0xc] sm:$0xf]
      %v1286 = vld [vmem:[%s1281 + $0x10] sm:$0xf]
      %v1287 = vld [vmem:[%s1281 + $0x14] sm:$0xf]
      %v1288 = vld [vmem:[%s1281 + $0x18] sm:$0xf]
      %v1289 = vld [vmem:[%s1281 + $0x1c] sm:$0xf]
      %v1298 = vunpack.c.l.b16 %v1282
      %v1299 = vunpack.c.l.b16 %v1283
      %v1300 = vunpack.c.l.b16 %v1284
      %v1301 = vunpack.c.l.b16 %v1285
      %v1302 = vunpack.c.l.b16 %v1286
      %v1303 = vunpack.c.l.b16 %v1287
      %v1304 = vunpack.c.l.b16 %v1288
      %v1305 = vunpack.c.l.b16 %v1289
      %v1306 = vpack.c.b16 %v1299, %v1298
      %v1307 = vpack.c.b16 %v1301, %v1300
      %v1308 = vpack.c.b16 %v1303, %v1302
      %v1309 = vpack.c.b16 %v1305, %v1304
      %v1315 = vsel %vm456, %v1280, 0
      %1317 = vmatprep.subr.bf16.mxu0 0
      %1318 = vmatpush1.bf16.msra.mxu0 %v1306
      %1319 = vmatprep.subr.bf16.mxu0 0
      %1320 = vmatpush1.bf16.msra.mxu0 %v1307
      %1321 = vmatprep.subr.bf16.mxu0 0
      %1322 = vmatpush1.bf16.msra.mxu0 %v1308
      %1323 = vmatprep.subr.bf16.mxu0 0
      %1324 = vmatpush1.bf16.msra.mxu0 %v1309
      %1325 = vmatprep.subr.bf16.mxu0 0
      %1326 = vmatpush1.bf16.msra.mxu0 0
      %1327 = vmatprep.subr.bf16.mxu0 0
      %1328 = vmatpush1.bf16.msra.mxu0 0
      %1329 = vmatprep.subr.bf16.mxu0 0
      %1330 = vmatpush1.bf16.msra.mxu0 0
      %1331 = vmatprep.subr.bf16.mxu0 0
      %1332 = vmatpush1.bf16.msra.mxu0 0
      %1333 = vmatprep.subr.bf16.mxu0 0
      %1334 = vmatpush1.bf16.msra.mxu0 0
      %1335 = vmatprep.subr.bf16.mxu0 0
      %1336 = vmatpush1.bf16.msra.mxu0 0
      %1337 = vmatprep.subr.bf16.mxu0 0
      %1338 = vmatpush1.bf16.msra.mxu0 0
      %1339 = vmatprep.subr.bf16.mxu0 0
      %1340 = vmatpush1.bf16.msra.mxu0 0
      %1341 = vmatprep.subr.bf16.mxu0 0
      %1342 = vmatpush1.bf16.msra.mxu0 0
      %1343 = vmatprep.subr.bf16.mxu0 0
      %1344 = vmatpush1.bf16.msra.mxu0 0
      %1345 = vmatprep.subr.bf16.mxu0 0
      %1346 = vmatpush1.bf16.msra.mxu0 0
      %1347 = vmatprep.subr.bf16.mxu0 0
      %1348 = vmatpush1.bf16.msra.mxu0 0
      %1349 = vmatprep.mubr.bf16.mxu0 0
      %1350 = vmatmul.mubr.bf16.gmra.mrb[0].mxu0 %v673
      %v1351 = vpop.f32.mrb[0].mxu0
      %v1352 = vadd.f32 0.0, %v1351
      %v1353 = vpop.f32.mrb[0].mxu0
      %v1354 = vpop.f32.mrb[0].mxu0
      %v1355 = vadd.f32 0.0, %v1354
      %v1356 = vpop.f32.mrb[0].mxu0
      %1357 = vmatprep.mubr.bf16.mxu0 0
      %1358 = vmatmul.mubr.bf16.gmra.mrb[0].mxu0 %v1315
      %v1359 = vpop.f32.mrb[0].mxu0
      %v1360 = vadd.f32 0.0, %v1359
      %v1361 = vpop.f32.mrb[0].mxu0
      %v1362 = vpop.f32.mrb[0].mxu0
      %v1363 = vadd.f32 0.0, %v1362
      %v1364 = vpop.f32.mrb[0].mxu0
      %1365 = vdwg.mxu0
      %v1366 = vadd.f32 %v1276, %v1352
      %v1367 = vadd.f32 %v1277, %v1355
      %v1368 = vadd.f32 %v1278, %v1360
      %v1369 = vadd.f32 %v1279, %v1363
      %1370 = vst [vmem:[#allocation3] sm:$0xff] %v1366
      %1371 = vst [vmem:[#allocation3 + $0x8] sm:$0xff] %v1367
      %1372 = vst [vmem:[#allocation3 + $0x10] sm:$0xff] %v1368
      %1373 = vst [vmem:[#allocation3 + $0x18] sm:$0xff] %v1369
      %v1375 = vrot.slane %v491, 1
      %v1376 = vrot.slane %v492, 1
      %v1377 = vsel %vm736, %v1375, %v1376
      %v1379 = vld [vmem:[#allocation3] sm:$0xff]
      %v1380 = vld [vmem:[#allocation3 + $0x8] sm:$0xff]
      %v1381 = vld [vmem:[#allocation3 + $0x10] sm:$0xff]
      %v1382 = vld [vmem:[#allocation3 + $0x18] sm:$0xff]
      %v1383 = vpack.c.bf16 %v1377, %v1068
      %s1384 = scalar_lea.vmem %s3, 256
      %v1385 = vld [vmem:[%s1384] sm:$0xf]
      %v1386 = vld [vmem:[%s1384 + $0x4] sm:$0xf]
      %v1387 = vld [vmem:[%s1384 + $0x8] sm:$0xf]
      %v1388 = vld [vmem:[%s1384 + $0xc] sm:$0xf]
      %v1389 = vld [vmem:[%s1384 + $0x10] sm:$0xf]
      %v1390 = vld [vmem:[%s1384 + $0x14] sm:$0xf]
      %v1391 = vld [vmem:[%s1384 + $0x18] sm:$0xf]
      %v1392 = vld [vmem:[%s1384 + $0x1c] sm:$0xf]
      %v1401 = vunpack.c.l.b16 %v1385
      %v1402 = vunpack.c.l.b16 %v1386
      %v1403 = vunpack.c.l.b16 %v1387
      %v1404 = vunpack.c.l.b16 %v1388
      %v1405 = vunpack.c.l.b16 %v1389
      %v1406 = vunpack.c.l.b16 %v1390
      %v1407 = vunpack.c.l.b16 %v1391
      %v1408 = vunpack.c.l.b16 %v1392
      %v1409 = vpack.c.b16 %v1402, %v1401
      %v1410 = vpack.c.b16 %v1404, %v1403
      %v1411 = vpack.c.b16 %v1406, %v1405
      %v1412 = vpack.c.b16 %v1408, %v1407
      %v1418 = vsel %vm456, %v1383, 0
      %1420 = vmatprep.subr.bf16.mxu0 0
      %1421 = vmatpush1.bf16.msra.mxu0 %v1409
      %1422 = vmatprep.subr.bf16.mxu0 0
      %1423 = vmatpush1.bf16.msra.mxu0 %v1410
      %1424 = vmatprep.subr.bf16.mxu0 0
      %1425 = vmatpush1.bf16.msra.mxu0 %v1411
      %1426 = vmatprep.subr.bf16.mxu0 0
      %1427 = vmatpush1.bf16.msra.mxu0 %v1412
      %1428 = vmatprep.subr.bf16.mxu0 0
      %1429 = vmatpush1.bf16.msra.mxu0 0
      %1430 = vmatprep.subr.bf16.mxu0 0
      %1431 = vmatpush1.bf16.msra.mxu0 0
      %1432 = vmatprep.subr.bf16.mxu0 0
      %1433 = vmatpush1.bf16.msra.mxu0 0
      %1434 = vmatprep.subr.bf16.mxu0 0
      %1435 = vmatpush1.bf16.msra.mxu0 0
      %1436 = vmatprep.subr.bf16.mxu0 0
      %1437 = vmatpush1.bf16.msra.mxu0 0
      %1438 = vmatprep.subr.bf16.mxu0 0
      %1439 = vmatpush1.bf16.msra.mxu0 0
      %1440 = vmatprep.subr.bf16.mxu0 0
      %1441 = vmatpush1.bf16.msra.mxu0 0
      %1442 = vmatprep.subr.bf16.mxu0 0
      %1443 = vmatpush1.bf16.msra.mxu0 0
      %1444 = vmatprep.subr.bf16.mxu0 0
      %1445 = vmatpush1.bf16.msra.mxu0 0
      %1446 = vmatprep.subr.bf16.mxu0 0
      %1447 = vmatpush1.bf16.msra.mxu0 0
      %1448 = vmatprep.subr.bf16.mxu0 0
      %1449 = vmatpush1.bf16.msra.mxu0 0
      %1450 = vmatprep.subr.bf16.mxu0 0
      %1451 = vmatpush1.bf16.msra.mxu0 0
      %1452 = vmatprep.mubr.bf16.mxu0 0
      %1453 = vmatmul.mubr.bf16.gmra.mrb[0].mxu0 %v796
      %v1454 = vpop.f32.mrb[0].mxu0
      %v1455 = vadd.f32 0.0, %v1454
      %v1456 = vpop.f32.mrb[0].mxu0
      %v1457 = vpop.f32.mrb[0].mxu0
      %v1458 = vadd.f32 0.0, %v1457
      %v1459 = vpop.f32.mrb[0].mxu0
      %1460 = vmatprep.mubr.bf16.mxu0 0
      %1461 = vmatmul.mubr.bf16.gmra.mrb[0].mxu0 %v1418
      %v1462 = vpop.f32.mrb[0].mxu0
      %v1463 = vadd.f32 0.0, %v1462
      %v1464 = vpop.f32.mrb[0].mxu0
      %v1465 = vpop.f32.mrb[0].mxu0
      %v1466 = vadd.f32 0.0, %v1465
      %v1467 = vpop.f32.mrb[0].mxu0
      %1468 = vdwg.mxu0
      %v1469 = vadd.f32 %v1379, %v1455
      %v1470 = vadd.f32 %v1380, %v1458
      %v1471 = vadd.f32 %v1381, %v1463
      %v1472 = vadd.f32 %v1382, %v1466
      %1473 = vst [vmem:[#allocation3] sm:$0xff] %v1469
      %1474 = vst [vmem:[#allocation3 + $0x8] sm:$0xff] %v1470
      %1475 = vst [vmem:[#allocation3 + $0x10] sm:$0xff] %v1471
      %1476 = vst [vmem:[#allocation3 + $0x18] sm:$0xff] %v1472
      %v1477 = vld [vmem:[#allocation3] sm:$0xff]
      %v1478 = vld [vmem:[#allocation3 + $0x8] sm:$0xff]
      %v1479 = vld [vmem:[#allocation3 + $0x10] sm:$0xff]
      %v1480 = vld [vmem:[#allocation3 + $0x18] sm:$0xff]
      %v1481 = vmax.f32 %v1477, 0.0
      %v1482 = vmax.f32 %v1478, 0.0
      %v1483 = vmax.f32 %v1479, 0.0
      %v1484 = vmax.f32 %v1480, 0.0
      %v1485 = vpack.c.bf16 %v1481, %v1481
      %v1486 = vpack.c.bf16 %v1482, %v1482
      %v1487 = vpack.c.bf16 %v1483, %v1483
      %v1488 = vpack.c.bf16 %v1484, %v1484
      %1489 = vst [vmem:[%s432] sm:$0xf] %v1485
      %1490 = vst [vmem:[%s432 + $0x4] sm:$0xf] %v1486
      %1491 = vst [vmem:[%s432 + $0x8] sm:$0xf] %v1487
      %1492 = vst [vmem:[%s432 + $0xc] sm:$0xf] %v1488
      %s1493 = smul.u32 4, %s21
      %p1494 = scmp.lt.s32.totalorder %s20, 1
      %s1495 = scalar_select %p1494, %s20, 1
      %p1496 = scmp.lt.s32.totalorder %s1493, 7
      %s1497 = scalar_select %p1496, %s1493, 7
      %s1498 = smul.addr %s1495, 8
      %s1499 = sadd.s32 %s1497, %s1498
      %s1500 = smul.addr %s1499, 4
      %s1501 = scalar_lea.vmem %s5, %s1500
      // Predicated region
      $region41: #{vgg_feature_extractor.6} parent=39 // pred_check
        %p1502 = pneg %p202
      $region42: #{vgg_feature_extractor.6} parent=39 // pred_check_branch
        %1504 = sbr.rel (%p1502) target = $region44
      $region43: #{vgg_feature_extractor.6} parent=39 // pred_region
        %s1505 = smul.u32 4, %s21
      $region44: #{vgg_feature_extractor.6} parent=39 // pred_fallthru
        _
    $region40: #{vgg_feature_extractor.6} parent=5 // pred_fallthru
      _
    %p1506 = scmp.le.s32.totalorder 2, %s11
    // Predicated region
    $region45: #{vgg_feature_extractor.6} parent=5 // pred_check
      %p1507 = pneg %p1506
    $region46: #{vgg_feature_extractor.6} parent=5 // pred_check_branch
      %1509 = sbr.rel (%p1507) target = $region48
    $region47: #{vgg_feature_extractor.6} parent=5 // pred_region
      %s1510 = ssub.s32 %s11, 2
      // Predicated region
      $region49: #{vgg_feature_extractor.6} parent=47 // pred_check
        %p1511 = pneg %p208
      $region50: #{vgg_feature_extractor.6} parent=47 // pred_check_branch
        %1513 = sbr.rel (%p1511) target = $region52
      $region51: #{vgg_feature_extractor.6} parent=47 // pred_region
        %s1514 = smul.u32 4, %s23
        %p1515 = scmp.lt.s32.totalorder %s22, 1
        %s1516 = scalar_select %p1515, %s22, 1
        %p1517 = scmp.lt.s32.totalorder %s1514, 7
        %s1518 = scalar_select %p1517, %s1514, 7
        %s1519 = smul.addr %s1516, 8
        %s1520 = sadd.s32 %s1518, %s1519
        %s1521 = smul.addr %s1520, 4
        %s1522 = scalar_lea.vmem %s5, %s1521
      $region52: #{vgg_feature_extractor.6} parent=47 // pred_fallthru
        _
    $region48: #{vgg_feature_extractor.6} parent=5 // pred_fallthru
      _
  $region6: #{vgg_feature_extractor.6} parent=0 // loop_footer
    %s15 = sadd.s32 1, %s11
  $region7: #{vgg_feature_extractor.6} parent=0 // loop_footer_branch
    %10 = sbr.rel target = $region3
  $region8: #{vgg_feature_extractor.6} parent=0 // loop_exit
    _

// kernel: vgg_feature_extractor.5
$region0: #{vgg_feature_extractor.5}
  #allocation0 [shape = 'u32[]', space=smem, size = 0x4, offset = 0x4, fixed_abs, tag = 'smem constant byte address 0x4 - core index']
  #allocation1 [shape = 'u32[144,128]{1,0:T(1,128)}', space=vmem, size = 0x12000, scoped, tag = 'internal scratch']
  #allocation2 [shape = 'f32[10,32,64]{2,1,0:T(8,128)}', space=vmem, size = 0x28000, scoped, tag = 'scratch operand']
  #allocation3 [shape = 'f32[128,64]{1,0:T(8,128)}', space=vmem, size = 0x10000, scoped, tag = 'scratch operand']
  %s0 = inlined_call_operand.vmem [shape: bf16[2,16,16,64], index: 0, kind: input, shape index: {}, may-alias: {0,1,2}]
  %s1 = inlined_call_operand.vmem [shape: bf16[2,16,16,64], index: 1, kind: input, shape index: {}, may-alias: {0,1,2}]
  %s2 = inlined_call_operand.vmem [shape: bf16[2,16,16,64], index: 2, kind: input, shape index: {}, may-alias: {0,1,2}]
  %s3 = inlined_call_operand.vmem [shape: bf16[3,3,64,64], index: 3, kind: input, shape index: {}]
  %s4 = inlined_call_operand.vmem [shape: f32[1,64], index: 4, kind: input, shape index: {}]
  %s5 = inlined_call_operand.vmem [shape: bf16[2,8,8,64], index: 5, kind: output, shape index: {}]
  %s6 = sld [smem:[#allocation0]]
  $region53: #{vgg_feature_extractor.5} parent=0
    _
  %s8 = ssub.s32 1, %s6
  %s9 = scalar_select 0, %s8, %s6
  loop: start=0, step=1, limit=6
  $region2: #{vgg_feature_extractor.5} parent=0 // loop_pre_header
    _
  $region3: #{vgg_feature_extractor.5} parent=0 // loop_header
    %s11 = sphi 0, %s15
    %p12 = scmp.ge.s32.totalorder %s11, 6
    %s18 = sphi 0, %s30
    %s19 = sphi 0, %s26
    %s20 = sphi 0, %s18
    %s21 = sphi 0, %s19
    %s22 = sphi 0, %s20
    %s23 = sphi 0, %s21
    %s43 = sphi 0, %s45
    %s46 = sphi 0, %s43
    %s47 = sphi 0, %s46
    %s63 = sphi 0, %s47
    %s81 = sphi 0, %s83
    %s84 = sphi 0, %s81
    %s85 = sphi 0, %s84
    %s101 = sphi 0, %s85
    %s119 = sphi 0, %s121
    %s122 = sphi 0, %s119
    %s123 = sphi 0, %s122
    %s139 = sphi 0, %s123
    %s143 = sphi 0, %s143
    %s145 = sphi 0, %s143
    %s146 = sphi 0, %s145
    %s160 = sphi 0, %s146
    %s164 = sphi 0, %s164
    %s166 = sphi 0, %s164
    %s167 = sphi 0, %s166
    %s181 = sphi 0, %s167
    %s189 = sphi 0, %s191
    %s192 = sphi 0, %s189
    %s193 = sphi 0, %s192
    %s209 = sphi 0, %s193
  $region4: #{vgg_feature_extractor.5} parent=0 // loop_header_branch
    %14 = sbr.rel (%p12) target = $region8
  $region5: #{vgg_feature_extractor.5} parent=0 // loop_body
    %s16 = ssub.s32 %s11, 1
    %s17 = ssub.s32 %s11, 2
    %s24 = sadd.s32 1, %s19
    %p25 = scmp.ge.s32.totalorder %s24, 2
    %s26 = scalar_select %p25, 0, %s24
    %s27 = sadd.s32 1, %s18
    %s28 = scalar_select %p25, %s27, %s18
    %p29 = scmp.ge.s32.totalorder %s28, 2
    %s30 = scalar_select %p29, 0, %s28
    %p31 = scmp.gt.s32.totalorder %s19, 0
    %s32 = scalar_select %p31, %s19, 0
    %p33 = scmp.lt.s32.totalorder %s32, 1
    %s34 = scalar_select %p33, %s32, 1
    %p35 = scmp.gt.s32.totalorder %s26, 0
    %s36 = scalar_select %p35, %s26, 0
    %p37 = scmp.lt.s32.totalorder %s36, 1
    %s38 = scalar_select %p37, %s36, 1
    %s39 = ssub.s32 %s18, %s30
    %s40 = ssub.s32 %s34, %s38
    %s41 = sor.u32 %s39, %s40
    %p42 = scmp.eq.s32.totalorder %s41, 0
    %s44 = sadd.s32 %s43, 1
    %s45 = scalar_select %p42, %s43, %s44
    %p48 = pneg %p42
    %p49 = scmp.eq.s32.totalorder %s11, 3
    %p50 = por %p48, %p49
    %p51 = scmp.ne.s32.totalorder %s43, %s46
    %p52 = scmp.eq.s32.totalorder %s11, 0
    %p53 = por %p51, %p52
    %p54 = scmp.ne.s32.totalorder %s43, %s46
    %p55 = scmp.eq.s32.totalorder %s16, 3
    %p56 = por %p54, %p55
    %p57 = scmp.ne.s32.totalorder %s46, %s47
    %p58 = scmp.eq.s32.totalorder %s16, 0
    %p59 = por %p57, %p58
    %p60 = scmp.ne.s32.totalorder %s46, %s47
    %p61 = scmp.eq.s32.totalorder %s17, 3
    %p62 = por %p60, %p61
    %p64 = scmp.ne.s32.totalorder %s47, %s63
    %p65 = scmp.eq.s32.totalorder %s17, 0
    %p66 = por %p64, %p65
    %s67 = sadd.s32 %s19, 4294967295
    %p68 = scmp.gt.s32.totalorder %s67, 0
    %s69 = scalar_select %p68, %s67, 0
    %p70 = scmp.lt.s32.totalorder %s69, 1
    %s71 = scalar_select %p70, %s69, 1
    %s72 = sadd.s32 %s26, 4294967295
    %p73 = scmp.gt.s32.totalorder %s72, 0
    %s74 = scalar_select %p73, %s72, 0
    %p75 = scmp.lt.s32.totalorder %s74, 1
    %s76 = scalar_select %p75, %s74, 1
    %s77 = ssub.s32 %s18, %s30
    %s78 = ssub.s32 %s71, %s76
    %s79 = sor.u32 %s77, %s78
    %p80 = scmp.eq.s32.totalorder %s79, 0
    %s82 = sadd.s32 %s81, 1
    %s83 = scalar_select %p80, %s81, %s82
    %p86 = pneg %p80
    %p87 = scmp.eq.s32.totalorder %s11, 3
    %p88 = por %p86, %p87
    %p89 = scmp.ne.s32.totalorder %s81, %s84
    %p90 = scmp.eq.s32.totalorder %s11, 0
    %p91 = por %p89, %p90
    %p92 = scmp.ne.s32.totalorder %s81, %s84
    %p93 = scmp.eq.s32.totalorder %s16, 3
    %p94 = por %p92, %p93
    %p95 = scmp.ne.s32.totalorder %s84, %s85
    %p96 = scmp.eq.s32.totalorder %s16, 0
    %p97 = por %p95, %p96
    %p98 = scmp.ne.s32.totalorder %s84, %s85
    %p99 = scmp.eq.s32.totalorder %s17, 3
    %p100 = por %p98, %p99
    %p102 = scmp.ne.s32.totalorder %s85, %s101
    %p103 = scmp.eq.s32.totalorder %s17, 0
    %p104 = por %p102, %p103
    %s105 = sadd.s32 %s19, 1
    %p106 = scmp.gt.s32.totalorder %s105, 0
    %s107 = scalar_select %p106, %s105, 0
    %p108 = scmp.lt.s32.totalorder %s107, 1
    %s109 = scalar_select %p108, %s107, 1
    %s110 = sadd.s32 %s26, 1
    %p111 = scmp.gt.s32.totalorder %s110, 0
    %s112 = scalar_select %p111, %s110, 0
    %p113 = scmp.lt.s32.totalorder %s112, 1
    %s114 = scalar_select %p113, %s112, 1
    %s115 = ssub.s32 %s18, %s30
    %s116 = ssub.s32 %s109, %s114
    %s117 = sor.u32 %s115, %s116
    %p118 = scmp.eq.s32.totalorder %s117, 0
    %s120 = sadd.s32 %s119, 1
    %s121 = scalar_select %p118, %s119, %s120
    %p124 = pneg %p118
    %p125 = scmp.eq.s32.totalorder %s11, 3
    %p126 = por %p124, %p125
    %p127 = scmp.ne.s32.totalorder %s119, %s122
    %p128 = scmp.eq.s32.totalorder %s11, 0
    %p129 = por %p127, %p128
    %p130 = scmp.ne.s32.totalorder %s119, %s122
    %p131 = scmp.eq.s32.totalorder %s16, 3
    %p132 = por %p130, %p131
    %p133 = scmp.ne.s32.totalorder %s122, %s123
    %p134 = scmp.eq.s32.totalorder %s16, 0
    %p135 = por %p133, %p134
    %p136 = scmp.ne.s32.totalorder %s122, %s123
    %p137 = scmp.eq.s32.totalorder %s17, 3
    %p138 = por %p136, %p137
    %p140 = scmp.ne.s32.totalorder %s123, %s139
    %p141 = scmp.eq.s32.totalorder %s17, 0
    %p142 = por %p140, %p141
    %s144 = sadd.s32 %s143, 1
    %p147 = scmp.eq.s32.totalorder %s11, 3
    %p148 = scmp.ne.s32.totalorder %s143, %s145
    %p149 = scmp.eq.s32.totalorder %s11, 0
    %p150 = por %p148, %p149
    %p151 = scmp.ne.s32.totalorder %s143, %s145
    %p152 = scmp.eq.s32.totalorder %s16, 3
    %p153 = por %p151, %p152
    %p154 = scmp.ne.s32.totalorder %s145, %s146
    %p155 = scmp.eq.s32.totalorder %s16, 0
    %p156 = por %p154, %p155
    %p157 = scmp.ne.s32.totalorder %s145, %s146
    %p158 = scmp.eq.s32.totalorder %s17, 3
    %p159 = por %p157, %p158
    %p161 = scmp.ne.s32.totalorder %s146, %s160
    %p162 = scmp.eq.s32.totalorder %s17, 0
    %p163 = por %p161, %p162
    %s165 = sadd.s32 %s164, 1
    %p168 = scmp.eq.s32.totalorder %s11, 3
    %p169 = scmp.ne.s32.totalorder %s164, %s166
    %p170 = scmp.eq.s32.totalorder %s11, 0
    %p171 = por %p169, %p170
    %p172 = scmp.ne.s32.totalorder %s164, %s166
    %p173 = scmp.eq.s32.totalorder %s16, 3
    %p174 = por %p172, %p173
    %p175 = scmp.ne.s32.totalorder %s166, %s167
    %p176 = scmp.eq.s32.totalorder %s16, 0
    %p177 = por %p175, %p176
    %p178 = scmp.ne.s32.totalorder %s166, %s167
    %p179 = scmp.eq.s32.totalorder %s17, 3
    %p180 = por %p178, %p179
    %p182 = scmp.ne.s32.totalorder %s167, %s181
    %p183 = scmp.eq.s32.totalorder %s17, 0
    %p184 = por %p182, %p183
    %s185 = ssub.s32 %s18, %s30
    %s186 = ssub.s32 %s19, %s26
    %s187 = sor.u32 %s185, %s186
    %p188 = scmp.eq.s32.totalorder %s187, 0
    %s190 = sadd.s32 %s189, 1
    %s191 = scalar_select %p188, %s189, %s190
    %p194 = pneg %p188
    %p195 = scmp.eq.s32.totalorder %s11, 3
    %p196 = por %p194, %p195
    %p197 = scmp.ne.s32.totalorder %s189, %s192
    %p198 = scmp.eq.s32.totalorder %s11, 0
    %p199 = por %p197, %p198
    %p200 = scmp.ne.s32.totalorder %s189, %s192
    %p201 = scmp.eq.s32.totalorder %s16, 3
    %p202 = por %p200, %p201
    %p203 = scmp.ne.s32.totalorder %s192, %s193
    %p204 = scmp.eq.s32.totalorder %s16, 0
    %p205 = por %p203, %p204
    %p206 = scmp.ne.s32.totalorder %s192, %s193
    %p207 = scmp.eq.s32.totalorder %s17, 3
    %p208 = por %p206, %p207
    %p210 = scmp.ne.s32.totalorder %s193, %s209
    %p211 = scmp.eq.s32.totalorder %s17, 0
    %p212 = por %p210, %p211
    %p213 = scmp.le.s32.totalorder 1, %s11
    %p214 = scmp.lt.s32.totalorder %s11, 5
    %p215 = pnand %p213, %p214
    %p216 = pneg %p215
    // Predicated region
    $region9: #{vgg_feature_extractor.5} parent=5 // pred_check
      _
    $region10: #{vgg_feature_extractor.5} parent=5 // pred_check_branch
      %218 = sbr.rel (%p215) target = $region12
    $region11: #{vgg_feature_extractor.5} parent=5 // pred_region
      %s219 = ssub.s32 %s11, 1
      // Predicated region
      $region13: #{vgg_feature_extractor.5} parent=11 // pred_check
        %p220 = pneg %p156
      $region14: #{vgg_feature_extractor.5} parent=11 // pred_check_branch
        %222 = sbr.rel (%p220) target = $region16
      $region15: #{vgg_feature_extractor.5} parent=11 // pred_region
        _
      $region16: #{vgg_feature_extractor.5} parent=11 // pred_fallthru
        _
      // Predicated region
      $region17: #{vgg_feature_extractor.5} parent=11 // pred_check
        %p223 = pneg %p177
      $region18: #{vgg_feature_extractor.5} parent=11 // pred_check_branch
        %225 = sbr.rel (%p223) target = $region20
      $region19: #{vgg_feature_extractor.5} parent=11 // pred_region
        _
      $region20: #{vgg_feature_extractor.5} parent=11 // pred_fallthru
        _
    $region12: #{vgg_feature_extractor.5} parent=5 // pred_fallthru
      _
    %p226 = scmp.lt.s32.totalorder %s11, 4
    // Predicated region
    $region21: #{vgg_feature_extractor.5} parent=5 // pred_check
      %p227 = pneg %p226
    $region22: #{vgg_feature_extractor.5} parent=5 // pred_check_branch
      %229 = sbr.rel (%p227) target = $region24
    $region23: #{vgg_feature_extractor.5} parent=5 // pred_region
      // Predicated region
      $region25: #{vgg_feature_extractor.5} parent=23 // pred_check
        %p230 = pneg %p53
      $region26: #{vgg_feature_extractor.5} parent=23 // pred_check_branch
        %232 = sbr.rel (%p230) target = $region28
      $region27: #{vgg_feature_extractor.5} parent=23 // pred_region
        %p233 = scmp.gt.s32.totalorder %s19, 0
        %s234 = scalar_select %p233, %s19, 0
        %p235 = scmp.lt.s32.totalorder %s234, 1
        %s236 = scalar_select %p235, %s234, 1
        %s237 = smul.u32 8, %s236
        %p238 = scmp.lt.s32.totalorder %s18, 1
        %s239 = scalar_select %p238, %s18, 1
        %p240 = scmp.lt.s32.totalorder %s237, 15
        %s241 = scalar_select %p240, %s237, 15
        %s242 = smul.addr %s241, 2
        %s243 = smul.addr %s239, 32
        %s244 = sadd.s32 %s242, %s243
        %s245 = smul.addr %s244, 4
        %s246 = scalar_lea.vmem %s0, %s245
        %p247 = scmp.gt.s32.totalorder %s19, 0
        %s248 = scalar_select %p247, %s19, 0
        %p249 = scmp.lt.s32.totalorder %s248, 1
        %s250 = scalar_select %p249, %s248, 1
        %s251 = smul.u32 8, %s250
      $region28: #{vgg_feature_extractor.5} parent=23 // pred_fallthru
        _
      // Predicated region
      $region29: #{vgg_feature_extractor.5} parent=23 // pred_check
        %p252 = pneg %p91
      $region30: #{vgg_feature_extractor.5} parent=23 // pred_check_branch
        %254 = sbr.rel (%p252) target = $region32
      $region31: #{vgg_feature_extractor.5} parent=23 // pred_region
        %s255 = sadd.s32 %s19, 4294967295
        %p256 = scmp.gt.s32.totalorder %s255, 0
        %s257 = scalar_select %p256, %s255, 0
        %p258 = scmp.lt.s32.totalorder %s257, 1
        %s259 = scalar_select %p258, %s257, 1
        %s260 = smul.u32 8, %s259
        %p261 = scmp.lt.s32.totalorder %s18, 1
        %s262 = scalar_select %p261, %s18, 1
        %p263 = scmp.lt.s32.totalorder %s260, 15
        %s264 = scalar_select %p263, %s260, 15
        %s265 = smul.addr %s264, 2
        %s266 = smul.addr %s262, 32
        %s267 = sadd.s32 %s265, %s266
        %s268 = smul.addr %s267, 4
        %s269 = scalar_lea.vmem %s1, %s268
        %s270 = sadd.s32 %s19, 4294967295
        %p271 = scmp.gt.s32.totalorder %s270, 0
        %s272 = scalar_select %p271, %s270, 0
        %p273 = scmp.lt.s32.totalorder %s272, 1
        %s274 = scalar_select %p273, %s272, 1
        %s275 = smul.u32 8, %s274
      $region32: #{vgg_feature_extractor.5} parent=23 // pred_fallthru
        _
      // Predicated region
      $region33: #{vgg_feature_extractor.5} parent=23 // pred_check
        %p276 = pneg %p129
      $region34: #{vgg_feature_extractor.5} parent=23 // pred_check_branch
        %278 = sbr.rel (%p276) target = $region36
      $region35: #{vgg_feature_extractor.5} parent=23 // pred_region
        %s279 = sadd.s32 %s19, 1
        %p280 = scmp.gt.s32.totalorder %s279, 0
        %s281 = scalar_select %p280, %s279, 0
        %p282 = scmp.lt.s32.totalorder %s281, 1
        %s283 = scalar_select %p282, %s281, 1
        %s284 = smul.u32 8, %s283
        %p285 = scmp.lt.s32.totalorder %s18, 1
        %s286 = scalar_select %p285, %s18, 1
        %p287 = scmp.lt.s32.totalorder %s284, 15
        %s288 = scalar_select %p287, %s284, 15
        %s289 = smul.addr %s288, 2
        %s290 = smul.addr %s286, 32
        %s291 = sadd.s32 %s289, %s290
        %s292 = smul.addr %s291, 4
        %s293 = scalar_lea.vmem %s2, %s292
        %s294 = sadd.s32 %s19, 1
        %p295 = scmp.gt.s32.totalorder %s294, 0
        %s296 = scalar_select %p295, %s294, 0
        %p297 = scmp.lt.s32.totalorder %s296, 1
        %s298 = scalar_select %p297, %s296, 1
        %s299 = smul.u32 8, %s298
      $region36: #{vgg_feature_extractor.5} parent=23 // pred_fallthru
        _
    $region24: #{vgg_feature_extractor.5} parent=5 // pred_fallthru
      _
    %p300 = scmp.le.s32.totalorder 1, %s11
    %p301 = scmp.lt.s32.totalorder %s11, 5
    %p302 = pnand %p300, %p301
    %p303 = pneg %p302
    // Predicated region
    $region37: #{vgg_feature_extractor.5} parent=5 // pred_check
      _
    $region38: #{vgg_feature_extractor.5} parent=5 // pred_check_branch
      %305 = sbr.rel (%p302) target = $region40
    $region39: #{vgg_feature_extractor.5} parent=5 // pred_region
      %s306 = ssub.s32 %s11, 1
      %p307 = scmp.gt.s32.totalorder %s21, 0
      %s308 = scalar_select %p307, %s21, 0
      %p309 = scmp.lt.s32.totalorder %s308, 1
      %s310 = scalar_select %p309, %s308, 1
      %s311 = smul.u32 8, %s310
      %p312 = scmp.lt.s32.totalorder %s20, 1
      %s313 = scalar_select %p312, %s20, 1
      %p314 = scmp.lt.s32.totalorder %s311, 15
      %s315 = scalar_select %p314, %s311, 15
      %s316 = smul.addr %s315, 2
      %s317 = smul.addr %s313, 32
      %s318 = sadd.s32 %s316, %s317
      %s319 = smul.addr %s318, 4
      %s320 = scalar_lea.vmem %s0, %s319
      %p321 = pneg %p59
      %p322 = pneg %p56
      %s323 = sadd.s32 %s21, 4294967295
      %p324 = scmp.gt.s32.totalorder %s323, 0
      %s325 = scalar_select %p324, %s323, 0
      %p326 = scmp.lt.s32.totalorder %s325, 1
      %s327 = scalar_select %p326, %s325, 1
      %s328 = smul.u32 8, %s327
      %p329 = scmp.lt.s32.totalorder %s20, 1
      %s330 = scalar_select %p329, %s20, 1
      %p331 = scmp.lt.s32.totalorder %s328, 15
      %s332 = scalar_select %p331, %s328, 15
      %s333 = smul.addr %s332, 2
      %s334 = smul.addr %s330, 32
      %s335 = sadd.s32 %s333, %s334
      %s336 = smul.addr %s335, 4
      %s337 = scalar_lea.vmem %s1, %s336
      %p338 = pneg %p97
      %p339 = pneg %p94
      %s340 = sadd.s32 %s21, 1
      %p341 = scmp.gt.s32.totalorder %s340, 0
      %s342 = scalar_select %p341, %s340, 0
      %p343 = scmp.lt.s32.totalorder %s342, 1
      %s344 = scalar_select %p343, %s342, 1
      %s345 = smul.u32 8, %s344
      %p346 = scmp.lt.s32.totalorder %s20, 1
      %s347 = scalar_select %p346, %s20, 1
      %p348 = scmp.lt.s32.totalorder %s345, 15
      %s349 = scalar_select %p348, %s345, 15
      %s350 = smul.addr %s349, 2
      %s351 = smul.addr %s347, 32
      %s352 = sadd.s32 %s350, %s351
      %s353 = smul.addr %s352, 4
      %s354 = scalar_lea.vmem %s2, %s353
      %p355 = pneg %p135
      %p356 = pneg %p132
      %p357 = pneg %p156
      %p358 = pneg %p153
      %p359 = pneg %p177
      %p360 = pneg %p174
      %p361 = pneg %p205
      %p362 = pneg %p202
      %s363 = smul.u32 4, %s21
      %p364 = scmp.lt.s32.totalorder %s20, 1
      %s365 = scalar_select %p364, %s20, 1
      %p366 = scmp.lt.s32.totalorder %s363, 7
      %s367 = scalar_select %p366, %s363, 7
      %s368 = smul.addr %s365, 8
      %s369 = sadd.s32 %s367, %s368
      %s370 = smul.addr %s369, 4
      %s371 = scalar_lea.vmem %s5, %s370
      %p372 = scmp.gt.s32.totalorder %s21, 0
      %s373 = scalar_select %p372, %s21, 0
      %p374 = scmp.lt.s32.totalorder %s373, 1
      %s375 = scalar_select %p374, %s373, 1
      %s376 = smul.u32 8, %s375
      %p377 = scmp.lt.s32.totalorder %s20, 1
      %s378 = scalar_select %p377, %s20, 1
      %p379 = scmp.lt.s32.totalorder %s376, 15
      %s380 = scalar_select %p379, %s376, 15
      %s381 = smul.addr %s380, 2
      %s382 = smul.addr %s378, 32
      %s383 = sadd.s32 %s381, %s382
      %s384 = smul.addr %s383, 4
      %s385 = scalar_lea.vmem %s0, %s384
      %p386 = scmp.gt.s32.totalorder %s21, 0
      %s387 = scalar_select %p386, %s21, 0
      %p388 = scmp.lt.s32.totalorder %s387, 1
      %s389 = scalar_select %p388, %s387, 1
      %s390 = smul.u32 8, %s389
      %s391 = sadd.s32 %s21, 4294967295
      %p392 = scmp.gt.s32.totalorder %s391, 0
      %s393 = scalar_select %p392, %s391, 0
      %p394 = scmp.lt.s32.totalorder %s393, 1
      %s395 = scalar_select %p394, %s393, 1
      %s396 = smul.u32 8, %s395
      %p397 = scmp.lt.s32.totalorder %s20, 1
      %s398 = scalar_select %p397, %s20, 1
      %p399 = scmp.lt.s32.totalorder %s396, 15
      %s400 = scalar_select %p399, %s396, 15
      %s401 = smul.addr %s400, 2
      %s402 = smul.addr %s398, 32
      %s403 = sadd.s32 %s401, %s402
      %s404 = smul.addr %s403, 4
      %s405 = scalar_lea.vmem %s1, %s404
      %s406 = sadd.s32 %s21, 4294967295
      %p407 = scmp.gt.s32.totalorder %s406, 0
      %s408 = scalar_select %p407, %s406, 0
      %p409 = scmp.lt.s32.totalorder %s408, 1
      %s410 = scalar_select %p409, %s408, 1
      %s411 = smul.u32 8, %s410
      %s412 = sadd.s32 %s21, 1
      %p413 = scmp.gt.s32.totalorder %s412, 0
      %s414 = scalar_select %p413, %s412, 0
      %p415 = scmp.lt.s32.totalorder %s414, 1
      %s416 = scalar_select %p415, %s414, 1
      %s417 = smul.u32 8, %s416
      %p418 = scmp.lt.s32.totalorder %s20, 1
      %s419 = scalar_select %p418, %s20, 1
      %p420 = scmp.lt.s32.totalorder %s417, 15
      %s421 = scalar_select %p420, %s417, 15
      %s422 = smul.addr %s421, 2
      %s423 = smul.addr %s419, 32
      %s424 = sadd.s32 %s422, %s423
      %s425 = smul.addr %s424, 4
      %s426 = scalar_lea.vmem %s2, %s425
      %s427 = sadd.s32 %s21, 1
      %p428 = scmp.gt.s32.totalorder %s427, 0
      %s429 = scalar_select %p428, %s427, 0
      %p430 = scmp.lt.s32.totalorder %s429, 1
      %s431 = scalar_select %p430, %s429, 1
      %s432 = smul.u32 8, %s431
      %s433 = smul.u32 4, %s21
      %p434 = scmp.lt.s32.totalorder %s20, 1
      %s435 = scalar_select %p434, %s20, 1
      %p436 = scmp.lt.s32.totalorder %s433, 7
      %s437 = scalar_select %p436, %s433, 7
      %s438 = smul.addr %s435, 8
      %s439 = sadd.s32 %s437, %s438
      %s440 = smul.addr %s439, 4
      %s441 = scalar_lea.vmem %s5, %s440
      %s442 = smul.u32 4, %s21
      %v444 = vld [vmem:[%s385] sm:$0xf]
      %v445 = vld [vmem:[%s385 + $0x4] sm:$0xf]
      %v446 = vld [vmem:[%s385 + $0x8] sm:$0xf]
      %v447 = vld [vmem:[%s385 + $0xc] sm:$0xf]
      %v448 = vld [vmem:[%s385 + $0x10] sm:$0xf]
      %v449 = vld [vmem:[%s385 + $0x14] sm:$0xf]
      %v450 = vld [vmem:[%s385 + $0x18] sm:$0xf]
      %v451 = vld [vmem:[%s385 + $0x1c] sm:$0xf]
      %v452 = vld [vmem:[%s385 + $0x20] sm:$0xf]
      %v453 = vld [vmem:[%s385 + $0x24] sm:$0xf]
      %v454 = vld [vmem:[%s385 + $0x28] sm:$0xf]
      %v455 = vld [vmem:[%s385 + $0x2c] sm:$0xf]
      %v456 = vld [vmem:[%s385 + $0x30] sm:$0xf]
      %v457 = vld [vmem:[%s385 + $0x34] sm:$0xf]
      %v458 = vld [vmem:[%s385 + $0x38] sm:$0xf]
      %v459 = vld [vmem:[%s385 + $0x3c] sm:$0xf]
      %v460 = vunpack.c.l.bf16 %v444
      %v461 = vunpack.c.l.bf16 %v445
      %v462 = vunpack.c.l.bf16 %v446
      %v463 = vunpack.c.l.bf16 %v447
      %v464 = vunpack.c.l.bf16 %v448
      %v465 = vunpack.c.l.bf16 %v449
      %v466 = vunpack.c.l.bf16 %v450
      %v467 = vunpack.c.l.bf16 %v451
      %v468 = vunpack.c.l.bf16 %v452
      %v469 = vunpack.c.l.bf16 %v453
      %v470 = vunpack.c.l.bf16 %v454
      %v471 = vunpack.c.l.bf16 %v455
      %v472 = vunpack.c.l.bf16 %v456
      %v473 = vunpack.c.l.bf16 %v457
      %v474 = vunpack.c.l.bf16 %v458
      %v475 = vunpack.c.l.bf16 %v459
      %s476 = scalar_lea.vmem %s405, 56
      %v477 = vld [vmem:[%s476] sm:$0xf]
      %v478 = vld [vmem:[%s476 + $0x4] sm:$0xf]
      %v479 = vunpack.c.l.bf16 %v477
      %v480 = vunpack.c.l.bf16 %v478
      %v481 = vld [vmem:[%s426] sm:$0xf]
      %v482 = vld [vmem:[%s426 + $0x4] sm:$0xf]
      %v483 = vunpack.c.l.bf16 %v481
      %v484 = vunpack.c.l.bf16 %v482
      %p485 = scmp.gt.s32.totalorder %s21, 0
      %s486 = scalar_select %p485, 1.0, 0.0
      %v487 = vstv %s486
      %v488 = vmul.f32 %v479, %v487
      %v489 = vmul.f32 %v480, %v487
      %p490 = scmp.lt.s32.totalorder %s21, 1
      %s491 = scalar_select %p490, 1.0, 0.0
      %v492 = vstv %s491
      %v493 = vmul.f32 %v483, %v492
      %v494 = vmul.f32 %v484, %v492
      %vm495 = vcmask 523264
      %496 = vst.msk [vmem:[#allocation2] sm:$0xff] %vm495, 0.0
      %497 = vst.msk [vmem:[#allocation2 + $0x20] sm:$0xff] %vm495, 0.0
      %498 = vst.msk [vmem:[#allocation2 + $0x40] sm:$0xff] %vm495, 0.0
      %499 = vst.msk [vmem:[#allocation2 + $0x60] sm:$0xff] %vm495, 0.0
      %500 = vst.msk [vmem:[#allocation2 + $0x80] sm:$0xff] %vm495, 0.0
      %501 = vst.msk [vmem:[#allocation2 + $0xa0] sm:$0xff] %vm495, 0.0
      %502 = vst.msk [vmem:[#allocation2 + $0xc0] sm:$0xff] %vm495, 0.0
      %503 = vst.msk [vmem:[#allocation2 + $0xe0] sm:$0xff] %vm495, 0.0
      %504 = vst.msk [vmem:[#allocation2 + $0x100] sm:$0xff] %vm495, 0.0
      %505 = vst.msk [vmem:[#allocation2 + $0x120] sm:$0xff] %vm495, 0.0
      %506 = vst.msk [vmem:[#allocation2 + $0x18] sm:$0xff] %vm495, 0.0
      %507 = vst.msk [vmem:[#allocation2 + $0x38] sm:$0xff] %vm495, 0.0
      %508 = vst.msk [vmem:[#allocation2 + $0x58] sm:$0xff] %vm495, 0.0
      %509 = vst.msk [vmem:[#allocation2 + $0x78] sm:$0xff] %vm495, 0.0
      %510 = vst.msk [vmem:[#allocation2 + $0x98] sm:$0xff] %vm495, 0.0
      %511 = vst.msk [vmem:[#allocation2 + $0xb8] sm:$0xff] %vm495, 0.0
      %512 = vst.msk [vmem:[#allocation2 + $0xd8] sm:$0xff] %vm495, 0.0
      %513 = vst.msk [vmem:[#allocation2 + $0xf8] sm:$0xff] %vm495, 0.0
      %514 = vst.msk [vmem:[#allocation2 + $0x118] sm:$0xff] %vm495, 0.0
      %515 = vst.msk [vmem:[#allocation2 + $0x138] sm:$0xff] %vm495, 0.0
      %516 = vst.msk [vmem:[#allocation2 + $0x8] sm:$0xff] %vm495, %v488
      %517 = vst.msk [vmem:[#allocation2 + $0x10] sm:$0xff] %vm495, %v489
      %518 = vst.msk [vmem:[#allocation2 + $0x28] sm:$0xff] %vm495, %v460
      %519 = vst.msk [vmem:[#allocation2 + $0x30] sm:$0xff] %vm495, %v461
      %520 = vst.msk [vmem:[#allocation2 + $0x48] sm:$0xff] %vm495, %v462
      %521 = vst.msk [vmem:[#allocation2 + $0x50] sm:$0xff] %vm495, %v463
      %522 = vst.msk [vmem:[#allocation2 + $0x68] sm:$0xff] %vm495, %v464
      %523 = vst.msk [vmem:[#allocation2 + $0x70] sm:$0xff] %vm495, %v465
      %524 = vst.msk [vmem:[#allocation2 + $0x88] sm:$0xff] %vm495, %v466
      %525 = vst.msk [vmem:[#allocation2 + $0x90] sm:$0xff] %vm495, %v467
      %526 = vst.msk [vmem:[#allocation2 + $0xa8] sm:$0xff] %vm495, %v468
      %527 = vst.msk [vmem:[#allocation2 + $0xb0] sm:$0xff] %vm495, %v469
      %528 = vst.msk [vmem:[#allocation2 + $0xc8] sm:$0xff] %vm495, %v470
      %529 = vst.msk [vmem:[#allocation2 + $0xd0] sm:$0xff] %vm495, %v471
      %530 = vst.msk [vmem:[#allocation2 + $0xe8] sm:$0xff] %vm495, %v472
      %531 = vst.msk [vmem:[#allocation2 + $0xf0] sm:$0xff] %vm495, %v473
      %532 = vst.msk [vmem:[#allocation2 + $0x108] sm:$0xff] %vm495, %v474
      %533 = vst.msk [vmem:[#allocation2 + $0x110] sm:$0xff] %vm495, %v475
      %534 = vst.msk [vmem:[#allocation2 + $0x128] sm:$0xff] %vm495, %v493
      %535 = vst.msk [vmem:[#allocation2 + $0x130] sm:$0xff] %vm495, %v494
      %v536 = vld [vmem:[#allocation2] sm:$0xff]
      %v537 = vld [vmem:[#allocation2 + $0x8] sm:$0xff]
      %v538 = vld [vmem:[#allocation2 + $0x10] sm:$0xff]
      %v539 = vld [vmem:[#allocation2 + $0x18] sm:$0xff]
      %v540 = vld [vmem:[#allocation2 + $0x20] sm:$0xff]
      %v541 = vld [vmem:[#allocation2 + $0x28] sm:$0xff]
      %v542 = vld [vmem:[#allocation2 + $0x30] sm:$0xff]
      %v543 = vld [vmem:[#allocation2 + $0x38] sm:$0xff]
      %v544 = vld [vmem:[#allocation2 + $0x40] sm:$0xff]
      %v545 = vld [vmem:[#allocation2 + $0x48] sm:$0xff]
      %v546 = vld [vmem:[#allocation2 + $0x50] sm:$0xff]
      %v547 = vld [vmem:[#allocation2 + $0x58] sm:$0xff]
      %v548 = vld [vmem:[#allocation2 + $0x60] sm:$0xff]
      %v549 = vld [vmem:[#allocation2 + $0x68] sm:$0xff]
      %v550 = vld [vmem:[#allocation2 + $0x70] sm:$0xff]
      %v551 = vld [vmem:[#allocation2 + $0x78] sm:$0xff]
      %v552 = vld [vmem:[#allocation2 + $0x80] sm:$0xff]
      %v553 = vld [vmem:[#allocation2 + $0x88] sm:$0xff]
      %v554 = vld [vmem:[#allocation2 + $0x90] sm:$0xff]
      %v555 = vld [vmem:[#allocation2 + $0x98] sm:$0xff]
      %v556 = vld [vmem:[#allocation2 + $0xa0] sm:$0xff]
      %v557 = vld [vmem:[#allocation2 + $0xa8] sm:$0xff]
      %v558 = vld [vmem:[#allocation2 + $0xb0] sm:$0xff]
      %v559 = vld [vmem:[#allocation2 + $0xb8] sm:$0xff]
      %v560 = vld [vmem:[#allocation2 + $0xc0] sm:$0xff]
      %v561 = vld [vmem:[#allocation2 + $0xc8] sm:$0xff]
      %v562 = vld [vmem:[#allocation2 + $0xd0] sm:$0xff]
      %v563 = vld [vmem:[#allocation2 + $0xd8] sm:$0xff]
      %v564 = vld [vmem:[#allocation2 + $0xe0] sm:$0xff]
      %v565 = vld [vmem:[#allocation2 + $0xe8] sm:$0xff]
      %v566 = vld [vmem:[#allocation2 + $0xf0] sm:$0xff]
      %v567 = vld [vmem:[#allocation2 + $0xf8] sm:$0xff]
      %v568 = vld [vmem:[#allocation2 + $0x100] sm:$0xff]
      %v569 = vld [vmem:[#allocation2 + $0x108] sm:$0xff]
      %v570 = vld [vmem:[#allocation2 + $0x110] sm:$0xff]
      %v571 = vld [vmem:[#allocation2 + $0x118] sm:$0xff]
      %v572 = vld [vmem:[#allocation2 + $0x120] sm:$0xff]
      %v573 = vld [vmem:[#allocation2 + $0x128] sm:$0xff]
      %v574 = vld [vmem:[#allocation2 + $0x130] sm:$0xff]
      %v575 = vld [vmem:[#allocation2 + $0x138] sm:$0xff]
      %v576 = vld [vmem:[%s4] sm:$0x1]
      %v578 = vlaneseq
      %v579 = vshrl.u32 %v578, 7
      %v580 = vsub.s32 0, %v579
      %v581 = vrot.slane %v576, %v580
      %583 = vst.msk [vmem:[#allocation3] sm:$0xff] %vm495, %v581
      %584 = vst.msk [vmem:[#allocation3 + $0x8] sm:$0xff] %vm495, %v581
      %585 = vst.msk [vmem:[#allocation3 + $0x10] sm:$0xff] %vm495, %v581
      %586 = vst.msk [vmem:[#allocation3 + $0x18] sm:$0xff] %vm495, %v581
      %587 = vst.msk [vmem:[#allocation3 + $0x20] sm:$0xff] %vm495, %v581
      %588 = vst.msk [vmem:[#allocation3 + $0x28] sm:$0xff] %vm495, %v581
      %589 = vst.msk [vmem:[#allocation3 + $0x30] sm:$0xff] %vm495, %v581
      %590 = vst.msk [vmem:[#allocation3 + $0x38] sm:$0xff] %vm495, %v581
      %591 = vst.msk [vmem:[#allocation3 + $0x40] sm:$0xff] %vm495, %v581
      %592 = vst.msk [vmem:[#allocation3 + $0x48] sm:$0xff] %vm495, %v581
      %593 = vst.msk [vmem:[#allocation3 + $0x50] sm:$0xff] %vm495, %v581
      %594 = vst.msk [vmem:[#allocation3 + $0x58] sm:$0xff] %vm495, %v581
      %595 = vst.msk [vmem:[#allocation3 + $0x60] sm:$0xff] %vm495, %v581
      %596 = vst.msk [vmem:[#allocation3 + $0x68] sm:$0xff] %vm495, %v581
      %597 = vst.msk [vmem:[#allocation3 + $0x70] sm:$0xff] %vm495, %v581
      %598 = vst.msk [vmem:[#allocation3 + $0x78] sm:$0xff] %vm495, %v581
      %vm623 = vcmask 1040384
      %v624 = vrot.slane %v536, 7
      %v625 = vrot.slane %v537, 7
      %v626 = vsel %vm623, %v624, %v625
      %v627 = vrot.slane %v538, 7
      %v628 = vsel %vm623, %v625, %v627
      %v629 = vrot.slane %v540, 7
      %v630 = vrot.slane %v541, 7
      %v631 = vsel %vm623, %v629, %v630
      %v632 = vrot.slane %v542, 7
      %v633 = vsel %vm623, %v630, %v632
      %v634 = vrot.slane %v544, 7
      %v635 = vrot.slane %v545, 7
      %v636 = vsel %vm623, %v634, %v635
      %v637 = vrot.slane %v546, 7
      %v638 = vsel %vm623, %v635, %v637
      %v639 = vrot.slane %v548, 7
      %v640 = vrot.slane %v549, 7
      %v641 = vsel %vm623, %v639, %v640
      %v642 = vrot.slane %v550, 7
      %v643 = vsel %vm623, %v640, %v642
      %v644 = vrot.slane %v552, 7
      %v645 = vrot.slane %v553, 7
      %v646 = vsel %vm623, %v644, %v645
      %v647 = vrot.slane %v554, 7
      %v648 = vsel %vm623, %v645, %v647
      %v649 = vrot.slane %v556, 7
      %v650 = vrot.slane %v557, 7
      %v651 = vsel %vm623, %v649, %v650
      %v652 = vrot.slane %v558, 7
      %v653 = vsel %vm623, %v650, %v652
      %v654 = vrot.slane %v560, 7
      %v655 = vrot.slane %v561, 7
      %v656 = vsel %vm623, %v654, %v655
      %v657 = vrot.slane %v562, 7
      %v658 = vsel %vm623, %v655, %v657
      %v659 = vrot.slane %v564, 7
      %v660 = vrot.slane %v565, 7
      %v661 = vsel %vm623, %v659, %v660
      %v662 = vrot.slane %v566, 7
      %v663 = vsel %vm623, %v660, %v662
      %v680 = vld [vmem:[#allocation3] sm:$0xff]
      %v681 = vld [vmem:[#allocation3 + $0x8] sm:$0xff]
      %v682 = vld [vmem:[#allocation3 + $0x10] sm:$0xff]
      %v683 = vld [vmem:[#allocation3 + $0x18] sm:$0xff]
      %v684 = vld [vmem:[#allocation3 + $0x20] sm:$0xff]
      %v685 = vld [vmem:[#allocation3 + $0x28] sm:$0xff]
      %v686 = vld [vmem:[#allocation3 + $0x30] sm:$0xff]
      %v687 = vld [vmem:[#allocation3 + $0x38] sm:$0xff]
      %v688 = vld [vmem:[#allocation3 + $0x40] sm:$0xff]
      %v689 = vld [vmem:[#allocation3 + $0x48] sm:$0xff]
      %v690 = vld [vmem:[#allocation3 + $0x50] sm:$0xff]
      %v691 = vld [vmem:[#allocation3 + $0x58] sm:$0xff]
      %v692 = vld [vmem:[#allocation3 + $0x60] sm:$0xff]
      %v693 = vld [vmem:[#allocation3 + $0x68] sm:$0xff]
      %v694 = vld [vmem:[#allocation3 + $0x70] sm:$0xff]
      %v695 = vld [vmem:[#allocation3 + $0x78] sm:$0xff]
      %v696 = vpack.c.bf16 %v628, %v626
      %v697 = vpack.c.bf16 %v633, %v631
      %v698 = vpack.c.bf16 %v638, %v636
      %v699 = vpack.c.bf16 %v643, %v641
      %v700 = vpack.c.bf16 %v648, %v646
      %v701 = vpack.c.bf16 %v653, %v651
      %v702 = vpack.c.bf16 %v658, %v656
      %v703 = vpack.c.bf16 %v663, %v661
      %v704 = vld [vmem:[%s3] sm:$0xf]
      %v705 = vld [vmem:[%s3 + $0x4] sm:$0xf]
      %v706 = vld [vmem:[%s3 + $0x8] sm:$0xf]
      %v707 = vld [vmem:[%s3 + $0xc] sm:$0xf]
      %v708 = vld [vmem:[%s3 + $0x10] sm:$0xf]
      %v709 = vld [vmem:[%s3 + $0x14] sm:$0xf]
      %v710 = vld [vmem:[%s3 + $0x18] sm:$0xf]
      %v711 = vld [vmem:[%s3 + $0x1c] sm:$0xf]
      %v720 = vunpack.c.l.b16 %v704
      %v721 = vunpack.c.l.b16 %v705
      %v722 = vunpack.c.l.b16 %v706
      %v723 = vunpack.c.l.b16 %v707
      %v724 = vunpack.c.l.b16 %v708
      %v725 = vunpack.c.l.b16 %v709
      %v726 = vunpack.c.l.b16 %v710
      %v727 = vunpack.c.l.b16 %v711
      %v728 = vpack.c.b16 %v721, %v720
      %v729 = vpack.c.b16 %v723, %v722
      %v730 = vpack.c.b16 %v725, %v724
      %v731 = vpack.c.b16 %v727, %v726
      %v737 = vsel %vm495, %v696, 0
      %v740 = vsel %vm495, %v697, 0
      %v743 = vsel %vm495, %v698, 0
      %v746 = vsel %vm495, %v699, 0
      %v749 = vsel %vm495, %v700, 0
      %v752 = vsel %vm495, %v701, 0
      %v755 = vsel %vm495, %v702, 0
      %v758 = vsel %vm495, %v703, 0
      %760 = vmatprep.subr.bf16.mxu0 0
      %761 = vmatpush1.bf16.msra.mxu0 %v728
      %762 = vmatprep.subr.bf16.mxu0 0
      %763 = vmatpush1.bf16.msra.mxu0 %v729
      %764 = vmatprep.subr.bf16.mxu0 0
      %765 = vmatpush1.bf16.msra.mxu0 %v730
      %766 = vmatprep.subr.bf16.mxu0 0
      %767 = vmatpush1.bf16.msra.mxu0 %v731
      %768 = vmatprep.subr.bf16.mxu0 0
      %769 = vmatpush1.bf16.msra.mxu0 0
      %770 = vmatprep.subr.bf16.mxu0 0
      %771 = vmatpush1.bf16.msra.mxu0 0
      %772 = vmatprep.subr.bf16.mxu0 0
      %773 = vmatpush1.bf16.msra.mxu0 0
      %774 = vmatprep.subr.bf16.mxu0 0
      %775 = vmatpush1.bf16.msra.mxu0 0
      %776 = vmatprep.subr.bf16.mxu0 0
      %777 = vmatpush1.bf16.msra.mxu0 0
      %778 = vmatprep.subr.bf16.mxu0 0
      %779 = vmatpush1.bf16.msra.mxu0 0
      %780 = vmatprep.subr.bf16.mxu0 0
      %781 = vmatpush1.bf16.msra.mxu0 0
      %782 = vmatprep.subr.bf16.mxu0 0
      %783 = vmatpush1.bf16.msra.mxu0 0
      %784 = vmatprep.subr.bf16.mxu0 0
      %785 = vmatpush1.bf16.msra.mxu0 0
      %786 = vmatprep.subr.bf16.mxu0 0
      %787 = vmatpush1.bf16.msra.mxu0 0
      %788 = vmatprep.subr.bf16.mxu0 0
      %789 = vmatpush1.bf16.msra.mxu0 0
      %790 = vmatprep.subr.bf16.mxu0 0
      %791 = vmatpush1.bf16.msra.mxu0 0
      %792 = vmatprep.mubr.bf16.mxu0 0
      %793 = vmatmul.mubr.bf16.gmra.mrb[0].mxu0 %v737
      %v794 = vpop.f32.mrb[0].mxu0
      %v795 = vadd.f32 0.0, %v794
      %v796 = vpop.f32.mrb[0].mxu0
      %v797 = vpop.f32.mrb[0].mxu0
      %v798 = vadd.f32 0.0, %v797
      %v799 = vpop.f32.mrb[0].mxu0
      %800 = vmatprep.mubr.bf16.mxu0 0
      %801 = vmatmul.mubr.bf16.gmra.mrb[0].mxu0 %v740
      %v802 = vpop.f32.mrb[0].mxu0
      %v803 = vadd.f32 0.0, %v802
      %v804 = vpop.f32.mrb[0].mxu0
      %v805 = vpop.f32.mrb[0].mxu0
      %v806 = vadd.f32 0.0, %v805
      %v807 = vpop.f32.mrb[0].mxu0
      %808 = vmatprep.mubr.bf16.mxu0 0
      %809 = vmatmul.mubr.bf16.gmra.mrb[0].mxu0 %v743
      %v810 = vpop.f32.mrb[0].mxu0
      %v811 = vadd.f32 0.0, %v810
      %v812 = vpop.f32.mrb[0].mxu0
      %v813 = vpop.f32.mrb[0].mxu0
      %v814 = vadd.f32 0.0, %v813
      %v815 = vpop.f32.mrb[0].mxu0
      %816 = vmatprep.mubr.bf16.mxu0 0
      %817 = vmatmul.mubr.bf16.gmra.mrb[0].mxu0 %v746
      %v818 = vpop.f32.mrb[0].mxu0
      %v819 = vadd.f32 0.0, %v818
      %v820 = vpop.f32.mrb[0].mxu0
      %v821 = vpop.f32.mrb[0].mxu0
      %v822 = vadd.f32 0.0, %v821
      %v823 = vpop.f32.mrb[0].mxu0
      %824 = vmatprep.mubr.bf16.mxu0 0
      %825 = vmatmul.mubr.bf16.gmra.mrb[0].mxu0 %v749
      %v826 = vpop.f32.mrb[0].mxu0
      %v827 = vadd.f32 0.0, %v826
      %v828 = vpop.f32.mrb[0].mxu0
      %v829 = vpop.f32.mrb[0].mxu0
      %v830 = vadd.f32 0.0, %v829
      %v831 = vpop.f32.mrb[0].mxu0
      %832 = vmatprep.mubr.bf16.mxu0 0
      %833 = vmatmul.mubr.bf16.gmra.mrb[0].mxu0 %v752
      %v834 = vpop.f32.mrb[0].mxu0
      %v835 = vadd.f32 0.0, %v834
      %v836 = vpop.f32.mrb[0].mxu0
      %v837 = vpop.f32.mrb[0].mxu0
      %v838 = vadd.f32 0.0, %v837
      %v839 = vpop.f32.mrb[0].mxu0
      %840 = vmatprep.mubr.bf16.mxu0 0
      %841 = vmatmul.mubr.bf16.gmra.mrb[0].mxu0 %v755
      %v842 = vpop.f32.mrb[0].mxu0
      %v843 = vadd.f32 0.0, %v842
      %v844 = vpop.f32.mrb[0].mxu0
      %v845 = vpop.f32.mrb[0].mxu0
      %v846 = vadd.f32 0.0, %v845
      %v847 = vpop.f32.mrb[0].mxu0
      %848 = vmatprep.mubr.bf16.mxu0 0
      %849 = vmatmul.mubr.bf16.gmra.mrb[0].mxu0 %v758
      %v850 = vpop.f32.mrb[0].mxu0
      %v851 = vadd.f32 0.0, %v850
      %v852 = vpop.f32.mrb[0].mxu0
      %v853 = vpop.f32.mrb[0].mxu0
      %v854 = vadd.f32 0.0, %v853
      %v855 = vpop.f32.mrb[0].mxu0
      %856 = vdwg.mxu0
      %v857 = vadd.f32 %v680, %v795
      %v858 = vadd.f32 %v681, %v798
      %v859 = vadd.f32 %v682, %v803
      %v860 = vadd.f32 %v683, %v806
      %v861 = vadd.f32 %v684, %v811
      %v862 = vadd.f32 %v685, %v814
      %v863 = vadd.f32 %v686, %v819
      %v864 = vadd.f32 %v687, %v822
      %v865 = vadd.f32 %v688, %v827
      %v866 = vadd.f32 %v689, %v830
      %v867 = vadd.f32 %v690, %v835
      %v868 = vadd.f32 %v691, %v838
      %v869 = vadd.f32 %v692, %v843
      %v870 = vadd.f32 %v693, %v846
      %v871 = vadd.f32 %v694, %v851
      %v872 = vadd.f32 %v695, %v854
      %873 = vst.msk [vmem:[#allocation3] sm:$0xff] %vm495, %v857
      %874 = vst.msk [vmem:[#allocation3 + $0x8] sm:$0xff] %vm495, %v858
      %875 = vst.msk [vmem:[#allocation3 + $0x10] sm:$0xff] %vm495, %v859
      %876 = vst.msk [vmem:[#allocation3 + $0x18] sm:$0xff] %vm495, %v860
      %877 = vst.msk [vmem:[#allocation3 + $0x20] sm:$0xff] %vm495, %v861
      %878 = vst.msk [vmem:[#allocation3 + $0x28] sm:$0xff] %vm495, %v862
      %879 = vst.msk [vmem:[#allocation3 + $0x30] sm:$0xff] %vm495, %v863
      %880 = vst.msk [vmem:[#allocation3 + $0x38] sm:$0xff] %vm495, %v864
      %881 = vst.msk [vmem:[#allocation3 + $0x40] sm:$0xff] %vm495, %v865
      %882 = vst.msk [vmem:[#allocation3 + $0x48] sm:$0xff] %vm495, %v866
      %883 = vst.msk [vmem:[#allocation3 + $0x50] sm:$0xff] %vm495, %v867
      %884 = vst.msk [vmem:[#allocation3 + $0x58] sm:$0xff] %vm495, %v868
      %885 = vst.msk [vmem:[#allocation3 + $0x60] sm:$0xff] %vm495, %v869
      %886 = vst.msk [vmem:[#allocation3 + $0x68] sm:$0xff] %vm495, %v870
      %887 = vst.msk [vmem:[#allocation3 + $0x70] sm:$0xff] %vm495, %v871
      %888 = vst.msk [vmem:[#allocation3 + $0x78] sm:$0xff] %vm495, %v872
      %v889 = vld [vmem:[#allocation3] sm:$0xff]
      %v890 = vld [vmem:[#allocation3 + $0x8] sm:$0xff]
      %v891 = vld [vmem:[#allocation3 + $0x10] sm:$0xff]
      %v892 = vld [vmem:[#allocation3 + $0x18] sm:$0xff]
      %v893 = vld [vmem:[#allocation3 + $0x20] sm:$0xff]
      %v894 = vld [vmem:[#allocation3 + $0x28] sm:$0xff]
      %v895 = vld [vmem:[#allocation3 + $0x30] sm:$0xff]
      %v896 = vld [vmem:[#allocation3 + $0x38] sm:$0xff]
      %v897 = vld [vmem:[#allocation3 + $0x40] sm:$0xff]
      %v898 = vld [vmem:[#allocation3 + $0x48] sm:$0xff]
      %v899 = vld [vmem:[#allocation3 + $0x50] sm:$0xff]
      %v900 = vld [vmem:[#allocation3 + $0x58] sm:$0xff]
      %v901 = vld [vmem:[#allocation3 + $0x60] sm:$0xff]
      %v902 = vld [vmem:[#allocation3 + $0x68] sm:$0xff]
      %v903 = vld [vmem:[#allocation3 + $0x70] sm:$0xff]
      %v904 = vld [vmem:[#allocation3 + $0x78] sm:$0xff]
      %v905 = vpack.c.bf16 %v538, %v537
      %v906 = vpack.c.bf16 %v542, %v541
      %v907 = vpack.c.bf16 %v546, %v545
      %v908 = vpack.c.bf16 %v550, %v549
      %v909 = vpack.c.bf16 %v554, %v553
      %v910 = vpack.c.bf16 %v558, %v557
      %v911 = vpack.c.bf16 %v562, %v561
      %v912 = vpack.c.bf16 %v566, %v565
      %s913 = scalar_lea.vmem %s3, 32
      %v914 = vld [vmem:[%s913] sm:$0xf]
      %v915 = vld [vmem:[%s913 + $0x4] sm:$0xf]
      %v916 = vld [vmem:[%s913 + $0x8] sm:$0xf]
      %v917 = vld [vmem:[%s913 + $0xc] sm:$0xf]
      %v918 = vld [vmem:[%s913 + $0x10] sm:$0xf]
      %v919 = vld [vmem:[%s913 + $0x14] sm:$0xf]
      %v920 = vld [vmem:[%s913 + $0x18] sm:$0xf]
      %v921 = vld [vmem:[%s913 + $0x1c] sm:$0xf]
      %v930 = vunpack.c.l.b16 %v914
      %v931 = vunpack.c.l.b16 %v915
      %v932 = vunpack.c.l.b16 %v916
      %v933 = vunpack.c.l.b16 %v917
      %v934 = vunpack.c.l.b16 %v918
      %v935 = vunpack.c.l.b16 %v919
      %v936 = vunpack.c.l.b16 %v920
      %v937 = vunpack.c.l.b16 %v921
      %v938 = vpack.c.b16 %v931, %v930
      %v939 = vpack.c.b16 %v933, %v932
      %v940 = vpack.c.b16 %v935, %v934
      %v941 = vpack.c.b16 %v937, %v936
      %v947 = vsel %vm495, %v905, 0
      %v950 = vsel %vm495, %v906, 0
      %v953 = vsel %vm495, %v907, 0
      %v956 = vsel %vm495, %v908, 0
      %v959 = vsel %vm495, %v909, 0
      %v962 = vsel %vm495, %v910, 0
      %v965 = vsel %vm495, %v911, 0
      %v968 = vsel %vm495, %v912, 0
      %970 = vmatprep.subr.bf16.mxu0 0
      %971 = vmatpush1.bf16.msra.mxu0 %v938
      %972 = vmatprep.subr.bf16.mxu0 0
      %973 = vmatpush1.bf16.msra.mxu0 %v939
      %974 = vmatprep.subr.bf16.mxu0 0
      %975 = vmatpush1.bf16.msra.mxu0 %v940
      %976 = vmatprep.subr.bf16.mxu0 0
      %977 = vmatpush1.bf16.msra.mxu0 %v941
      %978 = vmatprep.subr.bf16.mxu0 0
      %979 = vmatpush1.bf16.msra.mxu0 0
      %980 = vmatprep.subr.bf16.mxu0 0
      %981 = vmatpush1.bf16.msra.mxu0 0
      %982 = vmatprep.subr.bf16.mxu0 0
      %983 = vmatpush1.bf16.msra.mxu0 0
      %984 = vmatprep.subr.bf16.mxu0 0
      %985 = vmatpush1.bf16.msra.mxu0 0
      %986 = vmatprep.subr.bf16.mxu0 0
      %987 = vmatpush1.bf16.msra.mxu0 0
      %988 = vmatprep.subr.bf16.mxu0 0
      %989 = vmatpush1.bf16.msra.mxu0 0
      %990 = vmatprep.subr.bf16.mxu0 0
      %991 = vmatpush1.bf16.msra.mxu0 0
      %992 = vmatprep.subr.bf16.mxu0 0
      %993 = vmatpush1.bf16.msra.mxu0 0
      %994 = vmatprep.subr.bf16.mxu0 0
      %995 = vmatpush1.bf16.msra.mxu0 0
      %996 = vmatprep.subr.bf16.mxu0 0
      %997 = vmatpush1.bf16.msra.mxu0 0
      %998 = vmatprep.subr.bf16.mxu0 0
      %999 = vmatpush1.bf16.msra.mxu0 0
      %1000 = vmatprep.subr.bf16.mxu0 0
      %1001 = vmatpush1.bf16.msra.mxu0 0
      %1002 = vmatprep.mubr.bf16.mxu0 0
      %1003 = vmatmul.mubr.bf16.gmra.mrb[0].mxu0 %v947
      %v1004 = vpop.f32.mrb[0].mxu0
      %v1005 = vadd.f32 0.0, %v1004
      %v1006 = vpop.f32.mrb[0].mxu0
      %v1007 = vpop.f32.mrb[0].mxu0
      %v1008 = vadd.f32 0.0, %v1007
      %v1009 = vpop.f32.mrb[0].mxu0
      %1010 = vmatprep.mubr.bf16.mxu0 0
      %1011 = vmatmul.mubr.bf16.gmra.mrb[0].mxu0 %v950
      %v1012 = vpop.f32.mrb[0].mxu0
      %v1013 = vadd.f32 0.0, %v1012
      %v1014 = vpop.f32.mrb[0].mxu0
      %v1015 = vpop.f32.mrb[0].mxu0
      %v1016 = vadd.f32 0.0, %v1015
      %v1017 = vpop.f32.mrb[0].mxu0
      %1018 = vmatprep.mubr.bf16.mxu0 0
      %1019 = vmatmul.mubr.bf16.gmra.mrb[0].mxu0 %v953
      %v1020 = vpop.f32.mrb[0].mxu0
      %v1021 = vadd.f32 0.0, %v1020
      %v1022 = vpop.f32.mrb[0].mxu0
      %v1023 = vpop.f32.mrb[0].mxu0
      %v1024 = vadd.f32 0.0, %v1023
      %v1025 = vpop.f32.mrb[0].mxu0
      %1026 = vmatprep.mubr.bf16.mxu0 0
      %1027 = vmatmul.mubr.bf16.gmra.mrb[0].mxu0 %v956
      %v1028 = vpop.f32.mrb[0].mxu0
      %v1029 = vadd.f32 0.0, %v1028
      %v1030 = vpop.f32.mrb[0].mxu0
      %v1031 = vpop.f32.mrb[0].mxu0
      %v1032 = vadd.f32 0.0, %v1031
      %v1033 = vpop.f32.mrb[0].mxu0
      %1034 = vmatprep.mubr.bf16.mxu0 0
      %1035 = vmatmul.mubr.bf16.gmra.mrb[0].mxu0 %v959
      %v1036 = vpop.f32.mrb[0].mxu0
      %v1037 = vadd.f32 0.0, %v1036
      %v1038 = vpop.f32.mrb[0].mxu0
      %v1039 = vpop.f32.mrb[0].mxu0
      %v1040 = vadd.f32 0.0, %v1039
      %v1041 = vpop.f32.mrb[0].mxu0
      %1042 = vmatprep.mubr.bf16.mxu0 0
      %1043 = vmatmul.mubr.bf16.gmra.mrb[0].mxu0 %v962
      %v1044 = vpop.f32.mrb[0].mxu0
      %v1045 = vadd.f32 0.0, %v1044
      %v1046 = vpop.f32.mrb[0].mxu0
      %v1047 = vpop.f32.mrb[0].mxu0
      %v1048 = vadd.f32 0.0, %v1047
      %v1049 = vpop.f32.mrb[0].mxu0
      %1050 = vmatprep.mubr.bf16.mxu0 0
      %1051 = vmatmul.mubr.bf16.gmra.mrb[0].mxu0 %v965
      %v1052 = vpop.f32.mrb[0].mxu0
      %v1053 = vadd.f32 0.0, %v1052
      %v1054 = vpop.f32.mrb[0].mxu0
      %v1055 = vpop.f32.mrb[0].mxu0
      %v1056 = vadd.f32 0.0, %v1055
      %v1057 = vpop.f32.mrb[0].mxu0
      %1058 = vmatprep.mubr.bf16.mxu0 0
      %1059 = vmatmul.mubr.bf16.gmra.mrb[0].mxu0 %v968
      %v1060 = vpop.f32.mrb[0].mxu0
      %v1061 = vadd.f32 0.0, %v1060
      %v1062 = vpop.f32.mrb[0].mxu0
      %v1063 = vpop.f32.mrb[0].mxu0
      %v1064 = vadd.f32 0.0, %v1063
      %v1065 = vpop.f32.mrb[0].mxu0
      %1066 = vdwg.mxu0
      %v1067 = vadd.f32 %v889, %v1005
      %v1068 = vadd.f32 %v890, %v1008
      %v1069 = vadd.f32 %v891, %v1013
      %v1070 = vadd.f32 %v892, %v1016
      %v1071 = vadd.f32 %v893, %v1021
      %v1072 = vadd.f32 %v894, %v1024
      %v1073 = vadd.f32 %v895, %v1029
      %v1074 = vadd.f32 %v896, %v1032
      %v1075 = vadd.f32 %v897, %v1037
      %v1076 = vadd.f32 %v898, %v1040
      %v1077 = vadd.f32 %v899, %v1045
      %v1078 = vadd.f32 %v900, %v1048
      %v1079 = vadd.f32 %v901, %v1053
      %v1080 = vadd.f32 %v902, %v1056
      %v1081 = vadd.f32 %v903, %v1061
      %v1082 = vadd.f32 %v904, %v1064
      %1083 = vst.msk [vmem:[#allocation3] sm:$0xff] %vm495, %v1067
      %1084 = vst.msk [vmem:[#allocation3 + $0x8] sm:$0xff] %vm495, %v1068
      %1085 = vst.msk [vmem:[#allocation3 + $0x10] sm:$0xff] %vm495, %v1069
      %1086 = vst.msk [vmem:[#allocation3 + $0x18] sm:$0xff] %vm495, %v1070
      %1087 = vst.msk [vmem:[#allocation3 + $0x20] sm:$0xff] %vm495, %v1071
      %1088 = vst.msk [vmem:[#allocation3 + $0x28] sm:$0xff] %vm495, %v1072
      %1089 = vst.msk [vmem:[#allocation3 + $0x30] sm:$0xff] %vm495, %v1073
      %1090 = vst.msk [vmem:[#allocation3 + $0x38] sm:$0xff] %vm495, %v1074
      %1091 = vst.msk [vmem:[#allocation3 + $0x40] sm:$0xff] %vm495, %v1075
      %1092 = vst.msk [vmem:[#allocation3 + $0x48] sm:$0xff] %vm495, %v1076
      %1093 = vst.msk [vmem:[#allocation3 + $0x50] sm:$0xff] %vm495, %v1077
      %1094 = vst.msk [vmem:[#allocation3 + $0x58] sm:$0xff] %vm495, %v1078
      %1095 = vst.msk [vmem:[#allocation3 + $0x60] sm:$0xff] %vm495, %v1079
      %1096 = vst.msk [vmem:[#allocation3 + $0x68] sm:$0xff] %vm495, %v1080
      %1097 = vst.msk [vmem:[#allocation3 + $0x70] sm:$0xff] %vm495, %v1081
      %1098 = vst.msk [vmem:[#allocation3 + $0x78] sm:$0xff] %vm495, %v1082
      %vm1107 = vcmask 1046528
      %v1108 = vrot.slane %v537, 1
      %v1109 = vrot.slane %v538, 1
      %v1110 = vsel %vm1107, %v1108, %v1109
      %v1111 = vrot.slane %v539, 1
      %v1112 = vsel %vm1107, %v1109, %v1111
      %v1113 = vrot.slane %v541, 1
      %v1114 = vrot.slane %v542, 1
      %v1115 = vsel %vm1107, %v1113, %v1114
      %v1116 = vrot.slane %v543, 1
      %v1117 = vsel %vm1107, %v1114, %v1116
      %v1118 = vrot.slane %v545, 1
      %v1119 = vrot.slane %v546, 1
      %v1120 = vsel %vm1107, %v1118, %v1119
      %v1121 = vrot.slane %v547, 1
      %v1122 = vsel %vm1107, %v1119, %v1121
      %v1123 = vrot.slane %v549, 1
      %v1124 = vrot.slane %v550, 1
      %v1125 = vsel %vm1107, %v1123, %v1124
      %v1126 = vrot.slane %v551, 1
      %v1127 = vsel %vm1107, %v1124, %v1126
      %v1128 = vrot.slane %v553, 1
      %v1129 = vrot.slane %v554, 1
      %v1130 = vsel %vm1107, %v1128, %v1129
      %v1131 = vrot.slane %v555, 1
      %v1132 = vsel %vm1107, %v1129, %v1131
      %v1133 = vrot.slane %v557, 1
      %v1134 = vrot.slane %v558, 1
      %v1135 = vsel %vm1107, %v1133, %v1134
      %v1136 = vrot.slane %v559, 1
      %v1137 = vsel %vm1107, %v1134, %v1136
      %v1138 = vrot.slane %v561, 1
      %v1139 = vrot.slane %v562, 1
      %v1140 = vsel %vm1107, %v1138, %v1139
      %v1141 = vrot.slane %v563, 1
      %v1142 = vsel %vm1107, %v1139, %v1141
      %v1143 = vrot.slane %v565, 1
      %v1144 = vrot.slane %v566, 1
      %v1145 = vsel %vm1107, %v1143, %v1144
      %v1146 = vrot.slane %v567, 1
      %v1147 = vsel %vm1107, %v1144, %v1146
      %v1164 = vld [vmem:[#allocation3] sm:$0xff]
      %v1165 = vld [vmem:[#allocation3 + $0x8] sm:$0xff]
      %v1166 = vld [vmem:[#allocation3 + $0x10] sm:$0xff]
      %v1167 = vld [vmem:[#allocation3 + $0x18] sm:$0xff]
      %v1168 = vld [vmem:[#allocation3 + $0x20] sm:$0xff]
      %v1169 = vld [vmem:[#allocation3 + $0x28] sm:$0xff]
      %v1170 = vld [vmem:[#allocation3 + $0x30] sm:$0xff]
      %v1171 = vld [vmem:[#allocation3 + $0x38] sm:$0xff]
      %v1172 = vld [vmem:[#allocation3 + $0x40] sm:$0xff]
      %v1173 = vld [vmem:[#allocation3 + $0x48] sm:$0xff]
      %v1174 = vld [vmem:[#allocation3 + $0x50] sm:$0xff]
      %v1175 = vld [vmem:[#allocation3 + $0x58] sm:$0xff]
      %v1176 = vld [vmem:[#allocation3 + $0x60] sm:$0xff]
      %v1177 = vld [vmem:[#allocation3 + $0x68] sm:$0xff]
      %v1178 = vld [vmem:[#allocation3 + $0x70] sm:$0xff]
      %v1179 = vld [vmem:[#allocation3 + $0x78] sm:$0xff]
      %v1180 = vpack.c.bf16 %v1112, %v1110
      %v1181 = vpack.c.bf16 %v1117, %v1115
      %v1182 = vpack.c.bf16 %v1122, %v1120
      %v1183 = vpack.c.bf16 %v1127, %v1125
      %v1184 = vpack.c.bf16 %v1132, %v1130
      %v1185 = vpack.c.bf16 %v1137, %v1135
      %v1186 = vpack.c.bf16 %v1142, %v1140
      %v1187 = vpack.c.bf16 %v1147, %v1145
      %s1188 = scalar_lea.vmem %s3, 64
      %v1189 = vld [vmem:[%s1188] sm:$0xf]
      %v1190 = vld [vmem:[%s1188 + $0x4] sm:$0xf]
      %v1191 = vld [vmem:[%s1188 + $0x8] sm:$0xf]
      %v1192 = vld [vmem:[%s1188 + $0xc] sm:$0xf]
      %v1193 = vld [vmem:[%s1188 + $0x10] sm:$0xf]
      %v1194 = vld [vmem:[%s1188 + $0x14] sm:$0xf]
      %v1195 = vld [vmem:[%s1188 + $0x18] sm:$0xf]
      %v1196 = vld [vmem:[%s1188 + $0x1c] sm:$0xf]
      %v1205 = vunpack.c.l.b16 %v1189
      %v1206 = vunpack.c.l.b16 %v1190
      %v1207 = vunpack.c.l.b16 %v1191
      %v1208 = vunpack.c.l.b16 %v1192
      %v1209 = vunpack.c.l.b16 %v1193
      %v1210 = vunpack.c.l.b16 %v1194
      %v1211 = vunpack.c.l.b16 %v1195
      %v1212 = vunpack.c.l.b16 %v1196
      %v1213 = vpack.c.b16 %v1206, %v1205
      %v1214 = vpack.c.b16 %v1208, %v1207
      %v1215 = vpack.c.b16 %v1210, %v1209
      %v1216 = vpack.c.b16 %v1212, %v1211
      %v1222 = vsel %vm495, %v1180, 0
      %v1225 = vsel %vm495, %v1181, 0
      %v1228 = vsel %vm495, %v1182, 0
      %v1231 = vsel %vm495, %v1183, 0
      %v1234 = vsel %vm495, %v1184, 0
      %v1237 = vsel %vm495, %v1185, 0
      %v1240 = vsel %vm495, %v1186, 0
      %v1243 = vsel %vm495, %v1187, 0
      %1245 = vmatprep.subr.bf16.mxu0 0
      %1246 = vmatpush1.bf16.msra.mxu0 %v1213
      %1247 = vmatprep.subr.bf16.mxu0 0
      %1248 = vmatpush1.bf16.msra.mxu0 %v1214
      %1249 = vmatprep.subr.bf16.mxu0 0
      %1250 = vmatpush1.bf16.msra.mxu0 %v1215
      %1251 = vmatprep.subr.bf16.mxu0 0
      %1252 = vmatpush1.bf16.msra.mxu0 %v1216
      %1253 = vmatprep.subr.bf16.mxu0 0
      %1254 = vmatpush1.bf16.msra.mxu0 0
      %1255 = vmatprep.subr.bf16.mxu0 0
      %1256 = vmatpush1.bf16.msra.mxu0 0
      %1257 = vmatprep.subr.bf16.mxu0 0
      %1258 = vmatpush1.bf16.msra.mxu0 0
      %1259 = vmatprep.subr.bf16.mxu0 0
      %1260 = vmatpush1.bf16.msra.mxu0 0
      %1261 = vmatprep.subr.bf16.mxu0 0
      %1262 = vmatpush1.bf16.msra.mxu0 0
      %1263 = vmatprep.subr.bf16.mxu0 0
      %1264 = vmatpush1.bf16.msra.mxu0 0
      %1265 = vmatprep.subr.bf16.mxu0 0
      %1266 = vmatpush1.bf16.msra.mxu0 0
      %1267 = vmatprep.subr.bf16.mxu0 0
      %1268 = vmatpush1.bf16.msra.mxu0 0
      %1269 = vmatprep.subr.bf16.mxu0 0
      %1270 = vmatpush1.bf16.msra.mxu0 0
      %1271 = vmatprep.subr.bf16.mxu0 0
      %1272 = vmatpush1.bf16.msra.mxu0 0
      %1273 = vmatprep.subr.bf16.mxu0 0
      %1274 = vmatpush1.bf16.msra.mxu0 0
      %1275 = vmatprep.subr.bf16.mxu0 0
      %1276 = vmatpush1.bf16.msra.mxu0 0
      %1277 = vmatprep.mubr.bf16.mxu0 0
      %1278 = vmatmul.mubr.bf16.gmra.mrb[0].mxu0 %v1222
      %v1279 = vpop.f32.mrb[0].mxu0
      %v1280 = vadd.f32 0.0, %v1279
      %v1281 = vpop.f32.mrb[0].mxu0
      %v1282 = vpop.f32.mrb[0].mxu0
      %v1283 = vadd.f32 0.0, %v1282
      %v1284 = vpop.f32.mrb[0].mxu0
      %1285 = vmatprep.mubr.bf16.mxu0 0
      %1286 = vmatmul.mubr.bf16.gmra.mrb[0].mxu0 %v1225
      %v1287 = vpop.f32.mrb[0].mxu0
      %v1288 = vadd.f32 0.0, %v1287
      %v1289 = vpop.f32.mrb[0].mxu0
      %v1290 = vpop.f32.mrb[0].mxu0
      %v1291 = vadd.f32 0.0, %v1290
      %v1292 = vpop.f32.mrb[0].mxu0
      %1293 = vmatprep.mubr.bf16.mxu0 0
      %1294 = vmatmul.mubr.bf16.gmra.mrb[0].mxu0 %v1228
      %v1295 = vpop.f32.mrb[0].mxu0
      %v1296 = vadd.f32 0.0, %v1295
      %v1297 = vpop.f32.mrb[0].mxu0
      %v1298 = vpop.f32.mrb[0].mxu0
      %v1299 = vadd.f32 0.0, %v1298
      %v1300 = vpop.f32.mrb[0].mxu0
      %1301 = vmatprep.mubr.bf16.mxu0 0
      %1302 = vmatmul.mubr.bf16.gmra.mrb[0].mxu0 %v1231
      %v1303 = vpop.f32.mrb[0].mxu0
      %v1304 = vadd.f32 0.0, %v1303
      %v1305 = vpop.f32.mrb[0].mxu0
      %v1306 = vpop.f32.mrb[0].mxu0
      %v1307 = vadd.f32 0.0, %v1306
      %v1308 = vpop.f32.mrb[0].mxu0
      %1309 = vmatprep.mubr.bf16.mxu0 0
      %1310 = vmatmul.mubr.bf16.gmra.mrb[0].mxu0 %v1234
      %v1311 = vpop.f32.mrb[0].mxu0
      %v1312 = vadd.f32 0.0, %v1311
      %v1313 = vpop.f32.mrb[0].mxu0
      %v1314 = vpop.f32.mrb[0].mxu0
      %v1315 = vadd.f32 0.0, %v1314
      %v1316 = vpop.f32.mrb[0].mxu0
      %1317 = vmatprep.mubr.bf16.mxu0 0
      %1318 = vmatmul.mubr.bf16.gmra.mrb[0].mxu0 %v1237
      %v1319 = vpop.f32.mrb[0].mxu0
      %v1320 = vadd.f32 0.0, %v1319
      %v1321 = vpop.f32.mrb[0].mxu0
      %v1322 = vpop.f32.mrb[0].mxu0
      %v1323 = vadd.f32 0.0, %v1322
      %v1324 = vpop.f32.mrb[0].mxu0
      %1325 = vmatprep.mubr.bf16.mxu0 0
      %1326 = vmatmul.mubr.bf16.gmra.mrb[0].mxu0 %v1240
      %v1327 = vpop.f32.mrb[0].mxu0
      %v1328 = vadd.f32 0.0, %v1327
      %v1329 = vpop.f32.mrb[0].mxu0
      %v1330 = vpop.f32.mrb[0].mxu0
      %v1331 = vadd.f32 0.0, %v1330
      %v1332 = vpop.f32.mrb[0].mxu0
      %1333 = vmatprep.mubr.bf16.mxu0 0
      %1334 = vmatmul.mubr.bf16.gmra.mrb[0].mxu0 %v1243
      %v1335 = vpop.f32.mrb[0].mxu0
      %v1336 = vadd.f32 0.0, %v1335
      %v1337 = vpop.f32.mrb[0].mxu0
      %v1338 = vpop.f32.mrb[0].mxu0
      %v1339 = vadd.f32 0.0, %v1338
      %v1340 = vpop.f32.mrb[0].mxu0
      %1341 = vdwg.mxu0
      %v1342 = vadd.f32 %v1164, %v1280
      %v1343 = vadd.f32 %v1165, %v1283
      %v1344 = vadd.f32 %v1166, %v1288
      %v1345 = vadd.f32 %v1167, %v1291
      %v1346 = vadd.f32 %v1168, %v1296
      %v1347 = vadd.f32 %v1169, %v1299
      %v1348 = vadd.f32 %v1170, %v1304
      %v1349 = vadd.f32 %v1171, %v1307
      %v1350 = vadd.f32 %v1172, %v1312
      %v1351 = vadd.f32 %v1173, %v1315
      %v1352 = vadd.f32 %v1174, %v1320
      %v1353 = vadd.f32 %v1175, %v1323
      %v1354 = vadd.f32 %v1176, %v1328
      %v1355 = vadd.f32 %v1177, %v1331
      %v1356 = vadd.f32 %v1178, %v1336
      %v1357 = vadd.f32 %v1179, %v1339
      %1358 = vst.msk [vmem:[#allocation3] sm:$0xff] %vm495, %v1342
      %1359 = vst.msk [vmem:[#allocation3 + $0x8] sm:$0xff] %vm495, %v1343
      %1360 = vst.msk [vmem:[#allocation3 + $0x10] sm:$0xff] %vm495, %v1344
      %1361 = vst.msk [vmem:[#allocation3 + $0x18] sm:$0xff] %vm495, %v1345
      %1362 = vst.msk [vmem:[#allocation3 + $0x20] sm:$0xff] %vm495, %v1346
      %1363 = vst.msk [vmem:[#allocation3 + $0x28] sm:$0xff] %vm495, %v1347
      %1364 = vst.msk [vmem:[#allocation3 + $0x30] sm:$0xff] %vm495, %v1348
      %1365 = vst.msk [vmem:[#allocation3 + $0x38] sm:$0xff] %vm495, %v1349
      %1366 = vst.msk [vmem:[#allocation3 + $0x40] sm:$0xff] %vm495, %v1350
      %1367 = vst.msk [vmem:[#allocation3 + $0x48] sm:$0xff] %vm495, %v1351
      %1368 = vst.msk [vmem:[#allocation3 + $0x50] sm:$0xff] %vm495, %v1352
      %1369 = vst.msk [vmem:[#allocation3 + $0x58] sm:$0xff] %vm495, %v1353
      %1370 = vst.msk [vmem:[#allocation3 + $0x60] sm:$0xff] %vm495, %v1354
      %1371 = vst.msk [vmem:[#allocation3 + $0x68] sm:$0xff] %vm495, %v1355
      %1372 = vst.msk [vmem:[#allocation3 + $0x70] sm:$0xff] %vm495, %v1356
      %1373 = vst.msk [vmem:[#allocation3 + $0x78] sm:$0xff] %vm495, %v1357
      %v1377 = vrot.slane %v568, 7
      %v1378 = vrot.slane %v569, 7
      %v1379 = vsel %vm623, %v1377, %v1378
      %v1380 = vrot.slane %v570, 7
      %v1381 = vsel %vm623, %v1378, %v1380
      %v1384 = vld [vmem:[#allocation3] sm:$0xff]
      %v1385 = vld [vmem:[#allocation3 + $0x8] sm:$0xff]
      %v1386 = vld [vmem:[#allocation3 + $0x10] sm:$0xff]
      %v1387 = vld [vmem:[#allocation3 + $0x18] sm:$0xff]
      %v1388 = vld [vmem:[#allocation3 + $0x20] sm:$0xff]
      %v1389 = vld [vmem:[#allocation3 + $0x28] sm:$0xff]
      %v1390 = vld [vmem:[#allocation3 + $0x30] sm:$0xff]
      %v1391 = vld [vmem:[#allocation3 + $0x38] sm:$0xff]
      %v1392 = vld [vmem:[#allocation3 + $0x40] sm:$0xff]
      %v1393 = vld [vmem:[#allocation3 + $0x48] sm:$0xff]
      %v1394 = vld [vmem:[#allocation3 + $0x50] sm:$0xff]
      %v1395 = vld [vmem:[#allocation3 + $0x58] sm:$0xff]
      %v1396 = vld [vmem:[#allocation3 + $0x60] sm:$0xff]
      %v1397 = vld [vmem:[#allocation3 + $0x68] sm:$0xff]
      %v1398 = vld [vmem:[#allocation3 + $0x70] sm:$0xff]
      %v1399 = vld [vmem:[#allocation3 + $0x78] sm:$0xff]
      %v1400 = vpack.c.bf16 %v1381, %v1379
      %s1401 = scalar_lea.vmem %s3, 96
      %v1402 = vld [vmem:[%s1401] sm:$0xf]
      %v1403 = vld [vmem:[%s1401 + $0x4] sm:$0xf]
      %v1404 = vld [vmem:[%s1401 + $0x8] sm:$0xf]
      %v1405 = vld [vmem:[%s1401 + $0xc] sm:$0xf]
      %v1406 = vld [vmem:[%s1401 + $0x10] sm:$0xf]
      %v1407 = vld [vmem:[%s1401 + $0x14] sm:$0xf]
      %v1408 = vld [vmem:[%s1401 + $0x18] sm:$0xf]
      %v1409 = vld [vmem:[%s1401 + $0x1c] sm:$0xf]
      %v1418 = vunpack.c.l.b16 %v1402
      %v1419 = vunpack.c.l.b16 %v1403
      %v1420 = vunpack.c.l.b16 %v1404
      %v1421 = vunpack.c.l.b16 %v1405
      %v1422 = vunpack.c.l.b16 %v1406
      %v1423 = vunpack.c.l.b16 %v1407
      %v1424 = vunpack.c.l.b16 %v1408
      %v1425 = vunpack.c.l.b16 %v1409
      %v1426 = vpack.c.b16 %v1419, %v1418
      %v1427 = vpack.c.b16 %v1421, %v1420
      %v1428 = vpack.c.b16 %v1423, %v1422
      %v1429 = vpack.c.b16 %v1425, %v1424
      %v1435 = vsel %vm495, %v1400, 0
      %1437 = vmatprep.subr.bf16.mxu0 0
      %1438 = vmatpush1.bf16.msra.mxu0 %v1426
      %1439 = vmatprep.subr.bf16.mxu0 0
      %1440 = vmatpush1.bf16.msra.mxu0 %v1427
      %1441 = vmatprep.subr.bf16.mxu0 0
      %1442 = vmatpush1.bf16.msra.mxu0 %v1428
      %1443 = vmatprep.subr.bf16.mxu0 0
      %1444 = vmatpush1.bf16.msra.mxu0 %v1429
      %1445 = vmatprep.subr.bf16.mxu0 0
      %1446 = vmatpush1.bf16.msra.mxu0 0
      %1447 = vmatprep.subr.bf16.mxu0 0
      %1448 = vmatpush1.bf16.msra.mxu0 0
      %1449 = vmatprep.subr.bf16.mxu0 0
      %1450 = vmatpush1.bf16.msra.mxu0 0
      %1451 = vmatprep.subr.bf16.mxu0 0
      %1452 = vmatpush1.bf16.msra.mxu0 0
      %1453 = vmatprep.subr.bf16.mxu0 0
      %1454 = vmatpush1.bf16.msra.mxu0 0
      %1455 = vmatprep.subr.bf16.mxu0 0
      %1456 = vmatpush1.bf16.msra.mxu0 0
      %1457 = vmatprep.subr.bf16.mxu0 0
      %1458 = vmatpush1.bf16.msra.mxu0 0
      %1459 = vmatprep.subr.bf16.mxu0 0
      %1460 = vmatpush1.bf16.msra.mxu0 0
      %1461 = vmatprep.subr.bf16.mxu0 0
      %1462 = vmatpush1.bf16.msra.mxu0 0
      %1463 = vmatprep.subr.bf16.mxu0 0
      %1464 = vmatpush1.bf16.msra.mxu0 0
      %1465 = vmatprep.subr.bf16.mxu0 0
      %1466 = vmatpush1.bf16.msra.mxu0 0
      %1467 = vmatprep.subr.bf16.mxu0 0
      %1468 = vmatpush1.bf16.msra.mxu0 0
      %1469 = vmatprep.mubr.bf16.mxu0 0
      %1470 = vmatmul.mubr.bf16.gmra.mrb[0].mxu0 %v740
      %v1471 = vpop.f32.mrb[0].mxu0
      %v1472 = vadd.f32 0.0, %v1471
      %v1473 = vpop.f32.mrb[0].mxu0
      %v1474 = vpop.f32.mrb[0].mxu0
      %v1475 = vadd.f32 0.0, %v1474
      %v1476 = vpop.f32.mrb[0].mxu0
      %1477 = vmatprep.mubr.bf16.mxu0 0
      %1478 = vmatmul.mubr.bf16.gmra.mrb[0].mxu0 %v743
      %v1479 = vpop.f32.mrb[0].mxu0
      %v1480 = vadd.f32 0.0, %v1479
      %v1481 = vpop.f32.mrb[0].mxu0
      %v1482 = vpop.f32.mrb[0].mxu0
      %v1483 = vadd.f32 0.0, %v1482
      %v1484 = vpop.f32.mrb[0].mxu0
      %1485 = vmatprep.mubr.bf16.mxu0 0
      %1486 = vmatmul.mubr.bf16.gmra.mrb[0].mxu0 %v746
      %v1487 = vpop.f32.mrb[0].mxu0
      %v1488 = vadd.f32 0.0, %v1487
      %v1489 = vpop.f32.mrb[0].mxu0
      %v1490 = vpop.f32.mrb[0].mxu0
      %v1491 = vadd.f32 0.0, %v1490
      %v1492 = vpop.f32.mrb[0].mxu0
      %1493 = vmatprep.mubr.bf16.mxu0 0
      %1494 = vmatmul.mubr.bf16.gmra.mrb[0].mxu0 %v749
      %v1495 = vpop.f32.mrb[0].mxu0
      %v1496 = vadd.f32 0.0, %v1495
      %v1497 = vpop.f32.mrb[0].mxu0
      %v1498 = vpop.f32.mrb[0].mxu0
      %v1499 = vadd.f32 0.0, %v1498
      %v1500 = vpop.f32.mrb[0].mxu0
      %1501 = vmatprep.mubr.bf16.mxu0 0
      %1502 = vmatmul.mubr.bf16.gmra.mrb[0].mxu0 %v752
      %v1503 = vpop.f32.mrb[0].mxu0
      %v1504 = vadd.f32 0.0, %v1503
      %v1505 = vpop.f32.mrb[0].mxu0
      %v1506 = vpop.f32.mrb[0].mxu0
      %v1507 = vadd.f32 0.0, %v1506
      %v1508 = vpop.f32.mrb[0].mxu0
      %1509 = vmatprep.mubr.bf16.mxu0 0
      %1510 = vmatmul.mubr.bf16.gmra.mrb[0].mxu0 %v755
      %v1511 = vpop.f32.mrb[0].mxu0
      %v1512 = vadd.f32 0.0, %v1511
      %v1513 = vpop.f32.mrb[0].mxu0
      %v1514 = vpop.f32.mrb[0].mxu0
      %v1515 = vadd.f32 0.0, %v1514
      %v1516 = vpop.f32.mrb[0].mxu0
      %1517 = vmatprep.mubr.bf16.mxu0 0
      %1518 = vmatmul.mubr.bf16.gmra.mrb[0].mxu0 %v758
      %v1519 = vpop.f32.mrb[0].mxu0
      %v1520 = vadd.f32 0.0, %v1519
      %v1521 = vpop.f32.mrb[0].mxu0
      %v1522 = vpop.f32.mrb[0].mxu0
      %v1523 = vadd.f32 0.0, %v1522
      %v1524 = vpop.f32.mrb[0].mxu0
      %1525 = vmatprep.mubr.bf16.mxu0 0
      %1526 = vmatmul.mubr.bf16.gmra.mrb[0].mxu0 %v1435
      %v1527 = vpop.f32.mrb[0].mxu0
      %v1528 = vadd.f32 0.0, %v1527
      %v1529 = vpop.f32.mrb[0].mxu0
      %v1530 = vpop.f32.mrb[0].mxu0
      %v1531 = vadd.f32 0.0, %v1530
      %v1532 = vpop.f32.mrb[0].mxu0
      %1533 = vdwg.mxu0
      %v1534 = vadd.f32 %v1384, %v1472
      %v1535 = vadd.f32 %v1385, %v1475
      %v1536 = vadd.f32 %v1386, %v1480
      %v1537 = vadd.f32 %v1387, %v1483
      %v1538 = vadd.f32 %v1388, %v1488
      %v1539 = vadd.f32 %v1389, %v1491
      %v1540 = vadd.f32 %v1390, %v1496
      %v1541 = vadd.f32 %v1391, %v1499
      %v1542 = vadd.f32 %v1392, %v1504
      %v1543 = vadd.f32 %v1393, %v1507
      %v1544 = vadd.f32 %v1394, %v1512
      %v1545 = vadd.f32 %v1395, %v1515
      %v1546 = vadd.f32 %v1396, %v1520
      %v1547 = vadd.f32 %v1397, %v1523
      %v1548 = vadd.f32 %v1398, %v1528
      %v1549 = vadd.f32 %v1399, %v1531
      %1550 = vst.msk [vmem:[#allocation3] sm:$0xff] %vm495, %v1534
      %1551 = vst.msk [vmem:[#allocation3 + $0x8] sm:$0xff] %vm495, %v1535
      %1552 = vst.msk [vmem:[#allocation3 + $0x10] sm:$0xff] %vm495, %v1536
      %1553 = vst.msk [vmem:[#allocation3 + $0x18] sm:$0xff] %vm495, %v1537
      %1554 = vst.msk [vmem:[#allocation3 + $0x20] sm:$0xff] %vm495, %v1538
      %1555 = vst.msk [vmem:[#allocation3 + $0x28] sm:$0xff] %vm495, %v1539
      %1556 = vst.msk [vmem:[#allocation3 + $0x30] sm:$0xff] %vm495, %v1540
      %1557 = vst.msk [vmem:[#allocation3 + $0x38] sm:$0xff] %vm495, %v1541
      %1558 = vst.msk [vmem:[#allocation3 + $0x40] sm:$0xff] %vm495, %v1542
      %1559 = vst.msk [vmem:[#allocation3 + $0x48] sm:$0xff] %vm495, %v1543
      %1560 = vst.msk [vmem:[#allocation3 + $0x50] sm:$0xff] %vm495, %v1544
      %1561 = vst.msk [vmem:[#allocation3 + $0x58] sm:$0xff] %vm495, %v1545
      %1562 = vst.msk [vmem:[#allocation3 + $0x60] sm:$0xff] %vm495, %v1546
      %1563 = vst.msk [vmem:[#allocation3 + $0x68] sm:$0xff] %vm495, %v1547
      %1564 = vst.msk [vmem:[#allocation3 + $0x70] sm:$0xff] %vm495, %v1548
      %1565 = vst.msk [vmem:[#allocation3 + $0x78] sm:$0xff] %vm495, %v1549
      %v1566 = vld [vmem:[#allocation3] sm:$0xff]
      %v1567 = vld [vmem:[#allocation3 + $0x8] sm:$0xff]
      %v1568 = vld [vmem:[#allocation3 + $0x10] sm:$0xff]
      %v1569 = vld [vmem:[#allocation3 + $0x18] sm:$0xff]
      %v1570 = vld [vmem:[#allocation3 + $0x20] sm:$0xff]
      %v1571 = vld [vmem:[#allocation3 + $0x28] sm:$0xff]
      %v1572 = vld [vmem:[#allocation3 + $0x30] sm:$0xff]
      %v1573 = vld [vmem:[#allocation3 + $0x38] sm:$0xff]
      %v1574 = vld [vmem:[#allocation3 + $0x40] sm:$0xff]
      %v1575 = vld [vmem:[#allocation3 + $0x48] sm:$0xff]
      %v1576 = vld [vmem:[#allocation3 + $0x50] sm:$0xff]
      %v1577 = vld [vmem:[#allocation3 + $0x58] sm:$0xff]
      %v1578 = vld [vmem:[#allocation3 + $0x60] sm:$0xff]
      %v1579 = vld [vmem:[#allocation3 + $0x68] sm:$0xff]
      %v1580 = vld [vmem:[#allocation3 + $0x70] sm:$0xff]
      %v1581 = vld [vmem:[#allocation3 + $0x78] sm:$0xff]
      %v1582 = vpack.c.bf16 %v570, %v569
      %s1583 = scalar_lea.vmem %s3, 128
      %v1584 = vld [vmem:[%s1583] sm:$0xf]
      %v1585 = vld [vmem:[%s1583 + $0x4] sm:$0xf]
      %v1586 = vld [vmem:[%s1583 + $0x8] sm:$0xf]
      %v1587 = vld [vmem:[%s1583 + $0xc] sm:$0xf]
      %v1588 = vld [vmem:[%s1583 + $0x10] sm:$0xf]
      %v1589 = vld [vmem:[%s1583 + $0x14] sm:$0xf]
      %v1590 = vld [vmem:[%s1583 + $0x18] sm:$0xf]
      %v1591 = vld [vmem:[%s1583 + $0x1c] sm:$0xf]
      %v1600 = vunpack.c.l.b16 %v1584
      %v1601 = vunpack.c.l.b16 %v1585
      %v1602 = vunpack.c.l.b16 %v1586
      %v1603 = vunpack.c.l.b16 %v1587
      %v1604 = vunpack.c.l.b16 %v1588
      %v1605 = vunpack.c.l.b16 %v1589
      %v1606 = vunpack.c.l.b16 %v1590
      %v1607 = vunpack.c.l.b16 %v1591
      %v1608 = vpack.c.b16 %v1601, %v1600
      %v1609 = vpack.c.b16 %v1603, %v1602
      %v1610 = vpack.c.b16 %v1605, %v1604
      %v1611 = vpack.c.b16 %v1607, %v1606
      %v1617 = vsel %vm495, %v1582, 0
      %1619 = vmatprep.subr.bf16.mxu0 0
      %1620 = vmatpush1.bf16.msra.mxu0 %v1608
      %1621 = vmatprep.subr.bf16.mxu0 0
      %1622 = vmatpush1.bf16.msra.mxu0 %v1609
      %1623 = vmatprep.subr.bf16.mxu0 0
      %1624 = vmatpush1.bf16.msra.mxu0 %v1610
      %1625 = vmatprep.subr.bf16.mxu0 0
      %1626 = vmatpush1.bf16.msra.mxu0 %v1611
      %1627 = vmatprep.subr.bf16.mxu0 0
      %1628 = vmatpush1.bf16.msra.mxu0 0
      %1629 = vmatprep.subr.bf16.mxu0 0
      %1630 = vmatpush1.bf16.msra.mxu0 0
      %1631 = vmatprep.subr.bf16.mxu0 0
      %1632 = vmatpush1.bf16.msra.mxu0 0
      %1633 = vmatprep.subr.bf16.mxu0 0
      %1634 = vmatpush1.bf16.msra.mxu0 0
      %1635 = vmatprep.subr.bf16.mxu0 0
      %1636 = vmatpush1.bf16.msra.mxu0 0
      %1637 = vmatprep.subr.bf16.mxu0 0
      %1638 = vmatpush1.bf16.msra.mxu0 0
      %1639 = vmatprep.subr.bf16.mxu0 0
      %1640 = vmatpush1.bf16.msra.mxu0 0
      %1641 = vmatprep.subr.bf16.mxu0 0
      %1642 = vmatpush1.bf16.msra.mxu0 0
      %1643 = vmatprep.subr.bf16.mxu0 0
      %1644 = vmatpush1.bf16.msra.mxu0 0
      %1645 = vmatprep.subr.bf16.mxu0 0
      %1646 = vmatpush1.bf16.msra.mxu0 0
      %1647 = vmatprep.subr.bf16.mxu0 0
      %1648 = vmatpush1.bf16.msra.mxu0 0
      %1649 = vmatprep.subr.bf16.mxu0 0
      %1650 = vmatpush1.bf16.msra.mxu0 0
      %1651 = vmatprep.mubr.bf16.mxu0 0
      %1652 = vmatmul.mubr.bf16.gmra.mrb[0].mxu0 %v950
      %v1653 = vpop.f32.mrb[0].mxu0
      %v1654 = vadd.f32 0.0, %v1653
      %v1655 = vpop.f32.mrb[0].mxu0
      %v1656 = vpop.f32.mrb[0].mxu0
      %v1657 = vadd.f32 0.0, %v1656
      %v1658 = vpop.f32.mrb[0].mxu0
      %1659 = vmatprep.mubr.bf16.mxu0 0
      %1660 = vmatmul.mubr.bf16.gmra.mrb[0].mxu0 %v953
      %v1661 = vpop.f32.mrb[0].mxu0
      %v1662 = vadd.f32 0.0, %v1661
      %v1663 = vpop.f32.mrb[0].mxu0
      %v1664 = vpop.f32.mrb[0].mxu0
      %v1665 = vadd.f32 0.0, %v1664
      %v1666 = vpop.f32.mrb[0].mxu0
      %1667 = vmatprep.mubr.bf16.mxu0 0
      %1668 = vmatmul.mubr.bf16.gmra.mrb[0].mxu0 %v956
      %v1669 = vpop.f32.mrb[0].mxu0
      %v1670 = vadd.f32 0.0, %v1669
      %v1671 = vpop.f32.mrb[0].mxu0
      %v1672 = vpop.f32.mrb[0].mxu0
      %v1673 = vadd.f32 0.0, %v1672
      %v1674 = vpop.f32.mrb[0].mxu0
      %1675 = vmatprep.mubr.bf16.mxu0 0
      %1676 = vmatmul.mubr.bf16.gmra.mrb[0].mxu0 %v959
      %v1677 = vpop.f32.mrb[0].mxu0
      %v1678 = vadd.f32 0.0, %v1677
      %v1679 = vpop.f32.mrb[0].mxu0
      %v1680 = vpop.f32.mrb[0].mxu0
      %v1681 = vadd.f32 0.0, %v1680
      %v1682 = vpop.f32.mrb[0].mxu0
      %1683 = vmatprep.mubr.bf16.mxu0 0
      %1684 = vmatmul.mubr.bf16.gmra.mrb[0].mxu0 %v962
      %v1685 = vpop.f32.mrb[0].mxu0
      %v1686 = vadd.f32 0.0, %v1685
      %v1687 = vpop.f32.mrb[0].mxu0
      %v1688 = vpop.f32.mrb[0].mxu0
      %v1689 = vadd.f32 0.0, %v1688
      %v1690 = vpop.f32.mrb[0].mxu0
      %1691 = vmatprep.mubr.bf16.mxu0 0
      %1692 = vmatmul.mubr.bf16.gmra.mrb[0].mxu0 %v965
      %v1693 = vpop.f32.mrb[0].mxu0
      %v1694 = vadd.f32 0.0, %v1693
      %v1695 = vpop.f32.mrb[0].mxu0
      %v1696 = vpop.f32.mrb[0].mxu0
      %v1697 = vadd.f32 0.0, %v1696
      %v1698 = vpop.f32.mrb[0].mxu0
      %1699 = vmatprep.mubr.bf16.mxu0 0
      %1700 = vmatmul.mubr.bf16.gmra.mrb[0].mxu0 %v968
      %v1701 = vpop.f32.mrb[0].mxu0
      %v1702 = vadd.f32 0.0, %v1701
      %v1703 = vpop.f32.mrb[0].mxu0
      %v1704 = vpop.f32.mrb[0].mxu0
      %v1705 = vadd.f32 0.0, %v1704
      %v1706 = vpop.f32.mrb[0].mxu0
      %1707 = vmatprep.mubr.bf16.mxu0 0
      %1708 = vmatmul.mubr.bf16.gmra.mrb[0].mxu0 %v1617
      %v1709 = vpop.f32.mrb[0].mxu0
      %v1710 = vadd.f32 0.0, %v1709
      %v1711 = vpop.f32.mrb[0].mxu0
      %v1712 = vpop.f32.mrb[0].mxu0
      %v1713 = vadd.f32 0.0, %v1712
      %v1714 = vpop.f32.mrb[0].mxu0
      %1715 = vdwg.mxu0
      %v1716 = vadd.f32 %v1566, %v1654
      %v1717 = vadd.f32 %v1567, %v1657
      %v1718 = vadd.f32 %v1568, %v1662
      %v1719 = vadd.f32 %v1569, %v1665
      %v1720 = vadd.f32 %v1570, %v1670
      %v1721 = vadd.f32 %v1571, %v1673
      %v1722 = vadd.f32 %v1572, %v1678
      %v1723 = vadd.f32 %v1573, %v1681
      %v1724 = vadd.f32 %v1574, %v1686
      %v1725 = vadd.f32 %v1575, %v1689
      %v1726 = vadd.f32 %v1576, %v1694
      %v1727 = vadd.f32 %v1577, %v1697
      %v1728 = vadd.f32 %v1578, %v1702
      %v1729 = vadd.f32 %v1579, %v1705
      %v1730 = vadd.f32 %v1580, %v1710
      %v1731 = vadd.f32 %v1581, %v1713
      %1732 = vst.msk [vmem:[#allocation3] sm:$0xff] %vm495, %v1716
      %1733 = vst.msk [vmem:[#allocation3 + $0x8] sm:$0xff] %vm495, %v1717
      %1734 = vst.msk [vmem:[#allocation3 + $0x10] sm:$0xff] %vm495, %v1718
      %1735 = vst.msk [vmem:[#allocation3 + $0x18] sm:$0xff] %vm495, %v1719
      %1736 = vst.msk [vmem:[#allocation3 + $0x20] sm:$0xff] %vm495, %v1720
      %1737 = vst.msk [vmem:[#allocation3 + $0x28] sm:$0xff] %vm495, %v1721
      %1738 = vst.msk [vmem:[#allocation3 + $0x30] sm:$0xff] %vm495, %v1722
      %1739 = vst.msk [vmem:[#allocation3 + $0x38] sm:$0xff] %vm495, %v1723
      %1740 = vst.msk [vmem:[#allocation3 + $0x40] sm:$0xff] %vm495, %v1724
      %1741 = vst.msk [vmem:[#allocation3 + $0x48] sm:$0xff] %vm495, %v1725
      %1742 = vst.msk [vmem:[#allocation3 + $0x50] sm:$0xff] %vm495, %v1726
      %1743 = vst.msk [vmem:[#allocation3 + $0x58] sm:$0xff] %vm495, %v1727
      %1744 = vst.msk [vmem:[#allocation3 + $0x60] sm:$0xff] %vm495, %v1728
      %1745 = vst.msk [vmem:[#allocation3 + $0x68] sm:$0xff] %vm495, %v1729
      %1746 = vst.msk [vmem:[#allocation3 + $0x70] sm:$0xff] %vm495, %v1730
      %1747 = vst.msk [vmem:[#allocation3 + $0x78] sm:$0xff] %vm495, %v1731
      %v1749 = vrot.slane %v569, 1
      %v1750 = vrot.slane %v570, 1
      %v1751 = vsel %vm1107, %v1749, %v1750
      %v1752 = vrot.slane %v571, 1
      %v1753 = vsel %vm1107, %v1750, %v1752
      %v1756 = vld [vmem:[#allocation3] sm:$0xff]
      %v1757 = vld [vmem:[#allocation3 + $0x8] sm:$0xff]
      %v1758 = vld [vmem:[#allocation3 + $0x10] sm:$0xff]
      %v1759 = vld [vmem:[#allocation3 + $0x18] sm:$0xff]
      %v1760 = vld [vmem:[#allocation3 + $0x20] sm:$0xff]
      %v1761 = vld [vmem:[#allocation3 + $0x28] sm:$0xff]
      %v1762 = vld [vmem:[#allocation3 + $0x30] sm:$0xff]
      %v1763 = vld [vmem:[#allocation3 + $0x38] sm:$0xff]
      %v1764 = vld [vmem:[#allocation3 + $0x40] sm:$0xff]
      %v1765 = vld [vmem:[#allocation3 + $0x48] sm:$0xff]
      %v1766 = vld [vmem:[#allocation3 + $0x50] sm:$0xff]
      %v1767 = vld [vmem:[#allocation3 + $0x58] sm:$0xff]
      %v1768 = vld [vmem:[#allocation3 + $0x60] sm:$0xff]
      %v1769 = vld [vmem:[#allocation3 + $0x68] sm:$0xff]
      %v1770 = vld [vmem:[#allocation3 + $0x70] sm:$0xff]
      %v1771 = vld [vmem:[#allocation3 + $0x78] sm:$0xff]
      %v1772 = vpack.c.bf16 %v1753, %v1751
      %s1773 = scalar_lea.vmem %s3, 160
      %v1774 = vld [vmem:[%s1773] sm:$0xf]
      %v1775 = vld [vmem:[%s1773 + $0x4] sm:$0xf]
      %v1776 = vld [vmem:[%s1773 + $0x8] sm:$0xf]
      %v1777 = vld [vmem:[%s1773 + $0xc] sm:$0xf]
      %v1778 = vld [vmem:[%s1773 + $0x10] sm:$0xf]
      %v1779 = vld [vmem:[%s1773 + $0x14] sm:$0xf]
      %v1780 = vld [vmem:[%s1773 + $0x18] sm:$0xf]
      %v1781 = vld [vmem:[%s1773 + $0x1c] sm:$0xf]
      %v1790 = vunpack.c.l.b16 %v1774
      %v1791 = vunpack.c.l.b16 %v1775
      %v1792 = vunpack.c.l.b16 %v1776
      %v1793 = vunpack.c.l.b16 %v1777
      %v1794 = vunpack.c.l.b16 %v1778
      %v1795 = vunpack.c.l.b16 %v1779
      %v1796 = vunpack.c.l.b16 %v1780
      %v1797 = vunpack.c.l.b16 %v1781
      %v1798 = vpack.c.b16 %v1791, %v1790
      %v1799 = vpack.c.b16 %v1793, %v1792
      %v1800 = vpack.c.b16 %v1795, %v1794
      %v1801 = vpack.c.b16 %v1797, %v1796
      %v1807 = vsel %vm495, %v1772, 0
      %1809 = vmatprep.subr.bf16.mxu0 0
      %1810 = vmatpush1.bf16.msra.mxu0 %v1798
      %1811 = vmatprep.subr.bf16.mxu0 0
      %1812 = vmatpush1.bf16.msra.mxu0 %v1799
      %1813 = vmatprep.subr.bf16.mxu0 0
      %1814 = vmatpush1.bf16.msra.mxu0 %v1800
      %1815 = vmatprep.subr.bf16.mxu0 0
      %1816 = vmatpush1.bf16.msra.mxu0 %v1801
      %1817 = vmatprep.subr.bf16.mxu0 0
      %1818 = vmatpush1.bf16.msra.mxu0 0
      %1819 = vmatprep.subr.bf16.mxu0 0
      %1820 = vmatpush1.bf16.msra.mxu0 0
      %1821 = vmatprep.subr.bf16.mxu0 0
      %1822 = vmatpush1.bf16.msra.mxu0 0
      %1823 = vmatprep.subr.bf16.mxu0 0
      %1824 = vmatpush1.bf16.msra.mxu0 0
      %1825 = vmatprep.subr.bf16.mxu0 0
      %1826 = vmatpush1.bf16.msra.mxu0 0
      %1827 = vmatprep.subr.bf16.mxu0 0
      %1828 = vmatpush1.bf16.msra.mxu0 0
      %1829 = vmatprep.subr.bf16.mxu0 0
      %1830 = vmatpush1.bf16.msra.mxu0 0
      %1831 = vmatprep.subr.bf16.mxu0 0
      %1832 = vmatpush1.bf16.msra.mxu0 0
      %1833 = vmatprep.subr.bf16.mxu0 0
      %1834 = vmatpush1.bf16.msra.mxu0 0
      %1835 = vmatprep.subr.bf16.mxu0 0
      %1836 = vmatpush1.bf16.msra.mxu0 0
      %1837 = vmatprep.subr.bf16.mxu0 0
      %1838 = vmatpush1.bf16.msra.mxu0 0
      %1839 = vmatprep.subr.bf16.mxu0 0
      %1840 = vmatpush1.bf16.msra.mxu0 0
      %1841 = vmatprep.mubr.bf16.mxu0 0
      %1842 = vmatmul.mubr.bf16.gmra.mrb[0].mxu0 %v1225
      %v1843 = vpop.f32.mrb[0].mxu0
      %v1844 = vadd.f32 0.0, %v1843
      %v1845 = vpop.f32.mrb[0].mxu0
      %v1846 = vpop.f32.mrb[0].mxu0
      %v1847 = vadd.f32 0.0, %v1846
      %v1848 = vpop.f32.mrb[0].mxu0
      %1849 = vmatprep.mubr.bf16.mxu0 0
      %1850 = vmatmul.mubr.bf16.gmra.mrb[0].mxu0 %v1228
      %v1851 = vpop.f32.mrb[0].mxu0
      %v1852 = vadd.f32 0.0, %v1851
      %v1853 = vpop.f32.mrb[0].mxu0
      %v1854 = vpop.f32.mrb[0].mxu0
      %v1855 = vadd.f32 0.0, %v1854
      %v1856 = vpop.f32.mrb[0].mxu0
      %1857 = vmatprep.mubr.bf16.mxu0 0
      %1858 = vmatmul.mubr.bf16.gmra.mrb[0].mxu0 %v1231
      %v1859 = vpop.f32.mrb[0].mxu0
      %v1860 = vadd.f32 0.0, %v1859
      %v1861 = vpop.f32.mrb[0].mxu0
      %v1862 = vpop.f32.mrb[0].mxu0
      %v1863 = vadd.f32 0.0, %v1862
      %v1864 = vpop.f32.mrb[0].mxu0
      %1865 = vmatprep.mubr.bf16.mxu0 0
      %1866 = vmatmul.mubr.bf16.gmra.mrb[0].mxu0 %v1234
      %v1867 = vpop.f32.mrb[0].mxu0
      %v1868 = vadd.f32 0.0, %v1867
      %v1869 = vpop.f32.mrb[0].mxu0
      %v1870 = vpop.f32.mrb[0].mxu0
      %v1871 = vadd.f32 0.0, %v1870
      %v1872 = vpop.f32.mrb[0].mxu0
      %1873 = vmatprep.mubr.bf16.mxu0 0
      %1874 = vmatmul.mubr.bf16.gmra.mrb[0].mxu0 %v1237
      %v1875 = vpop.f32.mrb[0].mxu0
      %v1876 = vadd.f32 0.0, %v1875
      %v1877 = vpop.f32.mrb[0].mxu0
      %v1878 = vpop.f32.mrb[0].mxu0
      %v1879 = vadd.f32 0.0, %v1878
      %v1880 = vpop.f32.mrb[0].mxu0
      %1881 = vmatprep.mubr.bf16.mxu0 0
      %1882 = vmatmul.mubr.bf16.gmra.mrb[0].mxu0 %v1240
      %v1883 = vpop.f32.mrb[0].mxu0
      %v1884 = vadd.f32 0.0, %v1883
      %v1885 = vpop.f32.mrb[0].mxu0
      %v1886 = vpop.f32.mrb[0].mxu0
      %v1887 = vadd.f32 0.0, %v1886
      %v1888 = vpop.f32.mrb[0].mxu0
      %1889 = vmatprep.mubr.bf16.mxu0 0
      %1890 = vmatmul.mubr.bf16.gmra.mrb[0].mxu0 %v1243
      %v1891 = vpop.f32.mrb[0].mxu0
      %v1892 = vadd.f32 0.0, %v1891
      %v1893 = vpop.f32.mrb[0].mxu0
      %v1894 = vpop.f32.mrb[0].mxu0
      %v1895 = vadd.f32 0.0, %v1894
      %v1896 = vpop.f32.mrb[0].mxu0
      %1897 = vmatprep.mubr.bf16.mxu0 0
      %1898 = vmatmul.mubr.bf16.gmra.mrb[0].mxu0 %v1807
      %v1899 = vpop.f32.mrb[0].mxu0
      %v1900 = vadd.f32 0.0, %v1899
      %v1901 = vpop.f32.mrb[0].mxu0
      %v1902 = vpop.f32.mrb[0].mxu0
      %v1903 = vadd.f32 0.0, %v1902
      %v1904 = vpop.f32.mrb[0].mxu0
      %1905 = vdwg.mxu0
      %v1906 = vadd.f32 %v1756, %v1844
      %v1907 = vadd.f32 %v1757, %v1847
      %v1908 = vadd.f32 %v1758, %v1852
      %v1909 = vadd.f32 %v1759, %v1855
      %v1910 = vadd.f32 %v1760, %v1860
      %v1911 = vadd.f32 %v1761, %v1863
      %v1912 = vadd.f32 %v1762, %v1868
      %v1913 = vadd.f32 %v1763, %v1871
      %v1914 = vadd.f32 %v1764, %v1876
      %v1915 = vadd.f32 %v1765, %v1879
      %v1916 = vadd.f32 %v1766, %v1884
      %v1917 = vadd.f32 %v1767, %v1887
      %v1918 = vadd.f32 %v1768, %v1892
      %v1919 = vadd.f32 %v1769, %v1895
      %v1920 = vadd.f32 %v1770, %v1900
      %v1921 = vadd.f32 %v1771, %v1903
      %1922 = vst.msk [vmem:[#allocation3] sm:$0xff] %vm495, %v1906
      %1923 = vst.msk [vmem:[#allocation3 + $0x8] sm:$0xff] %vm495, %v1907
      %1924 = vst.msk [vmem:[#allocation3 + $0x10] sm:$0xff] %vm495, %v1908
      %1925 = vst.msk [vmem:[#allocation3 + $0x18] sm:$0xff] %vm495, %v1909
      %1926 = vst.msk [vmem:[#allocation3 + $0x20] sm:$0xff] %vm495, %v1910
      %1927 = vst.msk [vmem:[#allocation3 + $0x28] sm:$0xff] %vm495, %v1911
      %1928 = vst.msk [vmem:[#allocation3 + $0x30] sm:$0xff] %vm495, %v1912
      %1929 = vst.msk [vmem:[#allocation3 + $0x38] sm:$0xff] %vm495, %v1913
      %1930 = vst.msk [vmem:[#allocation3 + $0x40] sm:$0xff] %vm495, %v1914
      %1931 = vst.msk [vmem:[#allocation3 + $0x48] sm:$0xff] %vm495, %v1915
      %1932 = vst.msk [vmem:[#allocation3 + $0x50] sm:$0xff] %vm495, %v1916
      %1933 = vst.msk [vmem:[#allocation3 + $0x58] sm:$0xff] %vm495, %v1917
      %1934 = vst.msk [vmem:[#allocation3 + $0x60] sm:$0xff] %vm495, %v1918
      %1935 = vst.msk [vmem:[#allocation3 + $0x68] sm:$0xff] %vm495, %v1919
      %1936 = vst.msk [vmem:[#allocation3 + $0x70] sm:$0xff] %vm495, %v1920
      %1937 = vst.msk [vmem:[#allocation3 + $0x78] sm:$0xff] %vm495, %v1921
      %v1941 = vrot.slane %v572, 7
      %v1942 = vrot.slane %v573, 7
      %v1943 = vsel %vm623, %v1941, %v1942
      %v1944 = vrot.slane %v574, 7
      %v1945 = vsel %vm623, %v1942, %v1944
      %v1948 = vld [vmem:[#allocation3] sm:$0xff]
      %v1949 = vld [vmem:[#allocation3 + $0x8] sm:$0xff]
      %v1950 = vld [vmem:[#allocation3 + $0x10] sm:$0xff]
      %v1951 = vld [vmem:[#allocation3 + $0x18] sm:$0xff]
      %v1952 = vld [vmem:[#allocation3 + $0x20] sm:$0xff]
      %v1953 = vld [vmem:[#allocation3 + $0x28] sm:$0xff]
      %v1954 = vld [vmem:[#allocation3 + $0x30] sm:$0xff]
      %v1955 = vld [vmem:[#allocation3 + $0x38] sm:$0xff]
      %v1956 = vld [vmem:[#allocation3 + $0x40] sm:$0xff]
      %v1957 = vld [vmem:[#allocation3 + $0x48] sm:$0xff]
      %v1958 = vld [vmem:[#allocation3 + $0x50] sm:$0xff]
      %v1959 = vld [vmem:[#allocation3 + $0x58] sm:$0xff]
      %v1960 = vld [vmem:[#allocation3 + $0x60] sm:$0xff]
      %v1961 = vld [vmem:[#allocation3 + $0x68] sm:$0xff]
      %v1962 = vld [vmem:[#allocation3 + $0x70] sm:$0xff]
      %v1963 = vld [vmem:[#allocation3 + $0x78] sm:$0xff]
      %v1964 = vpack.c.bf16 %v1945, %v1943
      %s1965 = scalar_lea.vmem %s3, 192
      %v1966 = vld [vmem:[%s1965] sm:$0xf]
      %v1967 = vld [vmem:[%s1965 + $0x4] sm:$0xf]
      %v1968 = vld [vmem:[%s1965 + $0x8] sm:$0xf]
      %v1969 = vld [vmem:[%s1965 + $0xc] sm:$0xf]
      %v1970 = vld [vmem:[%s1965 + $0x10] sm:$0xf]
      %v1971 = vld [vmem:[%s1965 + $0x14] sm:$0xf]
      %v1972 = vld [vmem:[%s1965 + $0x18] sm:$0xf]
      %v1973 = vld [vmem:[%s1965 + $0x1c] sm:$0xf]
      %v1982 = vunpack.c.l.b16 %v1966
      %v1983 = vunpack.c.l.b16 %v1967
      %v1984 = vunpack.c.l.b16 %v1968
      %v1985 = vunpack.c.l.b16 %v1969
      %v1986 = vunpack.c.l.b16 %v1970
      %v1987 = vunpack.c.l.b16 %v1971
      %v1988 = vunpack.c.l.b16 %v1972
      %v1989 = vunpack.c.l.b16 %v1973
      %v1990 = vpack.c.b16 %v1983, %v1982
      %v1991 = vpack.c.b16 %v1985, %v1984
      %v1992 = vpack.c.b16 %v1987, %v1986
      %v1993 = vpack.c.b16 %v1989, %v1988
      %v1999 = vsel %vm495, %v1964, 0
      %2001 = vmatprep.subr.bf16.mxu0 0
      %2002 = vmatpush1.bf16.msra.mxu0 %v1990
      %2003 = vmatprep.subr.bf16.mxu0 0
      %2004 = vmatpush1.bf16.msra.mxu0 %v1991
      %2005 = vmatprep.subr.bf16.mxu0 0
      %2006 = vmatpush1.bf16.msra.mxu0 %v1992
      %2007 = vmatprep.subr.bf16.mxu0 0
      %2008 = vmatpush1.bf16.msra.mxu0 %v1993
      %2009 = vmatprep.subr.bf16.mxu0 0
      %2010 = vmatpush1.bf16.msra.mxu0 0
      %2011 = vmatprep.subr.bf16.mxu0 0
      %2012 = vmatpush1.bf16.msra.mxu0 0
      %2013 = vmatprep.subr.bf16.mxu0 0
      %2014 = vmatpush1.bf16.msra.mxu0 0
      %2015 = vmatprep.subr.bf16.mxu0 0
      %2016 = vmatpush1.bf16.msra.mxu0 0
      %2017 = vmatprep.subr.bf16.mxu0 0
      %2018 = vmatpush1.bf16.msra.mxu0 0
      %2019 = vmatprep.subr.bf16.mxu0 0
      %2020 = vmatpush1.bf16.msra.mxu0 0
      %2021 = vmatprep.subr.bf16.mxu0 0
      %2022 = vmatpush1.bf16.msra.mxu0 0
      %2023 = vmatprep.subr.bf16.mxu0 0
      %2024 = vmatpush1.bf16.msra.mxu0 0
      %2025 = vmatprep.subr.bf16.mxu0 0
      %2026 = vmatpush1.bf16.msra.mxu0 0
      %2027 = vmatprep.subr.bf16.mxu0 0
      %2028 = vmatpush1.bf16.msra.mxu0 0
      %2029 = vmatprep.subr.bf16.mxu0 0
      %2030 = vmatpush1.bf16.msra.mxu0 0
      %2031 = vmatprep.subr.bf16.mxu0 0
      %2032 = vmatpush1.bf16.msra.mxu0 0
      %2033 = vmatprep.mubr.bf16.mxu0 0
      %2034 = vmatmul.mubr.bf16.gmra.mrb[0].mxu0 %v743
      %v2035 = vpop.f32.mrb[0].mxu0
      %v2036 = vadd.f32 0.0, %v2035
      %v2037 = vpop.f32.mrb[0].mxu0
      %v2038 = vpop.f32.mrb[0].mxu0
      %v2039 = vadd.f32 0.0, %v2038
      %v2040 = vpop.f32.mrb[0].mxu0
      %2041 = vmatprep.mubr.bf16.mxu0 0
      %2042 = vmatmul.mubr.bf16.gmra.mrb[0].mxu0 %v746
      %v2043 = vpop.f32.mrb[0].mxu0
      %v2044 = vadd.f32 0.0, %v2043
      %v2045 = vpop.f32.mrb[0].mxu0
      %v2046 = vpop.f32.mrb[0].mxu0
      %v2047 = vadd.f32 0.0, %v2046
      %v2048 = vpop.f32.mrb[0].mxu0
      %2049 = vmatprep.mubr.bf16.mxu0 0
      %2050 = vmatmul.mubr.bf16.gmra.mrb[0].mxu0 %v749
      %v2051 = vpop.f32.mrb[0].mxu0
      %v2052 = vadd.f32 0.0, %v2051
      %v2053 = vpop.f32.mrb[0].mxu0
      %v2054 = vpop.f32.mrb[0].mxu0
      %v2055 = vadd.f32 0.0, %v2054
      %v2056 = vpop.f32.mrb[0].mxu0
      %2057 = vmatprep.mubr.bf16.mxu0 0
      %2058 = vmatmul.mubr.bf16.gmra.mrb[0].mxu0 %v752
      %v2059 = vpop.f32.mrb[0].mxu0
      %v2060 = vadd.f32 0.0, %v2059
      %v2061 = vpop.f32.mrb[0].mxu0
      %v2062 = vpop.f32.mrb[0].mxu0
      %v2063 = vadd.f32 0.0, %v2062
      %v2064 = vpop.f32.mrb[0].mxu0
      %2065 = vmatprep.mubr.bf16.mxu0 0
      %2066 = vmatmul.mubr.bf16.gmra.mrb[0].mxu0 %v755
      %v2067 = vpop.f32.mrb[0].mxu0
      %v2068 = vadd.f32 0.0, %v2067
      %v2069 = vpop.f32.mrb[0].mxu0
      %v2070 = vpop.f32.mrb[0].mxu0
      %v2071 = vadd.f32 0.0, %v2070
      %v2072 = vpop.f32.mrb[0].mxu0
      %2073 = vmatprep.mubr.bf16.mxu0 0
      %2074 = vmatmul.mubr.bf16.gmra.mrb[0].mxu0 %v758
      %v2075 = vpop.f32.mrb[0].mxu0
      %v2076 = vadd.f32 0.0, %v2075
      %v2077 = vpop.f32.mrb[0].mxu0
      %v2078 = vpop.f32.mrb[0].mxu0
      %v2079 = vadd.f32 0.0, %v2078
      %v2080 = vpop.f32.mrb[0].mxu0
      %2081 = vmatprep.mubr.bf16.mxu0 0
      %2082 = vmatmul.mubr.bf16.gmra.mrb[0].mxu0 %v1435
      %v2083 = vpop.f32.mrb[0].mxu0
      %v2084 = vadd.f32 0.0, %v2083
      %v2085 = vpop.f32.mrb[0].mxu0
      %v2086 = vpop.f32.mrb[0].mxu0
      %v2087 = vadd.f32 0.0, %v2086
      %v2088 = vpop.f32.mrb[0].mxu0
      %2089 = vmatprep.mubr.bf16.mxu0 0
      %2090 = vmatmul.mubr.bf16.gmra.mrb[0].mxu0 %v1999
      %v2091 = vpop.f32.mrb[0].mxu0
      %v2092 = vadd.f32 0.0, %v2091
      %v2093 = vpop.f32.mrb[0].mxu0
      %v2094 = vpop.f32.mrb[0].mxu0
      %v2095 = vadd.f32 0.0, %v2094
      %v2096 = vpop.f32.mrb[0].mxu0
      %2097 = vdwg.mxu0
      %v2098 = vadd.f32 %v1948, %v2036
      %v2099 = vadd.f32 %v1949, %v2039
      %v2100 = vadd.f32 %v1950, %v2044
      %v2101 = vadd.f32 %v1951, %v2047
      %v2102 = vadd.f32 %v1952, %v2052
      %v2103 = vadd.f32 %v1953, %v2055
      %v2104 = vadd.f32 %v1954, %v2060
      %v2105 = vadd.f32 %v1955, %v2063
      %v2106 = vadd.f32 %v1956, %v2068
      %v2107 = vadd.f32 %v1957, %v2071
      %v2108 = vadd.f32 %v1958, %v2076
      %v2109 = vadd.f32 %v1959, %v2079
      %v2110 = vadd.f32 %v1960, %v2084
      %v2111 = vadd.f32 %v1961, %v2087
      %v2112 = vadd.f32 %v1962, %v2092
      %v2113 = vadd.f32 %v1963, %v2095
      %2114 = vst.msk [vmem:[#allocation3] sm:$0xff] %vm495, %v2098
      %2115 = vst.msk [vmem:[#allocation3 + $0x8] sm:$0xff] %vm495, %v2099
      %2116 = vst.msk [vmem:[#allocation3 + $0x10] sm:$0xff] %vm495, %v2100
      %2117 = vst.msk [vmem:[#allocation3 + $0x18] sm:$0xff] %vm495, %v2101
      %2118 = vst.msk [vmem:[#allocation3 + $0x20] sm:$0xff] %vm495, %v2102
      %2119 = vst.msk [vmem:[#allocation3 + $0x28] sm:$0xff] %vm495, %v2103
      %2120 = vst.msk [vmem:[#allocation3 + $0x30] sm:$0xff] %vm495, %v2104
      %2121 = vst.msk [vmem:[#allocation3 + $0x38] sm:$0xff] %vm495, %v2105
      %2122 = vst.msk [vmem:[#allocation3 + $0x40] sm:$0xff] %vm495, %v2106
      %2123 = vst.msk [vmem:[#allocation3 + $0x48] sm:$0xff] %vm495, %v2107
      %2124 = vst.msk [vmem:[#allocation3 + $0x50] sm:$0xff] %vm495, %v2108
      %2125 = vst.msk [vmem:[#allocation3 + $0x58] sm:$0xff] %vm495, %v2109
      %2126 = vst.msk [vmem:[#allocation3 + $0x60] sm:$0xff] %vm495, %v2110
      %2127 = vst.msk [vmem:[#allocation3 + $0x68] sm:$0xff] %vm495, %v2111
      %2128 = vst.msk [vmem:[#allocation3 + $0x70] sm:$0xff] %vm495, %v2112
      %2129 = vst.msk [vmem:[#allocation3 + $0x78] sm:$0xff] %vm495, %v2113
      %v2130 = vld [vmem:[#allocation3] sm:$0xff]
      %v2131 = vld [vmem:[#allocation3 + $0x8] sm:$0xff]
      %v2132 = vld [vmem:[#allocation3 + $0x10] sm:$0xff]
      %v2133 = vld [vmem:[#allocation3 + $0x18] sm:$0xff]
      %v2134 = vld [vmem:[#allocation3 + $0x20] sm:$0xff]
      %v2135 = vld [vmem:[#allocation3 + $0x28] sm:$0xff]
      %v2136 = vld [vmem:[#allocation3 + $0x30] sm:$0xff]
      %v2137 = vld [vmem:[#allocation3 + $0x38] sm:$0xff]
      %v2138 = vld [vmem:[#allocation3 + $0x40] sm:$0xff]
      %v2139 = vld [vmem:[#allocation3 + $0x48] sm:$0xff]
      %v2140 = vld [vmem:[#allocation3 + $0x50] sm:$0xff]
      %v2141 = vld [vmem:[#allocation3 + $0x58] sm:$0xff]
      %v2142 = vld [vmem:[#allocation3 + $0x60] sm:$0xff]
      %v2143 = vld [vmem:[#allocation3 + $0x68] sm:$0xff]
      %v2144 = vld [vmem:[#allocation3 + $0x70] sm:$0xff]
      %v2145 = vld [vmem:[#allocation3 + $0x78] sm:$0xff]
      %v2146 = vpack.c.bf16 %v574, %v573
      %s2147 = scalar_lea.vmem %s3, 224
      %v2148 = vld [vmem:[%s2147] sm:$0xf]
      %v2149 = vld [vmem:[%s2147 + $0x4] sm:$0xf]
      %v2150 = vld [vmem:[%s2147 + $0x8] sm:$0xf]
      %v2151 = vld [vmem:[%s2147 + $0xc] sm:$0xf]
      %v2152 = vld [vmem:[%s2147 + $0x10] sm:$0xf]
      %v2153 = vld [vmem:[%s2147 + $0x14] sm:$0xf]
      %v2154 = vld [vmem:[%s2147 + $0x18] sm:$0xf]
      %v2155 = vld [vmem:[%s2147 + $0x1c] sm:$0xf]
      %v2164 = vunpack.c.l.b16 %v2148
      %v2165 = vunpack.c.l.b16 %v2149
      %v2166 = vunpack.c.l.b16 %v2150
      %v2167 = vunpack.c.l.b16 %v2151
      %v2168 = vunpack.c.l.b16 %v2152
      %v2169 = vunpack.c.l.b16 %v2153
      %v2170 = vunpack.c.l.b16 %v2154
      %v2171 = vunpack.c.l.b16 %v2155
      %v2172 = vpack.c.b16 %v2165, %v2164
      %v2173 = vpack.c.b16 %v2167, %v2166
      %v2174 = vpack.c.b16 %v2169, %v2168
      %v2175 = vpack.c.b16 %v2171, %v2170
      %v2181 = vsel %vm495, %v2146, 0
      %2183 = vmatprep.subr.bf16.mxu0 0
      %2184 = vmatpush1.bf16.msra.mxu0 %v2172
      %2185 = vmatprep.subr.bf16.mxu0 0
      %2186 = vmatpush1.bf16.msra.mxu0 %v2173
      %2187 = vmatprep.subr.bf16.mxu0 0
      %2188 = vmatpush1.bf16.msra.mxu0 %v2174
      %2189 = vmatprep.subr.bf16.mxu0 0
      %2190 = vmatpush1.bf16.msra.mxu0 %v2175
      %2191 = vmatprep.subr.bf16.mxu0 0
      %2192 = vmatpush1.bf16.msra.mxu0 0
      %2193 = vmatprep.subr.bf16.mxu0 0
      %2194 = vmatpush1.bf16.msra.mxu0 0
      %2195 = vmatprep.subr.bf16.mxu0 0
      %2196 = vmatpush1.bf16.msra.mxu0 0
      %2197 = vmatprep.subr.bf16.mxu0 0
      %2198 = vmatpush1.bf16.msra.mxu0 0
      %2199 = vmatprep.subr.bf16.mxu0 0
      %2200 = vmatpush1.bf16.msra.mxu0 0
      %2201 = vmatprep.subr.bf16.mxu0 0
      %2202 = vmatpush1.bf16.msra.mxu0 0
      %2203 = vmatprep.subr.bf16.mxu0 0
      %2204 = vmatpush1.bf16.msra.mxu0 0
      %2205 = vmatprep.subr.bf16.mxu0 0
      %2206 = vmatpush1.bf16.msra.mxu0 0
      %2207 = vmatprep.subr.bf16.mxu0 0
      %2208 = vmatpush1.bf16.msra.mxu0 0
      %2209 = vmatprep.subr.bf16.mxu0 0
      %2210 = vmatpush1.bf16.msra.mxu0 0
      %2211 = vmatprep.subr.bf16.mxu0 0
      %2212 = vmatpush1.bf16.msra.mxu0 0
      %2213 = vmatprep.subr.bf16.mxu0 0
      %2214 = vmatpush1.bf16.msra.mxu0 0
      %2215 = vmatprep.mubr.bf16.mxu0 0
      %2216 = vmatmul.mubr.bf16.gmra.mrb[0].mxu0 %v953
      %v2217 = vpop.f32.mrb[0].mxu0
      %v2218 = vadd.f32 0.0, %v2217
      %v2219 = vpop.f32.mrb[0].mxu0
      %v2220 = vpop.f32.mrb[0].mxu0
      %v2221 = vadd.f32 0.0, %v2220
      %v2222 = vpop.f32.mrb[0].mxu0
      %2223 = vmatprep.mubr.bf16.mxu0 0
      %2224 = vmatmul.mubr.bf16.gmra.mrb[0].mxu0 %v956
      %v2225 = vpop.f32.mrb[0].mxu0
      %v2226 = vadd.f32 0.0, %v2225
      %v2227 = vpop.f32.mrb[0].mxu0
      %v2228 = vpop.f32.mrb[0].mxu0
      %v2229 = vadd.f32 0.0, %v2228
      %v2230 = vpop.f32.mrb[0].mxu0
      %2231 = vmatprep.mubr.bf16.mxu0 0
      %2232 = vmatmul.mubr.bf16.gmra.mrb[0].mxu0 %v959
      %v2233 = vpop.f32.mrb[0].mxu0
      %v2234 = vadd.f32 0.0, %v2233
      %v2235 = vpop.f32.mrb[0].mxu0
      %v2236 = vpop.f32.mrb[0].mxu0
      %v2237 = vadd.f32 0.0, %v2236
      %v2238 = vpop.f32.mrb[0].mxu0
      %2239 = vmatprep.mubr.bf16.mxu0 0
      %2240 = vmatmul.mubr.bf16.gmra.mrb[0].mxu0 %v962
      %v2241 = vpop.f32.mrb[0].mxu0
      %v2242 = vadd.f32 0.0, %v2241
      %v2243 = vpop.f32.mrb[0].mxu0
      %v2244 = vpop.f32.mrb[0].mxu0
      %v2245 = vadd.f32 0.0, %v2244
      %v2246 = vpop.f32.mrb[0].mxu0
      %2247 = vmatprep.mubr.bf16.mxu0 0
      %2248 = vmatmul.mubr.bf16.gmra.mrb[0].mxu0 %v965
      %v2249 = vpop.f32.mrb[0].mxu0
      %v2250 = vadd.f32 0.0, %v2249
      %v2251 = vpop.f32.mrb[0].mxu0
      %v2252 = vpop.f32.mrb[0].mxu0
      %v2253 = vadd.f32 0.0, %v2252
      %v2254 = vpop.f32.mrb[0].mxu0
      %2255 = vmatprep.mubr.bf16.mxu0 0
      %2256 = vmatmul.mubr.bf16.gmra.mrb[0].mxu0 %v968
      %v2257 = vpop.f32.mrb[0].mxu0
      %v2258 = vadd.f32 0.0, %v2257
      %v2259 = vpop.f32.mrb[0].mxu0
      %v2260 = vpop.f32.mrb[0].mxu0
      %v2261 = vadd.f32 0.0, %v2260
      %v2262 = vpop.f32.mrb[0].mxu0
      %2263 = vmatprep.mubr.bf16.mxu0 0
      %2264 = vmatmul.mubr.bf16.gmra.mrb[0].mxu0 %v1617
      %v2265 = vpop.f32.mrb[0].mxu0
      %v2266 = vadd.f32 0.0, %v2265
      %v2267 = vpop.f32.mrb[0].mxu0
      %v2268 = vpop.f32.mrb[0].mxu0
      %v2269 = vadd.f32 0.0, %v2268
      %v2270 = vpop.f32.mrb[0].mxu0
      %2271 = vmatprep.mubr.bf16.mxu0 0
      %2272 = vmatmul.mubr.bf16.gmra.mrb[0].mxu0 %v2181
      %v2273 = vpop.f32.mrb[0].mxu0
      %v2274 = vadd.f32 0.0, %v2273
      %v2275 = vpop.f32.mrb[0].mxu0
      %v2276 = vpop.f32.mrb[0].mxu0
      %v2277 = vadd.f32 0.0, %v2276
      %v2278 = vpop.f32.mrb[0].mxu0
      %2279 = vdwg.mxu0
      %v2280 = vadd.f32 %v2130, %v2218
      %v2281 = vadd.f32 %v2131, %v2221
      %v2282 = vadd.f32 %v2132, %v2226
      %v2283 = vadd.f32 %v2133, %v2229
      %v2284 = vadd.f32 %v2134, %v2234
      %v2285 = vadd.f32 %v2135, %v2237
      %v2286 = vadd.f32 %v2136, %v2242
      %v2287 = vadd.f32 %v2137, %v2245
      %v2288 = vadd.f32 %v2138, %v2250
      %v2289 = vadd.f32 %v2139, %v2253
      %v2290 = vadd.f32 %v2140, %v2258
      %v2291 = vadd.f32 %v2141, %v2261
      %v2292 = vadd.f32 %v2142, %v2266
      %v2293 = vadd.f32 %v2143, %v2269
      %v2294 = vadd.f32 %v2144, %v2274
      %v2295 = vadd.f32 %v2145, %v2277
      %2296 = vst.msk [vmem:[#allocation3] sm:$0xff] %vm495, %v2280
      %2297 = vst.msk [vmem:[#allocation3 + $0x8] sm:$0xff] %vm495, %v2281
      %2298 = vst.msk [vmem:[#allocation3 + $0x10] sm:$0xff] %vm495, %v2282
      %2299 = vst.msk [vmem:[#allocation3 + $0x18] sm:$0xff] %vm495, %v2283
      %2300 = vst.msk [vmem:[#allocation3 + $0x20] sm:$0xff] %vm495, %v2284
      %2301 = vst.msk [vmem:[#allocation3 + $0x28] sm:$0xff] %vm495, %v2285
      %2302 = vst.msk [vmem:[#allocation3 + $0x30] sm:$0xff] %vm495, %v2286
      %2303 = vst.msk [vmem:[#allocation3 + $0x38] sm:$0xff] %vm495, %v2287
      %2304 = vst.msk [vmem:[#allocation3 + $0x40] sm:$0xff] %vm495, %v2288
      %2305 = vst.msk [vmem:[#allocation3 + $0x48] sm:$0xff] %vm495, %v2289
      %2306 = vst.msk [vmem:[#allocation3 + $0x50] sm:$0xff] %vm495, %v2290
      %2307 = vst.msk [vmem:[#allocation3 + $0x58] sm:$0xff] %vm495, %v2291
      %2308 = vst.msk [vmem:[#allocation3 + $0x60] sm:$0xff] %vm495, %v2292
      %2309 = vst.msk [vmem:[#allocation3 + $0x68] sm:$0xff] %vm495, %v2293
      %2310 = vst.msk [vmem:[#allocation3 + $0x70] sm:$0xff] %vm495, %v2294
      %2311 = vst.msk [vmem:[#allocation3 + $0x78] sm:$0xff] %vm495, %v2295
      %v2313 = vrot.slane %v573, 1
      %v2314 = vrot.slane %v574, 1
      %v2315 = vsel %vm1107, %v2313, %v2314
      %v2316 = vrot.slane %v575, 1
      %v2317 = vsel %vm1107, %v2314, %v2316
      %v2320 = vld [vmem:[#allocation3] sm:$0xff]
      %v2321 = vld [vmem:[#allocation3 + $0x8] sm:$0xff]
      %v2322 = vld [vmem:[#allocation3 + $0x10] sm:$0xff]
      %v2323 = vld [vmem:[#allocation3 + $0x18] sm:$0xff]
      %v2324 = vld [vmem:[#allocation3 + $0x20] sm:$0xff]
      %v2325 = vld [vmem:[#allocation3 + $0x28] sm:$0xff]
      %v2326 = vld [vmem:[#allocation3 + $0x30] sm:$0xff]
      %v2327 = vld [vmem:[#allocation3 + $0x38] sm:$0xff]
      %v2328 = vld [vmem:[#allocation3 + $0x40] sm:$0xff]
      %v2329 = vld [vmem:[#allocation3 + $0x48] sm:$0xff]
      %v2330 = vld [vmem:[#allocation3 + $0x50] sm:$0xff]
      %v2331 = vld [vmem:[#allocation3 + $0x58] sm:$0xff]
      %v2332 = vld [vmem:[#allocation3 + $0x60] sm:$0xff]
      %v2333 = vld [vmem:[#allocation3 + $0x68] sm:$0xff]
      %v2334 = vld [vmem:[#allocation3 + $0x70] sm:$0xff]
      %v2335 = vld [vmem:[#allocation3 + $0x78] sm:$0xff]
      %v2336 = vpack.c.bf16 %v2317, %v2315
      %s2337 = scalar_lea.vmem %s3, 256
      %v2338 = vld [vmem:[%s2337] sm:$0xf]
      %v2339 = vld [vmem:[%s2337 + $0x4] sm:$0xf]
      %v2340 = vld [vmem:[%s2337 + $0x8] sm:$0xf]
      %v2341 = vld [vmem:[%s2337 + $0xc] sm:$0xf]
      %v2342 = vld [vmem:[%s2337 + $0x10] sm:$0xf]
      %v2343 = vld [vmem:[%s2337 + $0x14] sm:$0xf]
      %v2344 = vld [vmem:[%s2337 + $0x18] sm:$0xf]
      %v2345 = vld [vmem:[%s2337 + $0x1c] sm:$0xf]
      %v2354 = vunpack.c.l.b16 %v2338
      %v2355 = vunpack.c.l.b16 %v2339
      %v2356 = vunpack.c.l.b16 %v2340
      %v2357 = vunpack.c.l.b16 %v2341
      %v2358 = vunpack.c.l.b16 %v2342
      %v2359 = vunpack.c.l.b16 %v2343
      %v2360 = vunpack.c.l.b16 %v2344
      %v2361 = vunpack.c.l.b16 %v2345
      %v2362 = vpack.c.b16 %v2355, %v2354
      %v2363 = vpack.c.b16 %v2357, %v2356
      %v2364 = vpack.c.b16 %v2359, %v2358
      %v2365 = vpack.c.b16 %v2361, %v2360
      %v2371 = vsel %vm495, %v2336, 0
      %2373 = vmatprep.subr.bf16.mxu0 0
      %2374 = vmatpush1.bf16.msra.mxu0 %v2362
      %2375 = vmatprep.subr.bf16.mxu0 0
      %2376 = vmatpush1.bf16.msra.mxu0 %v2363
      %2377 = vmatprep.subr.bf16.mxu0 0
      %2378 = vmatpush1.bf16.msra.mxu0 %v2364
      %2379 = vmatprep.subr.bf16.mxu0 0
      %2380 = vmatpush1.bf16.msra.mxu0 %v2365
      %2381 = vmatprep.subr.bf16.mxu0 0
      %2382 = vmatpush1.bf16.msra.mxu0 0
      %2383 = vmatprep.subr.bf16.mxu0 0
      %2384 = vmatpush1.bf16.msra.mxu0 0
      %2385 = vmatprep.subr.bf16.mxu0 0
      %2386 = vmatpush1.bf16.msra.mxu0 0
      %2387 = vmatprep.subr.bf16.mxu0 0
      %2388 = vmatpush1.bf16.msra.mxu0 0
      %2389 = vmatprep.subr.bf16.mxu0 0
      %2390 = vmatpush1.bf16.msra.mxu0 0
      %2391 = vmatprep.subr.bf16.mxu0 0
      %2392 = vmatpush1.bf16.msra.mxu0 0
      %2393 = vmatprep.subr.bf16.mxu0 0
      %2394 = vmatpush1.bf16.msra.mxu0 0
      %2395 = vmatprep.subr.bf16.mxu0 0
      %2396 = vmatpush1.bf16.msra.mxu0 0
      %2397 = vmatprep.subr.bf16.mxu0 0
      %2398 = vmatpush1.bf16.msra.mxu0 0
      %2399 = vmatprep.subr.bf16.mxu0 0
      %2400 = vmatpush1.bf16.msra.mxu0 0
      %2401 = vmatprep.subr.bf16.mxu0 0
      %2402 = vmatpush1.bf16.msra.mxu0 0
      %2403 = vmatprep.subr.bf16.mxu0 0
      %2404 = vmatpush1.bf16.msra.mxu0 0
      %2405 = vmatprep.mubr.bf16.mxu0 0
      %2406 = vmatmul.mubr.bf16.gmra.mrb[0].mxu0 %v1228
      %v2407 = vpop.f32.mrb[0].mxu0
      %v2408 = vadd.f32 0.0, %v2407
      %v2409 = vpop.f32.mrb[0].mxu0
      %v2410 = vpop.f32.mrb[0].mxu0
      %v2411 = vadd.f32 0.0, %v2410
      %v2412 = vpop.f32.mrb[0].mxu0
      %2413 = vmatprep.mubr.bf16.mxu0 0
      %2414 = vmatmul.mubr.bf16.gmra.mrb[0].mxu0 %v1231
      %v2415 = vpop.f32.mrb[0].mxu0
      %v2416 = vadd.f32 0.0, %v2415
      %v2417 = vpop.f32.mrb[0].mxu0
      %v2418 = vpop.f32.mrb[0].mxu0
      %v2419 = vadd.f32 0.0, %v2418
      %v2420 = vpop.f32.mrb[0].mxu0
      %2421 = vmatprep.mubr.bf16.mxu0 0
      %2422 = vmatmul.mubr.bf16.gmra.mrb[0].mxu0 %v1234
      %v2423 = vpop.f32.mrb[0].mxu0
      %v2424 = vadd.f32 0.0, %v2423
      %v2425 = vpop.f32.mrb[0].mxu0
      %v2426 = vpop.f32.mrb[0].mxu0
      %v2427 = vadd.f32 0.0, %v2426
      %v2428 = vpop.f32.mrb[0].mxu0
      %2429 = vmatprep.mubr.bf16.mxu0 0
      %2430 = vmatmul.mubr.bf16.gmra.mrb[0].mxu0 %v1237
      %v2431 = vpop.f32.mrb[0].mxu0
      %v2432 = vadd.f32 0.0, %v2431
      %v2433 = vpop.f32.mrb[0].mxu0
      %v2434 = vpop.f32.mrb[0].mxu0
      %v2435 = vadd.f32 0.0, %v2434
      %v2436 = vpop.f32.mrb[0].mxu0
      %2437 = vmatprep.mubr.bf16.mxu0 0
      %2438 = vmatmul.mubr.bf16.gmra.mrb[0].mxu0 %v1240
      %v2439 = vpop.f32.mrb[0].mxu0
      %v2440 = vadd.f32 0.0, %v2439
      %v2441 = vpop.f32.mrb[0].mxu0
      %v2442 = vpop.f32.mrb[0].mxu0
      %v2443 = vadd.f32 0.0, %v2442
      %v2444 = vpop.f32.mrb[0].mxu0
      %2445 = vmatprep.mubr.bf16.mxu0 0
      %2446 = vmatmul.mubr.bf16.gmra.mrb[0].mxu0 %v1243
      %v2447 = vpop.f32.mrb[0].mxu0
      %v2448 = vadd.f32 0.0, %v2447
      %v2449 = vpop.f32.mrb[0].mxu0
      %v2450 = vpop.f32.mrb[0].mxu0
      %v2451 = vadd.f32 0.0, %v2450
      %v2452 = vpop.f32.mrb[0].mxu0
      %2453 = vmatprep.mubr.bf16.mxu0 0
      %2454 = vmatmul.mubr.bf16.gmra.mrb[0].mxu0 %v1807
      %v2455 = vpop.f32.mrb[0].mxu0
      %v2456 = vadd.f32 0.0, %v2455
      %v2457 = vpop.f32.mrb[0].mxu0
      %v2458 = vpop.f32.mrb[0].mxu0
      %v2459 = vadd.f32 0.0, %v2458
      %v2460 = vpop.f32.mrb[0].mxu0
      %2461 = vmatprep.mubr.bf16.mxu0 0
      %2462 = vmatmul.mubr.bf16.gmra.mrb[0].mxu0 %v2371
      %v2463 = vpop.f32.mrb[0].mxu0
      %v2464 = vadd.f32 0.0, %v2463
      %v2465 = vpop.f32.mrb[0].mxu0
      %v2466 = vpop.f32.mrb[0].mxu0
      %v2467 = vadd.f32 0.0, %v2466
      %v2468 = vpop.f32.mrb[0].mxu0
      %2469 = vdwg.mxu0
      %v2470 = vadd.f32 %v2320, %v2408
      %v2471 = vadd.f32 %v2321, %v2411
      %v2472 = vadd.f32 %v2322, %v2416
      %v2473 = vadd.f32 %v2323, %v2419
      %v2474 = vadd.f32 %v2324, %v2424
      %v2475 = vadd.f32 %v2325, %v2427
      %v2476 = vadd.f32 %v2326, %v2432
      %v2477 = vadd.f32 %v2327, %v2435
      %v2478 = vadd.f32 %v2328, %v2440
      %v2479 = vadd.f32 %v2329, %v2443
      %v2480 = vadd.f32 %v2330, %v2448
      %v2481 = vadd.f32 %v2331, %v2451
      %v2482 = vadd.f32 %v2332, %v2456
      %v2483 = vadd.f32 %v2333, %v2459
      %v2484 = vadd.f32 %v2334, %v2464
      %v2485 = vadd.f32 %v2335, %v2467
      %2486 = vst.msk [vmem:[#allocation3] sm:$0xff] %vm495, %v2470
      %2487 = vst.msk [vmem:[#allocation3 + $0x8] sm:$0xff] %vm495, %v2471
      %2488 = vst.msk [vmem:[#allocation3 + $0x10] sm:$0xff] %vm495, %v2472
      %2489 = vst.msk [vmem:[#allocation3 + $0x18] sm:$0xff] %vm495, %v2473
      %2490 = vst.msk [vmem:[#allocation3 + $0x20] sm:$0xff] %vm495, %v2474
      %2491 = vst.msk [vmem:[#allocation3 + $0x28] sm:$0xff] %vm495, %v2475
      %2492 = vst.msk [vmem:[#allocation3 + $0x30] sm:$0xff] %vm495, %v2476
      %2493 = vst.msk [vmem:[#allocation3 + $0x38] sm:$0xff] %vm495, %v2477
      %2494 = vst.msk [vmem:[#allocation3 + $0x40] sm:$0xff] %vm495, %v2478
      %2495 = vst.msk [vmem:[#allocation3 + $0x48] sm:$0xff] %vm495, %v2479
      %2496 = vst.msk [vmem:[#allocation3 + $0x50] sm:$0xff] %vm495, %v2480
      %2497 = vst.msk [vmem:[#allocation3 + $0x58] sm:$0xff] %vm495, %v2481
      %2498 = vst.msk [vmem:[#allocation3 + $0x60] sm:$0xff] %vm495, %v2482
      %2499 = vst.msk [vmem:[#allocation3 + $0x68] sm:$0xff] %vm495, %v2483
      %2500 = vst.msk [vmem:[#allocation3 + $0x70] sm:$0xff] %vm495, %v2484
      %2501 = vst.msk [vmem:[#allocation3 + $0x78] sm:$0xff] %vm495, %v2485
      %v2502 = vld [vmem:[#allocation3] ss:$2 sm:$0xff]
      %s2503 = scalar_lea.vmem [#allocation3], 16
      %v2504 = vld [vmem:[%s2503] ss:$2 sm:$0xff]
      %s2505 = scalar_lea.vmem [#allocation3], 32
      %v2506 = vld [vmem:[%s2505] ss:$2 sm:$0xff]
      %s2507 = scalar_lea.vmem [#allocation3], 48
      %v2508 = vld [vmem:[%s2507] ss:$2 sm:$0xff]
      %s2509 = scalar_lea.vmem [#allocation3], 64
      %v2510 = vld [vmem:[%s2509] ss:$2 sm:$0xff]
      %s2511 = scalar_lea.vmem [#allocation3], 80
      %v2512 = vld [vmem:[%s2511] ss:$2 sm:$0xff]
      %s2513 = scalar_lea.vmem [#allocation3], 96
      %v2514 = vld [vmem:[%s2513] ss:$2 sm:$0xff]
      %s2515 = scalar_lea.vmem [#allocation3], 112
      %v2516 = vld [vmem:[%s2515] ss:$2 sm:$0xff]
      %s2517 = scalar_lea.vmem [#allocation3], 1
      %v2518 = vld [vmem:[%s2517] ss:$2 sm:$0xff]
      %s2519 = scalar_lea.vmem [#allocation3], 17
      %v2520 = vld [vmem:[%s2519] ss:$2 sm:$0xff]
      %s2521 = scalar_lea.vmem [#allocation3], 33
      %v2522 = vld [vmem:[%s2521] ss:$2 sm:$0xff]
      %s2523 = scalar_lea.vmem [#allocation3], 49
      %v2524 = vld [vmem:[%s2523] ss:$2 sm:$0xff]
      %s2525 = scalar_lea.vmem [#allocation3], 65
      %v2526 = vld [vmem:[%s2525] ss:$2 sm:$0xff]
      %s2527 = scalar_lea.vmem [#allocation3], 81
      %v2528 = vld [vmem:[%s2527] ss:$2 sm:$0xff]
      %s2529 = scalar_lea.vmem [#allocation3], 97
      %v2530 = vld [vmem:[%s2529] ss:$2 sm:$0xff]
      %s2531 = scalar_lea.vmem [#allocation3], 113
      %v2532 = vld [vmem:[%s2531] ss:$2 sm:$0xff]
      %v2533 = vmax.f32 %v2502, %v2518
      %v2534 = vmax.f32 %v2504, %v2520
      %v2535 = vmax.f32 %v2506, %v2522
      %v2536 = vmax.f32 %v2508, %v2524
      %v2537 = vmax.f32 %v2510, %v2526
      %v2538 = vmax.f32 %v2512, %v2528
      %v2539 = vmax.f32 %v2514, %v2530
      %v2540 = vmax.f32 %v2516, %v2532
      %v2541 = vmax.f32 %v2533, %v2534
      %v2542 = vmax.f32 %v2535, %v2536
      %v2543 = vmax.f32 %v2537, %v2538
      %v2544 = vmax.f32 %v2539, %v2540
      %v2545 = vmax.f32 %v2541, 0.0
      %v2546 = vmax.f32 %v2542, 0.0
      %v2547 = vmax.f32 %v2543, 0.0
      %v2548 = vmax.f32 %v2544, 0.0
      %v2549 = vpack.c.bf16 %v2545, %v2545
      %v2550 = vpack.c.bf16 %v2546, %v2546
      %v2551 = vpack.c.bf16 %v2547, %v2547
      %v2552 = vpack.c.bf16 %v2548, %v2548
      %vm2553 = vcmask 519168
      %2554 = vst.msk [vmem:[%s441] sm:$0xf] %vm2553, %v2549
      %2555 = vst.msk [vmem:[%s441 + $0x4] sm:$0xf] %vm2553, %v2550
      %2556 = vst.msk [vmem:[%s441 + $0x8] sm:$0xf] %vm2553, %v2551
      %2557 = vst.msk [vmem:[%s441 + $0xc] sm:$0xf] %vm2553, %v2552
      %s2558 = smul.u32 4, %s21
      %p2559 = scmp.lt.s32.totalorder %s20, 1
      %s2560 = scalar_select %p2559, %s20, 1
      %p2561 = scmp.lt.s32.totalorder %s2558, 7
      %s2562 = scalar_select %p2561, %s2558, 7
      %s2563 = smul.addr %s2560, 8
      %s2564 = sadd.s32 %s2562, %s2563
      %s2565 = smul.addr %s2564, 4
      %s2566 = scalar_lea.vmem %s5, %s2565
      // Predicated region
      $region41: #{vgg_feature_extractor.5} parent=39 // pred_check
        %p2567 = pneg %p202
      $region42: #{vgg_feature_extractor.5} parent=39 // pred_check_branch
        %2569 = sbr.rel (%p2567) target = $region44
      $region43: #{vgg_feature_extractor.5} parent=39 // pred_region
        %s2570 = smul.u32 4, %s21
      $region44: #{vgg_feature_extractor.5} parent=39 // pred_fallthru
        _
    $region40: #{vgg_feature_extractor.5} parent=5 // pred_fallthru
      _
    %p2571 = scmp.le.s32.totalorder 2, %s11
    // Predicated region
    $region45: #{vgg_feature_extractor.5} parent=5 // pred_check
      %p2572 = pneg %p2571
    $region46: #{vgg_feature_extractor.5} parent=5 // pred_check_branch
      %2574 = sbr.rel (%p2572) target = $region48
    $region47: #{vgg_feature_extractor.5} parent=5 // pred_region
      %s2575 = ssub.s32 %s11, 2
      // Predicated region
      $region49: #{vgg_feature_extractor.5} parent=47 // pred_check
        %p2576 = pneg %p208
      $region50: #{vgg_feature_extractor.5} parent=47 // pred_check_branch
        %2578 = sbr.rel (%p2576) target = $region52
      $region51: #{vgg_feature_extractor.5} parent=47 // pred_region
        %s2579 = smul.u32 4, %s23
        %p2580 = scmp.lt.s32.totalorder %s22, 1
        %s2581 = scalar_select %p2580, %s22, 1
        %p2582 = scmp.lt.s32.totalorder %s2579, 7
        %s2583 = scalar_select %p2582, %s2579, 7
        %s2584 = smul.addr %s2581, 8
        %s2585 = sadd.s32 %s2583, %s2584
        %s2586 = smul.addr %s2585, 4
        %s2587 = scalar_lea.vmem %s5, %s2586
      $region52: #{vgg_feature_extractor.5} parent=47 // pred_fallthru
        _
    $region48: #{vgg_feature_extractor.5} parent=5 // pred_fallthru
      _
  $region6: #{vgg_feature_extractor.5} parent=0 // loop_footer
    %s15 = sadd.s32 1, %s11
  $region7: #{vgg_feature_extractor.5} parent=0 // loop_footer_branch
    %10 = sbr.rel target = $region3
  $region8: #{vgg_feature_extractor.5} parent=0 // loop_exit
    _

// kernel: vgg_feature_extractor.4
$region0: #{vgg_feature_extractor.4}
  #allocation0 [shape = 'u32[]', space=smem, size = 0x4, offset = 0x4, fixed_abs, tag = 'smem constant byte address 0x4 - core index']
  #allocation1 [shape = 'u32[144,128]{1,0:T(1,128)}', space=vmem, size = 0x12000, scoped, tag = 'internal scratch']
  #allocation2 [shape = 'f32[10,32,3]{2,1,0:T(8,128)}', space=vmem, size = 0x28000, scoped, tag = 'scratch operand']
  #allocation3 [shape = 'f32[128,64]{1,0:T(8,128)}', space=vmem, size = 0x10000, scoped, tag = 'scratch operand']
  %s0 = inlined_call_operand.vmem [shape: f32[2,16,16,3], index: 0, kind: input, shape index: {}, may-alias: {0,1,2}]
  %s1 = inlined_call_operand.vmem [shape: f32[2,16,16,3], index: 1, kind: input, shape index: {}, may-alias: {0,1,2}]
  %s2 = inlined_call_operand.vmem [shape: f32[2,16,16,3], index: 2, kind: input, shape index: {}, may-alias: {0,1,2}]
  %s3 = inlined_call_operand.vmem [shape: bf16[3,3,3,64], index: 3, kind: input, shape index: {}]
  %s4 = inlined_call_operand.vmem [shape: f32[1,64], index: 4, kind: input, shape index: {}]
  %s5 = inlined_call_operand.vmem [shape: f32[1,3], index: 5, kind: input, shape index: {}]
  %s6 = inlined_call_operand.vmem [shape: f32[1,3], index: 6, kind: input, shape index: {}]
  %s7 = inlined_call_operand.vmem [shape: bf16[2,16,16,64], index: 7, kind: output, shape index: {}]
  %s8 = sld [smem:[#allocation0]]
  $region61: #{vgg_feature_extractor.4} parent=0
    _
  %s10 = ssub.s32 1, %s8
  %s11 = scalar_select 0, %s10, %s8
  loop: start=0, step=1, limit=6
  $region2: #{vgg_feature_extractor.4} parent=0 // loop_pre_header
    _
  $region3: #{vgg_feature_extractor.4} parent=0 // loop_header
    %s13 = sphi 0, %s17
    %p14 = scmp.ge.s32.totalorder %s13, 6
    %s20 = sphi 0, %s32
    %s21 = sphi 0, %s28
    %s22 = sphi 0, %s20
    %s23 = sphi 0, %s21
    %s24 = sphi 0, %s22
    %s25 = sphi 0, %s23
    %s45 = sphi 0, %s47
    %s48 = sphi 0, %s45
    %s49 = sphi 0, %s48
    %s65 = sphi 0, %s49
    %s83 = sphi 0, %s85
    %s86 = sphi 0, %s83
    %s87 = sphi 0, %s86
    %s103 = sphi 0, %s87
    %s121 = sphi 0, %s123
    %s124 = sphi 0, %s121
    %s125 = sphi 0, %s124
    %s141 = sphi 0, %s125
    %s145 = sphi 0, %s145
    %s147 = sphi 0, %s145
    %s148 = sphi 0, %s147
    %s162 = sphi 0, %s148
    %s166 = sphi 0, %s166
    %s168 = sphi 0, %s166
    %s169 = sphi 0, %s168
    %s183 = sphi 0, %s169
    %s187 = sphi 0, %s187
    %s189 = sphi 0, %s187
    %s190 = sphi 0, %s189
    %s204 = sphi 0, %s190
    %s208 = sphi 0, %s208
    %s210 = sphi 0, %s208
    %s211 = sphi 0, %s210
    %s225 = sphi 0, %s211
    %s233 = sphi 0, %s235
    %s236 = sphi 0, %s233
    %s237 = sphi 0, %s236
    %s253 = sphi 0, %s237
  $region4: #{vgg_feature_extractor.4} parent=0 // loop_header_branch
    %16 = sbr.rel (%p14) target = $region8
  $region5: #{vgg_feature_extractor.4} parent=0 // loop_body
    %s18 = ssub.s32 %s13, 1
    %s19 = ssub.s32 %s13, 2
    %s26 = sadd.s32 1, %s21
    %p27 = scmp.ge.s32.totalorder %s26, 2
    %s28 = scalar_select %p27, 0, %s26
    %s29 = sadd.s32 1, %s20
    %s30 = scalar_select %p27, %s29, %s20
    %p31 = scmp.ge.s32.totalorder %s30, 2
    %s32 = scalar_select %p31, 0, %s30
    %p33 = scmp.gt.s32.totalorder %s21, 0
    %s34 = scalar_select %p33, %s21, 0
    %p35 = scmp.lt.s32.totalorder %s34, 1
    %s36 = scalar_select %p35, %s34, 1
    %p37 = scmp.gt.s32.totalorder %s28, 0
    %s38 = scalar_select %p37, %s28, 0
    %p39 = scmp.lt.s32.totalorder %s38, 1
    %s40 = scalar_select %p39, %s38, 1
    %s41 = ssub.s32 %s20, %s32
    %s42 = ssub.s32 %s36, %s40
    %s43 = sor.u32 %s41, %s42
    %p44 = scmp.eq.s32.totalorder %s43, 0
    %s46 = sadd.s32 %s45, 1
    %s47 = scalar_select %p44, %s45, %s46
    %p50 = pneg %p44
    %p51 = scmp.eq.s32.totalorder %s13, 3
    %p52 = por %p50, %p51
    %p53 = scmp.ne.s32.totalorder %s45, %s48
    %p54 = scmp.eq.s32.totalorder %s13, 0
    %p55 = por %p53, %p54
    %p56 = scmp.ne.s32.totalorder %s45, %s48
    %p57 = scmp.eq.s32.totalorder %s18, 3
    %p58 = por %p56, %p57
    %p59 = scmp.ne.s32.totalorder %s48, %s49
    %p60 = scmp.eq.s32.totalorder %s18, 0
    %p61 = por %p59, %p60
    %p62 = scmp.ne.s32.totalorder %s48, %s49
    %p63 = scmp.eq.s32.totalorder %s19, 3
    %p64 = por %p62, %p63
    %p66 = scmp.ne.s32.totalorder %s49, %s65
    %p67 = scmp.eq.s32.totalorder %s19, 0
    %p68 = por %p66, %p67
    %s69 = sadd.s32 %s21, 4294967295
    %p70 = scmp.gt.s32.totalorder %s69, 0
    %s71 = scalar_select %p70, %s69, 0
    %p72 = scmp.lt.s32.totalorder %s71, 1
    %s73 = scalar_select %p72, %s71, 1
    %s74 = sadd.s32 %s28, 4294967295
    %p75 = scmp.gt.s32.totalorder %s74, 0
    %s76 = scalar_select %p75, %s74, 0
    %p77 = scmp.lt.s32.totalorder %s76, 1
    %s78 = scalar_select %p77, %s76, 1
    %s79 = ssub.s32 %s20, %s32
    %s80 = ssub.s32 %s73, %s78
    %s81 = sor.u32 %s79, %s80
    %p82 = scmp.eq.s32.totalorder %s81, 0
    %s84 = sadd.s32 %s83, 1
    %s85 = scalar_select %p82, %s83, %s84
    %p88 = pneg %p82
    %p89 = scmp.eq.s32.totalorder %s13, 3
    %p90 = por %p88, %p89
    %p91 = scmp.ne.s32.totalorder %s83, %s86
    %p92 = scmp.eq.s32.totalorder %s13, 0
    %p93 = por %p91, %p92
    %p94 = scmp.ne.s32.totalorder %s83, %s86
    %p95 = scmp.eq.s32.totalorder %s18, 3
    %p96 = por %p94, %p95
    %p97 = scmp.ne.s32.totalorder %s86, %s87
    %p98 = scmp.eq.s32.totalorder %s18, 0
    %p99 = por %p97, %p98
    %p100 = scmp.ne.s32.totalorder %s86, %s87
    %p101 = scmp.eq.s32.totalorder %s19, 3
    %p102 = por %p100, %p101
    %p104 = scmp.ne.s32.totalorder %s87, %s103
    %p105 = scmp.eq.s32.totalorder %s19, 0
    %p106 = por %p104, %p105
    %s107 = sadd.s32 %s21, 1
    %p108 = scmp.gt.s32.totalorder %s107, 0
    %s109 = scalar_select %p108, %s107, 0
    %p110 = scmp.lt.s32.totalorder %s109, 1
    %s111 = scalar_select %p110, %s109, 1
    %s112 = sadd.s32 %s28, 1
    %p113 = scmp.gt.s32.totalorder %s112, 0
    %s114 = scalar_select %p113, %s112, 0
    %p115 = scmp.lt.s32.totalorder %s114, 1
    %s116 = scalar_select %p115, %s114, 1
    %s117 = ssub.s32 %s20, %s32
    %s118 = ssub.s32 %s111, %s116
    %s119 = sor.u32 %s117, %s118
    %p120 = scmp.eq.s32.totalorder %s119, 0
    %s122 = sadd.s32 %s121, 1
    %s123 = scalar_select %p120, %s121, %s122
    %p126 = pneg %p120
    %p127 = scmp.eq.s32.totalorder %s13, 3
    %p128 = por %p126, %p127
    %p129 = scmp.ne.s32.totalorder %s121, %s124
    %p130 = scmp.eq.s32.totalorder %s13, 0
    %p131 = por %p129, %p130
    %p132 = scmp.ne.s32.totalorder %s121, %s124
    %p133 = scmp.eq.s32.totalorder %s18, 3
    %p134 = por %p132, %p133
    %p135 = scmp.ne.s32.totalorder %s124, %s125
    %p136 = scmp.eq.s32.totalorder %s18, 0
    %p137 = por %p135, %p136
    %p138 = scmp.ne.s32.totalorder %s124, %s125
    %p139 = scmp.eq.s32.totalorder %s19, 3
    %p140 = por %p138, %p139
    %p142 = scmp.ne.s32.totalorder %s125, %s141
    %p143 = scmp.eq.s32.totalorder %s19, 0
    %p144 = por %p142, %p143
    %s146 = sadd.s32 %s145, 1
    %p149 = scmp.eq.s32.totalorder %s13, 3
    %p150 = scmp.ne.s32.totalorder %s145, %s147
    %p151 = scmp.eq.s32.totalorder %s13, 0
    %p152 = por %p150, %p151
    %p153 = scmp.ne.s32.totalorder %s145, %s147
    %p154 = scmp.eq.s32.totalorder %s18, 3
    %p155 = por %p153, %p154
    %p156 = scmp.ne.s32.totalorder %s147, %s148
    %p157 = scmp.eq.s32.totalorder %s18, 0
    %p158 = por %p156, %p157
    %p159 = scmp.ne.s32.totalorder %s147, %s148
    %p160 = scmp.eq.s32.totalorder %s19, 3
    %p161 = por %p159, %p160
    %p163 = scmp.ne.s32.totalorder %s148, %s162
    %p164 = scmp.eq.s32.totalorder %s19, 0
    %p165 = por %p163, %p164
    %s167 = sadd.s32 %s166, 1
    %p170 = scmp.eq.s32.totalorder %s13, 3
    %p171 = scmp.ne.s32.totalorder %s166, %s168
    %p172 = scmp.eq.s32.totalorder %s13, 0
    %p173 = por %p171, %p172
    %p174 = scmp.ne.s32.totalorder %s166, %s168
    %p175 = scmp.eq.s32.totalorder %s18, 3
    %p176 = por %p174, %p175
    %p177 = scmp.ne.s32.totalorder %s168, %s169
    %p178 = scmp.eq.s32.totalorder %s18, 0
    %p179 = por %p177, %p178
    %p180 = scmp.ne.s32.totalorder %s168, %s169
    %p181 = scmp.eq.s32.totalorder %s19, 3
    %p182 = por %p180, %p181
    %p184 = scmp.ne.s32.totalorder %s169, %s183
    %p185 = scmp.eq.s32.totalorder %s19, 0
    %p186 = por %p184, %p185
    %s188 = sadd.s32 %s187, 1
    %p191 = scmp.eq.s32.totalorder %s13, 3
    %p192 = scmp.ne.s32.totalorder %s187, %s189
    %p193 = scmp.eq.s32.totalorder %s13, 0
    %p194 = por %p192, %p193
    %p195 = scmp.ne.s32.totalorder %s187, %s189
    %p196 = scmp.eq.s32.totalorder %s18, 3
    %p197 = por %p195, %p196
    %p198 = scmp.ne.s32.totalorder %s189, %s190
    %p199 = scmp.eq.s32.totalorder %s18, 0
    %p200 = por %p198, %p199
    %p201 = scmp.ne.s32.totalorder %s189, %s190
    %p202 = scmp.eq.s32.totalorder %s19, 3
    %p203 = por %p201, %p202
    %p205 = scmp.ne.s32.totalorder %s190, %s204
    %p206 = scmp.eq.s32.totalorder %s19, 0
    %p207 = por %p205, %p206
    %s209 = sadd.s32 %s208, 1
    %p212 = scmp.eq.s32.totalorder %s13, 3
    %p213 = scmp.ne.s32.totalorder %s208, %s210
    %p214 = scmp.eq.s32.totalorder %s13, 0
    %p215 = por %p213, %p214
    %p216 = scmp.ne.s32.totalorder %s208, %s210
    %p217 = scmp.eq.s32.totalorder %s18, 3
    %p218 = por %p216, %p217
    %p219 = scmp.ne.s32.totalorder %s210, %s211
    %p220 = scmp.eq.s32.totalorder %s18, 0
    %p221 = por %p219, %p220
    %p222 = scmp.ne.s32.totalorder %s210, %s211
    %p223 = scmp.eq.s32.totalorder %s19, 3
    %p224 = por %p222, %p223
    %p226 = scmp.ne.s32.totalorder %s211, %s225
    %p227 = scmp.eq.s32.totalorder %s19, 0
    %p228 = por %p226, %p227
    %s229 = ssub.s32 %s20, %s32
    %s230 = ssub.s32 %s21, %s28
    %s231 = sor.u32 %s229, %s230
    %p232 = scmp.eq.s32.totalorder %s231, 0
    %s234 = sadd.s32 %s233, 1
    %s235 = scalar_select %p232, %s233, %s234
    %p238 = pneg %p232
    %p239 = scmp.eq.s32.totalorder %s13, 3
    %p240 = por %p238, %p239
    %p241 = scmp.ne.s32.totalorder %s233, %s236
    %p242 = scmp.eq.s32.totalorder %s13, 0
    %p243 = por %p241, %p242
    %p244 = scmp.ne.s32.totalorder %s233, %s236
    %p245 = scmp.eq.s32.totalorder %s18, 3
    %p246 = por %p244, %p245
    %p247 = scmp.ne.s32.totalorder %s236, %s237
    %p248 = scmp.eq.s32.totalorder %s18, 0
    %p249 = por %p247, %p248
    %p250 = scmp.ne.s32.totalorder %s236, %s237
    %p251 = scmp.eq.s32.totalorder %s19, 3
    %p252 = por %p250, %p251
    %p254 = scmp.ne.s32.totalorder %s237, %s253
    %p255 = scmp.eq.s32.totalorder %s19, 0
    %p256 = por %p254, %p255
    %p257 = scmp.le.s32.totalorder 1, %s13
    %p258 = scmp.lt.s32.totalorder %s13, 5
    %p259 = pnand %p257, %p258
    %p260 = pneg %p259
    // Predicated region
    $region9: #{vgg_feature_extractor.4} parent=5 // pred_check
      _
    $region10: #{vgg_feature_extractor.4} parent=5 // pred_check_branch
      %262 = sbr.rel (%p259) target = $region12
    $region11: #{vgg_feature_extractor.4} parent=5 // pred_region
      %s263 = ssub.s32 %s13, 1
      // Predicated region
      $region13: #{vgg_feature_extractor.4} parent=11 // pred_check
        %p264 = pneg %p158
      $region14: #{vgg_feature_extractor.4} parent=11 // pred_check_branch
        %266 = sbr.rel (%p264) target = $region16
      $region15: #{vgg_feature_extractor.4} parent=11 // pred_region
        _
      $region16: #{vgg_feature_extractor.4} parent=11 // pred_fallthru
        _
      // Predicated region
      $region17: #{vgg_feature_extractor.4} parent=11 // pred_check
        %p267 = pneg %p179
      $region18: #{vgg_feature_extractor.4} parent=11 // pred_check_branch
        %269 = sbr.rel (%p267) target = $region20
      $region19: #{vgg_feature_extractor.4} parent=11 // pred_region
        _
      $region20: #{vgg_feature_extractor.4} parent=11 // pred_fallthru
        _
      // Predicated region
      $region21: #{vgg_feature_extractor.4} parent=11 // pred_check
        %p270 = pneg %p200
      $region22: #{vgg_feature_extractor.4} parent=11 // pred_check_branch
        %272 = sbr.rel (%p270) target = $region24
      $region23: #{vgg_feature_extractor.4} parent=11 // pred_region
        _
      $region24: #{vgg_feature_extractor.4} parent=11 // pred_fallthru
        _
      // Predicated region
      $region25: #{vgg_feature_extractor.4} parent=11 // pred_check
        %p273 = pneg %p221
      $region26: #{vgg_feature_extractor.4} parent=11 // pred_check_branch
        %275 = sbr.rel (%p273) target = $region28
      $region27: #{vgg_feature_extractor.4} parent=11 // pred_region
        _
      $region28: #{vgg_feature_extractor.4} parent=11 // pred_fallthru
        _
    $region12: #{vgg_feature_extractor.4} parent=5 // pred_fallthru
      _
    %p276 = scmp.lt.s32.totalorder %s13, 4
    // Predicated region
    $region29: #{vgg_feature_extractor.4} parent=5 // pred_check
      %p277 = pneg %p276
    $region30: #{vgg_feature_extractor.4} parent=5 // pred_check_branch
      %279 = sbr.rel (%p277) target = $region32
    $region31: #{vgg_feature_extractor.4} parent=5 // pred_region
      // Predicated region
      $region33: #{vgg_feature_extractor.4} parent=31 // pred_check
        %p280 = pneg %p55
      $region34: #{vgg_feature_extractor.4} parent=31 // pred_check_branch
        %282 = sbr.rel (%p280) target = $region36
      $region35: #{vgg_feature_extractor.4} parent=31 // pred_region
        %p283 = scmp.gt.s32.totalorder %s21, 0
        %s284 = scalar_select %p283, %s21, 0
        %p285 = scmp.lt.s32.totalorder %s284, 1
        %s286 = scalar_select %p285, %s284, 1
        %s287 = smul.u32 8, %s286
        %p288 = scmp.lt.s32.totalorder %s20, 1
        %s289 = scalar_select %p288, %s20, 1
        %p290 = scmp.lt.s32.totalorder %s287, 15
        %s291 = scalar_select %p290, %s287, 15
        %s292 = smul.addr %s291, 2
        %s293 = smul.addr %s289, 32
        %s294 = sadd.s32 %s292, %s293
        %s295 = smul.addr %s294, 8
        %s296 = scalar_lea.vmem %s0, %s295
        %p297 = scmp.gt.s32.totalorder %s21, 0
        %s298 = scalar_select %p297, %s21, 0
        %p299 = scmp.lt.s32.totalorder %s298, 1
        %s300 = scalar_select %p299, %s298, 1
        %s301 = smul.u32 8, %s300
      $region36: #{vgg_feature_extractor.4} parent=31 // pred_fallthru
        _
      // Predicated region
      $region37: #{vgg_feature_extractor.4} parent=31 // pred_check
        %p302 = pneg %p93
      $region38: #{vgg_feature_extractor.4} parent=31 // pred_check_branch
        %304 = sbr.rel (%p302) target = $region40
      $region39: #{vgg_feature_extractor.4} parent=31 // pred_region
        %s305 = sadd.s32 %s21, 4294967295
        %p306 = scmp.gt.s32.totalorder %s305, 0
        %s307 = scalar_select %p306, %s305, 0
        %p308 = scmp.lt.s32.totalorder %s307, 1
        %s309 = scalar_select %p308, %s307, 1
        %s310 = smul.u32 8, %s309
        %p311 = scmp.lt.s32.totalorder %s20, 1
        %s312 = scalar_select %p311, %s20, 1
        %p313 = scmp.lt.s32.totalorder %s310, 15
        %s314 = scalar_select %p313, %s310, 15
        %s315 = smul.addr %s314, 2
        %s316 = smul.addr %s312, 32
        %s317 = sadd.s32 %s315, %s316
        %s318 = smul.addr %s317, 8
        %s319 = scalar_lea.vmem %s1, %s318
        %s320 = sadd.s32 %s21, 4294967295
        %p321 = scmp.gt.s32.totalorder %s320, 0
        %s322 = scalar_select %p321, %s320, 0
        %p323 = scmp.lt.s32.totalorder %s322, 1
        %s324 = scalar_select %p323, %s322, 1
        %s325 = smul.u32 8, %s324
      $region40: #{vgg_feature_extractor.4} parent=31 // pred_fallthru
        _
      // Predicated region
      $region41: #{vgg_feature_extractor.4} parent=31 // pred_check
        %p326 = pneg %p131
      $region42: #{vgg_feature_extractor.4} parent=31 // pred_check_branch
        %328 = sbr.rel (%p326) target = $region44
      $region43: #{vgg_feature_extractor.4} parent=31 // pred_region
        %s329 = sadd.s32 %s21, 1
        %p330 = scmp.gt.s32.totalorder %s329, 0
        %s331 = scalar_select %p330, %s329, 0
        %p332 = scmp.lt.s32.totalorder %s331, 1
        %s333 = scalar_select %p332, %s331, 1
        %s334 = smul.u32 8, %s333
        %p335 = scmp.lt.s32.totalorder %s20, 1
        %s336 = scalar_select %p335, %s20, 1
        %p337 = scmp.lt.s32.totalorder %s334, 15
        %s338 = scalar_select %p337, %s334, 15
        %s339 = smul.addr %s338, 2
        %s340 = smul.addr %s336, 32
        %s341 = sadd.s32 %s339, %s340
        %s342 = smul.addr %s341, 8
        %s343 = scalar_lea.vmem %s2, %s342
        %s344 = sadd.s32 %s21, 1
        %p345 = scmp.gt.s32.totalorder %s344, 0
        %s346 = scalar_select %p345, %s344, 0
        %p347 = scmp.lt.s32.totalorder %s346, 1
        %s348 = scalar_select %p347, %s346, 1
        %s349 = smul.u32 8, %s348
      $region44: #{vgg_feature_extractor.4} parent=31 // pred_fallthru
        _
    $region32: #{vgg_feature_extractor.4} parent=5 // pred_fallthru
      _
    %p350 = scmp.le.s32.totalorder 1, %s13
    %p351 = scmp.lt.s32.totalorder %s13, 5
    %p352 = pnand %p350, %p351
    %p353 = pneg %p352
    // Predicated region
    $region45: #{vgg_feature_extractor.4} parent=5 // pred_check
      _
    $region46: #{vgg_feature_extractor.4} parent=5 // pred_check_branch
      %355 = sbr.rel (%p352) target = $region48
    $region47: #{vgg_feature_extractor.4} parent=5 // pred_region
      %s356 = ssub.s32 %s13, 1
      %p357 = scmp.gt.s32.totalorder %s23, 0
      %s358 = scalar_select %p357, %s23, 0
      %p359 = scmp.lt.s32.totalorder %s358, 1
      %s360 = scalar_select %p359, %s358, 1
      %s361 = smul.u32 8, %s360
      %p362 = scmp.lt.s32.totalorder %s22, 1
      %s363 = scalar_select %p362, %s22, 1
      %p364 = scmp.lt.s32.totalorder %s361, 15
      %s365 = scalar_select %p364, %s361, 15
      %s366 = smul.addr %s365, 2
      %s367 = smul.addr %s363, 32
      %s368 = sadd.s32 %s366, %s367
      %s369 = smul.addr %s368, 8
      %s370 = scalar_lea.vmem %s0, %s369
      %p371 = pneg %p61
      %p372 = pneg %p58
      %s373 = sadd.s32 %s23, 4294967295
      %p374 = scmp.gt.s32.totalorder %s373, 0
      %s375 = scalar_select %p374, %s373, 0
      %p376 = scmp.lt.s32.totalorder %s375, 1
      %s377 = scalar_select %p376, %s375, 1
      %s378 = smul.u32 8, %s377
      %p379 = scmp.lt.s32.totalorder %s22, 1
      %s380 = scalar_select %p379, %s22, 1
      %p381 = scmp.lt.s32.totalorder %s378, 15
      %s382 = scalar_select %p381, %s378, 15
      %s383 = smul.addr %s382, 2
      %s384 = smul.addr %s380, 32
      %s385 = sadd.s32 %s383, %s384
      %s386 = smul.addr %s385, 8
      %s387 = scalar_lea.vmem %s1, %s386
      %p388 = pneg %p99
      %p389 = pneg %p96
      %s390 = sadd.s32 %s23, 1
      %p391 = scmp.gt.s32.totalorder %s390, 0
      %s392 = scalar_select %p391, %s390, 0
      %p393 = scmp.lt.s32.totalorder %s392, 1
      %s394 = scalar_select %p393, %s392, 1
      %s395 = smul.u32 8, %s394
      %p396 = scmp.lt.s32.totalorder %s22, 1
      %s397 = scalar_select %p396, %s22, 1
      %p398 = scmp.lt.s32.totalorder %s395, 15
      %s399 = scalar_select %p398, %s395, 15
      %s400 = smul.addr %s399, 2
      %s401 = smul.addr %s397, 32
      %s402 = sadd.s32 %s400, %s401
      %s403 = smul.addr %s402, 8
      %s404 = scalar_lea.vmem %s2, %s403
      %p405 = pneg %p137
      %p406 = pneg %p134
      %p407 = pneg %p158
      %p408 = pneg %p155
      %p409 = pneg %p179
      %p410 = pneg %p176
      %p411 = pneg %p200
      %p412 = pneg %p197
      %p413 = pneg %p221
      %p414 = pneg %p218
      %p415 = pneg %p249
      %p416 = pneg %p246
      %s417 = smul.u32 8, %s23
      %p418 = scmp.lt.s32.totalorder %s22, 1
      %s419 = scalar_select %p418, %s22, 1
      %p420 = scmp.lt.s32.totalorder %s417, 15
      %s421 = scalar_select %p420, %s417, 15
      %s422 = smul.addr %s421, 2
      %s423 = smul.addr %s419, 32
      %s424 = sadd.s32 %s422, %s423
      %s425 = smul.addr %s424, 4
      %s426 = scalar_lea.vmem %s7, %s425
      %p427 = scmp.gt.s32.totalorder %s23, 0
      %s428 = scalar_select %p427, %s23, 0
      %p429 = scmp.lt.s32.totalorder %s428, 1
      %s430 = scalar_select %p429, %s428, 1
      %s431 = smul.u32 8, %s430
      %p432 = scmp.lt.s32.totalorder %s22, 1
      %s433 = scalar_select %p432, %s22, 1
      %p434 = scmp.lt.s32.totalorder %s431, 15
      %s435 = scalar_select %p434, %s431, 15
      %s436 = smul.addr %s435, 2
      %s437 = smul.addr %s433, 32
      %s438 = sadd.s32 %s436, %s437
      %s439 = smul.addr %s438, 8
      %s440 = scalar_lea.vmem %s0, %s439
      %p441 = scmp.gt.s32.totalorder %s23, 0
      %s442 = scalar_select %p441, %s23, 0
      %p443 = scmp.lt.s32.totalorder %s442, 1
      %s444 = scalar_select %p443, %s442, 1
      %s445 = smul.u32 8, %s444
      %s446 = sadd.s32 %s23, 4294967295
      %p447 = scmp.gt.s32.totalorder %s446, 0
      %s448 = scalar_select %p447, %s446, 0
      %p449 = scmp.lt.s32.totalorder %s448, 1
      %s450 = scalar_select %p449, %s448, 1
      %s451 = smul.u32 8, %s450
      %p452 = scmp.lt.s32.totalorder %s22, 1
      %s453 = scalar_select %p452, %s22, 1
      %p454 = scmp.lt.s32.totalorder %s451, 15
      %s455 = scalar_select %p454, %s451, 15
      %s456 = smul.addr %s455, 2
      %s457 = smul.addr %s453, 32
      %s458 = sadd.s32 %s456, %s457
      %s459 = smul.addr %s458, 8
      %s460 = scalar_lea.vmem %s1, %s459
      %s461 = sadd.s32 %s23, 4294967295
      %p462 = scmp.gt.s32.totalorder %s461, 0
      %s463 = scalar_select %p462, %s461, 0
      %p464 = scmp.lt.s32.totalorder %s463, 1
      %s465 = scalar_select %p464, %s463, 1
      %s466 = smul.u32 8, %s465
      %s467 = sadd.s32 %s23, 1
      %p468 = scmp.gt.s32.totalorder %s467, 0
      %s469 = scalar_select %p468, %s467, 0
      %p470 = scmp.lt.s32.totalorder %s469, 1
      %s471 = scalar_select %p470, %s469, 1
      %s472 = smul.u32 8, %s471
      %p473 = scmp.lt.s32.totalorder %s22, 1
      %s474 = scalar_select %p473, %s22, 1
      %p475 = scmp.lt.s32.totalorder %s472, 15
      %s476 = scalar_select %p475, %s472, 15
      %s477 = smul.addr %s476, 2
      %s478 = smul.addr %s474, 32
      %s479 = sadd.s32 %s477, %s478
      %s480 = smul.addr %s479, 8
      %s481 = scalar_lea.vmem %s2, %s480
      %s482 = sadd.s32 %s23, 1
      %p483 = scmp.gt.s32.totalorder %s482, 0
      %s484 = scalar_select %p483, %s482, 0
      %p485 = scmp.lt.s32.totalorder %s484, 1
      %s486 = scalar_select %p485, %s484, 1
      %s487 = smul.u32 8, %s486
      %s488 = smul.u32 8, %s23
      %p489 = scmp.lt.s32.totalorder %s22, 1
      %s490 = scalar_select %p489, %s22, 1
      %p491 = scmp.lt.s32.totalorder %s488, 15
      %s492 = scalar_select %p491, %s488, 15
      %s493 = smul.addr %s492, 2
      %s494 = smul.addr %s490, 32
      %s495 = sadd.s32 %s493, %s494
      %s496 = smul.addr %s495, 4
      %s497 = scalar_lea.vmem %s7, %s496
      %s498 = smul.u32 8, %s23
      %v500 = vld [vmem:[%s440] sm:$0xff]
      %v501 = vld [vmem:[%s440 + $0x8] sm:$0xff]
      %v502 = vld [vmem:[%s440 + $0x10] sm:$0xff]
      %v503 = vld [vmem:[%s440 + $0x18] sm:$0xff]
      %v504 = vld [vmem:[%s440 + $0x20] sm:$0xff]
      %v505 = vld [vmem:[%s440 + $0x28] sm:$0xff]
      %v506 = vld [vmem:[%s440 + $0x30] sm:$0xff]
      %v507 = vld [vmem:[%s440 + $0x38] sm:$0xff]
      %v508 = vld [vmem:[%s440 + $0x40] sm:$0xff]
      %v509 = vld [vmem:[%s440 + $0x48] sm:$0xff]
      %v510 = vld [vmem:[%s440 + $0x50] sm:$0xff]
      %v511 = vld [vmem:[%s440 + $0x58] sm:$0xff]
      %v512 = vld [vmem:[%s440 + $0x60] sm:$0xff]
      %v513 = vld [vmem:[%s440 + $0x68] sm:$0xff]
      %v514 = vld [vmem:[%s440 + $0x70] sm:$0xff]
      %v515 = vld [vmem:[%s440 + $0x78] sm:$0xff]
      %v516 = vld [vmem:[%s5] sm:$0x1]
      %v518 = vlaneseq
      %v519 = vshrl.u32 %v518, 7
      %v520 = vsub.s32 0, %v519
      %v521 = vrot.slane %v516, %v520
      %v523 = vmul.f32 %v500, %v521
      %v524 = vmul.f32 %v501, %v521
      %v525 = vmul.f32 %v502, %v521
      %v526 = vmul.f32 %v503, %v521
      %v527 = vmul.f32 %v504, %v521
      %v528 = vmul.f32 %v505, %v521
      %v529 = vmul.f32 %v506, %v521
      %v530 = vmul.f32 %v507, %v521
      %v531 = vmul.f32 %v508, %v521
      %v532 = vmul.f32 %v509, %v521
      %v533 = vmul.f32 %v510, %v521
      %v534 = vmul.f32 %v511, %v521
      %v535 = vmul.f32 %v512, %v521
      %v536 = vmul.f32 %v513, %v521
      %v537 = vmul.f32 %v514, %v521
      %v538 = vmul.f32 %v515, %v521
      %v539 = vld [vmem:[%s6] sm:$0x1]
      %v541 = vlaneseq
      %v542 = vshrl.u32 %v541, 7
      %v543 = vsub.s32 0, %v542
      %v544 = vrot.slane %v539, %v543
      %v546 = vadd.f32 %v523, %v544
      %v547 = vadd.f32 %v524, %v544
      %v548 = vadd.f32 %v525, %v544
      %v549 = vadd.f32 %v526, %v544
      %v550 = vadd.f32 %v527, %v544
      %v551 = vadd.f32 %v528, %v544
      %v552 = vadd.f32 %v529, %v544
      %v553 = vadd.f32 %v530, %v544
      %v554 = vadd.f32 %v531, %v544
      %v555 = vadd.f32 %v532, %v544
      %v556 = vadd.f32 %v533, %v544
      %v557 = vadd.f32 %v534, %v544
      %v558 = vadd.f32 %v535, %v544
      %v559 = vadd.f32 %v536, %v544
      %v560 = vadd.f32 %v537, %v544
      %v561 = vadd.f32 %v538, %v544
      %s562 = scalar_lea.vmem %s460, 112
      %v563 = vld [vmem:[%s562] sm:$0xff]
      %v564 = vld [vmem:[%s562 + $0x8] sm:$0xff]
      %v565 = vmul.f32 %v563, %v521
      %v566 = vmul.f32 %v564, %v521
      %v567 = vadd.f32 %v565, %v544
      %v568 = vadd.f32 %v566, %v544
      %v569 = vld [vmem:[%s481] sm:$0xff]
      %v570 = vld [vmem:[%s481 + $0x8] sm:$0xff]
      %v571 = vmul.f32 %v569, %v521
      %v572 = vmul.f32 %v570, %v521
      %v573 = vadd.f32 %v571, %v544
      %v574 = vadd.f32 %v572, %v544
      %p575 = scmp.gt.s32.totalorder %s23, 0
      %s576 = scalar_select %p575, 1.0, 0.0
      %v577 = vstv %s576
      %v578 = vmul.f32 %v567, %v577
      %v579 = vmul.f32 %v568, %v577
      %p580 = scmp.lt.s32.totalorder %s23, 1
      %s581 = scalar_select %p580, 1.0, 0.0
      %v582 = vstv %s581
      %v583 = vmul.f32 %v573, %v582
      %v584 = vmul.f32 %v574, %v582
      %vm585 = vcmask 23552
      %586 = vst.msk [vmem:[#allocation2] sm:$0xff] %vm585, 0.0
      %587 = vst.msk [vmem:[#allocation2 + $0x20] sm:$0xff] %vm585, 0.0
      %588 = vst.msk [vmem:[#allocation2 + $0x40] sm:$0xff] %vm585, 0.0
      %589 = vst.msk [vmem:[#allocation2 + $0x60] sm:$0xff] %vm585, 0.0
      %590 = vst.msk [vmem:[#allocation2 + $0x80] sm:$0xff] %vm585, 0.0
      %591 = vst.msk [vmem:[#allocation2 + $0xa0] sm:$0xff] %vm585, 0.0
      %592 = vst.msk [vmem:[#allocation2 + $0xc0] sm:$0xff] %vm585, 0.0
      %593 = vst.msk [vmem:[#allocation2 + $0xe0] sm:$0xff] %vm585, 0.0
      %594 = vst.msk [vmem:[#allocation2 + $0x100] sm:$0xff] %vm585, 0.0
      %595 = vst.msk [vmem:[#allocation2 + $0x120] sm:$0xff] %vm585, 0.0
      %596 = vst.msk [vmem:[#allocation2 + $0x18] sm:$0xff] %vm585, 0.0
      %597 = vst.msk [vmem:[#allocation2 + $0x38] sm:$0xff] %vm585, 0.0
      %598 = vst.msk [vmem:[#allocation2 + $0x58] sm:$0xff] %vm585, 0.0
      %599 = vst.msk [vmem:[#allocation2 + $0x78] sm:$0xff] %vm585, 0.0
      %600 = vst.msk [vmem:[#allocation2 + $0x98] sm:$0xff] %vm585, 0.0
      %601 = vst.msk [vmem:[#allocation2 + $0xb8] sm:$0xff] %vm585, 0.0
      %602 = vst.msk [vmem:[#allocation2 + $0xd8] sm:$0xff] %vm585, 0.0
      %603 = vst.msk [vmem:[#allocation2 + $0xf8] sm:$0xff] %vm585, 0.0
      %604 = vst.msk [vmem:[#allocation2 + $0x118] sm:$0xff] %vm585, 0.0
      %605 = vst.msk [vmem:[#allocation2 + $0x138] sm:$0xff] %vm585, 0.0
      %606 = vst.msk [vmem:[#allocation2 + $0x8] sm:$0xff] %vm585, %v578
      %607 = vst.msk [vmem:[#allocation2 + $0x10] sm:$0xff] %vm585, %v579
      %608 = vst.msk [vmem:[#allocation2 + $0x28] sm:$0xff] %vm585, %v546
      %609 = vst.msk [vmem:[#allocation2 + $0x30] sm:$0xff] %vm585, %v547
      %610 = vst.msk [vmem:[#allocation2 + $0x48] sm:$0xff] %vm585, %v548
      %611 = vst.msk [vmem:[#allocation2 + $0x50] sm:$0xff] %vm585, %v549
      %612 = vst.msk [vmem:[#allocation2 + $0x68] sm:$0xff] %vm585, %v550
      %613 = vst.msk [vmem:[#allocation2 + $0x70] sm:$0xff] %vm585, %v551
      %614 = vst.msk [vmem:[#allocation2 + $0x88] sm:$0xff] %vm585, %v552
      %615 = vst.msk [vmem:[#allocation2 + $0x90] sm:$0xff] %vm585, %v553
      %616 = vst.msk [vmem:[#allocation2 + $0xa8] sm:$0xff] %vm585, %v554
      %617 = vst.msk [vmem:[#allocation2 + $0xb0] sm:$0xff] %vm585, %v555
      %618 = vst.msk [vmem:[#allocation2 + $0xc8] sm:$0xff] %vm585, %v556
      %619 = vst.msk [vmem:[#allocation2 + $0xd0] sm:$0xff] %vm585, %v557
      %620 = vst.msk [vmem:[#allocation2 + $0xe8] sm:$0xff] %vm585, %v558
      %621 = vst.msk [vmem:[#allocation2 + $0xf0] sm:$0xff] %vm585, %v559
      %622 = vst.msk [vmem:[#allocation2 + $0x108] sm:$0xff] %vm585, %v560
      %623 = vst.msk [vmem:[#allocation2 + $0x110] sm:$0xff] %vm585, %v561
      %624 = vst.msk [vmem:[#allocation2 + $0x128] sm:$0xff] %vm585, %v583
      %625 = vst.msk [vmem:[#allocation2 + $0x130] sm:$0xff] %vm585, %v584
      %v626 = vld [vmem:[#allocation2] sm:$0xff]
      %v627 = vld [vmem:[#allocation2 + $0x8] sm:$0xff]
      %v628 = vld [vmem:[#allocation2 + $0x10] sm:$0xff]
      %v629 = vld [vmem:[#allocation2 + $0x18] sm:$0xff]
      %v630 = vld [vmem:[#allocation2 + $0x20] sm:$0xff]
      %v631 = vld [vmem:[#allocation2 + $0x28] sm:$0xff]
      %v632 = vld [vmem:[#allocation2 + $0x30] sm:$0xff]
      %v633 = vld [vmem:[#allocation2 + $0x38] sm:$0xff]
      %v634 = vld [vmem:[#allocation2 + $0x40] sm:$0xff]
      %v635 = vld [vmem:[#allocation2 + $0x48] sm:$0xff]
      %v636 = vld [vmem:[#allocation2 + $0x50] sm:$0xff]
      %v637 = vld [vmem:[#allocation2 + $0x58] sm:$0xff]
      %v638 = vld [vmem:[#allocation2 + $0x60] sm:$0xff]
      %v639 = vld [vmem:[#allocation2 + $0x68] sm:$0xff]
      %v640 = vld [vmem:[#allocation2 + $0x70] sm:$0xff]
      %v641 = vld [vmem:[#allocation2 + $0x78] sm:$0xff]
      %v642 = vld [vmem:[#allocation2 + $0x80] sm:$0xff]
      %v643 = vld [vmem:[#allocation2 + $0x88] sm:$0xff]
      %v644 = vld [vmem:[#allocation2 + $0x90] sm:$0xff]
      %v645 = vld [vmem:[#allocation2 + $0x98] sm:$0xff]
      %v646 = vld [vmem:[#allocation2 + $0xa0] sm:$0xff]
      %v647 = vld [vmem:[#allocation2 + $0xa8] sm:$0xff]
      %v648 = vld [vmem:[#allocation2 + $0xb0] sm:$0xff]
      %v649 = vld [vmem:[#allocation2 + $0xb8] sm:$0xff]
      %v650 = vld [vmem:[#allocation2 + $0xc0] sm:$0xff]
      %v651 = vld [vmem:[#allocation2 + $0xc8] sm:$0xff]
      %v652 = vld [vmem:[#allocation2 + $0xd0] sm:$0xff]
      %v653 = vld [vmem:[#allocation2 + $0xd8] sm:$0xff]
      %v654 = vld [vmem:[#allocation2 + $0xe0] sm:$0xff]
      %v655 = vld [vmem:[#allocation2 + $0xe8] sm:$0xff]
      %v656 = vld [vmem:[#allocation2 + $0xf0] sm:$0xff]
      %v657 = vld [vmem:[#allocation2 + $0xf8] sm:$0xff]
      %v658 = vld [vmem:[#allocation2 + $0x100] sm:$0xff]
      %v659 = vld [vmem:[#allocation2 + $0x108] sm:$0xff]
      %v660 = vld [vmem:[#allocation2 + $0x110] sm:$0xff]
      %v661 = vld [vmem:[#allocation2 + $0x118] sm:$0xff]
      %v662 = vld [vmem:[#allocation2 + $0x120] sm:$0xff]
      %v663 = vld [vmem:[#allocation2 + $0x128] sm:$0xff]
      %v664 = vld [vmem:[#allocation2 + $0x130] sm:$0xff]
      %v665 = vld [vmem:[#allocation2 + $0x138] sm:$0xff]
      %v666 = vld [vmem:[%s4] sm:$0x1]
      %v668 = vlaneseq
      %v669 = vshrl.u32 %v668, 7
      %v670 = vsub.s32 0, %v669
      %v671 = vrot.slane %v666, %v670
      %vm673 = vcmask 523264
      %674 = vst.msk [vmem:[#allocation3] sm:$0xff] %vm673, %v671
      %675 = vst.msk [vmem:[#allocation3 + $0x8] sm:$0xff] %vm673, %v671
      %676 = vst.msk [vmem:[#allocation3 + $0x10] sm:$0xff] %vm673, %v671
      %677 = vst.msk [vmem:[#allocation3 + $0x18] sm:$0xff] %vm673, %v671
      %678 = vst.msk [vmem:[#allocation3 + $0x20] sm:$0xff] %vm673, %v671
      %679 = vst.msk [vmem:[#allocation3 + $0x28] sm:$0xff] %vm673, %v671
      %680 = vst.msk [vmem:[#allocation3 + $0x30] sm:$0xff] %vm673, %v671
      %681 = vst.msk [vmem:[#allocation3 + $0x38] sm:$0xff] %vm673, %v671
      %682 = vst.msk [vmem:[#allocation3 + $0x40] sm:$0xff] %vm673, %v671
      %683 = vst.msk [vmem:[#allocation3 + $0x48] sm:$0xff] %vm673, %v671
      %684 = vst.msk [vmem:[#allocation3 + $0x50] sm:$0xff] %vm673, %v671
      %685 = vst.msk [vmem:[#allocation3 + $0x58] sm:$0xff] %vm673, %v671
      %686 = vst.msk [vmem:[#allocation3 + $0x60] sm:$0xff] %vm673, %v671
      %687 = vst.msk [vmem:[#allocation3 + $0x68] sm:$0xff] %vm673, %v671
      %688 = vst.msk [vmem:[#allocation3 + $0x70] sm:$0xff] %vm673, %v671
      %689 = vst.msk [vmem:[#allocation3 + $0x78] sm:$0xff] %vm673, %v671
      %vm714 = vcmask 1040384
      %v715 = vrot.slane %v626, 7
      %v716 = vrot.slane %v627, 7
      %v717 = vsel %vm714, %v715, %v716
      %v718 = vrot.slane %v628, 7
      %v719 = vsel %vm714, %v716, %v718
      %v720 = vrot.slane %v630, 7
      %v721 = vrot.slane %v631, 7
      %v722 = vsel %vm714, %v720, %v721
      %v723 = vrot.slane %v632, 7
      %v724 = vsel %vm714, %v721, %v723
      %v725 = vrot.slane %v634, 7
      %v726 = vrot.slane %v635, 7
      %v727 = vsel %vm714, %v725, %v726
      %v728 = vrot.slane %v636, 7
      %v729 = vsel %vm714, %v726, %v728
      %v730 = vrot.slane %v638, 7
      %v731 = vrot.slane %v639, 7
      %v732 = vsel %vm714, %v730, %v731
      %v733 = vrot.slane %v640, 7
      %v734 = vsel %vm714, %v731, %v733
      %v735 = vrot.slane %v642, 7
      %v736 = vrot.slane %v643, 7
      %v737 = vsel %vm714, %v735, %v736
      %v738 = vrot.slane %v644, 7
      %v739 = vsel %vm714, %v736, %v738
      %v740 = vrot.slane %v646, 7
      %v741 = vrot.slane %v647, 7
      %v742 = vsel %vm714, %v740, %v741
      %v743 = vrot.slane %v648, 7
      %v744 = vsel %vm714, %v741, %v743
      %v745 = vrot.slane %v650, 7
      %v746 = vrot.slane %v651, 7
      %v747 = vsel %vm714, %v745, %v746
      %v748 = vrot.slane %v652, 7
      %v749 = vsel %vm714, %v746, %v748
      %v750 = vrot.slane %v654, 7
      %v751 = vrot.slane %v655, 7
      %v752 = vsel %vm714, %v750, %v751
      %v753 = vrot.slane %v656, 7
      %v754 = vsel %vm714, %v751, %v753
      %v771 = vld [vmem:[#allocation3] sm:$0xff]
      %v772 = vld [vmem:[#allocation3 + $0x8] sm:$0xff]
      %v773 = vld [vmem:[#allocation3 + $0x10] sm:$0xff]
      %v774 = vld [vmem:[#allocation3 + $0x18] sm:$0xff]
      %v775 = vld [vmem:[#allocation3 + $0x20] sm:$0xff]
      %v776 = vld [vmem:[#allocation3 + $0x28] sm:$0xff]
      %v777 = vld [vmem:[#allocation3 + $0x30] sm:$0xff]
      %v778 = vld [vmem:[#allocation3 + $0x38] sm:$0xff]
      %v779 = vld [vmem:[#allocation3 + $0x40] sm:$0xff]
      %v780 = vld [vmem:[#allocation3 + $0x48] sm:$0xff]
      %v781 = vld [vmem:[#allocation3 + $0x50] sm:$0xff]
      %v782 = vld [vmem:[#allocation3 + $0x58] sm:$0xff]
      %v783 = vld [vmem:[#allocation3 + $0x60] sm:$0xff]
      %v784 = vld [vmem:[#allocation3 + $0x68] sm:$0xff]
      %v785 = vld [vmem:[#allocation3 + $0x70] sm:$0xff]
      %v786 = vld [vmem:[#allocation3 + $0x78] sm:$0xff]
      %v787 = vpack.c.bf16 %v719, %v717
      %v788 = vpack.c.bf16 %v724, %v722
      %v789 = vpack.c.bf16 %v729, %v727
      %v790 = vpack.c.bf16 %v734, %v732
      %v791 = vpack.c.bf16 %v739, %v737
      %v792 = vpack.c.bf16 %v744, %v742
      %v793 = vpack.c.bf16 %v749, %v747
      %v794 = vpack.c.bf16 %v754, %v752
      %v795 = vld [vmem:[%s3] sm:$0x3]
      %v797 = vsel %vm585, %v787, 0
      %v800 = vsel %vm585, %v788, 0
      %v803 = vsel %vm585, %v789, 0
      %v806 = vsel %vm585, %v790, 0
      %v809 = vsel %vm585, %v791, 0
      %v812 = vsel %vm585, %v792, 0
      %v815 = vsel %vm585, %v793, 0
      %v818 = vsel %vm585, %v794, 0
      %vm820 = vcmask 1041408
      %v821 = vsel %vm714, 4294967295, 65535
      %v822 = vsel %vm820, %v821, 0
      %v824 = vand.u32 %v795, %v822
      %826 = vmatprep.subr.bf16.mxu0 0
      %827 = vmatpush1.bf16.msra.mxu0 %v824
      %828 = vmatprep.subr.bf16.mxu0 0
      %829 = vmatpush1.bf16.msra.mxu0 0
      %830 = vmatprep.subr.bf16.mxu0 0
      %831 = vmatpush1.bf16.msra.mxu0 0
      %832 = vmatprep.subr.bf16.mxu0 0
      %833 = vmatpush1.bf16.msra.mxu0 0
      %834 = vmatprep.subr.bf16.mxu0 0
      %835 = vmatpush1.bf16.msra.mxu0 0
      %836 = vmatprep.subr.bf16.mxu0 0
      %837 = vmatpush1.bf16.msra.mxu0 0
      %838 = vmatprep.subr.bf16.mxu0 0
      %839 = vmatpush1.bf16.msra.mxu0 0
      %840 = vmatprep.subr.bf16.mxu0 0
      %841 = vmatpush1.bf16.msra.mxu0 0
      %842 = vmatprep.subr.bf16.mxu0 0
      %843 = vmatpush1.bf16.msra.mxu0 0
      %844 = vmatprep.subr.bf16.mxu0 0
      %845 = vmatpush1.bf16.msra.mxu0 0
      %846 = vmatprep.subr.bf16.mxu0 0
      %847 = vmatpush1.bf16.msra.mxu0 0
      %848 = vmatprep.subr.bf16.mxu0 0
      %849 = vmatpush1.bf16.msra.mxu0 0
      %850 = vmatprep.subr.bf16.mxu0 0
      %851 = vmatpush1.bf16.msra.mxu0 0
      %852 = vmatprep.subr.bf16.mxu0 0
      %853 = vmatpush1.bf16.msra.mxu0 0
      %854 = vmatprep.subr.bf16.mxu0 0
      %855 = vmatpush1.bf16.msra.mxu0 0
      %856 = vmatprep.subr.bf16.mxu0 0
      %857 = vmatpush1.bf16.msra.mxu0 0
      %858 = vmatprep.mubr.bf16.mxu0 0
      %859 = vmatmul.mubr.bf16.gmra.mrb[0].mxu0 %v797
      %v860 = vpop.f32.mrb[0].mxu0
      %v861 = vadd.f32 0.0, %v860
      %v862 = vpop.f32.mrb[0].mxu0
      %v863 = vpop.f32.mrb[0].mxu0
      %v864 = vadd.f32 0.0, %v863
      %v865 = vpop.f32.mrb[0].mxu0
      %866 = vmatprep.mubr.bf16.mxu0 0
      %867 = vmatmul.mubr.bf16.gmra.mrb[0].mxu0 %v800
      %v868 = vpop.f32.mrb[0].mxu0
      %v869 = vadd.f32 0.0, %v868
      %v870 = vpop.f32.mrb[0].mxu0
      %v871 = vpop.f32.mrb[0].mxu0
      %v872 = vadd.f32 0.0, %v871
      %v873 = vpop.f32.mrb[0].mxu0
      %874 = vmatprep.mubr.bf16.mxu0 0
      %875 = vmatmul.mubr.bf16.gmra.mrb[0].mxu0 %v803
      %v876 = vpop.f32.mrb[0].mxu0
      %v877 = vadd.f32 0.0, %v876
      %v878 = vpop.f32.mrb[0].mxu0
      %v879 = vpop.f32.mrb[0].mxu0
      %v880 = vadd.f32 0.0, %v879
      %v881 = vpop.f32.mrb[0].mxu0
      %882 = vmatprep.mubr.bf16.mxu0 0
      %883 = vmatmul.mubr.bf16.gmra.mrb[0].mxu0 %v806
      %v884 = vpop.f32.mrb[0].mxu0
      %v885 = vadd.f32 0.0, %v884
      %v886 = vpop.f32.mrb[0].mxu0
      %v887 = vpop.f32.mrb[0].mxu0
      %v888 = vadd.f32 0.0, %v887
      %v889 = vpop.f32.mrb[0].mxu0
      %890 = vmatprep.mubr.bf16.mxu0 0
      %891 = vmatmul.mubr.bf16.gmra.mrb[0].mxu0 %v809
      %v892 = vpop.f32.mrb[0].mxu0
      %v893 = vadd.f32 0.0, %v892
      %v894 = vpop.f32.mrb[0].mxu0
      %v895 = vpop.f32.mrb[0].mxu0
      %v896 = vadd.f32 0.0, %v895
      %v897 = vpop.f32.mrb[0].mxu0
      %898 = vmatprep.mubr.bf16.mxu0 0
      %899 = vmatmul.mubr.bf16.gmra.mrb[0].mxu0 %v812
      %v900 = vpop.f32.mrb[0].mxu0
      %v901 = vadd.f32 0.0, %v900
      %v902 = vpop.f32.mrb[0].mxu0
      %v903 = vpop.f32.mrb[0].mxu0
      %v904 = vadd.f32 0.0, %v903
      %v905 = vpop.f32.mrb[0].mxu0
      %906 = vmatprep.mubr.bf16.mxu0 0
      %907 = vmatmul.mubr.bf16.gmra.mrb[0].mxu0 %v815
      %v908 = vpop.f32.mrb[0].mxu0
      %v909 = vadd.f32 0.0, %v908
      %v910 = vpop.f32.mrb[0].mxu0
      %v911 = vpop.f32.mrb[0].mxu0
      %v912 = vadd.f32 0.0, %v911
      %v913 = vpop.f32.mrb[0].mxu0
      %914 = vmatprep.mubr.bf16.mxu0 0
      %915 = vmatmul.mubr.bf16.gmra.mrb[0].mxu0 %v818
      %v916 = vpop.f32.mrb[0].mxu0
      %v917 = vadd.f32 0.0, %v916
      %v918 = vpop.f32.mrb[0].mxu0
      %v919 = vpop.f32.mrb[0].mxu0
      %v920 = vadd.f32 0.0, %v919
      %v921 = vpop.f32.mrb[0].mxu0
      %922 = vdwg.mxu0
      %v923 = vadd.f32 %v771, %v861
      %v924 = vadd.f32 %v772, %v864
      %v925 = vadd.f32 %v773, %v869
      %v926 = vadd.f32 %v774, %v872
      %v927 = vadd.f32 %v775, %v877
      %v928 = vadd.f32 %v776, %v880
      %v929 = vadd.f32 %v777, %v885
      %v930 = vadd.f32 %v778, %v888
      %v931 = vadd.f32 %v779, %v893
      %v932 = vadd.f32 %v780, %v896
      %v933 = vadd.f32 %v781, %v901
      %v934 = vadd.f32 %v782, %v904
      %v935 = vadd.f32 %v783, %v909
      %v936 = vadd.f32 %v784, %v912
      %v937 = vadd.f32 %v785, %v917
      %v938 = vadd.f32 %v786, %v920
      %939 = vst.msk [vmem:[#allocation3] sm:$0xff] %vm673, %v923
      %940 = vst.msk [vmem:[#allocation3 + $0x8] sm:$0xff] %vm673, %v924
      %941 = vst.msk [vmem:[#allocation3 + $0x10] sm:$0xff] %vm673, %v925
      %942 = vst.msk [vmem:[#allocation3 + $0x18] sm:$0xff] %vm673, %v926
      %943 = vst.msk [vmem:[#allocation3 + $0x20] sm:$0xff] %vm673, %v927
      %944 = vst.msk [vmem:[#allocation3 + $0x28] sm:$0xff] %vm673, %v928
      %945 = vst.msk [vmem:[#allocation3 + $0x30] sm:$0xff] %vm673, %v929
      %946 = vst.msk [vmem:[#allocation3 + $0x38] sm:$0xff] %vm673, %v930
      %947 = vst.msk [vmem:[#allocation3 + $0x40] sm:$0xff] %vm673, %v931
      %948 = vst.msk [vmem:[#allocation3 + $0x48] sm:$0xff] %vm673, %v932
      %949 = vst.msk [vmem:[#allocation3 + $0x50] sm:$0xff] %vm673, %v933
      %950 = vst.msk [vmem:[#allocation3 + $0x58] sm:$0xff] %vm673, %v934
      %951 = vst.msk [vmem:[#allocation3 + $0x60] sm:$0xff] %vm673, %v935
      %952 = vst.msk [vmem:[#allocation3 + $0x68] sm:$0xff] %vm673, %v936
      %953 = vst.msk [vmem:[#allocation3 + $0x70] sm:$0xff] %vm673, %v937
      %954 = vst.msk [vmem:[#allocation3 + $0x78] sm:$0xff] %vm673, %v938
      %v955 = vld [vmem:[#allocation3] sm:$0xff]
      %v956 = vld [vmem:[#allocation3 + $0x8] sm:$0xff]
      %v957 = vld [vmem:[#allocation3 + $0x10] sm:$0xff]
      %v958 = vld [vmem:[#allocation3 + $0x18] sm:$0xff]
      %v959 = vld [vmem:[#allocation3 + $0x20] sm:$0xff]
      %v960 = vld [vmem:[#allocation3 + $0x28] sm:$0xff]
      %v961 = vld [vmem:[#allocation3 + $0x30] sm:$0xff]
      %v962 = vld [vmem:[#allocation3 + $0x38] sm:$0xff]
      %v963 = vld [vmem:[#allocation3 + $0x40] sm:$0xff]
      %v964 = vld [vmem:[#allocation3 + $0x48] sm:$0xff]
      %v965 = vld [vmem:[#allocation3 + $0x50] sm:$0xff]
      %v966 = vld [vmem:[#allocation3 + $0x58] sm:$0xff]
      %v967 = vld [vmem:[#allocation3 + $0x60] sm:$0xff]
      %v968 = vld [vmem:[#allocation3 + $0x68] sm:$0xff]
      %v969 = vld [vmem:[#allocation3 + $0x70] sm:$0xff]
      %v970 = vld [vmem:[#allocation3 + $0x78] sm:$0xff]
      %v971 = vpack.c.bf16 %v628, %v627
      %v972 = vpack.c.bf16 %v632, %v631
      %v973 = vpack.c.bf16 %v636, %v635
      %v974 = vpack.c.bf16 %v640, %v639
      %v975 = vpack.c.bf16 %v644, %v643
      %v976 = vpack.c.bf16 %v648, %v647
      %v977 = vpack.c.bf16 %v652, %v651
      %v978 = vpack.c.bf16 %v656, %v655
      %s979 = scalar_lea.vmem %s3, 2
      %v980 = vld [vmem:[%s979] sm:$0x3]
      %v982 = vsel %vm585, %v971, 0
      %v985 = vsel %vm585, %v972, 0
      %v988 = vsel %vm585, %v973, 0
      %v991 = vsel %vm585, %v974, 0
      %v994 = vsel %vm585, %v975, 0
      %v997 = vsel %vm585, %v976, 0
      %v1000 = vsel %vm585, %v977, 0
      %v1003 = vsel %vm585, %v978, 0
      %v1006 = vand.u32 %v980, %v822
      %1008 = vmatprep.subr.bf16.mxu0 0
      %1009 = vmatpush1.bf16.msra.mxu0 %v1006
      %1010 = vmatprep.subr.bf16.mxu0 0
      %1011 = vmatpush1.bf16.msra.mxu0 0
      %1012 = vmatprep.subr.bf16.mxu0 0
      %1013 = vmatpush1.bf16.msra.mxu0 0
      %1014 = vmatprep.subr.bf16.mxu0 0
      %1015 = vmatpush1.bf16.msra.mxu0 0
      %1016 = vmatprep.subr.bf16.mxu0 0
      %1017 = vmatpush1.bf16.msra.mxu0 0
      %1018 = vmatprep.subr.bf16.mxu0 0
      %1019 = vmatpush1.bf16.msra.mxu0 0
      %1020 = vmatprep.subr.bf16.mxu0 0
      %1021 = vmatpush1.bf16.msra.mxu0 0
      %1022 = vmatprep.subr.bf16.mxu0 0
      %1023 = vmatpush1.bf16.msra.mxu0 0
      %1024 = vmatprep.subr.bf16.mxu0 0
      %1025 = vmatpush1.bf16.msra.mxu0 0
      %1026 = vmatprep.subr.bf16.mxu0 0
      %1027 = vmatpush1.bf16.msra.mxu0 0
      %1028 = vmatprep.subr.bf16.mxu0 0
      %1029 = vmatpush1.bf16.msra.mxu0 0
      %1030 = vmatprep.subr.bf16.mxu0 0
      %1031 = vmatpush1.bf16.msra.mxu0 0
      %1032 = vmatprep.subr.bf16.mxu0 0
      %1033 = vmatpush1.bf16.msra.mxu0 0
      %1034 = vmatprep.subr.bf16.mxu0 0
      %1035 = vmatpush1.bf16.msra.mxu0 0
      %1036 = vmatprep.subr.bf16.mxu0 0
      %1037 = vmatpush1.bf16.msra.mxu0 0
      %1038 = vmatprep.subr.bf16.mxu0 0
      %1039 = vmatpush1.bf16.msra.mxu0 0
      %1040 = vmatprep.mubr.bf16.mxu0 0
      %1041 = vmatmul.mubr.bf16.gmra.mrb[0].mxu0 %v982
      %v1042 = vpop.f32.mrb[0].mxu0
      %v1043 = vadd.f32 0.0, %v1042
      %v1044 = vpop.f32.mrb[0].mxu0
      %v1045 = vpop.f32.mrb[0].mxu0
      %v1046 = vadd.f32 0.0, %v1045
      %v1047 = vpop.f32.mrb[0].mxu0
      %1048 = vmatprep.mubr.bf16.mxu0 0
      %1049 = vmatmul.mubr.bf16.gmra.mrb[0].mxu0 %v985
      %v1050 = vpop.f32.mrb[0].mxu0
      %v1051 = vadd.f32 0.0, %v1050
      %v1052 = vpop.f32.mrb[0].mxu0
      %v1053 = vpop.f32.mrb[0].mxu0
      %v1054 = vadd.f32 0.0, %v1053
      %v1055 = vpop.f32.mrb[0].mxu0
      %1056 = vmatprep.mubr.bf16.mxu0 0
      %1057 = vmatmul.mubr.bf16.gmra.mrb[0].mxu0 %v988
      %v1058 = vpop.f32.mrb[0].mxu0
      %v1059 = vadd.f32 0.0, %v1058
      %v1060 = vpop.f32.mrb[0].mxu0
      %v1061 = vpop.f32.mrb[0].mxu0
      %v1062 = vadd.f32 0.0, %v1061
      %v1063 = vpop.f32.mrb[0].mxu0
      %1064 = vmatprep.mubr.bf16.mxu0 0
      %1065 = vmatmul.mubr.bf16.gmra.mrb[0].mxu0 %v991
      %v1066 = vpop.f32.mrb[0].mxu0
      %v1067 = vadd.f32 0.0, %v1066
      %v1068 = vpop.f32.mrb[0].mxu0
      %v1069 = vpop.f32.mrb[0].mxu0
      %v1070 = vadd.f32 0.0, %v1069
      %v1071 = vpop.f32.mrb[0].mxu0
      %1072 = vmatprep.mubr.bf16.mxu0 0
      %1073 = vmatmul.mubr.bf16.gmra.mrb[0].mxu0 %v994
      %v1074 = vpop.f32.mrb[0].mxu0
      %v1075 = vadd.f32 0.0, %v1074
      %v1076 = vpop.f32.mrb[0].mxu0
      %v1077 = vpop.f32.mrb[0].mxu0
      %v1078 = vadd.f32 0.0, %v1077
      %v1079 = vpop.f32.mrb[0].mxu0
      %1080 = vmatprep.mubr.bf16.mxu0 0
      %1081 = vmatmul.mubr.bf16.gmra.mrb[0].mxu0 %v997
      %v1082 = vpop.f32.mrb[0].mxu0
      %v1083 = vadd.f32 0.0, %v1082
      %v1084 = vpop.f32.mrb[0].mxu0
      %v1085 = vpop.f32.mrb[0].mxu0
      %v1086 = vadd.f32 0.0, %v1085
      %v1087 = vpop.f32.mrb[0].mxu0
      %1088 = vmatprep.mubr.bf16.mxu0 0
      %1089 = vmatmul.mubr.bf16.gmra.mrb[0].mxu0 %v1000
      %v1090 = vpop.f32.mrb[0].mxu0
      %v1091 = vadd.f32 0.0, %v1090
      %v1092 = vpop.f32.mrb[0].mxu0
      %v1093 = vpop.f32.mrb[0].mxu0
      %v1094 = vadd.f32 0.0, %v1093
      %v1095 = vpop.f32.mrb[0].mxu0
      %1096 = vmatprep.mubr.bf16.mxu0 0
      %1097 = vmatmul.mubr.bf16.gmra.mrb[0].mxu0 %v1003
      %v1098 = vpop.f32.mrb[0].mxu0
      %v1099 = vadd.f32 0.0, %v1098
      %v1100 = vpop.f32.mrb[0].mxu0
      %v1101 = vpop.f32.mrb[0].mxu0
      %v1102 = vadd.f32 0.0, %v1101
      %v1103 = vpop.f32.mrb[0].mxu0
      %1104 = vdwg.mxu0
      %v1105 = vadd.f32 %v955, %v1043
      %v1106 = vadd.f32 %v956, %v1046
      %v1107 = vadd.f32 %v957, %v1051
      %v1108 = vadd.f32 %v958, %v1054
      %v1109 = vadd.f32 %v959, %v1059
      %v1110 = vadd.f32 %v960, %v1062
      %v1111 = vadd.f32 %v961, %v1067
      %v1112 = vadd.f32 %v962, %v1070
      %v1113 = vadd.f32 %v963, %v1075
      %v1114 = vadd.f32 %v964, %v1078
      %v1115 = vadd.f32 %v965, %v1083
      %v1116 = vadd.f32 %v966, %v1086
      %v1117 = vadd.f32 %v967, %v1091
      %v1118 = vadd.f32 %v968, %v1094
      %v1119 = vadd.f32 %v969, %v1099
      %v1120 = vadd.f32 %v970, %v1102
      %1121 = vst.msk [vmem:[#allocation3] sm:$0xff] %vm673, %v1105
      %1122 = vst.msk [vmem:[#allocation3 + $0x8] sm:$0xff] %vm673, %v1106
      %1123 = vst.msk [vmem:[#allocation3 + $0x10] sm:$0xff] %vm673, %v1107
      %1124 = vst.msk [vmem:[#allocation3 + $0x18] sm:$0xff] %vm673, %v1108
      %1125 = vst.msk [vmem:[#allocation3 + $0x20] sm:$0xff] %vm673, %v1109
      %1126 = vst.msk [vmem:[#allocation3 + $0x28] sm:$0xff] %vm673, %v1110
      %1127 = vst.msk [vmem:[#allocation3 + $0x30] sm:$0xff] %vm673, %v1111
      %1128 = vst.msk [vmem:[#allocation3 + $0x38] sm:$0xff] %vm673, %v1112
      %1129 = vst.msk [vmem:[#allocation3 + $0x40] sm:$0xff] %vm673, %v1113
      %1130 = vst.msk [vmem:[#allocation3 + $0x48] sm:$0xff] %vm673, %v1114
      %1131 = vst.msk [vmem:[#allocation3 + $0x50] sm:$0xff] %vm673, %v1115
      %1132 = vst.msk [vmem:[#allocation3 + $0x58] sm:$0xff] %vm673, %v1116
      %1133 = vst.msk [vmem:[#allocation3 + $0x60] sm:$0xff] %vm673, %v1117
      %1134 = vst.msk [vmem:[#allocation3 + $0x68] sm:$0xff] %vm673, %v1118
      %1135 = vst.msk [vmem:[#allocation3 + $0x70] sm:$0xff] %vm673, %v1119
      %1136 = vst.msk [vmem:[#allocation3 + $0x78] sm:$0xff] %vm673, %v1120
      %vm1145 = vcmask 1046528
      %v1146 = vrot.slane %v627, 1
      %v1147 = vrot.slane %v628, 1
      %v1148 = vsel %vm1145, %v1146, %v1147
      %v1149 = vrot.slane %v629, 1
      %v1150 = vsel %vm1145, %v1147, %v1149
      %v1151 = vrot.slane %v631, 1
      %v1152 = vrot.slane %v632, 1
      %v1153 = vsel %vm1145, %v1151, %v1152
      %v1154 = vrot.slane %v633, 1
      %v1155 = vsel %vm1145, %v1152, %v1154
      %v1156 = vrot.slane %v635, 1
      %v1157 = vrot.slane %v636, 1
      %v1158 = vsel %vm1145, %v1156, %v1157
      %v1159 = vrot.slane %v637, 1
      %v1160 = vsel %vm1145, %v1157, %v1159
      %v1161 = vrot.slane %v639, 1
      %v1162 = vrot.slane %v640, 1
      %v1163 = vsel %vm1145, %v1161, %v1162
      %v1164 = vrot.slane %v641, 1
      %v1165 = vsel %vm1145, %v1162, %v1164
      %v1166 = vrot.slane %v643, 1
      %v1167 = vrot.slane %v644, 1
      %v1168 = vsel %vm1145, %v1166, %v1167
      %v1169 = vrot.slane %v645, 1
      %v1170 = vsel %vm1145, %v1167, %v1169
      %v1171 = vrot.slane %v647, 1
      %v1172 = vrot.slane %v648, 1
      %v1173 = vsel %vm1145, %v1171, %v1172
      %v1174 = vrot.slane %v649, 1
      %v1175 = vsel %vm1145, %v1172, %v1174
      %v1176 = vrot.slane %v651, 1
      %v1177 = vrot.slane %v652, 1
      %v1178 = vsel %vm1145, %v1176, %v1177
      %v1179 = vrot.slane %v653, 1
      %v1180 = vsel %vm1145, %v1177, %v1179
      %v1181 = vrot.slane %v655, 1
      %v1182 = vrot.slane %v656, 1
      %v1183 = vsel %vm1145, %v1181, %v1182
      %v1184 = vrot.slane %v657, 1
      %v1185 = vsel %vm1145, %v1182, %v1184
      %v1202 = vld [vmem:[#allocation3] sm:$0xff]
      %v1203 = vld [vmem:[#allocation3 + $0x8] sm:$0xff]
      %v1204 = vld [vmem:[#allocation3 + $0x10] sm:$0xff]
      %v1205 = vld [vmem:[#allocation3 + $0x18] sm:$0xff]
      %v1206 = vld [vmem:[#allocation3 + $0x20] sm:$0xff]
      %v1207 = vld [vmem:[#allocation3 + $0x28] sm:$0xff]
      %v1208 = vld [vmem:[#allocation3 + $0x30] sm:$0xff]
      %v1209 = vld [vmem:[#allocation3 + $0x38] sm:$0xff]
      %v1210 = vld [vmem:[#allocation3 + $0x40] sm:$0xff]
      %v1211 = vld [vmem:[#allocation3 + $0x48] sm:$0xff]
      %v1212 = vld [vmem:[#allocation3 + $0x50] sm:$0xff]
      %v1213 = vld [vmem:[#allocation3 + $0x58] sm:$0xff]
      %v1214 = vld [vmem:[#allocation3 + $0x60] sm:$0xff]
      %v1215 = vld [vmem:[#allocation3 + $0x68] sm:$0xff]
      %v1216 = vld [vmem:[#allocation3 + $0x70] sm:$0xff]
      %v1217 = vld [vmem:[#allocation3 + $0x78] sm:$0xff]
      %v1218 = vpack.c.bf16 %v1150, %v1148
      %v1219 = vpack.c.bf16 %v1155, %v1153
      %v1220 = vpack.c.bf16 %v1160, %v1158
      %v1221 = vpack.c.bf16 %v1165, %v1163
      %v1222 = vpack.c.bf16 %v1170, %v1168
      %v1223 = vpack.c.bf16 %v1175, %v1173
      %v1224 = vpack.c.bf16 %v1180, %v1178
      %v1225 = vpack.c.bf16 %v1185, %v1183
      %s1226 = scalar_lea.vmem %s3, 4
      %v1227 = vld [vmem:[%s1226] sm:$0x3]
      %v1229 = vsel %vm585, %v1218, 0
      %v1232 = vsel %vm585, %v1219, 0
      %v1235 = vsel %vm585, %v1220, 0
      %v1238 = vsel %vm585, %v1221, 0
      %v1241 = vsel %vm585, %v1222, 0
      %v1244 = vsel %vm585, %v1223, 0
      %v1247 = vsel %vm585, %v1224, 0
      %v1250 = vsel %vm585, %v1225, 0
      %v1253 = vand.u32 %v1227, %v822
      %1255 = vmatprep.subr.bf16.mxu0 0
      %1256 = vmatpush1.bf16.msra.mxu0 %v1253
      %1257 = vmatprep.subr.bf16.mxu0 0
      %1258 = vmatpush1.bf16.msra.mxu0 0
      %1259 = vmatprep.subr.bf16.mxu0 0
      %1260 = vmatpush1.bf16.msra.mxu0 0
      %1261 = vmatprep.subr.bf16.mxu0 0
      %1262 = vmatpush1.bf16.msra.mxu0 0
      %1263 = vmatprep.subr.bf16.mxu0 0
      %1264 = vmatpush1.bf16.msra.mxu0 0
      %1265 = vmatprep.subr.bf16.mxu0 0
      %1266 = vmatpush1.bf16.msra.mxu0 0
      %1267 = vmatprep.subr.bf16.mxu0 0
      %1268 = vmatpush1.bf16.msra.mxu0 0
      %1269 = vmatprep.subr.bf16.mxu0 0
      %1270 = vmatpush1.bf16.msra.mxu0 0
      %1271 = vmatprep.subr.bf16.mxu0 0
      %1272 = vmatpush1.bf16.msra.mxu0 0
      %1273 = vmatprep.subr.bf16.mxu0 0
      %1274 = vmatpush1.bf16.msra.mxu0 0
      %1275 = vmatprep.subr.bf16.mxu0 0
      %1276 = vmatpush1.bf16.msra.mxu0 0
      %1277 = vmatprep.subr.bf16.mxu0 0
      %1278 = vmatpush1.bf16.msra.mxu0 0
      %1279 = vmatprep.subr.bf16.mxu0 0
      %1280 = vmatpush1.bf16.msra.mxu0 0
      %1281 = vmatprep.subr.bf16.mxu0 0
      %1282 = vmatpush1.bf16.msra.mxu0 0
      %1283 = vmatprep.subr.bf16.mxu0 0
      %1284 = vmatpush1.bf16.msra.mxu0 0
      %1285 = vmatprep.subr.bf16.mxu0 0
      %1286 = vmatpush1.bf16.msra.mxu0 0
      %1287 = vmatprep.mubr.bf16.mxu0 0
      %1288 = vmatmul.mubr.bf16.gmra.mrb[0].mxu0 %v1229
      %v1289 = vpop.f32.mrb[0].mxu0
      %v1290 = vadd.f32 0.0, %v1289
      %v1291 = vpop.f32.mrb[0].mxu0
      %v1292 = vpop.f32.mrb[0].mxu0
      %v1293 = vadd.f32 0.0, %v1292
      %v1294 = vpop.f32.mrb[0].mxu0
      %1295 = vmatprep.mubr.bf16.mxu0 0
      %1296 = vmatmul.mubr.bf16.gmra.mrb[0].mxu0 %v1232
      %v1297 = vpop.f32.mrb[0].mxu0
      %v1298 = vadd.f32 0.0, %v1297
      %v1299 = vpop.f32.mrb[0].mxu0
      %v1300 = vpop.f32.mrb[0].mxu0
      %v1301 = vadd.f32 0.0, %v1300
      %v1302 = vpop.f32.mrb[0].mxu0
      %1303 = vmatprep.mubr.bf16.mxu0 0
      %1304 = vmatmul.mubr.bf16.gmra.mrb[0].mxu0 %v1235
      %v1305 = vpop.f32.mrb[0].mxu0
      %v1306 = vadd.f32 0.0, %v1305
      %v1307 = vpop.f32.mrb[0].mxu0
      %v1308 = vpop.f32.mrb[0].mxu0
      %v1309 = vadd.f32 0.0, %v1308
      %v1310 = vpop.f32.mrb[0].mxu0
      %1311 = vmatprep.mubr.bf16.mxu0 0
      %1312 = vmatmul.mubr.bf16.gmra.mrb[0].mxu0 %v1238
      %v1313 = vpop.f32.mrb[0].mxu0
      %v1314 = vadd.f32 0.0, %v1313
      %v1315 = vpop.f32.mrb[0].mxu0
      %v1316 = vpop.f32.mrb[0].mxu0
      %v1317 = vadd.f32 0.0, %v1316
      %v1318 = vpop.f32.mrb[0].mxu0
      %1319 = vmatprep.mubr.bf16.mxu0 0
      %1320 = vmatmul.mubr.bf16.gmra.mrb[0].mxu0 %v1241
      %v1321 = vpop.f32.mrb[0].mxu0
      %v1322 = vadd.f32 0.0, %v1321
      %v1323 = vpop.f32.mrb[0].mxu0
      %v1324 = vpop.f32.mrb[0].mxu0
      %v1325 = vadd.f32 0.0, %v1324
      %v1326 = vpop.f32.mrb[0].mxu0
      %1327 = vmatprep.mubr.bf16.mxu0 0
      %1328 = vmatmul.mubr.bf16.gmra.mrb[0].mxu0 %v1244
      %v1329 = vpop.f32.mrb[0].mxu0
      %v1330 = vadd.f32 0.0, %v1329
      %v1331 = vpop.f32.mrb[0].mxu0
      %v1332 = vpop.f32.mrb[0].mxu0
      %v1333 = vadd.f32 0.0, %v1332
      %v1334 = vpop.f32.mrb[0].mxu0
      %1335 = vmatprep.mubr.bf16.mxu0 0
      %1336 = vmatmul.mubr.bf16.gmra.mrb[0].mxu0 %v1247
      %v1337 = vpop.f32.mrb[0].mxu0
      %v1338 = vadd.f32 0.0, %v1337
      %v1339 = vpop.f32.mrb[0].mxu0
      %v1340 = vpop.f32.mrb[0].mxu0
      %v1341 = vadd.f32 0.0, %v1340
      %v1342 = vpop.f32.mrb[0].mxu0
      %1343 = vmatprep.mubr.bf16.mxu0 0
      %1344 = vmatmul.mubr.bf16.gmra.mrb[0].mxu0 %v1250
      %v1345 = vpop.f32.mrb[0].mxu0
      %v1346 = vadd.f32 0.0, %v1345
      %v1347 = vpop.f32.mrb[0].mxu0
      %v1348 = vpop.f32.mrb[0].mxu0
      %v1349 = vadd.f32 0.0, %v1348
      %v1350 = vpop.f32.mrb[0].mxu0
      %1351 = vdwg.mxu0
      %v1352 = vadd.f32 %v1202, %v1290
      %v1353 = vadd.f32 %v1203, %v1293
      %v1354 = vadd.f32 %v1204, %v1298
      %v1355 = vadd.f32 %v1205, %v1301
      %v1356 = vadd.f32 %v1206, %v1306
      %v1357 = vadd.f32 %v1207, %v1309
      %v1358 = vadd.f32 %v1208, %v1314
      %v1359 = vadd.f32 %v1209, %v1317
      %v1360 = vadd.f32 %v1210, %v1322
      %v1361 = vadd.f32 %v1211, %v1325
      %v1362 = vadd.f32 %v1212, %v1330
      %v1363 = vadd.f32 %v1213, %v1333
      %v1364 = vadd.f32 %v1214, %v1338
      %v1365 = vadd.f32 %v1215, %v1341
      %v1366 = vadd.f32 %v1216, %v1346
      %v1367 = vadd.f32 %v1217, %v1349
      %1368 = vst.msk [vmem:[#allocation3] sm:$0xff] %vm673, %v1352
      %1369 = vst.msk [vmem:[#allocation3 + $0x8] sm:$0xff] %vm673, %v1353
      %1370 = vst.msk [vmem:[#allocation3 + $0x10] sm:$0xff] %vm673, %v1354
      %1371 = vst.msk [vmem:[#allocation3 + $0x18] sm:$0xff] %vm673, %v1355
      %1372 = vst.msk [vmem:[#allocation3 + $0x20] sm:$0xff] %vm673, %v1356
      %1373 = vst.msk [vmem:[#allocation3 + $0x28] sm:$0xff] %vm673, %v1357
      %1374 = vst.msk [vmem:[#allocation3 + $0x30] sm:$0xff] %vm673, %v1358
      %1375 = vst.msk [vmem:[#allocation3 + $0x38] sm:$0xff] %vm673, %v1359
      %1376 = vst.msk [vmem:[#allocation3 + $0x40] sm:$0xff] %vm673, %v1360
      %1377 = vst.msk [vmem:[#allocation3 + $0x48] sm:$0xff] %vm673, %v1361
      %1378 = vst.msk [vmem:[#allocation3 + $0x50] sm:$0xff] %vm673, %v1362
      %1379 = vst.msk [vmem:[#allocation3 + $0x58] sm:$0xff] %vm673, %v1363
      %1380 = vst.msk [vmem:[#allocation3 + $0x60] sm:$0xff] %vm673, %v1364
      %1381 = vst.msk [vmem:[#allocation3 + $0x68] sm:$0xff] %vm673, %v1365
      %1382 = vst.msk [vmem:[#allocation3 + $0x70] sm:$0xff] %vm673, %v1366
      %1383 = vst.msk [vmem:[#allocation3 + $0x78] sm:$0xff] %vm673, %v1367
      %v1387 = vrot.slane %v658, 7
      %v1388 = vrot.slane %v659, 7
      %v1389 = vsel %vm714, %v1387, %v1388
      %v1390 = vrot.slane %v660, 7
      %v1391 = vsel %vm714, %v1388, %v1390
      %v1394 = vld [vmem:[#allocation3] sm:$0xff]
      %v1395 = vld [vmem:[#allocation3 + $0x8] sm:$0xff]
      %v1396 = vld [vmem:[#allocation3 + $0x10] sm:$0xff]
      %v1397 = vld [vmem:[#allocation3 + $0x18] sm:$0xff]
      %v1398 = vld [vmem:[#allocation3 + $0x20] sm:$0xff]
      %v1399 = vld [vmem:[#allocation3 + $0x28] sm:$0xff]
      %v1400 = vld [vmem:[#allocation3 + $0x30] sm:$0xff]
      %v1401 = vld [vmem:[#allocation3 + $0x38] sm:$0xff]
      %v1402 = vld [vmem:[#allocation3 + $0x40] sm:$0xff]
      %v1403 = vld [vmem:[#allocation3 + $0x48] sm:$0xff]
      %v1404 = vld [vmem:[#allocation3 + $0x50] sm:$0xff]
      %v1405 = vld [vmem:[#allocation3 + $0x58] sm:$0xff]
      %v1406 = vld [vmem:[#allocation3 + $0x60] sm:$0xff]
      %v1407 = vld [vmem:[#allocation3 + $0x68] sm:$0xff]
      %v1408 = vld [vmem:[#allocation3 + $0x70] sm:$0xff]
      %v1409 = vld [vmem:[#allocation3 + $0x78] sm:$0xff]
      %v1410 = vpack.c.bf16 %v1391, %v1389
      %s1411 = scalar_lea.vmem %s3, 6
      %v1412 = vld [vmem:[%s1411] sm:$0x3]
      %v1414 = vsel %vm585, %v1410, 0
      %v1417 = vand.u32 %v1412, %v822
      %1419 = vmatprep.subr.bf16.mxu0 0
      %1420 = vmatpush1.bf16.msra.mxu0 %v1417
      %1421 = vmatprep.subr.bf16.mxu0 0
      %1422 = vmatpush1.bf16.msra.mxu0 0
      %1423 = vmatprep.subr.bf16.mxu0 0
      %1424 = vmatpush1.bf16.msra.mxu0 0
      %1425 = vmatprep.subr.bf16.mxu0 0
      %1426 = vmatpush1.bf16.msra.mxu0 0
      %1427 = vmatprep.subr.bf16.mxu0 0
      %1428 = vmatpush1.bf16.msra.mxu0 0
      %1429 = vmatprep.subr.bf16.mxu0 0
      %1430 = vmatpush1.bf16.msra.mxu0 0
      %1431 = vmatprep.subr.bf16.mxu0 0
      %1432 = vmatpush1.bf16.msra.mxu0 0
      %1433 = vmatprep.subr.bf16.mxu0 0
      %1434 = vmatpush1.bf16.msra.mxu0 0
      %1435 = vmatprep.subr.bf16.mxu0 0
      %1436 = vmatpush1.bf16.msra.mxu0 0
      %1437 = vmatprep.subr.bf16.mxu0 0
      %1438 = vmatpush1.bf16.msra.mxu0 0
      %1439 = vmatprep.subr.bf16.mxu0 0
      %1440 = vmatpush1.bf16.msra.mxu0 0
      %1441 = vmatprep.subr.bf16.mxu0 0
      %1442 = vmatpush1.bf16.msra.mxu0 0
      %1443 = vmatprep.subr.bf16.mxu0 0
      %1444 = vmatpush1.bf16.msra.mxu0 0
      %1445 = vmatprep.subr.bf16.mxu0 0
      %1446 = vmatpush1.bf16.msra.mxu0 0
      %1447 = vmatprep.subr.bf16.mxu0 0
      %1448 = vmatpush1.bf16.msra.mxu0 0
      %1449 = vmatprep.subr.bf16.mxu0 0
      %1450 = vmatpush1.bf16.msra.mxu0 0
      %1451 = vmatprep.mubr.bf16.mxu0 0
      %1452 = vmatmul.mubr.bf16.gmra.mrb[0].mxu0 %v800
      %v1453 = vpop.f32.mrb[0].mxu0
      %v1454 = vadd.f32 0.0, %v1453
      %v1455 = vpop.f32.mrb[0].mxu0
      %v1456 = vpop.f32.mrb[0].mxu0
      %v1457 = vadd.f32 0.0, %v1456
      %v1458 = vpop.f32.mrb[0].mxu0
      %1459 = vmatprep.mubr.bf16.mxu0 0
      %1460 = vmatmul.mubr.bf16.gmra.mrb[0].mxu0 %v803
      %v1461 = vpop.f32.mrb[0].mxu0
      %v1462 = vadd.f32 0.0, %v1461
      %v1463 = vpop.f32.mrb[0].mxu0
      %v1464 = vpop.f32.mrb[0].mxu0
      %v1465 = vadd.f32 0.0, %v1464
      %v1466 = vpop.f32.mrb[0].mxu0
      %1467 = vmatprep.mubr.bf16.mxu0 0
      %1468 = vmatmul.mubr.bf16.gmra.mrb[0].mxu0 %v806
      %v1469 = vpop.f32.mrb[0].mxu0
      %v1470 = vadd.f32 0.0, %v1469
      %v1471 = vpop.f32.mrb[0].mxu0
      %v1472 = vpop.f32.mrb[0].mxu0
      %v1473 = vadd.f32 0.0, %v1472
      %v1474 = vpop.f32.mrb[0].mxu0
      %1475 = vmatprep.mubr.bf16.mxu0 0
      %1476 = vmatmul.mubr.bf16.gmra.mrb[0].mxu0 %v809
      %v1477 = vpop.f32.mrb[0].mxu0
      %v1478 = vadd.f32 0.0, %v1477
      %v1479 = vpop.f32.mrb[0].mxu0
      %v1480 = vpop.f32.mrb[0].mxu0
      %v1481 = vadd.f32 0.0, %v1480
      %v1482 = vpop.f32.mrb[0].mxu0
      %1483 = vmatprep.mubr.bf16.mxu0 0
      %1484 = vmatmul.mubr.bf16.gmra.mrb[0].mxu0 %v812
      %v1485 = vpop.f32.mrb[0].mxu0
      %v1486 = vadd.f32 0.0, %v1485
      %v1487 = vpop.f32.mrb[0].mxu0
      %v1488 = vpop.f32.mrb[0].mxu0
      %v1489 = vadd.f32 0.0, %v1488
      %v1490 = vpop.f32.mrb[0].mxu0
      %1491 = vmatprep.mubr.bf16.mxu0 0
      %1492 = vmatmul.mubr.bf16.gmra.mrb[0].mxu0 %v815
      %v1493 = vpop.f32.mrb[0].mxu0
      %v1494 = vadd.f32 0.0, %v1493
      %v1495 = vpop.f32.mrb[0].mxu0
      %v1496 = vpop.f32.mrb[0].mxu0
      %v1497 = vadd.f32 0.0, %v1496
      %v1498 = vpop.f32.mrb[0].mxu0
      %1499 = vmatprep.mubr.bf16.mxu0 0
      %1500 = vmatmul.mubr.bf16.gmra.mrb[0].mxu0 %v818
      %v1501 = vpop.f32.mrb[0].mxu0
      %v1502 = vadd.f32 0.0, %v1501
      %v1503 = vpop.f32.mrb[0].mxu0
      %v1504 = vpop.f32.mrb[0].mxu0
      %v1505 = vadd.f32 0.0, %v1504
      %v1506 = vpop.f32.mrb[0].mxu0
      %1507 = vmatprep.mubr.bf16.mxu0 0
      %1508 = vmatmul.mubr.bf16.gmra.mrb[0].mxu0 %v1414
      %v1509 = vpop.f32.mrb[0].mxu0
      %v1510 = vadd.f32 0.0, %v1509
      %v1511 = vpop.f32.mrb[0].mxu0
      %v1512 = vpop.f32.mrb[0].mxu0
      %v1513 = vadd.f32 0.0, %v1512
      %v1514 = vpop.f32.mrb[0].mxu0
      %1515 = vdwg.mxu0
      %v1516 = vadd.f32 %v1394, %v1454
      %v1517 = vadd.f32 %v1395, %v1457
      %v1518 = vadd.f32 %v1396, %v1462
      %v1519 = vadd.f32 %v1397, %v1465
      %v1520 = vadd.f32 %v1398, %v1470
      %v1521 = vadd.f32 %v1399, %v1473
      %v1522 = vadd.f32 %v1400, %v1478
      %v1523 = vadd.f32 %v1401, %v1481
      %v1524 = vadd.f32 %v1402, %v1486
      %v1525 = vadd.f32 %v1403, %v1489
      %v1526 = vadd.f32 %v1404, %v1494
      %v1527 = vadd.f32 %v1405, %v1497
      %v1528 = vadd.f32 %v1406, %v1502
      %v1529 = vadd.f32 %v1407, %v1505
      %v1530 = vadd.f32 %v1408, %v1510
      %v1531 = vadd.f32 %v1409, %v1513
      %1532 = vst.msk [vmem:[#allocation3] sm:$0xff] %vm673, %v1516
      %1533 = vst.msk [vmem:[#allocation3 + $0x8] sm:$0xff] %vm673, %v1517
      %1534 = vst.msk [vmem:[#allocation3 + $0x10] sm:$0xff] %vm673, %v1518
      %1535 = vst.msk [vmem:[#allocation3 + $0x18] sm:$0xff] %vm673, %v1519
      %1536 = vst.msk [vmem:[#allocation3 + $0x20] sm:$0xff] %vm673, %v1520
      %1537 = vst.msk [vmem:[#allocation3 + $0x28] sm:$0xff] %vm673, %v1521
      %1538 = vst.msk [vmem:[#allocation3 + $0x30] sm:$0xff] %vm673, %v1522
      %1539 = vst.msk [vmem:[#allocation3 + $0x38] sm:$0xff] %vm673, %v1523
      %1540 = vst.msk [vmem:[#allocation3 + $0x40] sm:$0xff] %vm673, %v1524
      %1541 = vst.msk [vmem:[#allocation3 + $0x48] sm:$0xff] %vm673, %v1525
      %1542 = vst.msk [vmem:[#allocation3 + $0x50] sm:$0xff] %vm673, %v1526
      %1543 = vst.msk [vmem:[#allocation3 + $0x58] sm:$0xff] %vm673, %v1527
      %1544 = vst.msk [vmem:[#allocation3 + $0x60] sm:$0xff] %vm673, %v1528
      %1545 = vst.msk [vmem:[#allocation3 + $0x68] sm:$0xff] %vm673, %v1529
      %1546 = vst.msk [vmem:[#allocation3 + $0x70] sm:$0xff] %vm673, %v1530
      %1547 = vst.msk [vmem:[#allocation3 + $0x78] sm:$0xff] %vm673, %v1531
      %v1548 = vld [vmem:[#allocation3] sm:$0xff]
      %v1549 = vld [vmem:[#allocation3 + $0x8] sm:$0xff]
      %v1550 = vld [vmem:[#allocation3 + $0x10] sm:$0xff]
      %v1551 = vld [vmem:[#allocation3 + $0x18] sm:$0xff]
      %v1552 = vld [vmem:[#allocation3 + $0x20] sm:$0xff]
      %v1553 = vld [vmem:[#allocation3 + $0x28] sm:$0xff]
      %v1554 = vld [vmem:[#allocation3 + $0x30] sm:$0xff]
      %v1555 = vld [vmem:[#allocation3 + $0x38] sm:$0xff]
      %v1556 = vld [vmem:[#allocation3 + $0x40] sm:$0xff]
      %v1557 = vld [vmem:[#allocation3 + $0x48] sm:$0xff]
      %v1558 = vld [vmem:[#allocation3 + $0x50] sm:$0xff]
      %v1559 = vld [vmem:[#allocation3 + $0x58] sm:$0xff]
      %v1560 = vld [vmem:[#allocation3 + $0x60] sm:$0xff]
      %v1561 = vld [vmem:[#allocation3 + $0x68] sm:$0xff]
      %v1562 = vld [vmem:[#allocation3 + $0x70] sm:$0xff]
      %v1563 = vld [vmem:[#allocation3 + $0x78] sm:$0xff]
      %v1564 = vpack.c.bf16 %v660, %v659
      %s1565 = scalar_lea.vmem %s3, 8
      %v1566 = vld [vmem:[%s1565] sm:$0x3]
      %v1568 = vsel %vm585, %v1564, 0
      %v1571 = vand.u32 %v1566, %v822
      %1573 = vmatprep.subr.bf16.mxu0 0
      %1574 = vmatpush1.bf16.msra.mxu0 %v1571
      %1575 = vmatprep.subr.bf16.mxu0 0
      %1576 = vmatpush1.bf16.msra.mxu0 0
      %1577 = vmatprep.subr.bf16.mxu0 0
      %1578 = vmatpush1.bf16.msra.mxu0 0
      %1579 = vmatprep.subr.bf16.mxu0 0
      %1580 = vmatpush1.bf16.msra.mxu0 0
      %1581 = vmatprep.subr.bf16.mxu0 0
      %1582 = vmatpush1.bf16.msra.mxu0 0
      %1583 = vmatprep.subr.bf16.mxu0 0
      %1584 = vmatpush1.bf16.msra.mxu0 0
      %1585 = vmatprep.subr.bf16.mxu0 0
      %1586 = vmatpush1.bf16.msra.mxu0 0
      %1587 = vmatprep.subr.bf16.mxu0 0
      %1588 = vmatpush1.bf16.msra.mxu0 0
      %1589 = vmatprep.subr.bf16.mxu0 0
      %1590 = vmatpush1.bf16.msra.mxu0 0
      %1591 = vmatprep.subr.bf16.mxu0 0
      %1592 = vmatpush1.bf16.msra.mxu0 0
      %1593 = vmatprep.subr.bf16.mxu0 0
      %1594 = vmatpush1.bf16.msra.mxu0 0
      %1595 = vmatprep.subr.bf16.mxu0 0
      %1596 = vmatpush1.bf16.msra.mxu0 0
      %1597 = vmatprep.subr.bf16.mxu0 0
      %1598 = vmatpush1.bf16.msra.mxu0 0
      %1599 = vmatprep.subr.bf16.mxu0 0
      %1600 = vmatpush1.bf16.msra.mxu0 0
      %1601 = vmatprep.subr.bf16.mxu0 0
      %1602 = vmatpush1.bf16.msra.mxu0 0
      %1603 = vmatprep.subr.bf16.mxu0 0
      %1604 = vmatpush1.bf16.msra.mxu0 0
      %1605 = vmatprep.mubr.bf16.mxu0 0
      %1606 = vmatmul.mubr.bf16.gmra.mrb[0].mxu0 %v985
      %v1607 = vpop.f32.mrb[0].mxu0
      %v1608 = vadd.f32 0.0, %v1607
      %v1609 = vpop.f32.mrb[0].mxu0
      %v1610 = vpop.f32.mrb[0].mxu0
      %v1611 = vadd.f32 0.0, %v1610
      %v1612 = vpop.f32.mrb[0].mxu0
      %1613 = vmatprep.mubr.bf16.mxu0 0
      %1614 = vmatmul.mubr.bf16.gmra.mrb[0].mxu0 %v988
      %v1615 = vpop.f32.mrb[0].mxu0
      %v1616 = vadd.f32 0.0, %v1615
      %v1617 = vpop.f32.mrb[0].mxu0
      %v1618 = vpop.f32.mrb[0].mxu0
      %v1619 = vadd.f32 0.0, %v1618
      %v1620 = vpop.f32.mrb[0].mxu0
      %1621 = vmatprep.mubr.bf16.mxu0 0
      %1622 = vmatmul.mubr.bf16.gmra.mrb[0].mxu0 %v991
      %v1623 = vpop.f32.mrb[0].mxu0
      %v1624 = vadd.f32 0.0, %v1623
      %v1625 = vpop.f32.mrb[0].mxu0
      %v1626 = vpop.f32.mrb[0].mxu0
      %v1627 = vadd.f32 0.0, %v1626
      %v1628 = vpop.f32.mrb[0].mxu0
      %1629 = vmatprep.mubr.bf16.mxu0 0
      %1630 = vmatmul.mubr.bf16.gmra.mrb[0].mxu0 %v994
      %v1631 = vpop.f32.mrb[0].mxu0
      %v1632 = vadd.f32 0.0, %v1631
      %v1633 = vpop.f32.mrb[0].mxu0
      %v1634 = vpop.f32.mrb[0].mxu0
      %v1635 = vadd.f32 0.0, %v1634
      %v1636 = vpop.f32.mrb[0].mxu0
      %1637 = vmatprep.mubr.bf16.mxu0 0
      %1638 = vmatmul.mubr.bf16.gmra.mrb[0].mxu0 %v997
      %v1639 = vpop.f32.mrb[0].mxu0
      %v1640 = vadd.f32 0.0, %v1639
      %v1641 = vpop.f32.mrb[0].mxu0
      %v1642 = vpop.f32.mrb[0].mxu0
      %v1643 = vadd.f32 0.0, %v1642
      %v1644 = vpop.f32.mrb[0].mxu0
      %1645 = vmatprep.mubr.bf16.mxu0 0
      %1646 = vmatmul.mubr.bf16.gmra.mrb[0].mxu0 %v1000
      %v1647 = vpop.f32.mrb[0].mxu0
      %v1648 = vadd.f32 0.0, %v1647
      %v1649 = vpop.f32.mrb[0].mxu0
      %v1650 = vpop.f32.mrb[0].mxu0
      %v1651 = vadd.f32 0.0, %v1650
      %v1652 = vpop.f32.mrb[0].mxu0
      %1653 = vmatprep.mubr.bf16.mxu0 0
      %1654 = vmatmul.mubr.bf16.gmra.mrb[0].mxu0 %v1003
      %v1655 = vpop.f32.mrb[0].mxu0
      %v1656 = vadd.f32 0.0, %v1655
      %v1657 = vpop.f32.mrb[0].mxu0
      %v1658 = vpop.f32.mrb[0].mxu0
      %v1659 = vadd.f32 0.0, %v1658
      %v1660 = vpop.f32.mrb[0].mxu0
      %1661 = vmatprep.mubr.bf16.mxu0 0
      %1662 = vmatmul.mubr.bf16.gmra.mrb[0].mxu0 %v1568
      %v1663 = vpop.f32.mrb[0].mxu0
      %v1664 = vadd.f32 0.0, %v1663
      %v1665 = vpop.f32.mrb[0].mxu0
      %v1666 = vpop.f32.mrb[0].mxu0
      %v1667 = vadd.f32 0.0, %v1666
      %v1668 = vpop.f32.mrb[0].mxu0
      %1669 = vdwg.mxu0
      %v1670 = vadd.f32 %v1548, %v1608
      %v1671 = vadd.f32 %v1549, %v1611
      %v1672 = vadd.f32 %v1550, %v1616
      %v1673 = vadd.f32 %v1551, %v1619
      %v1674 = vadd.f32 %v1552, %v1624
      %v1675 = vadd.f32 %v1553, %v1627
      %v1676 = vadd.f32 %v1554, %v1632
      %v1677 = vadd.f32 %v1555, %v1635
      %v1678 = vadd.f32 %v1556, %v1640
      %v1679 = vadd.f32 %v1557, %v1643
      %v1680 = vadd.f32 %v1558, %v1648
      %v1681 = vadd.f32 %v1559, %v1651
      %v1682 = vadd.f32 %v1560, %v1656
      %v1683 = vadd.f32 %v1561, %v1659
      %v1684 = vadd.f32 %v1562, %v1664
      %v1685 = vadd.f32 %v1563, %v1667
      %1686 = vst.msk [vmem:[#allocation3] sm:$0xff] %vm673, %v1670
      %1687 = vst.msk [vmem:[#allocation3 + $0x8] sm:$0xff] %vm673, %v1671
      %1688 = vst.msk [vmem:[#allocation3 + $0x10] sm:$0xff] %vm673, %v1672
      %1689 = vst.msk [vmem:[#allocation3 + $0x18] sm:$0xff] %vm673, %v1673
      %1690 = vst.msk [vmem:[#allocation3 + $0x20] sm:$0xff] %vm673, %v1674
      %1691 = vst.msk [vmem:[#allocation3 + $0x28] sm:$0xff] %vm673, %v1675
      %1692 = vst.msk [vmem:[#allocation3 + $0x30] sm:$0xff] %vm673, %v1676
      %1693 = vst.msk [vmem:[#allocation3 + $0x38] sm:$0xff] %vm673, %v1677
      %1694 = vst.msk [vmem:[#allocation3 + $0x40] sm:$0xff] %vm673, %v1678
      %1695 = vst.msk [vmem:[#allocation3 + $0x48] sm:$0xff] %vm673, %v1679
      %1696 = vst.msk [vmem:[#allocation3 + $0x50] sm:$0xff] %vm673, %v1680
      %1697 = vst.msk [vmem:[#allocation3 + $0x58] sm:$0xff] %vm673, %v1681
      %1698 = vst.msk [vmem:[#allocation3 + $0x60] sm:$0xff] %vm673, %v1682
      %1699 = vst.msk [vmem:[#allocation3 + $0x68] sm:$0xff] %vm673, %v1683
      %1700 = vst.msk [vmem:[#allocation3 + $0x70] sm:$0xff] %vm673, %v1684
      %1701 = vst.msk [vmem:[#allocation3 + $0x78] sm:$0xff] %vm673, %v1685
      %v1703 = vrot.slane %v659, 1
      %v1704 = vrot.slane %v660, 1
      %v1705 = vsel %vm1145, %v1703, %v1704
      %v1706 = vrot.slane %v661, 1
      %v1707 = vsel %vm1145, %v1704, %v1706
      %v1710 = vld [vmem:[#allocation3] sm:$0xff]
      %v1711 = vld [vmem:[#allocation3 + $0x8] sm:$0xff]
      %v1712 = vld [vmem:[#allocation3 + $0x10] sm:$0xff]
      %v1713 = vld [vmem:[#allocation3 + $0x18] sm:$0xff]
      %v1714 = vld [vmem:[#allocation3 + $0x20] sm:$0xff]
      %v1715 = vld [vmem:[#allocation3 + $0x28] sm:$0xff]
      %v1716 = vld [vmem:[#allocation3 + $0x30] sm:$0xff]
      %v1717 = vld [vmem:[#allocation3 + $0x38] sm:$0xff]
      %v1718 = vld [vmem:[#allocation3 + $0x40] sm:$0xff]
      %v1719 = vld [vmem:[#allocation3 + $0x48] sm:$0xff]
      %v1720 = vld [vmem:[#allocation3 + $0x50] sm:$0xff]
      %v1721 = vld [vmem:[#allocation3 + $0x58] sm:$0xff]
      %v1722 = vld [vmem:[#allocation3 + $0x60] sm:$0xff]
      %v1723 = vld [vmem:[#allocation3 + $0x68] sm:$0xff]
      %v1724 = vld [vmem:[#allocation3 + $0x70] sm:$0xff]
      %v1725 = vld [vmem:[#allocation3 + $0x78] sm:$0xff]
      %v1726 = vpack.c.bf16 %v1707, %v1705
      %s1727 = scalar_lea.vmem %s3, 10
      %v1728 = vld [vmem:[%s1727] sm:$0x3]
      %v1730 = vsel %vm585, %v1726, 0
      %v1733 = vand.u32 %v1728, %v822
      %1735 = vmatprep.subr.bf16.mxu0 0
      %1736 = vmatpush1.bf16.msra.mxu0 %v1733
      %1737 = vmatprep.subr.bf16.mxu0 0
      %1738 = vmatpush1.bf16.msra.mxu0 0
      %1739 = vmatprep.subr.bf16.mxu0 0
      %1740 = vmatpush1.bf16.msra.mxu0 0
      %1741 = vmatprep.subr.bf16.mxu0 0
      %1742 = vmatpush1.bf16.msra.mxu0 0
      %1743 = vmatprep.subr.bf16.mxu0 0
      %1744 = vmatpush1.bf16.msra.mxu0 0
      %1745 = vmatprep.subr.bf16.mxu0 0
      %1746 = vmatpush1.bf16.msra.mxu0 0
      %1747 = vmatprep.subr.bf16.mxu0 0
      %1748 = vmatpush1.bf16.msra.mxu0 0
      %1749 = vmatprep.subr.bf16.mxu0 0
      %1750 = vmatpush1.bf16.msra.mxu0 0
      %1751 = vmatprep.subr.bf16.mxu0 0
      %1752 = vmatpush1.bf16.msra.mxu0 0
      %1753 = vmatprep.subr.bf16.mxu0 0
      %1754 = vmatpush1.bf16.msra.mxu0 0
      %1755 = vmatprep.subr.bf16.mxu0 0
      %1756 = vmatpush1.bf16.msra.mxu0 0
      %1757 = vmatprep.subr.bf16.mxu0 0
      %1758 = vmatpush1.bf16.msra.mxu0 0
      %1759 = vmatprep.subr.bf16.mxu0 0
      %1760 = vmatpush1.bf16.msra.mxu0 0
      %1761 = vmatprep.subr.bf16.mxu0 0
      %1762 = vmatpush1.bf16.msra.mxu0 0
      %1763 = vmatprep.subr.bf16.mxu0 0
      %1764 = vmatpush1.bf16.msra.mxu0 0
      %1765 = vmatprep.subr.bf16.mxu0 0
      %1766 = vmatpush1.bf16.msra.mxu0 0
      %1767 = vmatprep.mubr.bf16.mxu0 0
      %1768 = vmatmul.mubr.bf16.gmra.mrb[0].mxu0 %v1232
      %v1769 = vpop.f32.mrb[0].mxu0
      %v1770 = vadd.f32 0.0, %v1769
      %v1771 = vpop.f32.mrb[0].mxu0
      %v1772 = vpop.f32.mrb[0].mxu0
      %v1773 = vadd.f32 0.0, %v1772
      %v1774 = vpop.f32.mrb[0].mxu0
      %1775 = vmatprep.mubr.bf16.mxu0 0
      %1776 = vmatmul.mubr.bf16.gmra.mrb[0].mxu0 %v1235
      %v1777 = vpop.f32.mrb[0].mxu0
      %v1778 = vadd.f32 0.0, %v1777
      %v1779 = vpop.f32.mrb[0].mxu0
      %v1780 = vpop.f32.mrb[0].mxu0
      %v1781 = vadd.f32 0.0, %v1780
      %v1782 = vpop.f32.mrb[0].mxu0
      %1783 = vmatprep.mubr.bf16.mxu0 0
      %1784 = vmatmul.mubr.bf16.gmra.mrb[0].mxu0 %v1238
      %v1785 = vpop.f32.mrb[0].mxu0
      %v1786 = vadd.f32 0.0, %v1785
      %v1787 = vpop.f32.mrb[0].mxu0
      %v1788 = vpop.f32.mrb[0].mxu0
      %v1789 = vadd.f32 0.0, %v1788
      %v1790 = vpop.f32.mrb[0].mxu0
      %1791 = vmatprep.mubr.bf16.mxu0 0
      %1792 = vmatmul.mubr.bf16.gmra.mrb[0].mxu0 %v1241
      %v1793 = vpop.f32.mrb[0].mxu0
      %v1794 = vadd.f32 0.0, %v1793
      %v1795 = vpop.f32.mrb[0].mxu0
      %v1796 = vpop.f32.mrb[0].mxu0
      %v1797 = vadd.f32 0.0, %v1796
      %v1798 = vpop.f32.mrb[0].mxu0
      %1799 = vmatprep.mubr.bf16.mxu0 0
      %1800 = vmatmul.mubr.bf16.gmra.mrb[0].mxu0 %v1244
      %v1801 = vpop.f32.mrb[0].mxu0
      %v1802 = vadd.f32 0.0, %v1801
      %v1803 = vpop.f32.mrb[0].mxu0
      %v1804 = vpop.f32.mrb[0].mxu0
      %v1805 = vadd.f32 0.0, %v1804
      %v1806 = vpop.f32.mrb[0].mxu0
      %1807 = vmatprep.mubr.bf16.mxu0 0
      %1808 = vmatmul.mubr.bf16.gmra.mrb[0].mxu0 %v1247
      %v1809 = vpop.f32.mrb[0].mxu0
      %v1810 = vadd.f32 0.0, %v1809
      %v1811 = vpop.f32.mrb[0].mxu0
      %v1812 = vpop.f32.mrb[0].mxu0
      %v1813 = vadd.f32 0.0, %v1812
      %v1814 = vpop.f32.mrb[0].mxu0
      %1815 = vmatprep.mubr.bf16.mxu0 0
      %1816 = vmatmul.mubr.bf16.gmra.mrb[0].mxu0 %v1250
      %v1817 = vpop.f32.mrb[0].mxu0
      %v1818 = vadd.f32 0.0, %v1817
      %v1819 = vpop.f32.mrb[0].mxu0
      %v1820 = vpop.f32.mrb[0].mxu0
      %v1821 = vadd.f32 0.0, %v1820
      %v1822 = vpop.f32.mrb[0].mxu0
      %1823 = vmatprep.mubr.bf16.mxu0 0
      %1824 = vmatmul.mubr.bf16.gmra.mrb[0].mxu0 %v1730
      %v1825 = vpop.f32.mrb[0].mxu0
      %v1826 = vadd.f32 0.0, %v1825
      %v1827 = vpop.f32.mrb[0].mxu0
      %v1828 = vpop.f32.mrb[0].mxu0
      %v1829 = vadd.f32 0.0, %v1828
      %v1830 = vpop.f32.mrb[0].mxu0
      %1831 = vdwg.mxu0
      %v1832 = vadd.f32 %v1710, %v1770
      %v1833 = vadd.f32 %v1711, %v1773
      %v1834 = vadd.f32 %v1712, %v1778
      %v1835 = vadd.f32 %v1713, %v1781
      %v1836 = vadd.f32 %v1714, %v1786
      %v1837 = vadd.f32 %v1715, %v1789
      %v1838 = vadd.f32 %v1716, %v1794
      %v1839 = vadd.f32 %v1717, %v1797
      %v1840 = vadd.f32 %v1718, %v1802
      %v1841 = vadd.f32 %v1719, %v1805
      %v1842 = vadd.f32 %v1720, %v1810
      %v1843 = vadd.f32 %v1721, %v1813
      %v1844 = vadd.f32 %v1722, %v1818
      %v1845 = vadd.f32 %v1723, %v1821
      %v1846 = vadd.f32 %v1724, %v1826
      %v1847 = vadd.f32 %v1725, %v1829
      %1848 = vst.msk [vmem:[#allocation3] sm:$0xff] %vm673, %v1832
      %1849 = vst.msk [vmem:[#allocation3 + $0x8] sm:$0xff] %vm673, %v1833
      %1850 = vst.msk [vmem:[#allocation3 + $0x10] sm:$0xff] %vm673, %v1834
      %1851 = vst.msk [vmem:[#allocation3 + $0x18] sm:$0xff] %vm673, %v1835
      %1852 = vst.msk [vmem:[#allocation3 + $0x20] sm:$0xff] %vm673, %v1836
      %1853 = vst.msk [vmem:[#allocation3 + $0x28] sm:$0xff] %vm673, %v1837
      %1854 = vst.msk [vmem:[#allocation3 + $0x30] sm:$0xff] %vm673, %v1838
      %1855 = vst.msk [vmem:[#allocation3 + $0x38] sm:$0xff] %vm673, %v1839
      %1856 = vst.msk [vmem:[#allocation3 + $0x40] sm:$0xff] %vm673, %v1840
      %1857 = vst.msk [vmem:[#allocation3 + $0x48] sm:$0xff] %vm673, %v1841
      %1858 = vst.msk [vmem:[#allocation3 + $0x50] sm:$0xff] %vm673, %v1842
      %1859 = vst.msk [vmem:[#allocation3 + $0x58] sm:$0xff] %vm673, %v1843
      %1860 = vst.msk [vmem:[#allocation3 + $0x60] sm:$0xff] %vm673, %v1844
      %1861 = vst.msk [vmem:[#allocation3 + $0x68] sm:$0xff] %vm673, %v1845
      %1862 = vst.msk [vmem:[#allocation3 + $0x70] sm:$0xff] %vm673, %v1846
      %1863 = vst.msk [vmem:[#allocation3 + $0x78] sm:$0xff] %vm673, %v1847
      %v1867 = vrot.slane %v662, 7
      %v1868 = vrot.slane %v663, 7
      %v1869 = vsel %vm714, %v1867, %v1868
      %v1870 = vrot.slane %v664, 7
      %v1871 = vsel %vm714, %v1868, %v1870
      %v1874 = vld [vmem:[#allocation3] sm:$0xff]
      %v1875 = vld [vmem:[#allocation3 + $0x8] sm:$0xff]
      %v1876 = vld [vmem:[#allocation3 + $0x10] sm:$0xff]
      %v1877 = vld [vmem:[#allocation3 + $0x18] sm:$0xff]
      %v1878 = vld [vmem:[#allocation3 + $0x20] sm:$0xff]
      %v1879 = vld [vmem:[#allocation3 + $0x28] sm:$0xff]
      %v1880 = vld [vmem:[#allocation3 + $0x30] sm:$0xff]
      %v1881 = vld [vmem:[#allocation3 + $0x38] sm:$0xff]
      %v1882 = vld [vmem:[#allocation3 + $0x40] sm:$0xff]
      %v1883 = vld [vmem:[#allocation3 + $0x48] sm:$0xff]
      %v1884 = vld [vmem:[#allocation3 + $0x50] sm:$0xff]
      %v1885 = vld [vmem:[#allocation3 + $0x58] sm:$0xff]
      %v1886 = vld [vmem:[#allocation3 + $0x60] sm:$0xff]
      %v1887 = vld [vmem:[#allocation3 + $0x68] sm:$0xff]
      %v1888 = vld [vmem:[#allocation3 + $0x70] sm:$0xff]
      %v1889 = vld [vmem:[#allocation3 + $0x78] sm:$0xff]
      %v1890 = vpack.c.bf16 %v1871, %v1869
      %s1891 = scalar_lea.vmem %s3, 12
      %v1892 = vld [vmem:[%s1891] sm:$0x3]
      %v1894 = vsel %vm585, %v1890, 0
      %v1897 = vand.u32 %v1892, %v822
      %1899 = vmatprep.subr.bf16.mxu0 0
      %1900 = vmatpush1.bf16.msra.mxu0 %v1897
      %1901 = vmatprep.subr.bf16.mxu0 0
      %1902 = vmatpush1.bf16.msra.mxu0 0
      %1903 = vmatprep.subr.bf16.mxu0 0
      %1904 = vmatpush1.bf16.msra.mxu0 0
      %1905 = vmatprep.subr.bf16.mxu0 0
      %1906 = vmatpush1.bf16.msra.mxu0 0
      %1907 = vmatprep.subr.bf16.mxu0 0
      %1908 = vmatpush1.bf16.msra.mxu0 0
      %1909 = vmatprep.subr.bf16.mxu0 0
      %1910 = vmatpush1.bf16.msra.mxu0 0
      %1911 = vmatprep.subr.bf16.mxu0 0
      %1912 = vmatpush1.bf16.msra.mxu0 0
      %1913 = vmatprep.subr.bf16.mxu0 0
      %1914 = vmatpush1.bf16.msra.mxu0 0
      %1915 = vmatprep.subr.bf16.mxu0 0
      %1916 = vmatpush1.bf16.msra.mxu0 0
      %1917 = vmatprep.subr.bf16.mxu0 0
      %1918 = vmatpush1.bf16.msra.mxu0 0
      %1919 = vmatprep.subr.bf16.mxu0 0
      %1920 = vmatpush1.bf16.msra.mxu0 0
      %1921 = vmatprep.subr.bf16.mxu0 0
      %1922 = vmatpush1.bf16.msra.mxu0 0
      %1923 = vmatprep.subr.bf16.mxu0 0
      %1924 = vmatpush1.bf16.msra.mxu0 0
      %1925 = vmatprep.subr.bf16.mxu0 0
      %1926 = vmatpush1.bf16.msra.mxu0 0
      %1927 = vmatprep.subr.bf16.mxu0 0
      %1928 = vmatpush1.bf16.msra.mxu0 0
      %1929 = vmatprep.subr.bf16.mxu0 0
      %1930 = vmatpush1.bf16.msra.mxu0 0
      %1931 = vmatprep.mubr.bf16.mxu0 0
      %1932 = vmatmul.mubr.bf16.gmra.mrb[0].mxu0 %v803
      %v1933 = vpop.f32.mrb[0].mxu0
      %v1934 = vadd.f32 0.0, %v1933
      %v1935 = vpop.f32.mrb[0].mxu0
      %v1936 = vpop.f32.mrb[0].mxu0
      %v1937 = vadd.f32 0.0, %v1936
      %v1938 = vpop.f32.mrb[0].mxu0
      %1939 = vmatprep.mubr.bf16.mxu0 0
      %1940 = vmatmul.mubr.bf16.gmra.mrb[0].mxu0 %v806
      %v1941 = vpop.f32.mrb[0].mxu0
      %v1942 = vadd.f32 0.0, %v1941
      %v1943 = vpop.f32.mrb[0].mxu0
      %v1944 = vpop.f32.mrb[0].mxu0
      %v1945 = vadd.f32 0.0, %v1944
      %v1946 = vpop.f32.mrb[0].mxu0
      %1947 = vmatprep.mubr.bf16.mxu0 0
      %1948 = vmatmul.mubr.bf16.gmra.mrb[0].mxu0 %v809
      %v1949 = vpop.f32.mrb[0].mxu0
      %v1950 = vadd.f32 0.0, %v1949
      %v1951 = vpop.f32.mrb[0].mxu0
      %v1952 = vpop.f32.mrb[0].mxu0
      %v1953 = vadd.f32 0.0, %v1952
      %v1954 = vpop.f32.mrb[0].mxu0
      %1955 = vmatprep.mubr.bf16.mxu0 0
      %1956 = vmatmul.mubr.bf16.gmra.mrb[0].mxu0 %v812
      %v1957 = vpop.f32.mrb[0].mxu0
      %v1958 = vadd.f32 0.0, %v1957
      %v1959 = vpop.f32.mrb[0].mxu0
      %v1960 = vpop.f32.mrb[0].mxu0
      %v1961 = vadd.f32 0.0, %v1960
      %v1962 = vpop.f32.mrb[0].mxu0
      %1963 = vmatprep.mubr.bf16.mxu0 0
      %1964 = vmatmul.mubr.bf16.gmra.mrb[0].mxu0 %v815
      %v1965 = vpop.f32.mrb[0].mxu0
      %v1966 = vadd.f32 0.0, %v1965
      %v1967 = vpop.f32.mrb[0].mxu0
      %v1968 = vpop.f32.mrb[0].mxu0
      %v1969 = vadd.f32 0.0, %v1968
      %v1970 = vpop.f32.mrb[0].mxu0
      %1971 = vmatprep.mubr.bf16.mxu0 0
      %1972 = vmatmul.mubr.bf16.gmra.mrb[0].mxu0 %v818
      %v1973 = vpop.f32.mrb[0].mxu0
      %v1974 = vadd.f32 0.0, %v1973
      %v1975 = vpop.f32.mrb[0].mxu0
      %v1976 = vpop.f32.mrb[0].mxu0
      %v1977 = vadd.f32 0.0, %v1976
      %v1978 = vpop.f32.mrb[0].mxu0
      %1979 = vmatprep.mubr.bf16.mxu0 0
      %1980 = vmatmul.mubr.bf16.gmra.mrb[0].mxu0 %v1414
      %v1981 = vpop.f32.mrb[0].mxu0
      %v1982 = vadd.f32 0.0, %v1981
      %v1983 = vpop.f32.mrb[0].mxu0
      %v1984 = vpop.f32.mrb[0].mxu0
      %v1985 = vadd.f32 0.0, %v1984
      %v1986 = vpop.f32.mrb[0].mxu0
      %1987 = vmatprep.mubr.bf16.mxu0 0
      %1988 = vmatmul.mubr.bf16.gmra.mrb[0].mxu0 %v1894
      %v1989 = vpop.f32.mrb[0].mxu0
      %v1990 = vadd.f32 0.0, %v1989
      %v1991 = vpop.f32.mrb[0].mxu0
      %v1992 = vpop.f32.mrb[0].mxu0
      %v1993 = vadd.f32 0.0, %v1992
      %v1994 = vpop.f32.mrb[0].mxu0
      %1995 = vdwg.mxu0
      %v1996 = vadd.f32 %v1874, %v1934
      %v1997 = vadd.f32 %v1875, %v1937
      %v1998 = vadd.f32 %v1876, %v1942
      %v1999 = vadd.f32 %v1877, %v1945
      %v2000 = vadd.f32 %v1878, %v1950
      %v2001 = vadd.f32 %v1879, %v1953
      %v2002 = vadd.f32 %v1880, %v1958
      %v2003 = vadd.f32 %v1881, %v1961
      %v2004 = vadd.f32 %v1882, %v1966
      %v2005 = vadd.f32 %v1883, %v1969
      %v2006 = vadd.f32 %v1884, %v1974
      %v2007 = vadd.f32 %v1885, %v1977
      %v2008 = vadd.f32 %v1886, %v1982
      %v2009 = vadd.f32 %v1887, %v1985
      %v2010 = vadd.f32 %v1888, %v1990
      %v2011 = vadd.f32 %v1889, %v1993
      %2012 = vst.msk [vmem:[#allocation3] sm:$0xff] %vm673, %v1996
      %2013 = vst.msk [vmem:[#allocation3 + $0x8] sm:$0xff] %vm673, %v1997
      %2014 = vst.msk [vmem:[#allocation3 + $0x10] sm:$0xff] %vm673, %v1998
      %2015 = vst.msk [vmem:[#allocation3 + $0x18] sm:$0xff] %vm673, %v1999
      %2016 = vst.msk [vmem:[#allocation3 + $0x20] sm:$0xff] %vm673, %v2000
      %2017 = vst.msk [vmem:[#allocation3 + $0x28] sm:$0xff] %vm673, %v2001
      %2018 = vst.msk [vmem:[#allocation3 + $0x30] sm:$0xff] %vm673, %v2002
      %2019 = vst.msk [vmem:[#allocation3 + $0x38] sm:$0xff] %vm673, %v2003
      %2020 = vst.msk [vmem:[#allocation3 + $0x40] sm:$0xff] %vm673, %v2004
      %2021 = vst.msk [vmem:[#allocation3 + $0x48] sm:$0xff] %vm673, %v2005
      %2022 = vst.msk [vmem:[#allocation3 + $0x50] sm:$0xff] %vm673, %v2006
      %2023 = vst.msk [vmem:[#allocation3 + $0x58] sm:$0xff] %vm673, %v2007
      %2024 = vst.msk [vmem:[#allocation3 + $0x60] sm:$0xff] %vm673, %v2008
      %2025 = vst.msk [vmem:[#allocation3 + $0x68] sm:$0xff] %vm673, %v2009
      %2026 = vst.msk [vmem:[#allocation3 + $0x70] sm:$0xff] %vm673, %v2010
      %2027 = vst.msk [vmem:[#allocation3 + $0x78] sm:$0xff] %vm673, %v2011
      %v2028 = vld [vmem:[#allocation3] sm:$0xff]
      %v2029 = vld [vmem:[#allocation3 + $0x8] sm:$0xff]
      %v2030 = vld [vmem:[#allocation3 + $0x10] sm:$0xff]
      %v2031 = vld [vmem:[#allocation3 + $0x18] sm:$0xff]
      %v2032 = vld [vmem:[#allocation3 + $0x20] sm:$0xff]
      %v2033 = vld [vmem:[#allocation3 + $0x28] sm:$0xff]
      %v2034 = vld [vmem:[#allocation3 + $0x30] sm:$0xff]
      %v2035 = vld [vmem:[#allocation3 + $0x38] sm:$0xff]
      %v2036 = vld [vmem:[#allocation3 + $0x40] sm:$0xff]
      %v2037 = vld [vmem:[#allocation3 + $0x48] sm:$0xff]
      %v2038 = vld [vmem:[#allocation3 + $0x50] sm:$0xff]
      %v2039 = vld [vmem:[#allocation3 + $0x58] sm:$0xff]
      %v2040 = vld [vmem:[#allocation3 + $0x60] sm:$0xff]
      %v2041 = vld [vmem:[#allocation3 + $0x68] sm:$0xff]
      %v2042 = vld [vmem:[#allocation3 + $0x70] sm:$0xff]
      %v2043 = vld [vmem:[#allocation3 + $0x78] sm:$0xff]
      %v2044 = vpack.c.bf16 %v664, %v663
      %s2045 = scalar_lea.vmem %s3, 14
      %v2046 = vld [vmem:[%s2045] sm:$0x3]
      %v2048 = vsel %vm585, %v2044, 0
      %v2051 = vand.u32 %v2046, %v822
      %2053 = vmatprep.subr.bf16.mxu0 0
      %2054 = vmatpush1.bf16.msra.mxu0 %v2051
      %2055 = vmatprep.subr.bf16.mxu0 0
      %2056 = vmatpush1.bf16.msra.mxu0 0
      %2057 = vmatprep.subr.bf16.mxu0 0
      %2058 = vmatpush1.bf16.msra.mxu0 0
      %2059 = vmatprep.subr.bf16.mxu0 0
      %2060 = vmatpush1.bf16.msra.mxu0 0
      %2061 = vmatprep.subr.bf16.mxu0 0
      %2062 = vmatpush1.bf16.msra.mxu0 0
      %2063 = vmatprep.subr.bf16.mxu0 0
      %2064 = vmatpush1.bf16.msra.mxu0 0
      %2065 = vmatprep.subr.bf16.mxu0 0
      %2066 = vmatpush1.bf16.msra.mxu0 0
      %2067 = vmatprep.subr.bf16.mxu0 0
      %2068 = vmatpush1.bf16.msra.mxu0 0
      %2069 = vmatprep.subr.bf16.mxu0 0
      %2070 = vmatpush1.bf16.msra.mxu0 0
      %2071 = vmatprep.subr.bf16.mxu0 0
      %2072 = vmatpush1.bf16.msra.mxu0 0
      %2073 = vmatprep.subr.bf16.mxu0 0
      %2074 = vmatpush1.bf16.msra.mxu0 0
      %2075 = vmatprep.subr.bf16.mxu0 0
      %2076 = vmatpush1.bf16.msra.mxu0 0
      %2077 = vmatprep.subr.bf16.mxu0 0
      %2078 = vmatpush1.bf16.msra.mxu0 0
      %2079 = vmatprep.subr.bf16.mxu0 0
      %2080 = vmatpush1.bf16.msra.mxu0 0
      %2081 = vmatprep.subr.bf16.mxu0 0
      %2082 = vmatpush1.bf16.msra.mxu0 0
      %2083 = vmatprep.subr.bf16.mxu0 0
      %2084 = vmatpush1.bf16.msra.mxu0 0
      %2085 = vmatprep.mubr.bf16.mxu0 0
      %2086 = vmatmul.mubr.bf16.gmra.mrb[0].mxu0 %v988
      %v2087 = vpop.f32.mrb[0].mxu0
      %v2088 = vadd.f32 0.0, %v2087
      %v2089 = vpop.f32.mrb[0].mxu0
      %v2090 = vpop.f32.mrb[0].mxu0
      %v2091 = vadd.f32 0.0, %v2090
      %v2092 = vpop.f32.mrb[0].mxu0
      %2093 = vmatprep.mubr.bf16.mxu0 0
      %2094 = vmatmul.mubr.bf16.gmra.mrb[0].mxu0 %v991
      %v2095 = vpop.f32.mrb[0].mxu0
      %v2096 = vadd.f32 0.0, %v2095
      %v2097 = vpop.f32.mrb[0].mxu0
      %v2098 = vpop.f32.mrb[0].mxu0
      %v2099 = vadd.f32 0.0, %v2098
      %v2100 = vpop.f32.mrb[0].mxu0
      %2101 = vmatprep.mubr.bf16.mxu0 0
      %2102 = vmatmul.mubr.bf16.gmra.mrb[0].mxu0 %v994
      %v2103 = vpop.f32.mrb[0].mxu0
      %v2104 = vadd.f32 0.0, %v2103
      %v2105 = vpop.f32.mrb[0].mxu0
      %v2106 = vpop.f32.mrb[0].mxu0
      %v2107 = vadd.f32 0.0, %v2106
      %v2108 = vpop.f32.mrb[0].mxu0
      %2109 = vmatprep.mubr.bf16.mxu0 0
      %2110 = vmatmul.mubr.bf16.gmra.mrb[0].mxu0 %v997
      %v2111 = vpop.f32.mrb[0].mxu0
      %v2112 = vadd.f32 0.0, %v2111
      %v2113 = vpop.f32.mrb[0].mxu0
      %v2114 = vpop.f32.mrb[0].mxu0
      %v2115 = vadd.f32 0.0, %v2114
      %v2116 = vpop.f32.mrb[0].mxu0
      %2117 = vmatprep.mubr.bf16.mxu0 0
      %2118 = vmatmul.mubr.bf16.gmra.mrb[0].mxu0 %v1000
      %v2119 = vpop.f32.mrb[0].mxu0
      %v2120 = vadd.f32 0.0, %v2119
      %v2121 = vpop.f32.mrb[0].mxu0
      %v2122 = vpop.f32.mrb[0].mxu0
      %v2123 = vadd.f32 0.0, %v2122
      %v2124 = vpop.f32.mrb[0].mxu0
      %2125 = vmatprep.mubr.bf16.mxu0 0
      %2126 = vmatmul.mubr.bf16.gmra.mrb[0].mxu0 %v1003
      %v2127 = vpop.f32.mrb[0].mxu0
      %v2128 = vadd.f32 0.0, %v2127
      %v2129 = vpop.f32.mrb[0].mxu0
      %v2130 = vpop.f32.mrb[0].mxu0
      %v2131 = vadd.f32 0.0, %v2130
      %v2132 = vpop.f32.mrb[0].mxu0
      %2133 = vmatprep.mubr.bf16.mxu0 0
      %2134 = vmatmul.mubr.bf16.gmra.mrb[0].mxu0 %v1568
      %v2135 = vpop.f32.mrb[0].mxu0
      %v2136 = vadd.f32 0.0, %v2135
      %v2137 = vpop.f32.mrb[0].mxu0
      %v2138 = vpop.f32.mrb[0].mxu0
      %v2139 = vadd.f32 0.0, %v2138
      %v2140 = vpop.f32.mrb[0].mxu0
      %2141 = vmatprep.mubr.bf16.mxu0 0
      %2142 = vmatmul.mubr.bf16.gmra.mrb[0].mxu0 %v2048
      %v2143 = vpop.f32.mrb[0].mxu0
      %v2144 = vadd.f32 0.0, %v2143
      %v2145 = vpop.f32.mrb[0].mxu0
      %v2146 = vpop.f32.mrb[0].mxu0
      %v2147 = vadd.f32 0.0, %v2146
      %v2148 = vpop.f32.mrb[0].mxu0
      %2149 = vdwg.mxu0
      %v2150 = vadd.f32 %v2028, %v2088
      %v2151 = vadd.f32 %v2029, %v2091
      %v2152 = vadd.f32 %v2030, %v2096
      %v2153 = vadd.f32 %v2031, %v2099
      %v2154 = vadd.f32 %v2032, %v2104
      %v2155 = vadd.f32 %v2033, %v2107
      %v2156 = vadd.f32 %v2034, %v2112
      %v2157 = vadd.f32 %v2035, %v2115
      %v2158 = vadd.f32 %v2036, %v2120
      %v2159 = vadd.f32 %v2037, %v2123
      %v2160 = vadd.f32 %v2038, %v2128
      %v2161 = vadd.f32 %v2039, %v2131
      %v2162 = vadd.f32 %v2040, %v2136
      %v2163 = vadd.f32 %v2041, %v2139
      %v2164 = vadd.f32 %v2042, %v2144
      %v2165 = vadd.f32 %v2043, %v2147
      %2166 = vst.msk [vmem:[#allocation3] sm:$0xff] %vm673, %v2150
      %2167 = vst.msk [vmem:[#allocation3 + $0x8] sm:$0xff] %vm673, %v2151
      %2168 = vst.msk [vmem:[#allocation3 + $0x10] sm:$0xff] %vm673, %v2152
      %2169 = vst.msk [vmem:[#allocation3 + $0x18] sm:$0xff] %vm673, %v2153
      %2170 = vst.msk [vmem:[#allocation3 + $0x20] sm:$0xff] %vm673, %v2154
      %2171 = vst.msk [vmem:[#allocation3 + $0x28] sm:$0xff] %vm673, %v2155
      %2172 = vst.msk [vmem:[#allocation3 + $0x30] sm:$0xff] %vm673, %v2156
      %2173 = vst.msk [vmem:[#allocation3 + $0x38] sm:$0xff] %vm673, %v2157
      %2174 = vst.msk [vmem:[#allocation3 + $0x40] sm:$0xff] %vm673, %v2158
      %2175 = vst.msk [vmem:[#allocation3 + $0x48] sm:$0xff] %vm673, %v2159
      %2176 = vst.msk [vmem:[#allocation3 + $0x50] sm:$0xff] %vm673, %v2160
      %2177 = vst.msk [vmem:[#allocation3 + $0x58] sm:$0xff] %vm673, %v2161
      %2178 = vst.msk [vmem:[#allocation3 + $0x60] sm:$0xff] %vm673, %v2162
      %2179 = vst.msk [vmem:[#allocation3 + $0x68] sm:$0xff] %vm673, %v2163
      %2180 = vst.msk [vmem:[#allocation3 + $0x70] sm:$0xff] %vm673, %v2164
      %2181 = vst.msk [vmem:[#allocation3 + $0x78] sm:$0xff] %vm673, %v2165
      %v2183 = vrot.slane %v663, 1
      %v2184 = vrot.slane %v664, 1
      %v2185 = vsel %vm1145, %v2183, %v2184
      %v2186 = vrot.slane %v665, 1
      %v2187 = vsel %vm1145, %v2184, %v2186
      %v2190 = vld [vmem:[#allocation3] sm:$0xff]
      %v2191 = vld [vmem:[#allocation3 + $0x8] sm:$0xff]
      %v2192 = vld [vmem:[#allocation3 + $0x10] sm:$0xff]
      %v2193 = vld [vmem:[#allocation3 + $0x18] sm:$0xff]
      %v2194 = vld [vmem:[#allocation3 + $0x20] sm:$0xff]
      %v2195 = vld [vmem:[#allocation3 + $0x28] sm:$0xff]
      %v2196 = vld [vmem:[#allocation3 + $0x30] sm:$0xff]
      %v2197 = vld [vmem:[#allocation3 + $0x38] sm:$0xff]
      %v2198 = vld [vmem:[#allocation3 + $0x40] sm:$0xff]
      %v2199 = vld [vmem:[#allocation3 + $0x48] sm:$0xff]
      %v2200 = vld [vmem:[#allocation3 + $0x50] sm:$0xff]
      %v2201 = vld [vmem:[#allocation3 + $0x58] sm:$0xff]
      %v2202 = vld [vmem:[#allocation3 + $0x60] sm:$0xff]
      %v2203 = vld [vmem:[#allocation3 + $0x68] sm:$0xff]
      %v2204 = vld [vmem:[#allocation3 + $0x70] sm:$0xff]
      %v2205 = vld [vmem:[#allocation3 + $0x78] sm:$0xff]
      %v2206 = vpack.c.bf16 %v2187, %v2185
      %s2207 = scalar_lea.vmem %s3, 16
      %v2208 = vld [vmem:[%s2207] sm:$0x3]
      %v2210 = vsel %vm585, %v2206, 0
      %v2213 = vand.u32 %v2208, %v822
      %2215 = vmatprep.subr.bf16.mxu0 0
      %2216 = vmatpush1.bf16.msra.mxu0 %v2213
      %2217 = vmatprep.subr.bf16.mxu0 0
      %2218 = vmatpush1.bf16.msra.mxu0 0
      %2219 = vmatprep.subr.bf16.mxu0 0
      %2220 = vmatpush1.bf16.msra.mxu0 0
      %2221 = vmatprep.subr.bf16.mxu0 0
      %2222 = vmatpush1.bf16.msra.mxu0 0
      %2223 = vmatprep.subr.bf16.mxu0 0
      %2224 = vmatpush1.bf16.msra.mxu0 0
      %2225 = vmatprep.subr.bf16.mxu0 0
      %2226 = vmatpush1.bf16.msra.mxu0 0
      %2227 = vmatprep.subr.bf16.mxu0 0
      %2228 = vmatpush1.bf16.msra.mxu0 0
      %2229 = vmatprep.subr.bf16.mxu0 0
      %2230 = vmatpush1.bf16.msra.mxu0 0
      %2231 = vmatprep.subr.bf16.mxu0 0
      %2232 = vmatpush1.bf16.msra.mxu0 0
      %2233 = vmatprep.subr.bf16.mxu0 0
      %2234 = vmatpush1.bf16.msra.mxu0 0
      %2235 = vmatprep.subr.bf16.mxu0 0
      %2236 = vmatpush1.bf16.msra.mxu0 0
      %2237 = vmatprep.subr.bf16.mxu0 0
      %2238 = vmatpush1.bf16.msra.mxu0 0
      %2239 = vmatprep.subr.bf16.mxu0 0
      %2240 = vmatpush1.bf16.msra.mxu0 0
      %2241 = vmatprep.subr.bf16.mxu0 0
      %2242 = vmatpush1.bf16.msra.mxu0 0
      %2243 = vmatprep.subr.bf16.mxu0 0
      %2244 = vmatpush1.bf16.msra.mxu0 0
      %2245 = vmatprep.subr.bf16.mxu0 0
      %2246 = vmatpush1.bf16.msra.mxu0 0
      %2247 = vmatprep.mubr.bf16.mxu0 0
      %2248 = vmatmul.mubr.bf16.gmra.mrb[0].mxu0 %v1235
      %v2249 = vpop.f32.mrb[0].mxu0
      %v2250 = vadd.f32 0.0, %v2249
      %v2251 = vpop.f32.mrb[0].mxu0
      %v2252 = vpop.f32.mrb[0].mxu0
      %v2253 = vadd.f32 0.0, %v2252
      %v2254 = vpop.f32.mrb[0].mxu0
      %2255 = vmatprep.mubr.bf16.mxu0 0
      %2256 = vmatmul.mubr.bf16.gmra.mrb[0].mxu0 %v1238
      %v2257 = vpop.f32.mrb[0].mxu0
      %v2258 = vadd.f32 0.0, %v2257
      %v2259 = vpop.f32.mrb[0].mxu0
      %v2260 = vpop.f32.mrb[0].mxu0
      %v2261 = vadd.f32 0.0, %v2260
      %v2262 = vpop.f32.mrb[0].mxu0
      %2263 = vmatprep.mubr.bf16.mxu0 0
      %2264 = vmatmul.mubr.bf16.gmra.mrb[0].mxu0 %v1241
      %v2265 = vpop.f32.mrb[0].mxu0
      %v2266 = vadd.f32 0.0, %v2265
      %v2267 = vpop.f32.mrb[0].mxu0
      %v2268 = vpop.f32.mrb[0].mxu0
      %v2269 = vadd.f32 0.0, %v2268
      %v2270 = vpop.f32.mrb[0].mxu0
      %2271 = vmatprep.mubr.bf16.mxu0 0
      %2272 = vmatmul.mubr.bf16.gmra.mrb[0].mxu0 %v1244
      %v2273 = vpop.f32.mrb[0].mxu0
      %v2274 = vadd.f32 0.0, %v2273
      %v2275 = vpop.f32.mrb[0].mxu0
      %v2276 = vpop.f32.mrb[0].mxu0
      %v2277 = vadd.f32 0.0, %v2276
      %v2278 = vpop.f32.mrb[0].mxu0
      %2279 = vmatprep.mubr.bf16.mxu0 0
      %2280 = vmatmul.mubr.bf16.gmra.mrb[0].mxu0 %v1247
      %v2281 = vpop.f32.mrb[0].mxu0
      %v2282 = vadd.f32 0.0, %v2281
      %v2283 = vpop.f32.mrb[0].mxu0
      %v2284 = vpop.f32.mrb[0].mxu0
      %v2285 = vadd.f32 0.0, %v2284
      %v2286 = vpop.f32.mrb[0].mxu0
      %2287 = vmatprep.mubr.bf16.mxu0 0
      %2288 = vmatmul.mubr.bf16.gmra.mrb[0].mxu0 %v1250
      %v2289 = vpop.f32.mrb[0].mxu0
      %v2290 = vadd.f32 0.0, %v2289
      %v2291 = vpop.f32.mrb[0].mxu0
      %v2292 = vpop.f32.mrb[0].mxu0
      %v2293 = vadd.f32 0.0, %v2292
      %v2294 = vpop.f32.mrb[0].mxu0
      %2295 = vmatprep.mubr.bf16.mxu0 0
      %2296 = vmatmul.mubr.bf16.gmra.mrb[0].mxu0 %v1730
      %v2297 = vpop.f32.mrb[0].mxu0
      %v2298 = vadd.f32 0.0, %v2297
      %v2299 = vpop.f32.mrb[0].mxu0
      %v2300 = vpop.f32.mrb[0].mxu0
      %v2301 = vadd.f32 0.0, %v2300
      %v2302 = vpop.f32.mrb[0].mxu0
      %2303 = vmatprep.mubr.bf16.mxu0 0
      %2304 = vmatmul.mubr.bf16.gmra.mrb[0].mxu0 %v2210
      %v2305 = vpop.f32.mrb[0].mxu0
      %v2306 = vadd.f32 0.0, %v2305
      %v2307 = vpop.f32.mrb[0].mxu0
      %v2308 = vpop.f32.mrb[0].mxu0
      %v2309 = vadd.f32 0.0, %v2308
      %v2310 = vpop.f32.mrb[0].mxu0
      %2311 = vdwg.mxu0
      %v2312 = vadd.f32 %v2190, %v2250
      %v2313 = vadd.f32 %v2191, %v2253
      %v2314 = vadd.f32 %v2192, %v2258
      %v2315 = vadd.f32 %v2193, %v2261
      %v2316 = vadd.f32 %v2194, %v2266
      %v2317 = vadd.f32 %v2195, %v2269
      %v2318 = vadd.f32 %v2196, %v2274
      %v2319 = vadd.f32 %v2197, %v2277
      %v2320 = vadd.f32 %v2198, %v2282
      %v2321 = vadd.f32 %v2199, %v2285
      %v2322 = vadd.f32 %v2200, %v2290
      %v2323 = vadd.f32 %v2201, %v2293
      %v2324 = vadd.f32 %v2202, %v2298
      %v2325 = vadd.f32 %v2203, %v2301
      %v2326 = vadd.f32 %v2204, %v2306
      %v2327 = vadd.f32 %v2205, %v2309
      %2328 = vst.msk [vmem:[#allocation3] sm:$0xff] %vm673, %v2312
      %2329 = vst.msk [vmem:[#allocation3 + $0x8] sm:$0xff] %vm673, %v2313
      %2330 = vst.msk [vmem:[#allocation3 + $0x10] sm:$0xff] %vm673, %v2314
      %2331 = vst.msk [vmem:[#allocation3 + $0x18] sm:$0xff] %vm673, %v2315
      %2332 = vst.msk [vmem:[#allocation3 + $0x20] sm:$0xff] %vm673, %v2316
      %2333 = vst.msk [vmem:[#allocation3 + $0x28] sm:$0xff] %vm673, %v2317
      %2334 = vst.msk [vmem:[#allocation3 + $0x30] sm:$0xff] %vm673, %v2318
      %2335 = vst.msk [vmem:[#allocation3 + $0x38] sm:$0xff] %vm673, %v2319
      %2336 = vst.msk [vmem:[#allocation3 + $0x40] sm:$0xff] %vm673, %v2320
      %2337 = vst.msk [vmem:[#allocation3 + $0x48] sm:$0xff] %vm673, %v2321
      %2338 = vst.msk [vmem:[#allocation3 + $0x50] sm:$0xff] %vm673, %v2322
      %2339 = vst.msk [vmem:[#allocation3 + $0x58] sm:$0xff] %vm673, %v2323
      %2340 = vst.msk [vmem:[#allocation3 + $0x60] sm:$0xff] %vm673, %v2324
      %2341 = vst.msk [vmem:[#allocation3 + $0x68] sm:$0xff] %vm673, %v2325
      %2342 = vst.msk [vmem:[#allocation3 + $0x70] sm:$0xff] %vm673, %v2326
      %2343 = vst.msk [vmem:[#allocation3 + $0x78] sm:$0xff] %vm673, %v2327
      %v2344 = vld [vmem:[#allocation3] sm:$0xff]
      %v2345 = vld [vmem:[#allocation3 + $0x8] sm:$0xff]
      %v2346 = vld [vmem:[#allocation3 + $0x10] sm:$0xff]
      %v2347 = vld [vmem:[#allocation3 + $0x18] sm:$0xff]
      %v2348 = vld [vmem:[#allocation3 + $0x20] sm:$0xff]
      %v2349 = vld [vmem:[#allocation3 + $0x28] sm:$0xff]
      %v2350 = vld [vmem:[#allocation3 + $0x30] sm:$0xff]
      %v2351 = vld [vmem:[#allocation3 + $0x38] sm:$0xff]
      %v2352 = vld [vmem:[#allocation3 + $0x40] sm:$0xff]
      %v2353 = vld [vmem:[#allocation3 + $0x48] sm:$0xff]
      %v2354 = vld [vmem:[#allocation3 + $0x50] sm:$0xff]
      %v2355 = vld [vmem:[#allocation3 + $0x58] sm:$0xff]
      %v2356 = vld [vmem:[#allocation3 + $0x60] sm:$0xff]
      %v2357 = vld [vmem:[#allocation3 + $0x68] sm:$0xff]
      %v2358 = vld [vmem:[#allocation3 + $0x70] sm:$0xff]
      %v2359 = vld [vmem:[#allocation3 + $0x78] sm:$0xff]
      %v2360 = vmax.f32 %v2344, 0.0
      %v2361 = vmax.f32 %v2345, 0.0
      %v2362 = vmax.f32 %v2346, 0.0
      %v2363 = vmax.f32 %v2347, 0.0
      %v2364 = vmax.f32 %v2348, 0.0
      %v2365 = vmax.f32 %v2349, 0.0
      %v2366 = vmax.f32 %v2350, 0.0
      %v2367 = vmax.f32 %v2351, 0.0
      %v2368 = vmax.f32 %v2352, 0.0
      %v2369 = vmax.f32 %v2353, 0.0
      %v2370 = vmax.f32 %v2354, 0.0
      %v2371 = vmax.f32 %v2355, 0.0
      %v2372 = vmax.f32 %v2356, 0.0
      %v2373 = vmax.f32 %v2357, 0.0
      %v2374 = vmax.f32 %v2358, 0.0
      %v2375 = vmax.f32 %v2359, 0.0
      %v2376 = vpack.c.bf16 %v2361, %v2360
      %v2377 = vpack.c.bf16 %v2363, %v2362
      %v2378 = vpack.c.bf16 %v2365, %v2364
      %v2379 = vpack.c.bf16 %v2367, %v2366
      %v2380 = vpack.c.bf16 %v2369, %v2368
      %v2381 = vpack.c.bf16 %v2371, %v2370
      %v2382 = vpack.c.bf16 %v2373, %v2372
      %v2383 = vpack.c.bf16 %v2375, %v2374
      %v2392 = vunpack.c.l.b16 %v2376
      %v2393 = vunpack.c.h.b16 %v2376
      %v2394 = vunpack.c.l.b16 %v2377
      %v2395 = vunpack.c.h.b16 %v2377
      %v2396 = vunpack.c.l.b16 %v2378
      %v2397 = vunpack.c.h.b16 %v2378
      %v2398 = vunpack.c.l.b16 %v2379
      %v2399 = vunpack.c.h.b16 %v2379
      %v2400 = vunpack.c.l.b16 %v2380
      %v2401 = vunpack.c.h.b16 %v2380
      %v2402 = vunpack.c.l.b16 %v2381
      %v2403 = vunpack.c.h.b16 %v2381
      %v2404 = vunpack.c.l.b16 %v2382
      %v2405 = vunpack.c.h.b16 %v2382
      %v2406 = vunpack.c.l.b16 %v2383
      %v2407 = vunpack.c.h.b16 %v2383
      %v2408 = vpack.c.b16 %v2392, %v2392
      %v2409 = vpack.c.b16 %v2393, %v2393
      %v2410 = vpack.c.b16 %v2394, %v2394
      %v2411 = vpack.c.b16 %v2395, %v2395
      %v2412 = vpack.c.b16 %v2396, %v2396
      %v2413 = vpack.c.b16 %v2397, %v2397
      %v2414 = vpack.c.b16 %v2398, %v2398
      %v2415 = vpack.c.b16 %v2399, %v2399
      %v2416 = vpack.c.b16 %v2400, %v2400
      %v2417 = vpack.c.b16 %v2401, %v2401
      %v2418 = vpack.c.b16 %v2402, %v2402
      %v2419 = vpack.c.b16 %v2403, %v2403
      %v2420 = vpack.c.b16 %v2404, %v2404
      %v2421 = vpack.c.b16 %v2405, %v2405
      %v2422 = vpack.c.b16 %v2406, %v2406
      %v2423 = vpack.c.b16 %v2407, %v2407
      %vm2440 = vcmask 519168
      %2441 = vst.msk [vmem:[%s497] sm:$0xf] %vm2440, %v2408
      %2442 = vst.msk [vmem:[%s497 + $0x4] sm:$0xf] %vm2440, %v2409
      %2443 = vst.msk [vmem:[%s497 + $0x8] sm:$0xf] %vm2440, %v2410
      %2444 = vst.msk [vmem:[%s497 + $0xc] sm:$0xf] %vm2440, %v2411
      %2445 = vst.msk [vmem:[%s497 + $0x10] sm:$0xf] %vm2440, %v2412
      %2446 = vst.msk [vmem:[%s497 + $0x14] sm:$0xf] %vm2440, %v2413
      %2447 = vst.msk [vmem:[%s497 + $0x18] sm:$0xf] %vm2440, %v2414
      %2448 = vst.msk [vmem:[%s497 + $0x1c] sm:$0xf] %vm2440, %v2415
      %2449 = vst.msk [vmem:[%s497 + $0x20] sm:$0xf] %vm2440, %v2416
      %2450 = vst.msk [vmem:[%s497 + $0x24] sm:$0xf] %vm2440, %v2417
      %2451 = vst.msk [vmem:[%s497 + $0x28] sm:$0xf] %vm2440, %v2418
      %2452 = vst.msk [vmem:[%s497 + $0x2c] sm:$0xf] %vm2440, %v2419
      %2453 = vst.msk [vmem:[%s497 + $0x30] sm:$0xf] %vm2440, %v2420
      %2454 = vst.msk [vmem:[%s497 + $0x34] sm:$0xf] %vm2440, %v2421
      %2455 = vst.msk [vmem:[%s497 + $0x38] sm:$0xf] %vm2440, %v2422
      %2456 = vst.msk [vmem:[%s497 + $0x3c] sm:$0xf] %vm2440, %v2423
      %s2457 = smul.u32 8, %s23
      %p2458 = scmp.lt.s32.totalorder %s22, 1
      %s2459 = scalar_select %p2458, %s22, 1
      %p2460 = scmp.lt.s32.totalorder %s2457, 15
      %s2461 = scalar_select %p2460, %s2457, 15
      %s2462 = smul.addr %s2461, 2
      %s2463 = smul.addr %s2459, 32
      %s2464 = sadd.s32 %s2462, %s2463
      %s2465 = smul.addr %s2464, 4
      %s2466 = scalar_lea.vmem %s7, %s2465
      // Predicated region
      $region49: #{vgg_feature_extractor.4} parent=47 // pred_check
        %p2467 = pneg %p246
      $region50: #{vgg_feature_extractor.4} parent=47 // pred_check_branch
        %2469 = sbr.rel (%p2467) target = $region52
      $region51: #{vgg_feature_extractor.4} parent=47 // pred_region
        %s2470 = smul.u32 8, %s23
      $region52: #{vgg_feature_extractor.4} parent=47 // pred_fallthru
        _
    $region48: #{vgg_feature_extractor.4} parent=5 // pred_fallthru
      _
    %p2471 = scmp.le.s32.totalorder 2, %s13
    // Predicated region
    $region53: #{vgg_feature_extractor.4} parent=5 // pred_check
      %p2472 = pneg %p2471
    $region54: #{vgg_feature_extractor.4} parent=5 // pred_check_branch
      %2474 = sbr.rel (%p2472) target = $region56
    $region55: #{vgg_feature_extractor.4} parent=5 // pred_region
      %s2475 = ssub.s32 %s13, 2
      // Predicated region
      $region57: #{vgg_feature_extractor.4} parent=55 // pred_check
        %p2476 = pneg %p252
      $region58: #{vgg_feature_extractor.4} parent=55 // pred_check_branch
        %2478 = sbr.rel (%p2476) target = $region60
      $region59: #{vgg_feature_extractor.4} parent=55 // pred_region
        %s2479 = smul.u32 8, %s25
        %p2480 = scmp.lt.s32.totalorder %s24, 1
        %s2481 = scalar_select %p2480, %s24, 1
        %p2482 = scmp.lt.s32.totalorder %s2479, 15
        %s2483 = scalar_select %p2482, %s2479, 15
        %s2484 = smul.addr %s2483, 2
        %s2485 = smul.addr %s2481, 32
        %s2486 = sadd.s32 %s2484, %s2485
        %s2487 = smul.addr %s2486, 4
        %s2488 = scalar_lea.vmem %s7, %s2487
      $region60: #{vgg_feature_extractor.4} parent=55 // pred_fallthru
        _
    $region56: #{vgg_feature_extractor.4} parent=5 // pred_fallthru
      _
  $region6: #{vgg_feature_extractor.4} parent=0 // loop_footer
    %s17 = sadd.s32 1, %s13
  $region7: #{vgg_feature_extractor.4} parent=0 // loop_footer_branch
    %12 = sbr.rel target = $region3
  $region8: #{vgg_feature_extractor.4} parent=0 // loop_exit
    _

// kernel: vgg_feature_extractor.7
$region0: #{vgg_feature_extractor.7}
  #allocation0 [shape = 'u32[]', space=smem, size = 0x4, offset = 0x4, fixed_abs, tag = 'smem constant byte address 0x4 - core index']
  #allocation1 [shape = 'u32[144,128]{1,0:T(1,128)}', space=vmem, size = 0x12000, scoped, tag = 'internal scratch']
  #allocation2 [shape = 'f32[6,24,128]{2,1,0:T(8,128)}', space=vmem, size = 0x12000, scoped, tag = 'scratch operand']
  #allocation3 [shape = 'f32[32,128]{1,0:T(8,128)}', space=vmem, size = 0x4000, scoped, tag = 'scratch operand']
  %s0 = inlined_call_operand.vmem [shape: bf16[2,8,8,128], index: 0, kind: input, shape index: {}, may-alias: {0,1,2}]
  %s1 = inlined_call_operand.vmem [shape: bf16[2,8,8,128], index: 1, kind: input, shape index: {}, may-alias: {0,1,2}]
  %s2 = inlined_call_operand.vmem [shape: bf16[2,8,8,128], index: 2, kind: input, shape index: {}, may-alias: {0,1,2}]
  %s3 = inlined_call_operand.vmem [shape: bf16[3,3,128,128], index: 3, kind: input, shape index: {}]
  %s4 = inlined_call_operand.vmem [shape: f32[1,128], index: 4, kind: input, shape index: {}]
  %s5 = inlined_call_operand.hbm [shape: f32[2,8,8,128], index: 5, kind: output, shape index: {}]
  %s6 = sld [smem:[#allocation0]]
  $region53: #{vgg_feature_extractor.7} parent=0
    _
  %s8 = ssub.s32 1, %s6
  %s9 = scalar_select 0, %s8, %s6
  $region1: #{vgg_feature_extractor.7} parent=0
    #allocation4 [shape = 'u8[32768]{0}', space=vmem, size = 0x8000, scoped, tag = 'output window, operand 0']
    #allocation5 [shape = 's32[2]{0}', space=sflag, size = 0x8, scoped, tag = 'scoped memory for vgg_feature_extractor.7']
    %10 = vsyncpa [#allocation5], 0
    %s11 = scalar_lea.sflag [#allocation5], 1
    %12 = vsyncpa %s11, 0
    loop: start=0, step=1, limit=6
    $region2: #{vgg_feature_extractor.7} parent=1 // loop_pre_header
      _
    $region3: #{vgg_feature_extractor.7} parent=1 // loop_header
      %s14 = sphi 0, %s18
      %p15 = scmp.ge.s32.totalorder %s14, 6
      %s21 = sphi 0, %s33
      %s22 = sphi 0, %s29
      %s23 = sphi 0, %s21
      %s24 = sphi 0, %s22
      %s25 = sphi 0, %s23
      %s26 = sphi 0, %s24
      %s46 = sphi 0, %s48
      %s49 = sphi 0, %s46
      %s50 = sphi 0, %s49
      %s66 = sphi 0, %s50
      %s84 = sphi 0, %s86
      %s87 = sphi 0, %s84
      %s88 = sphi 0, %s87
      %s104 = sphi 0, %s88
      %s122 = sphi 0, %s124
      %s125 = sphi 0, %s122
      %s126 = sphi 0, %s125
      %s142 = sphi 0, %s126
      %s146 = sphi 0, %s146
      %s148 = sphi 0, %s146
      %s149 = sphi 0, %s148
      %s163 = sphi 0, %s149
      %s167 = sphi 0, %s167
      %s169 = sphi 0, %s167
      %s170 = sphi 0, %s169
      %s184 = sphi 0, %s170
      %s192 = sphi 0, %s194
      %s195 = sphi 0, %s192
      %s196 = sphi 0, %s195
      %s212 = sphi 0, %s196
    $region4: #{vgg_feature_extractor.7} parent=1 // loop_header_branch
      %17 = sbr.rel (%p15) target = $region8
    $region5: #{vgg_feature_extractor.7} parent=1 // loop_body
      %s19 = ssub.s32 %s14, 1
      %s20 = ssub.s32 %s14, 2
      %s27 = sadd.s32 1, %s22
      %p28 = scmp.ge.s32.totalorder %s27, 2
      %s29 = scalar_select %p28, 0, %s27
      %s30 = sadd.s32 1, %s21
      %s31 = scalar_select %p28, %s30, %s21
      %p32 = scmp.ge.s32.totalorder %s31, 2
      %s33 = scalar_select %p32, 0, %s31
      %p34 = scmp.gt.s32.totalorder %s22, 0
      %s35 = scalar_select %p34, %s22, 0
      %p36 = scmp.lt.s32.totalorder %s35, 1
      %s37 = scalar_select %p36, %s35, 1
      %p38 = scmp.gt.s32.totalorder %s29, 0
      %s39 = scalar_select %p38, %s29, 0
      %p40 = scmp.lt.s32.totalorder %s39, 1
      %s41 = scalar_select %p40, %s39, 1
      %s42 = ssub.s32 %s21, %s33
      %s43 = ssub.s32 %s37, %s41
      %s44 = sor.u32 %s42, %s43
      %p45 = scmp.eq.s32.totalorder %s44, 0
      %s47 = sadd.s32 %s46, 1
      %s48 = scalar_select %p45, %s46, %s47
      %p51 = pneg %p45
      %p52 = scmp.eq.s32.totalorder %s14, 3
      %p53 = por %p51, %p52
      %p54 = scmp.ne.s32.totalorder %s46, %s49
      %p55 = scmp.eq.s32.totalorder %s14, 0
      %p56 = por %p54, %p55
      %p57 = scmp.ne.s32.totalorder %s46, %s49
      %p58 = scmp.eq.s32.totalorder %s19, 3
      %p59 = por %p57, %p58
      %p60 = scmp.ne.s32.totalorder %s49, %s50
      %p61 = scmp.eq.s32.totalorder %s19, 0
      %p62 = por %p60, %p61
      %p63 = scmp.ne.s32.totalorder %s49, %s50
      %p64 = scmp.eq.s32.totalorder %s20, 3
      %p65 = por %p63, %p64
      %p67 = scmp.ne.s32.totalorder %s50, %s66
      %p68 = scmp.eq.s32.totalorder %s20, 0
      %p69 = por %p67, %p68
      %s70 = sadd.s32 %s22, 4294967295
      %p71 = scmp.gt.s32.totalorder %s70, 0
      %s72 = scalar_select %p71, %s70, 0
      %p73 = scmp.lt.s32.totalorder %s72, 1
      %s74 = scalar_select %p73, %s72, 1
      %s75 = sadd.s32 %s29, 4294967295
      %p76 = scmp.gt.s32.totalorder %s75, 0
      %s77 = scalar_select %p76, %s75, 0
      %p78 = scmp.lt.s32.totalorder %s77, 1
      %s79 = scalar_select %p78, %s77, 1
      %s80 = ssub.s32 %s21, %s33
      %s81 = ssub.s32 %s74, %s79
      %s82 = sor.u32 %s80, %s81
      %p83 = scmp.eq.s32.totalorder %s82, 0
      %s85 = sadd.s32 %s84, 1
      %s86 = scalar_select %p83, %s84, %s85
      %p89 = pneg %p83
      %p90 = scmp.eq.s32.totalorder %s14, 3
      %p91 = por %p89, %p90
      %p92 = scmp.ne.s32.totalorder %s84, %s87
      %p93 = scmp.eq.s32.totalorder %s14, 0
      %p94 = por %p92, %p93
      %p95 = scmp.ne.s32.totalorder %s84, %s87
      %p96 = scmp.eq.s32.totalorder %s19, 3
      %p97 = por %p95, %p96
      %p98 = scmp.ne.s32.totalorder %s87, %s88
      %p99 = scmp.eq.s32.totalorder %s19, 0
      %p100 = por %p98, %p99
      %p101 = scmp.ne.s32.totalorder %s87, %s88
      %p102 = scmp.eq.s32.totalorder %s20, 3
      %p103 = por %p101, %p102
      %p105 = scmp.ne.s32.totalorder %s88, %s104
      %p106 = scmp.eq.s32.totalorder %s20, 0
      %p107 = por %p105, %p106
      %s108 = sadd.s32 %s22, 1
      %p109 = scmp.gt.s32.totalorder %s108, 0
      %s110 = scalar_select %p109, %s108, 0
      %p111 = scmp.lt.s32.totalorder %s110, 1
      %s112 = scalar_select %p111, %s110, 1
      %s113 = sadd.s32 %s29, 1
      %p114 = scmp.gt.s32.totalorder %s113, 0
      %s115 = scalar_select %p114, %s113, 0
      %p116 = scmp.lt.s32.totalorder %s115, 1
      %s117 = scalar_select %p116, %s115, 1
      %s118 = ssub.s32 %s21, %s33
      %s119 = ssub.s32 %s112, %s117
      %s120 = sor.u32 %s118, %s119
      %p121 = scmp.eq.s32.totalorder %s120, 0
      %s123 = sadd.s32 %s122, 1
      %s124 = scalar_select %p121, %s122, %s123
      %p127 = pneg %p121
      %p128 = scmp.eq.s32.totalorder %s14, 3
      %p129 = por %p127, %p128
      %p130 = scmp.ne.s32.totalorder %s122, %s125
      %p131 = scmp.eq.s32.totalorder %s14, 0
      %p132 = por %p130, %p131
      %p133 = scmp.ne.s32.totalorder %s122, %s125
      %p134 = scmp.eq.s32.totalorder %s19, 3
      %p135 = por %p133, %p134
      %p136 = scmp.ne.s32.totalorder %s125, %s126
      %p137 = scmp.eq.s32.totalorder %s19, 0
      %p138 = por %p136, %p137
      %p139 = scmp.ne.s32.totalorder %s125, %s126
      %p140 = scmp.eq.s32.totalorder %s20, 3
      %p141 = por %p139, %p140
      %p143 = scmp.ne.s32.totalorder %s126, %s142
      %p144 = scmp.eq.s32.totalorder %s20, 0
      %p145 = por %p143, %p144
      %s147 = sadd.s32 %s146, 1
      %p150 = scmp.eq.s32.totalorder %s14, 3
      %p151 = scmp.ne.s32.totalorder %s146, %s148
      %p152 = scmp.eq.s32.totalorder %s14, 0
      %p153 = por %p151, %p152
      %p154 = scmp.ne.s32.totalorder %s146, %s148
      %p155 = scmp.eq.s32.totalorder %s19, 3
      %p156 = por %p154, %p155
      %p157 = scmp.ne.s32.totalorder %s148, %s149
      %p158 = scmp.eq.s32.totalorder %s19, 0
      %p159 = por %p157, %p158
      %p160 = scmp.ne.s32.totalorder %s148, %s149
      %p161 = scmp.eq.s32.totalorder %s20, 3
      %p162 = por %p160, %p161
      %p164 = scmp.ne.s32.totalorder %s149, %s163
      %p165 = scmp.eq.s32.totalorder %s20, 0
      %p166 = por %p164, %p165
      %s168 = sadd.s32 %s167, 1
      %p171 = scmp.eq.s32.totalorder %s14, 3
      %p172 = scmp.ne.s32.totalorder %s167, %s169
      %p173 = scmp.eq.s32.totalorder %s14, 0
      %p174 = por %p172, %p173
      %p175 = scmp.ne.s32.totalorder %s167, %s169
      %p176 = scmp.eq.s32.totalorder %s19, 3
      %p177 = por %p175, %p176
      %p178 = scmp.ne.s32.totalorder %s169, %s170
      %p179 = scmp.eq.s32.totalorder %s19, 0
      %p180 = por %p178, %p179
      %p181 = scmp.ne.s32.totalorder %s169, %s170
      %p182 = scmp.eq.s32.totalorder %s20, 3
      %p183 = por %p181, %p182
      %p185 = scmp.ne.s32.totalorder %s170, %s184
      %p186 = scmp.eq.s32.totalorder %s20, 0
      %p187 = por %p185, %p186
      %s188 = ssub.s32 %s21, %s33
      %s189 = ssub.s32 %s22, %s29
      %s190 = sor.u32 %s188, %s189
      %p191 = scmp.eq.s32.totalorder %s190, 0
      %s193 = sadd.s32 %s192, 1
      %s194 = scalar_select %p191, %s192, %s193
      %p197 = pneg %p191
      %p198 = scmp.eq.s32.totalorder %s14, 3
      %p199 = por %p197, %p198
      %p200 = scmp.ne.s32.totalorder %s192, %s195
      %p201 = scmp.eq.s32.totalorder %s14, 0
      %p202 = por %p200, %p201
      %p203 = scmp.ne.s32.totalorder %s192, %s195
      %p204 = scmp.eq.s32.totalorder %s19, 3
      %p205 = por %p203, %p204
      %p206 = scmp.ne.s32.totalorder %s195, %s196
      %p207 = scmp.eq.s32.totalorder %s19, 0
      %p208 = por %p206, %p207
      %p209 = scmp.ne.s32.totalorder %s195, %s196
      %p210 = scmp.eq.s32.totalorder %s20, 3
      %p211 = por %p209, %p210
      %p213 = scmp.ne.s32.totalorder %s196, %s212
      %p214 = scmp.eq.s32.totalorder %s20, 0
      %p215 = por %p213, %p214
      %p216 = scmp.le.s32.totalorder 1, %s14
      %p217 = scmp.lt.s32.totalorder %s14, 5
      %p218 = pnand %p216, %p217
      %p219 = pneg %p218
      // Predicated region
      $region9: #{vgg_feature_extractor.7} parent=5 // pred_check
        _
      $region10: #{vgg_feature_extractor.7} parent=5 // pred_check_branch
        %221 = sbr.rel (%p218) target = $region12
      $region11: #{vgg_feature_extractor.7} parent=5 // pred_region
        %s222 = ssub.s32 %s14, 1
        // Predicated region
        $region13: #{vgg_feature_extractor.7} parent=11 // pred_check
          %p223 = pneg %p159
        $region14: #{vgg_feature_extractor.7} parent=11 // pred_check_branch
          %225 = sbr.rel (%p223) target = $region16
        $region15: #{vgg_feature_extractor.7} parent=11 // pred_region
          _
        $region16: #{vgg_feature_extractor.7} parent=11 // pred_fallthru
          _
        // Predicated region
        $region17: #{vgg_feature_extractor.7} parent=11 // pred_check
          %p226 = pneg %p180
        $region18: #{vgg_feature_extractor.7} parent=11 // pred_check_branch
          %228 = sbr.rel (%p226) target = $region20
        $region19: #{vgg_feature_extractor.7} parent=11 // pred_region
          _
        $region20: #{vgg_feature_extractor.7} parent=11 // pred_fallthru
          _
      $region12: #{vgg_feature_extractor.7} parent=5 // pred_fallthru
        _
      %p229 = scmp.lt.s32.totalorder %s14, 4
      // Predicated region
      $region21: #{vgg_feature_extractor.7} parent=5 // pred_check
        %p230 = pneg %p229
      $region22: #{vgg_feature_extractor.7} parent=5 // pred_check_branch
        %232 = sbr.rel (%p230) target = $region24
      $region23: #{vgg_feature_extractor.7} parent=5 // pred_region
        // Predicated region
        $region25: #{vgg_feature_extractor.7} parent=23 // pred_check
          %p233 = pneg %p56
        $region26: #{vgg_feature_extractor.7} parent=23 // pred_check_branch
          %235 = sbr.rel (%p233) target = $region28
        $region27: #{vgg_feature_extractor.7} parent=23 // pred_region
          %p236 = scmp.gt.s32.totalorder %s22, 0
          %s237 = scalar_select %p236, %s22, 0
          %p238 = scmp.lt.s32.totalorder %s237, 1
          %s239 = scalar_select %p238, %s237, 1
          %s240 = smul.u32 4, %s239
          %p241 = scmp.lt.s32.totalorder %s21, 1
          %s242 = scalar_select %p241, %s21, 1
          %p243 = scmp.lt.s32.totalorder %s240, 7
          %s244 = scalar_select %p243, %s240, 7
          %s245 = smul.addr %s242, 8
          %s246 = sadd.s32 %s244, %s245
          %s247 = smul.addr %s246, 4
          %s248 = scalar_lea.vmem %s0, %s247
          %p249 = scmp.gt.s32.totalorder %s22, 0
          %s250 = scalar_select %p249, %s22, 0
          %p251 = scmp.lt.s32.totalorder %s250, 1
          %s252 = scalar_select %p251, %s250, 1
          %s253 = smul.u32 4, %s252
        $region28: #{vgg_feature_extractor.7} parent=23 // pred_fallthru
          _
        // Predicated region
        $region29: #{vgg_feature_extractor.7} parent=23 // pred_check
          %p254 = pneg %p94
        $region30: #{vgg_feature_extractor.7} parent=23 // pred_check_branch
          %256 = sbr.rel (%p254) target = $region32
        $region31: #{vgg_feature_extractor.7} parent=23 // pred_region
          %s257 = sadd.s32 %s22, 4294967295
          %p258 = scmp.gt.s32.totalorder %s257, 0
          %s259 = scalar_select %p258, %s257, 0
          %p260 = scmp.lt.s32.totalorder %s259, 1
          %s261 = scalar_select %p260, %s259, 1
          %s262 = smul.u32 4, %s261
          %p263 = scmp.lt.s32.totalorder %s21, 1
          %s264 = scalar_select %p263, %s21, 1
          %p265 = scmp.lt.s32.totalorder %s262, 7
          %s266 = scalar_select %p265, %s262, 7
          %s267 = smul.addr %s264, 8
          %s268 = sadd.s32 %s266, %s267
          %s269 = smul.addr %s268, 4
          %s270 = scalar_lea.vmem %s1, %s269
          %s271 = sadd.s32 %s22, 4294967295
          %p272 = scmp.gt.s32.totalorder %s271, 0
          %s273 = scalar_select %p272, %s271, 0
          %p274 = scmp.lt.s32.totalorder %s273, 1
          %s275 = scalar_select %p274, %s273, 1
          %s276 = smul.u32 4, %s275
        $region32: #{vgg_feature_extractor.7} parent=23 // pred_fallthru
          _
        // Predicated region
        $region33: #{vgg_feature_extractor.7} parent=23 // pred_check
          %p277 = pneg %p132
        $region34: #{vgg_feature_extractor.7} parent=23 // pred_check_branch
          %279 = sbr.rel (%p277) target = $region36
        $region35: #{vgg_feature_extractor.7} parent=23 // pred_region
          %s280 = sadd.s32 %s22, 1
          %p281 = scmp.gt.s32.totalorder %s280, 0
          %s282 = scalar_select %p281, %s280, 0
          %p283 = scmp.lt.s32.totalorder %s282, 1
          %s284 = scalar_select %p283, %s282, 1
          %s285 = smul.u32 4, %s284
          %p286 = scmp.lt.s32.totalorder %s21, 1
          %s287 = scalar_select %p286, %s21, 1
          %p288 = scmp.lt.s32.totalorder %s285, 7
          %s289 = scalar_select %p288, %s285, 7
          %s290 = smul.addr %s287, 8
          %s291 = sadd.s32 %s289, %s290
          %s292 = smul.addr %s291, 4
          %s293 = scalar_lea.vmem %s2, %s292
          %s294 = sadd.s32 %s22, 1
          %p295 = scmp.gt.s32.totalorder %s294, 0
          %s296 = scalar_select %p295, %s294, 0
          %p297 = scmp.lt.s32.totalorder %s296, 1
          %s298 = scalar_select %p297, %s296, 1
          %s299 = smul.u32 4, %s298
        $region36: #{vgg_feature_extractor.7} parent=23 // pred_fallthru
          _
      $region24: #{vgg_feature_extractor.7} parent=5 // pred_fallthru
        _
      %p300 = scmp.le.s32.totalorder 1, %s14
      %p301 = scmp.lt.s32.totalorder %s14, 5
      %p302 = pnand %p300, %p301
      %p303 = pneg %p302
      // Predicated region
      $region37: #{vgg_feature_extractor.7} parent=5 // pred_check
        _
      $region38: #{vgg_feature_extractor.7} parent=5 // pred_check_branch
        %305 = sbr.rel (%p302) target = $region40
      $region39: #{vgg_feature_extractor.7} parent=5 // pred_region
        %s306 = ssub.s32 %s14, 1
        %p307 = scmp.gt.s32.totalorder %s24, 0
        %s308 = scalar_select %p307, %s24, 0
        %p309 = scmp.lt.s32.totalorder %s308, 1
        %s310 = scalar_select %p309, %s308, 1
        %s311 = smul.u32 4, %s310
        %p312 = scmp.lt.s32.totalorder %s23, 1
        %s313 = scalar_select %p312, %s23, 1
        %p314 = scmp.lt.s32.totalorder %s311, 7
        %s315 = scalar_select %p314, %s311, 7
        %s316 = smul.addr %s313, 8
        %s317 = sadd.s32 %s315, %s316
        %s318 = smul.addr %s317, 4
        %s319 = scalar_lea.vmem %s0, %s318
        %p320 = pneg %p62
        %p321 = pneg %p59
        %s322 = sadd.s32 %s24, 4294967295
        %p323 = scmp.gt.s32.totalorder %s322, 0
        %s324 = scalar_select %p323, %s322, 0
        %p325 = scmp.lt.s32.totalorder %s324, 1
        %s326 = scalar_select %p325, %s324, 1
        %s327 = smul.u32 4, %s326
        %p328 = scmp.lt.s32.totalorder %s23, 1
        %s329 = scalar_select %p328, %s23, 1
        %p330 = scmp.lt.s32.totalorder %s327, 7
        %s331 = scalar_select %p330, %s327, 7
        %s332 = smul.addr %s329, 8
        %s333 = sadd.s32 %s331, %s332
        %s334 = smul.addr %s333, 4
        %s335 = scalar_lea.vmem %s1, %s334
        %p336 = pneg %p100
        %p337 = pneg %p97
        %s338 = sadd.s32 %s24, 1
        %p339 = scmp.gt.s32.totalorder %s338, 0
        %s340 = scalar_select %p339, %s338, 0
        %p341 = scmp.lt.s32.totalorder %s340, 1
        %s342 = scalar_select %p341, %s340, 1
        %s343 = smul.u32 4, %s342
        %p344 = scmp.lt.s32.totalorder %s23, 1
        %s345 = scalar_select %p344, %s23, 1
        %p346 = scmp.lt.s32.totalorder %s343, 7
        %s347 = scalar_select %p346, %s343, 7
        %s348 = smul.addr %s345, 8
        %s349 = sadd.s32 %s347, %s348
        %s350 = smul.addr %s349, 4
        %s351 = scalar_lea.vmem %s2, %s350
        %p352 = pneg %p138
        %p353 = pneg %p135
        %p354 = pneg %p159
        %p355 = pneg %p156
        %p356 = pneg %p180
        %p357 = pneg %p177
        %p358 = pneg %p208
        %p359 = pneg %p205
        %s360 = sand.u32 %s195, 1
        %s361 = scalar_lea.sflag [#allocation5], %s360
        %s362 = sand.u32 %s195, 1
        %s363 = smul.addr %s362, 32
        %s364 = scalar_lea.vmem [#allocation4], %s363
        %p365 = scmp.gt.s32.totalorder %s24, 0
        %s366 = scalar_select %p365, %s24, 0
        %p367 = scmp.lt.s32.totalorder %s366, 1
        %s368 = scalar_select %p367, %s366, 1
        %s369 = smul.u32 4, %s368
        %p370 = scmp.lt.s32.totalorder %s23, 1
        %s371 = scalar_select %p370, %s23, 1
        %p372 = scmp.lt.s32.totalorder %s369, 7
        %s373 = scalar_select %p372, %s369, 7
        %s374 = smul.addr %s371, 8
        %s375 = sadd.s32 %s373, %s374
        %s376 = smul.addr %s375, 4
        %s377 = scalar_lea.vmem %s0, %s376
        %p378 = scmp.gt.s32.totalorder %s24, 0
        %s379 = scalar_select %p378, %s24, 0
        %p380 = scmp.lt.s32.totalorder %s379, 1
        %s381 = scalar_select %p380, %s379, 1
        %s382 = smul.u32 4, %s381
        %s383 = sadd.s32 %s24, 4294967295
        %p384 = scmp.gt.s32.totalorder %s383, 0
        %s385 = scalar_select %p384, %s383, 0
        %p386 = scmp.lt.s32.totalorder %s385, 1
        %s387 = scalar_select %p386, %s385, 1
        %s388 = smul.u32 4, %s387
        %p389 = scmp.lt.s32.totalorder %s23, 1
        %s390 = scalar_select %p389, %s23, 1
        %p391 = scmp.lt.s32.totalorder %s388, 7
        %s392 = scalar_select %p391, %s388, 7
        %s393 = smul.addr %s390, 8
        %s394 = sadd.s32 %s392, %s393
        %s395 = smul.addr %s394, 4
        %s396 = scalar_lea.vmem %s1, %s395
        %s397 = sadd.s32 %s24, 4294967295
        %p398 = scmp.gt.s32.totalorder %s397, 0
        %s399 = scalar_select %p398, %s397, 0
        %p400 = scmp.lt.s32.totalorder %s399, 1
        %s401 = scalar_select %p400, %s399, 1
        %s402 = smul.u32 4, %s401
        %s403 = sadd.s32 %s24, 1
        %p404 = scmp.gt.s32.totalorder %s403, 0
        %s405 = scalar_select %p404, %s403, 0
        %p406 = scmp.lt.s32.totalorder %s405, 1
        %s407 = scalar_select %p406, %s405, 1
        %s408 = smul.u32 4, %s407
        %p409 = scmp.lt.s32.totalorder %s23, 1
        %s410 = scalar_select %p409, %s23, 1
        %p411 = scmp.lt.s32.totalorder %s408, 7
        %s412 = scalar_select %p411, %s408, 7
        %s413 = smul.addr %s410, 8
        %s414 = sadd.s32 %s412, %s413
        %s415 = smul.addr %s414, 4
        %s416 = scalar_lea.vmem %s2, %s415
        %s417 = sadd.s32 %s24, 1
        %p418 = scmp.gt.s32.totalorder %s417, 0
        %s419 = scalar_select %p418, %s417, 0
        %p420 = scmp.lt.s32.totalorder %s419, 1
        %s421 = scalar_select %p420, %s419, 1
        %s422 = smul.u32 4, %s421
        %s423 = smul.u32 4, %s24
        %v425 = vld [vmem:[%s377] sm:$0xf]
        %v426 = vld [vmem:[%s377 + $0x4] sm:$0xf]
        %v427 = vld [vmem:[%s377 + $0x8] sm:$0xf]
        %v428 = vld [vmem:[%s377 + $0xc] sm:$0xf]
        %v429 = vunpack.c.l.bf16 %v425
        %v430 = vunpack.c.l.bf16 %v426
        %v431 = vunpack.c.l.bf16 %v427
        %v432 = vunpack.c.l.bf16 %v428
        %s433 = scalar_lea.vmem %s396, 12
        %v434 = vld [vmem:[%s433] sm:$0xf]
        %v435 = vunpack.c.l.bf16 %v434
        %v436 = vld [vmem:[%s416] sm:$0xf]
        %v437 = vunpack.c.l.bf16 %v436
        %p438 = scmp.gt.s32.totalorder %s24, 0
        %s439 = scalar_select %p438, 1.0, 0.0
        %v440 = vstv %s439
        %v441 = vmul.f32 %v435, %v440
        %p442 = scmp.lt.s32.totalorder %s24, 1
        %s443 = scalar_select %p442, 1.0, 0.0
        %v444 = vstv %s443
        %v445 = vmul.f32 %v437, %v444
        %446 = vst [vmem:[#allocation2] sm:$0xff] 0.0
        %447 = vst [vmem:[#allocation2 + $0x18] sm:$0xff] 0.0
        %448 = vst [vmem:[#allocation2 + $0x30] sm:$0xff] 0.0
        %449 = vst [vmem:[#allocation2 + $0x48] sm:$0xff] 0.0
        %450 = vst [vmem:[#allocation2 + $0x60] sm:$0xff] 0.0
        %451 = vst [vmem:[#allocation2 + $0x78] sm:$0xff] 0.0
        %452 = vst [vmem:[#allocation2 + $0x10] sm:$0xff] 0.0
        %453 = vst [vmem:[#allocation2 + $0x28] sm:$0xff] 0.0
        %454 = vst [vmem:[#allocation2 + $0x40] sm:$0xff] 0.0
        %455 = vst [vmem:[#allocation2 + $0x58] sm:$0xff] 0.0
        %456 = vst [vmem:[#allocation2 + $0x70] sm:$0xff] 0.0
        %457 = vst [vmem:[#allocation2 + $0x88] sm:$0xff] 0.0
        %458 = vst [vmem:[#allocation2 + $0x8] sm:$0xff] %v441
        %459 = vst [vmem:[#allocation2 + $0x20] sm:$0xff] %v429
        %460 = vst [vmem:[#allocation2 + $0x38] sm:$0xff] %v430
        %461 = vst [vmem:[#allocation2 + $0x50] sm:$0xff] %v431
        %462 = vst [vmem:[#allocation2 + $0x68] sm:$0xff] %v432
        %463 = vst [vmem:[#allocation2 + $0x80] sm:$0xff] %v445
        %v464 = vld [vmem:[#allocation2] sm:$0xff]
        %v465 = vld [vmem:[#allocation2 + $0x8] sm:$0xff]
        %v466 = vld [vmem:[#allocation2 + $0x10] sm:$0xff]
        %v467 = vld [vmem:[#allocation2 + $0x18] sm:$0xff]
        %v468 = vld [vmem:[#allocation2 + $0x20] sm:$0xff]
        %v469 = vld [vmem:[#allocation2 + $0x28] sm:$0xff]
        %v470 = vld [vmem:[#allocation2 + $0x30] sm:$0xff]
        %v471 = vld [vmem:[#allocation2 + $0x38] sm:$0xff]
        %v472 = vld [vmem:[#allocation2 + $0x40] sm:$0xff]
        %v473 = vld [vmem:[#allocation2 + $0x48] sm:$0xff]
        %v474 = vld [vmem:[#allocation2 + $0x50] sm:$0xff]
        %v475 = vld [vmem:[#allocation2 + $0x58] sm:$0xff]
        %v476 = vld [vmem:[#allocation2 + $0x60] sm:$0xff]
        %v477 = vld [vmem:[#allocation2 + $0x68] sm:$0xff]
        %v478 = vld [vmem:[#allocation2 + $0x70] sm:$0xff]
        %v479 = vld [vmem:[#allocation2 + $0x78] sm:$0xff]
        %v480 = vld [vmem:[#allocation2 + $0x80] sm:$0xff]
        %v481 = vld [vmem:[#allocation2 + $0x88] sm:$0xff]
        %v482 = vld [vmem:[%s4] sm:$0x1]
        %v484 = vlaneseq
        %v485 = vshrl.u32 %v484, 7
        %v486 = vsub.s32 0, %v485
        %v487 = vrot.slane %v482, %v486
        %489 = vst [vmem:[#allocation3] sm:$0xff] %v487
        %490 = vst [vmem:[#allocation3 + $0x8] sm:$0xff] %v487
        %491 = vst [vmem:[#allocation3 + $0x10] sm:$0xff] %v487
        %492 = vst [vmem:[#allocation3 + $0x18] sm:$0xff] %v487
        %vm501 = vcmask 1040384
        %v502 = vrot.slane %v464, 7
        %v503 = vrot.slane %v465, 7
        %v504 = vsel %vm501, %v502, %v503
        %v505 = vrot.slane %v467, 7
        %v506 = vrot.slane %v468, 7
        %v507 = vsel %vm501, %v505, %v506
        %v508 = vrot.slane %v470, 7
        %v509 = vrot.slane %v471, 7
        %v510 = vsel %vm501, %v508, %v509
        %v511 = vrot.slane %v473, 7
        %v512 = vrot.slane %v474, 7
        %v513 = vsel %vm501, %v511, %v512
        %v518 = vld [vmem:[#allocation3] sm:$0xff]
        %v519 = vld [vmem:[#allocation3 + $0x8] sm:$0xff]
        %v520 = vld [vmem:[#allocation3 + $0x10] sm:$0xff]
        %v521 = vld [vmem:[#allocation3 + $0x18] sm:$0xff]
        %v522 = vpack.c.bf16 %v507, %v504
        %v523 = vpack.c.bf16 %v513, %v510
        %v524 = vld [vmem:[%s3] sm:$0xf]
        %v525 = vld [vmem:[%s3 + $0x4] sm:$0xf]
        %v526 = vld [vmem:[%s3 + $0x8] sm:$0xf]
        %v527 = vld [vmem:[%s3 + $0xc] sm:$0xf]
        %v528 = vld [vmem:[%s3 + $0x10] sm:$0xf]
        %v529 = vld [vmem:[%s3 + $0x14] sm:$0xf]
        %v530 = vld [vmem:[%s3 + $0x18] sm:$0xf]
        %v531 = vld [vmem:[%s3 + $0x1c] sm:$0xf]
        %v532 = vld [vmem:[%s3 + $0x20] sm:$0xf]
        %v533 = vld [vmem:[%s3 + $0x24] sm:$0xf]
        %v534 = vld [vmem:[%s3 + $0x28] sm:$0xf]
        %v535 = vld [vmem:[%s3 + $0x2c] sm:$0xf]
        %v536 = vld [vmem:[%s3 + $0x30] sm:$0xf]
        %v537 = vld [vmem:[%s3 + $0x34] sm:$0xf]
        %v538 = vld [vmem:[%s3 + $0x38] sm:$0xf]
        %v539 = vld [vmem:[%s3 + $0x3c] sm:$0xf]
        %v556 = vunpack.c.l.b16 %v524
        %v557 = vunpack.c.l.b16 %v525
        %v558 = vunpack.c.l.b16 %v526
        %v559 = vunpack.c.l.b16 %v527
        %v560 = vunpack.c.l.b16 %v528
        %v561 = vunpack.c.l.b16 %v529
        %v562 = vunpack.c.l.b16 %v530
        %v563 = vunpack.c.l.b16 %v531
        %v564 = vunpack.c.l.b16 %v532
        %v565 = vunpack.c.l.b16 %v533
        %v566 = vunpack.c.l.b16 %v534
        %v567 = vunpack.c.l.b16 %v535
        %v568 = vunpack.c.l.b16 %v536
        %v569 = vunpack.c.l.b16 %v537
        %v570 = vunpack.c.l.b16 %v538
        %v571 = vunpack.c.l.b16 %v539
        %v572 = vpack.c.b16 %v557, %v556
        %v573 = vpack.c.b16 %v559, %v558
        %v574 = vpack.c.b16 %v561, %v560
        %v575 = vpack.c.b16 %v563, %v562
        %v576 = vpack.c.b16 %v565, %v564
        %v577 = vpack.c.b16 %v567, %v566
        %v578 = vpack.c.b16 %v569, %v568
        %v579 = vpack.c.b16 %v571, %v570
        %588 = vmatprep.subr.bf16.mxu0 0
        %589 = vmatpush1.bf16.msra.mxu0 %v572
        %590 = vmatprep.subr.bf16.mxu0 0
        %591 = vmatpush1.bf16.msra.mxu0 %v573
        %592 = vmatprep.subr.bf16.mxu0 0
        %593 = vmatpush1.bf16.msra.mxu0 %v574
        %594 = vmatprep.subr.bf16.mxu0 0
        %595 = vmatpush1.bf16.msra.mxu0 %v575
        %596 = vmatprep.subr.bf16.mxu0 0
        %597 = vmatpush1.bf16.msra.mxu0 %v576
        %598 = vmatprep.subr.bf16.mxu0 0
        %599 = vmatpush1.bf16.msra.mxu0 %v577
        %600 = vmatprep.subr.bf16.mxu0 0
        %601 = vmatpush1.bf16.msra.mxu0 %v578
        %602 = vmatprep.subr.bf16.mxu0 0
        %603 = vmatpush1.bf16.msra.mxu0 %v579
        %604 = vmatprep.subr.bf16.mxu0 0
        %605 = vmatpush1.bf16.msra.mxu0 0
        %606 = vmatprep.subr.bf16.mxu0 0
        %607 = vmatpush1.bf16.msra.mxu0 0
        %608 = vmatprep.subr.bf16.mxu0 0
        %609 = vmatpush1.bf16.msra.mxu0 0
        %610 = vmatprep.subr.bf16.mxu0 0
        %611 = vmatpush1.bf16.msra.mxu0 0
        %612 = vmatprep.subr.bf16.mxu0 0
        %613 = vmatpush1.bf16.msra.mxu0 0
        %614 = vmatprep.subr.bf16.mxu0 0
        %615 = vmatpush1.bf16.msra.mxu0 0
        %616 = vmatprep.subr.bf16.mxu0 0
        %617 = vmatpush1.bf16.msra.mxu0 0
        %618 = vmatprep.subr.bf16.mxu0 0
        %619 = vmatpush1.bf16.msra.mxu0 0
        %620 = vmatprep.mubr.bf16.mxu0 0
        %621 = vmatmul.mubr.bf16.gmra.mrb[0].mxu0 %v522
        %v622 = vpop.f32.mrb[0].mxu0
        %v623 = vadd.f32 0.0, %v622
        %v624 = vpop.f32.mrb[0].mxu0
        %v625 = vpop.f32.mrb[0].mxu0
        %v626 = vadd.f32 0.0, %v625
        %v627 = vpop.f32.mrb[0].mxu0
        %628 = vmatprep.mubr.bf16.mxu0 0
        %629 = vmatmul.mubr.bf16.gmra.mrb[0].mxu0 %v523
        %v630 = vpop.f32.mrb[0].mxu0
        %v631 = vadd.f32 0.0, %v630
        %v632 = vpop.f32.mrb[0].mxu0
        %v633 = vpop.f32.mrb[0].mxu0
        %v634 = vadd.f32 0.0, %v633
        %v635 = vpop.f32.mrb[0].mxu0
        %636 = vdwg.mxu0
        %v637 = vadd.f32 %v518, %v623
        %v638 = vadd.f32 %v519, %v626
        %v639 = vadd.f32 %v520, %v631
        %v640 = vadd.f32 %v521, %v634
        %641 = vst [vmem:[#allocation3] sm:$0xff] %v637
        %642 = vst [vmem:[#allocation3 + $0x8] sm:$0xff] %v638
        %643 = vst [vmem:[#allocation3 + $0x10] sm:$0xff] %v639
        %644 = vst [vmem:[#allocation3 + $0x18] sm:$0xff] %v640
        %v645 = vld [vmem:[#allocation3] sm:$0xff]
        %v646 = vld [vmem:[#allocation3 + $0x8] sm:$0xff]
        %v647 = vld [vmem:[#allocation3 + $0x10] sm:$0xff]
        %v648 = vld [vmem:[#allocation3 + $0x18] sm:$0xff]
        %v649 = vpack.c.bf16 %v468, %v465
        %v650 = vpack.c.bf16 %v474, %v471
        %s651 = scalar_lea.vmem %s3, 64
        %v652 = vld [vmem:[%s651] sm:$0xf]
        %v653 = vld [vmem:[%s651 + $0x4] sm:$0xf]
        %v654 = vld [vmem:[%s651 + $0x8] sm:$0xf]
        %v655 = vld [vmem:[%s651 + $0xc] sm:$0xf]
        %v656 = vld [vmem:[%s651 + $0x10] sm:$0xf]
        %v657 = vld [vmem:[%s651 + $0x14] sm:$0xf]
        %v658 = vld [vmem:[%s651 + $0x18] sm:$0xf]
        %v659 = vld [vmem:[%s651 + $0x1c] sm:$0xf]
        %v660 = vld [vmem:[%s651 + $0x20] sm:$0xf]
        %v661 = vld [vmem:[%s651 + $0x24] sm:$0xf]
        %v662 = vld [vmem:[%s651 + $0x28] sm:$0xf]
        %v663 = vld [vmem:[%s651 + $0x2c] sm:$0xf]
        %v664 = vld [vmem:[%s651 + $0x30] sm:$0xf]
        %v665 = vld [vmem:[%s651 + $0x34] sm:$0xf]
        %v666 = vld [vmem:[%s651 + $0x38] sm:$0xf]
        %v667 = vld [vmem:[%s651 + $0x3c] sm:$0xf]
        %v684 = vunpack.c.l.b16 %v652
        %v685 = vunpack.c.l.b16 %v653
        %v686 = vunpack.c.l.b16 %v654
        %v687 = vunpack.c.l.b16 %v655
        %v688 = vunpack.c.l.b16 %v656
        %v689 = vunpack.c.l.b16 %v657
        %v690 = vunpack.c.l.b16 %v658
        %v691 = vunpack.c.l.b16 %v659
        %v692 = vunpack.c.l.b16 %v660
        %v693 = vunpack.c.l.b16 %v661
        %v694 = vunpack.c.l.b16 %v662
        %v695 = vunpack.c.l.b16 %v663
        %v696 = vunpack.c.l.b16 %v664
        %v697 = vunpack.c.l.b16 %v665
        %v698 = vunpack.c.l.b16 %v666
        %v699 = vunpack.c.l.b16 %v667
        %v700 = vpack.c.b16 %v685, %v684
        %v701 = vpack.c.b16 %v687, %v686
        %v702 = vpack.c.b16 %v689, %v688
        %v703 = vpack.c.b16 %v691, %v690
        %v704 = vpack.c.b16 %v693, %v692
        %v705 = vpack.c.b16 %v695, %v694
        %v706 = vpack.c.b16 %v697, %v696
        %v707 = vpack.c.b16 %v699, %v698
        %716 = vmatprep.subr.bf16.mxu0 0
        %717 = vmatpush1.bf16.msra.mxu0 %v700
        %718 = vmatprep.subr.bf16.mxu0 0
        %719 = vmatpush1.bf16.msra.mxu0 %v701
        %720 = vmatprep.subr.bf16.mxu0 0
        %721 = vmatpush1.bf16.msra.mxu0 %v702
        %722 = vmatprep.subr.bf16.mxu0 0
        %723 = vmatpush1.bf16.msra.mxu0 %v703
        %724 = vmatprep.subr.bf16.mxu0 0
        %725 = vmatpush1.bf16.msra.mxu0 %v704
        %726 = vmatprep.subr.bf16.mxu0 0
        %727 = vmatpush1.bf16.msra.mxu0 %v705
        %728 = vmatprep.subr.bf16.mxu0 0
        %729 = vmatpush1.bf16.msra.mxu0 %v706
        %730 = vmatprep.subr.bf16.mxu0 0
        %731 = vmatpush1.bf16.msra.mxu0 %v707
        %732 = vmatprep.subr.bf16.mxu0 0
        %733 = vmatpush1.bf16.msra.mxu0 0
        %734 = vmatprep.subr.bf16.mxu0 0
        %735 = vmatpush1.bf16.msra.mxu0 0
        %736 = vmatprep.subr.bf16.mxu0 0
        %737 = vmatpush1.bf16.msra.mxu0 0
        %738 = vmatprep.subr.bf16.mxu0 0
        %739 = vmatpush1.bf16.msra.mxu0 0
        %740 = vmatprep.subr.bf16.mxu0 0
        %741 = vmatpush1.bf16.msra.mxu0 0
        %742 = vmatprep.subr.bf16.mxu0 0
        %743 = vmatpush1.bf16.msra.mxu0 0
        %744 = vmatprep.subr.bf16.mxu0 0
        %745 = vmatpush1.bf16.msra.mxu0 0
        %746 = vmatprep.subr.bf16.mxu0 0
        %747 = vmatpush1.bf16.msra.mxu0 0
        %748 = vmatprep.mubr.bf16.mxu0 0
        %749 = vmatmul.mubr.bf16.gmra.mrb[0].mxu0 %v649
        %v750 = vpop.f32.mrb[0].mxu0
        %v751 = vadd.f32 0.0, %v750
        %v752 = vpop.f32.mrb[0].mxu0
        %v753 = vpop.f32.mrb[0].mxu0
        %v754 = vadd.f32 0.0, %v753
        %v755 = vpop.f32.mrb[0].mxu0
        %756 = vmatprep.mubr.bf16.mxu0 0
        %757 = vmatmul.mubr.bf16.gmra.mrb[0].mxu0 %v650
        %v758 = vpop.f32.mrb[0].mxu0
        %v759 = vadd.f32 0.0, %v758
        %v760 = vpop.f32.mrb[0].mxu0
        %v761 = vpop.f32.mrb[0].mxu0
        %v762 = vadd.f32 0.0, %v761
        %v763 = vpop.f32.mrb[0].mxu0
        %764 = vdwg.mxu0
        %v765 = vadd.f32 %v645, %v751
        %v766 = vadd.f32 %v646, %v754
        %v767 = vadd.f32 %v647, %v759
        %v768 = vadd.f32 %v648, %v762
        %769 = vst [vmem:[#allocation3] sm:$0xff] %v765
        %770 = vst [vmem:[#allocation3 + $0x8] sm:$0xff] %v766
        %771 = vst [vmem:[#allocation3 + $0x10] sm:$0xff] %v767
        %772 = vst [vmem:[#allocation3 + $0x18] sm:$0xff] %v768
        %vm777 = vcmask 1046528
        %v778 = vrot.slane %v465, 1
        %v779 = vrot.slane %v466, 1
        %v780 = vsel %vm777, %v778, %v779
        %v781 = vrot.slane %v468, 1
        %v782 = vrot.slane %v469, 1
        %v783 = vsel %vm777, %v781, %v782
        %v784 = vrot.slane %v471, 1
        %v785 = vrot.slane %v472, 1
        %v786 = vsel %vm777, %v784, %v785
        %v787 = vrot.slane %v474, 1
        %v788 = vrot.slane %v475, 1
        %v789 = vsel %vm777, %v787, %v788
        %v794 = vld [vmem:[#allocation3] sm:$0xff]
        %v795 = vld [vmem:[#allocation3 + $0x8] sm:$0xff]
        %v796 = vld [vmem:[#allocation3 + $0x10] sm:$0xff]
        %v797 = vld [vmem:[#allocation3 + $0x18] sm:$0xff]
        %v798 = vpack.c.bf16 %v783, %v780
        %v799 = vpack.c.bf16 %v789, %v786
        %s800 = scalar_lea.vmem %s3, 128
        %v801 = vld [vmem:[%s800] sm:$0xf]
        %v802 = vld [vmem:[%s800 + $0x4] sm:$0xf]
        %v803 = vld [vmem:[%s800 + $0x8] sm:$0xf]
        %v804 = vld [vmem:[%s800 + $0xc] sm:$0xf]
        %v805 = vld [vmem:[%s800 + $0x10] sm:$0xf]
        %v806 = vld [vmem:[%s800 + $0x14] sm:$0xf]
        %v807 = vld [vmem:[%s800 + $0x18] sm:$0xf]
        %v808 = vld [vmem:[%s800 + $0x1c] sm:$0xf]
        %v809 = vld [vmem:[%s800 + $0x20] sm:$0xf]
        %v810 = vld [vmem:[%s800 + $0x24] sm:$0xf]
        %v811 = vld [vmem:[%s800 + $0x28] sm:$0xf]
        %v812 = vld [vmem:[%s800 + $0x2c] sm:$0xf]
        %v813 = vld [vmem:[%s800 + $0x30] sm:$0xf]
        %v814 = vld [vmem:[%s800 + $0x34] sm:$0xf]
        %v815 = vld [vmem:[%s800 + $0x38] sm:$0xf]
        %v816 = vld [vmem:[%s800 + $0x3c] sm:$0xf]
        %v833 = vunpack.c.l.b16 %v801
        %v834 = vunpack.c.l.b16 %v802
        %v835 = vunpack.c.l.b16 %v803
        %v836 = vunpack.c.l.b16 %v804
        %v837 = vunpack.c.l.b16 %v805
        %v838 = vunpack.c.l.b16 %v806
        %v839 = vunpack.c.l.b16 %v807
        %v840 = vunpack.c.l.b16 %v808
        %v841 = vunpack.c.l.b16 %v809
        %v842 = vunpack.c.l.b16 %v810
        %v843 = vunpack.c.l.b16 %v811
        %v844 = vunpack.c.l.b16 %v812
        %v845 = vunpack.c.l.b16 %v813
        %v846 = vunpack.c.l.b16 %v814
        %v847 = vunpack.c.l.b16 %v815
        %v848 = vunpack.c.l.b16 %v816
        %v849 = vpack.c.b16 %v834, %v833
        %v850 = vpack.c.b16 %v836, %v835
        %v851 = vpack.c.b16 %v838, %v837
        %v852 = vpack.c.b16 %v840, %v839
        %v853 = vpack.c.b16 %v842, %v841
        %v854 = vpack.c.b16 %v844, %v843
        %v855 = vpack.c.b16 %v846, %v845
        %v856 = vpack.c.b16 %v848, %v847
        %865 = vmatprep.subr.bf16.mxu0 0
        %866 = vmatpush1.bf16.msra.mxu0 %v849
        %867 = vmatprep.subr.bf16.mxu0 0
        %868 = vmatpush1.bf16.msra.mxu0 %v850
        %869 = vmatprep.subr.bf16.mxu0 0
        %870 = vmatpush1.bf16.msra.mxu0 %v851
        %871 = vmatprep.subr.bf16.mxu0 0
        %872 = vmatpush1.bf16.msra.mxu0 %v852
        %873 = vmatprep.subr.bf16.mxu0 0
        %874 = vmatpush1.bf16.msra.mxu0 %v853
        %875 = vmatprep.subr.bf16.mxu0 0
        %876 = vmatpush1.bf16.msra.mxu0 %v854
        %877 = vmatprep.subr.bf16.mxu0 0
        %878 = vmatpush1.bf16.msra.mxu0 %v855
        %879 = vmatprep.subr.bf16.mxu0 0
        %880 = vmatpush1.bf16.msra.mxu0 %v856
        %881 = vmatprep.subr.bf16.mxu0 0
        %882 = vmatpush1.bf16.msra.mxu0 0
        %883 = vmatprep.subr.bf16.mxu0 0
        %884 = vmatpush1.bf16.msra.mxu0 0
        %885 = vmatprep.subr.bf16.mxu0 0
        %886 = vmatpush1.bf16.msra.mxu0 0
        %887 = vmatprep.subr.bf16.mxu0 0
        %888 = vmatpush1.bf16.msra.mxu0 0
        %889 = vmatprep.subr.bf16.mxu0 0
        %890 = vmatpush1.bf16.msra.mxu0 0
        %891 = vmatprep.subr.bf16.mxu0 0
        %892 = vmatpush1.bf16.msra.mxu0 0
        %893 = vmatprep.subr.bf16.mxu0 0
        %894 = vmatpush1.bf16.msra.mxu0 0
        %895 = vmatprep.subr.bf16.mxu0 0
        %896 = vmatpush1.bf16.msra.mxu0 0
        %897 = vmatprep.mubr.bf16.mxu0 0
        %898 = vmatmul.mubr.bf16.gmra.mrb[0].mxu0 %v798
        %v899 = vpop.f32.mrb[0].mxu0
        %v900 = vadd.f32 0.0, %v899
        %v901 = vpop.f32.mrb[0].mxu0
        %v902 = vpop.f32.mrb[0].mxu0
        %v903 = vadd.f32 0.0, %v902
        %v904 = vpop.f32.mrb[0].mxu0
        %905 = vmatprep.mubr.bf16.mxu0 0
        %906 = vmatmul.mubr.bf16.gmra.mrb[0].mxu0 %v799
        %v907 = vpop.f32.mrb[0].mxu0
        %v908 = vadd.f32 0.0, %v907
        %v909 = vpop.f32.mrb[0].mxu0
        %v910 = vpop.f32.mrb[0].mxu0
        %v911 = vadd.f32 0.0, %v910
        %v912 = vpop.f32.mrb[0].mxu0
        %913 = vdwg.mxu0
        %v914 = vadd.f32 %v794, %v900
        %v915 = vadd.f32 %v795, %v903
        %v916 = vadd.f32 %v796, %v908
        %v917 = vadd.f32 %v797, %v911
        %918 = vst [vmem:[#allocation3] sm:$0xff] %v914
        %919 = vst [vmem:[#allocation3 + $0x8] sm:$0xff] %v915
        %920 = vst [vmem:[#allocation3 + $0x10] sm:$0xff] %v916
        %921 = vst [vmem:[#allocation3 + $0x18] sm:$0xff] %v917
        %v924 = vrot.slane %v476, 7
        %v925 = vrot.slane %v477, 7
        %v926 = vsel %vm501, %v924, %v925
        %v928 = vld [vmem:[#allocation3] sm:$0xff]
        %v929 = vld [vmem:[#allocation3 + $0x8] sm:$0xff]
        %v930 = vld [vmem:[#allocation3 + $0x10] sm:$0xff]
        %v931 = vld [vmem:[#allocation3 + $0x18] sm:$0xff]
        %v932 = vpack.c.bf16 %v510, %v507
        %v933 = vpack.c.bf16 %v926, %v513
        %s934 = scalar_lea.vmem %s3, 192
        %v935 = vld [vmem:[%s934] sm:$0xf]
        %v936 = vld [vmem:[%s934 + $0x4] sm:$0xf]
        %v937 = vld [vmem:[%s934 + $0x8] sm:$0xf]
        %v938 = vld [vmem:[%s934 + $0xc] sm:$0xf]
        %v939 = vld [vmem:[%s934 + $0x10] sm:$0xf]
        %v940 = vld [vmem:[%s934 + $0x14] sm:$0xf]
        %v941 = vld [vmem:[%s934 + $0x18] sm:$0xf]
        %v942 = vld [vmem:[%s934 + $0x1c] sm:$0xf]
        %v943 = vld [vmem:[%s934 + $0x20] sm:$0xf]
        %v944 = vld [vmem:[%s934 + $0x24] sm:$0xf]
        %v945 = vld [vmem:[%s934 + $0x28] sm:$0xf]
        %v946 = vld [vmem:[%s934 + $0x2c] sm:$0xf]
        %v947 = vld [vmem:[%s934 + $0x30] sm:$0xf]
        %v948 = vld [vmem:[%s934 + $0x34] sm:$0xf]
        %v949 = vld [vmem:[%s934 + $0x38] sm:$0xf]
        %v950 = vld [vmem:[%s934 + $0x3c] sm:$0xf]
        %v967 = vunpack.c.l.b16 %v935
        %v968 = vunpack.c.l.b16 %v936
        %v969 = vunpack.c.l.b16 %v937
        %v970 = vunpack.c.l.b16 %v938
        %v971 = vunpack.c.l.b16 %v939
        %v972 = vunpack.c.l.b16 %v940
        %v973 = vunpack.c.l.b16 %v941
        %v974 = vunpack.c.l.b16 %v942
        %v975 = vunpack.c.l.b16 %v943
        %v976 = vunpack.c.l.b16 %v944
        %v977 = vunpack.c.l.b16 %v945
        %v978 = vunpack.c.l.b16 %v946
        %v979 = vunpack.c.l.b16 %v947
        %v980 = vunpack.c.l.b16 %v948
        %v981 = vunpack.c.l.b16 %v949
        %v982 = vunpack.c.l.b16 %v950
        %v983 = vpack.c.b16 %v968, %v967
        %v984 = vpack.c.b16 %v970, %v969
        %v985 = vpack.c.b16 %v972, %v971
        %v986 = vpack.c.b16 %v974, %v973
        %v987 = vpack.c.b16 %v976, %v975
        %v988 = vpack.c.b16 %v978, %v977
        %v989 = vpack.c.b16 %v980, %v979
        %v990 = vpack.c.b16 %v982, %v981
        %999 = vmatprep.subr.bf16.mxu0 0
        %1000 = vmatpush1.bf16.msra.mxu0 %v983
        %1001 = vmatprep.subr.bf16.mxu0 0
        %1002 = vmatpush1.bf16.msra.mxu0 %v984
        %1003 = vmatprep.subr.bf16.mxu0 0
        %1004 = vmatpush1.bf16.msra.mxu0 %v985
        %1005 = vmatprep.subr.bf16.mxu0 0
        %1006 = vmatpush1.bf16.msra.mxu0 %v986
        %1007 = vmatprep.subr.bf16.mxu0 0
        %1008 = vmatpush1.bf16.msra.mxu0 %v987
        %1009 = vmatprep.subr.bf16.mxu0 0
        %1010 = vmatpush1.bf16.msra.mxu0 %v988
        %1011 = vmatprep.subr.bf16.mxu0 0
        %1012 = vmatpush1.bf16.msra.mxu0 %v989
        %1013 = vmatprep.subr.bf16.mxu0 0
        %1014 = vmatpush1.bf16.msra.mxu0 %v990
        %1015 = vmatprep.subr.bf16.mxu0 0
        %1016 = vmatpush1.bf16.msra.mxu0 0
        %1017 = vmatprep.subr.bf16.mxu0 0
        %1018 = vmatpush1.bf16.msra.mxu0 0
        %1019 = vmatprep.subr.bf16.mxu0 0
        %1020 = vmatpush1.bf16.msra.mxu0 0
        %1021 = vmatprep.subr.bf16.mxu0 0
        %1022 = vmatpush1.bf16.msra.mxu0 0
        %1023 = vmatprep.subr.bf16.mxu0 0
        %1024 = vmatpush1.bf16.msra.mxu0 0
        %1025 = vmatprep.subr.bf16.mxu0 0
        %1026 = vmatpush1.bf16.msra.mxu0 0
        %1027 = vmatprep.subr.bf16.mxu0 0
        %1028 = vmatpush1.bf16.msra.mxu0 0
        %1029 = vmatprep.subr.bf16.mxu0 0
        %1030 = vmatpush1.bf16.msra.mxu0 0
        %1031 = vmatprep.mubr.bf16.mxu0 0
        %1032 = vmatmul.mubr.bf16.gmra.mrb[0].mxu0 %v932
        %v1033 = vpop.f32.mrb[0].mxu0
        %v1034 = vadd.f32 0.0, %v1033
        %v1035 = vpop.f32.mrb[0].mxu0
        %v1036 = vpop.f32.mrb[0].mxu0
        %v1037 = vadd.f32 0.0, %v1036
        %v1038 = vpop.f32.mrb[0].mxu0
        %1039 = vmatprep.mubr.bf16.mxu0 0
        %1040 = vmatmul.mubr.bf16.gmra.mrb[0].mxu0 %v933
        %v1041 = vpop.f32.mrb[0].mxu0
        %v1042 = vadd.f32 0.0, %v1041
        %v1043 = vpop.f32.mrb[0].mxu0
        %v1044 = vpop.f32.mrb[0].mxu0
        %v1045 = vadd.f32 0.0, %v1044
        %v1046 = vpop.f32.mrb[0].mxu0
        %1047 = vdwg.mxu0
        %v1048 = vadd.f32 %v928, %v1034
        %v1049 = vadd.f32 %v929, %v1037
        %v1050 = vadd.f32 %v930, %v1042
        %v1051 = vadd.f32 %v931, %v1045
        %1052 = vst [vmem:[#allocation3] sm:$0xff] %v1048
        %1053 = vst [vmem:[#allocation3 + $0x8] sm:$0xff] %v1049
        %1054 = vst [vmem:[#allocation3 + $0x10] sm:$0xff] %v1050
        %1055 = vst [vmem:[#allocation3 + $0x18] sm:$0xff] %v1051
        %v1056 = vld [vmem:[#allocation3] sm:$0xff]
        %v1057 = vld [vmem:[#allocation3 + $0x8] sm:$0xff]
        %v1058 = vld [vmem:[#allocation3 + $0x10] sm:$0xff]
        %v1059 = vld [vmem:[#allocation3 + $0x18] sm:$0xff]
        %v1060 = vpack.c.bf16 %v471, %v468
        %v1061 = vpack.c.bf16 %v477, %v474
        %s1062 = scalar_lea.vmem %s3, 256
        %v1063 = vld [vmem:[%s1062] sm:$0xf]
        %v1064 = vld [vmem:[%s1062 + $0x4] sm:$0xf]
        %v1065 = vld [vmem:[%s1062 + $0x8] sm:$0xf]
        %v1066 = vld [vmem:[%s1062 + $0xc] sm:$0xf]
        %v1067 = vld [vmem:[%s1062 + $0x10] sm:$0xf]
        %v1068 = vld [vmem:[%s1062 + $0x14] sm:$0xf]
        %v1069 = vld [vmem:[%s1062 + $0x18] sm:$0xf]
        %v1070 = vld [vmem:[%s1062 + $0x1c] sm:$0xf]
        %v1071 = vld [vmem:[%s1062 + $0x20] sm:$0xf]
        %v1072 = vld [vmem:[%s1062 + $0x24] sm:$0xf]
        %v1073 = vld [vmem:[%s1062 + $0x28] sm:$0xf]
        %v1074 = vld [vmem:[%s1062 + $0x2c] sm:$0xf]
        %v1075 = vld [vmem:[%s1062 + $0x30] sm:$0xf]
        %v1076 = vld [vmem:[%s1062 + $0x34] sm:$0xf]
        %v1077 = vld [vmem:[%s1062 + $0x38] sm:$0xf]
        %v1078 = vld [vmem:[%s1062 + $0x3c] sm:$0xf]
        %v1095 = vunpack.c.l.b16 %v1063
        %v1096 = vunpack.c.l.b16 %v1064
        %v1097 = vunpack.c.l.b16 %v1065
        %v1098 = vunpack.c.l.b16 %v1066
        %v1099 = vunpack.c.l.b16 %v1067
        %v1100 = vunpack.c.l.b16 %v1068
        %v1101 = vunpack.c.l.b16 %v1069
        %v1102 = vunpack.c.l.b16 %v1070
        %v1103 = vunpack.c.l.b16 %v1071
        %v1104 = vunpack.c.l.b16 %v1072
        %v1105 = vunpack.c.l.b16 %v1073
        %v1106 = vunpack.c.l.b16 %v1074
        %v1107 = vunpack.c.l.b16 %v1075
        %v1108 = vunpack.c.l.b16 %v1076
        %v1109 = vunpack.c.l.b16 %v1077
        %v1110 = vunpack.c.l.b16 %v1078
        %v1111 = vpack.c.b16 %v1096, %v1095
        %v1112 = vpack.c.b16 %v1098, %v1097
        %v1113 = vpack.c.b16 %v1100, %v1099
        %v1114 = vpack.c.b16 %v1102, %v1101
        %v1115 = vpack.c.b16 %v1104, %v1103
        %v1116 = vpack.c.b16 %v1106, %v1105
        %v1117 = vpack.c.b16 %v1108, %v1107
        %v1118 = vpack.c.b16 %v1110, %v1109
        %1127 = vmatprep.subr.bf16.mxu0 0
        %1128 = vmatpush1.bf16.msra.mxu0 %v1111
        %1129 = vmatprep.subr.bf16.mxu0 0
        %1130 = vmatpush1.bf16.msra.mxu0 %v1112
        %1131 = vmatprep.subr.bf16.mxu0 0
        %1132 = vmatpush1.bf16.msra.mxu0 %v1113
        %1133 = vmatprep.subr.bf16.mxu0 0
        %1134 = vmatpush1.bf16.msra.mxu0 %v1114
        %1135 = vmatprep.subr.bf16.mxu0 0
        %1136 = vmatpush1.bf16.msra.mxu0 %v1115
        %1137 = vmatprep.subr.bf16.mxu0 0
        %1138 = vmatpush1.bf16.msra.mxu0 %v1116
        %1139 = vmatprep.subr.bf16.mxu0 0
        %1140 = vmatpush1.bf16.msra.mxu0 %v1117
        %1141 = vmatprep.subr.bf16.mxu0 0
        %1142 = vmatpush1.bf16.msra.mxu0 %v1118
        %1143 = vmatprep.subr.bf16.mxu0 0
        %1144 = vmatpush1.bf16.msra.mxu0 0
        %1145 = vmatprep.subr.bf16.mxu0 0
        %1146 = vmatpush1.bf16.msra.mxu0 0
        %1147 = vmatprep.subr.bf16.mxu0 0
        %1148 = vmatpush1.bf16.msra.mxu0 0
        %1149 = vmatprep.subr.bf16.mxu0 0
        %1150 = vmatpush1.bf16.msra.mxu0 0
        %1151 = vmatprep.subr.bf16.mxu0 0
        %1152 = vmatpush1.bf16.msra.mxu0 0
        %1153 = vmatprep.subr.bf16.mxu0 0
        %1154 = vmatpush1.bf16.msra.mxu0 0
        %1155 = vmatprep.subr.bf16.mxu0 0
        %1156 = vmatpush1.bf16.msra.mxu0 0
        %1157 = vmatprep.subr.bf16.mxu0 0
        %1158 = vmatpush1.bf16.msra.mxu0 0
        %1159 = vmatprep.mubr.bf16.mxu0 0
        %1160 = vmatmul.mubr.bf16.gmra.mrb[0].mxu0 %v1060
        %v1161 = vpop.f32.mrb[0].mxu0
        %v1162 = vadd.f32 0.0, %v1161
        %v1163 = vpop.f32.mrb[0].mxu0
        %v1164 = vpop.f32.mrb[0].mxu0
        %v1165 = vadd.f32 0.0, %v1164
        %v1166 = vpop.f32.mrb[0].mxu0
        %1167 = vmatprep.mubr.bf16.mxu0 0
        %1168 = vmatmul.mubr.bf16.gmra.mrb[0].mxu0 %v1061
        %v1169 = vpop.f32.mrb[0].mxu0
        %v1170 = vadd.f32 0.0, %v1169
        %v1171 = vpop.f32.mrb[0].mxu0
        %v1172 = vpop.f32.mrb[0].mxu0
        %v1173 = vadd.f32 0.0, %v1172
        %v1174 = vpop.f32.mrb[0].mxu0
        %1175 = vdwg.mxu0
        %v1176 = vadd.f32 %v1056, %v1162
        %v1177 = vadd.f32 %v1057, %v1165
        %v1178 = vadd.f32 %v1058, %v1170
        %v1179 = vadd.f32 %v1059, %v1173
        %1180 = vst [vmem:[#allocation3] sm:$0xff] %v1176
        %1181 = vst [vmem:[#allocation3 + $0x8] sm:$0xff] %v1177
        %1182 = vst [vmem:[#allocation3 + $0x10] sm:$0xff] %v1178
        %1183 = vst [vmem:[#allocation3 + $0x18] sm:$0xff] %v1179
        %v1185 = vrot.slane %v477, 1
        %v1186 = vrot.slane %v478, 1
        %v1187 = vsel %vm777, %v1185, %v1186
        %v1189 = vld [vmem:[#allocation3] sm:$0xff]
        %v1190 = vld [vmem:[#allocation3 + $0x8] sm:$0xff]
        %v1191 = vld [vmem:[#allocation3 + $0x10] sm:$0xff]
        %v1192 = vld [vmem:[#allocation3 + $0x18] sm:$0xff]
        %v1193 = vpack.c.bf16 %v786, %v783
        %v1194 = vpack.c.bf16 %v1187, %v789
        %s1195 = scalar_lea.vmem %s3, 320
        %v1196 = vld [vmem:[%s1195] sm:$0xf]
        %v1197 = vld [vmem:[%s1195 + $0x4] sm:$0xf]
        %v1198 = vld [vmem:[%s1195 + $0x8] sm:$0xf]
        %v1199 = vld [vmem:[%s1195 + $0xc] sm:$0xf]
        %v1200 = vld [vmem:[%s1195 + $0x10] sm:$0xf]
        %v1201 = vld [vmem:[%s1195 + $0x14] sm:$0xf]
        %v1202 = vld [vmem:[%s1195 + $0x18] sm:$0xf]
        %v1203 = vld [vmem:[%s1195 + $0x1c] sm:$0xf]
        %v1204 = vld [vmem:[%s1195 + $0x20] sm:$0xf]
        %v1205 = vld [vmem:[%s1195 + $0x24] sm:$0xf]
        %v1206 = vld [vmem:[%s1195 + $0x28] sm:$0xf]
        %v1207 = vld [vmem:[%s1195 + $0x2c] sm:$0xf]
        %v1208 = vld [vmem:[%s1195 + $0x30] sm:$0xf]
        %v1209 = vld [vmem:[%s1195 + $0x34] sm:$0xf]
        %v1210 = vld [vmem:[%s1195 + $0x38] sm:$0xf]
        %v1211 = vld [vmem:[%s1195 + $0x3c] sm:$0xf]
        %v1228 = vunpack.c.l.b16 %v1196
        %v1229 = vunpack.c.l.b16 %v1197
        %v1230 = vunpack.c.l.b16 %v1198
        %v1231 = vunpack.c.l.b16 %v1199
        %v1232 = vunpack.c.l.b16 %v1200
        %v1233 = vunpack.c.l.b16 %v1201
        %v1234 = vunpack.c.l.b16 %v1202
        %v1235 = vunpack.c.l.b16 %v1203
        %v1236 = vunpack.c.l.b16 %v1204
        %v1237 = vunpack.c.l.b16 %v1205
        %v1238 = vunpack.c.l.b16 %v1206
        %v1239 = vunpack.c.l.b16 %v1207
        %v1240 = vunpack.c.l.b16 %v1208
        %v1241 = vunpack.c.l.b16 %v1209
        %v1242 = vunpack.c.l.b16 %v1210
        %v1243 = vunpack.c.l.b16 %v1211
        %v1244 = vpack.c.b16 %v1229, %v1228
        %v1245 = vpack.c.b16 %v1231, %v1230
        %v1246 = vpack.c.b16 %v1233, %v1232
        %v1247 = vpack.c.b16 %v1235, %v1234
        %v1248 = vpack.c.b16 %v1237, %v1236
        %v1249 = vpack.c.b16 %v1239, %v1238
        %v1250 = vpack.c.b16 %v1241, %v1240
        %v1251 = vpack.c.b16 %v1243, %v1242
        %1260 = vmatprep.subr.bf16.mxu0 0
        %1261 = vmatpush1.bf16.msra.mxu0 %v1244
        %1262 = vmatprep.subr.bf16.mxu0 0
        %1263 = vmatpush1.bf16.msra.mxu0 %v1245
        %1264 = vmatprep.subr.bf16.mxu0 0
        %1265 = vmatpush1.bf16.msra.mxu0 %v1246
        %1266 = vmatprep.subr.bf16.mxu0 0
        %1267 = vmatpush1.bf16.msra.mxu0 %v1247
        %1268 = vmatprep.subr.bf16.mxu0 0
        %1269 = vmatpush1.bf16.msra.mxu0 %v1248
        %1270 = vmatprep.subr.bf16.mxu0 0
        %1271 = vmatpush1.bf16.msra.mxu0 %v1249
        %1272 = vmatprep.subr.bf16.mxu0 0
        %1273 = vmatpush1.bf16.msra.mxu0 %v1250
        %1274 = vmatprep.subr.bf16.mxu0 0
        %1275 = vmatpush1.bf16.msra.mxu0 %v1251
        %1276 = vmatprep.subr.bf16.mxu0 0
        %1277 = vmatpush1.bf16.msra.mxu0 0
        %1278 = vmatprep.subr.bf16.mxu0 0
        %1279 = vmatpush1.bf16.msra.mxu0 0
        %1280 = vmatprep.subr.bf16.mxu0 0
        %1281 = vmatpush1.bf16.msra.mxu0 0
        %1282 = vmatprep.subr.bf16.mxu0 0
        %1283 = vmatpush1.bf16.msra.mxu0 0
        %1284 = vmatprep.subr.bf16.mxu0 0
        %1285 = vmatpush1.bf16.msra.mxu0 0
        %1286 = vmatprep.subr.bf16.mxu0 0
        %1287 = vmatpush1.bf16.msra.mxu0 0
        %1288 = vmatprep.subr.bf16.mxu0 0
        %1289 = vmatpush1.bf16.msra.mxu0 0
        %1290 = vmatprep.subr.bf16.mxu0 0
        %1291 = vmatpush1.bf16.msra.mxu0 0
        %1292 = vmatprep.mubr.bf16.mxu0 0
        %1293 = vmatmul.mubr.bf16.gmra.mrb[0].mxu0 %v1193
        %v1294 = vpop.f32.mrb[0].mxu0
        %v1295 = vadd.f32 0.0, %v1294
        %v1296 = vpop.f32.mrb[0].mxu0
        %v1297 = vpop.f32.mrb[0].mxu0
        %v1298 = vadd.f32 0.0, %v1297
        %v1299 = vpop.f32.mrb[0].mxu0
        %1300 = vmatprep.mubr.bf16.mxu0 0
        %1301 = vmatmul.mubr.bf16.gmra.mrb[0].mxu0 %v1194
        %v1302 = vpop.f32.mrb[0].mxu0
        %v1303 = vadd.f32 0.0, %v1302
        %v1304 = vpop.f32.mrb[0].mxu0
        %v1305 = vpop.f32.mrb[0].mxu0
        %v1306 = vadd.f32 0.0, %v1305
        %v1307 = vpop.f32.mrb[0].mxu0
        %1308 = vdwg.mxu0
        %v1309 = vadd.f32 %v1189, %v1295
        %v1310 = vadd.f32 %v1190, %v1298
        %v1311 = vadd.f32 %v1191, %v1303
        %v1312 = vadd.f32 %v1192, %v1306
        %1313 = vst [vmem:[#allocation3] sm:$0xff] %v1309
        %1314 = vst [vmem:[#allocation3 + $0x8] sm:$0xff] %v1310
        %1315 = vst [vmem:[#allocation3 + $0x10] sm:$0xff] %v1311
        %1316 = vst [vmem:[#allocation3 + $0x18] sm:$0xff] %v1312
        %v1319 = vrot.slane %v479, 7
        %v1320 = vrot.slane %v480, 7
        %v1321 = vsel %vm501, %v1319, %v1320
        %v1323 = vld [vmem:[#allocation3] sm:$0xff]
        %v1324 = vld [vmem:[#allocation3 + $0x8] sm:$0xff]
        %v1325 = vld [vmem:[#allocation3 + $0x10] sm:$0xff]
        %v1326 = vld [vmem:[#allocation3 + $0x18] sm:$0xff]
        %v1327 = vpack.c.bf16 %v1321, %v926
        %s1328 = scalar_lea.vmem %s3, 384
        %v1329 = vld [vmem:[%s1328] sm:$0xf]
        %v1330 = vld [vmem:[%s1328 + $0x4] sm:$0xf]
        %v1331 = vld [vmem:[%s1328 + $0x8] sm:$0xf]
        %v1332 = vld [vmem:[%s1328 + $0xc] sm:$0xf]
        %v1333 = vld [vmem:[%s1328 + $0x10] sm:$0xf]
        %v1334 = vld [vmem:[%s1328 + $0x14] sm:$0xf]
        %v1335 = vld [vmem:[%s1328 + $0x18] sm:$0xf]
        %v1336 = vld [vmem:[%s1328 + $0x1c] sm:$0xf]
        %v1337 = vld [vmem:[%s1328 + $0x20] sm:$0xf]
        %v1338 = vld [vmem:[%s1328 + $0x24] sm:$0xf]
        %v1339 = vld [vmem:[%s1328 + $0x28] sm:$0xf]
        %v1340 = vld [vmem:[%s1328 + $0x2c] sm:$0xf]
        %v1341 = vld [vmem:[%s1328 + $0x30] sm:$0xf]
        %v1342 = vld [vmem:[%s1328 + $0x34] sm:$0xf]
        %v1343 = vld [vmem:[%s1328 + $0x38] sm:$0xf]
        %v1344 = vld [vmem:[%s1328 + $0x3c] sm:$0xf]
        %v1361 = vunpack.c.l.b16 %v1329
        %v1362 = vunpack.c.l.b16 %v1330
        %v1363 = vunpack.c.l.b16 %v1331
        %v1364 = vunpack.c.l.b16 %v1332
        %v1365 = vunpack.c.l.b16 %v1333
        %v1366 = vunpack.c.l.b16 %v1334
        %v1367 = vunpack.c.l.b16 %v1335
        %v1368 = vunpack.c.l.b16 %v1336
        %v1369 = vunpack.c.l.b16 %v1337
        %v1370 = vunpack.c.l.b16 %v1338
        %v1371 = vunpack.c.l.b16 %v1339
        %v1372 = vunpack.c.l.b16 %v1340
        %v1373 = vunpack.c.l.b16 %v1341
        %v1374 = vunpack.c.l.b16 %v1342
        %v1375 = vunpack.c.l.b16 %v1343
        %v1376 = vunpack.c.l.b16 %v1344
        %v1377 = vpack.c.b16 %v1362, %v1361
        %v1378 = vpack.c.b16 %v1364, %v1363
        %v1379 = vpack.c.b16 %v1366, %v1365
        %v1380 = vpack.c.b16 %v1368, %v1367
        %v1381 = vpack.c.b16 %v1370, %v1369
        %v1382 = vpack.c.b16 %v1372, %v1371
        %v1383 = vpack.c.b16 %v1374, %v1373
        %v1384 = vpack.c.b16 %v1376, %v1375
        %1393 = vmatprep.subr.bf16.mxu0 0
        %1394 = vmatpush1.bf16.msra.mxu0 %v1377
        %1395 = vmatprep.subr.bf16.mxu0 0
        %1396 = vmatpush1.bf16.msra.mxu0 %v1378
        %1397 = vmatprep.subr.bf16.mxu0 0
        %1398 = vmatpush1.bf16.msra.mxu0 %v1379
        %1399 = vmatprep.subr.bf16.mxu0 0
        %1400 = vmatpush1.bf16.msra.mxu0 %v1380
        %1401 = vmatprep.subr.bf16.mxu0 0
        %1402 = vmatpush1.bf16.msra.mxu0 %v1381
        %1403 = vmatprep.subr.bf16.mxu0 0
        %1404 = vmatpush1.bf16.msra.mxu0 %v1382
        %1405 = vmatprep.subr.bf16.mxu0 0
        %1406 = vmatpush1.bf16.msra.mxu0 %v1383
        %1407 = vmatprep.subr.bf16.mxu0 0
        %1408 = vmatpush1.bf16.msra.mxu0 %v1384
        %1409 = vmatprep.subr.bf16.mxu0 0
        %1410 = vmatpush1.bf16.msra.mxu0 0
        %1411 = vmatprep.subr.bf16.mxu0 0
        %1412 = vmatpush1.bf16.msra.mxu0 0
        %1413 = vmatprep.subr.bf16.mxu0 0
        %1414 = vmatpush1.bf16.msra.mxu0 0
        %1415 = vmatprep.subr.bf16.mxu0 0
        %1416 = vmatpush1.bf16.msra.mxu0 0
        %1417 = vmatprep.subr.bf16.mxu0 0
        %1418 = vmatpush1.bf16.msra.mxu0 0
        %1419 = vmatprep.subr.bf16.mxu0 0
        %1420 = vmatpush1.bf16.msra.mxu0 0
        %1421 = vmatprep.subr.bf16.mxu0 0
        %1422 = vmatpush1.bf16.msra.mxu0 0
        %1423 = vmatprep.subr.bf16.mxu0 0
        %1424 = vmatpush1.bf16.msra.mxu0 0
        %1425 = vmatprep.mubr.bf16.mxu0 0
        %1426 = vmatmul.mubr.bf16.gmra.mrb[0].mxu0 %v523
        %v1427 = vpop.f32.mrb[0].mxu0
        %v1428 = vadd.f32 0.0, %v1427
        %v1429 = vpop.f32.mrb[0].mxu0
        %v1430 = vpop.f32.mrb[0].mxu0
        %v1431 = vadd.f32 0.0, %v1430
        %v1432 = vpop.f32.mrb[0].mxu0
        %1433 = vmatprep.mubr.bf16.mxu0 0
        %1434 = vmatmul.mubr.bf16.gmra.mrb[0].mxu0 %v1327
        %v1435 = vpop.f32.mrb[0].mxu0
        %v1436 = vadd.f32 0.0, %v1435
        %v1437 = vpop.f32.mrb[0].mxu0
        %v1438 = vpop.f32.mrb[0].mxu0
        %v1439 = vadd.f32 0.0, %v1438
        %v1440 = vpop.f32.mrb[0].mxu0
        %1441 = vdwg.mxu0
        %v1442 = vadd.f32 %v1323, %v1428
        %v1443 = vadd.f32 %v1324, %v1431
        %v1444 = vadd.f32 %v1325, %v1436
        %v1445 = vadd.f32 %v1326, %v1439
        %1446 = vst [vmem:[#allocation3] sm:$0xff] %v1442
        %1447 = vst [vmem:[#allocation3 + $0x8] sm:$0xff] %v1443
        %1448 = vst [vmem:[#allocation3 + $0x10] sm:$0xff] %v1444
        %1449 = vst [vmem:[#allocation3 + $0x18] sm:$0xff] %v1445
        %v1450 = vld [vmem:[#allocation3] sm:$0xff]
        %v1451 = vld [vmem:[#allocation3 + $0x8] sm:$0xff]
        %v1452 = vld [vmem:[#allocation3 + $0x10] sm:$0xff]
        %v1453 = vld [vmem:[#allocation3 + $0x18] sm:$0xff]
        %v1454 = vpack.c.bf16 %v480, %v477
        %s1455 = scalar_lea.vmem %s3, 448
        %v1456 = vld [vmem:[%s1455] sm:$0xf]
        %v1457 = vld [vmem:[%s1455 + $0x4] sm:$0xf]
        %v1458 = vld [vmem:[%s1455 + $0x8] sm:$0xf]
        %v1459 = vld [vmem:[%s1455 + $0xc] sm:$0xf]
        %v1460 = vld [vmem:[%s1455 + $0x10] sm:$0xf]
        %v1461 = vld [vmem:[%s1455 + $0x14] sm:$0xf]
        %v1462 = vld [vmem:[%s1455 + $0x18] sm:$0xf]
        %v1463 = vld [vmem:[%s1455 + $0x1c] sm:$0xf]
        %v1464 = vld [vmem:[%s1455 + $0x20] sm:$0xf]
        %v1465 = vld [vmem:[%s1455 + $0x24] sm:$0xf]
        %v1466 = vld [vmem:[%s1455 + $0x28] sm:$0xf]
        %v1467 = vld [vmem:[%s1455 + $0x2c] sm:$0xf]
        %v1468 = vld [vmem:[%s1455 + $0x30] sm:$0xf]
        %v1469 = vld [vmem:[%s1455 + $0x34] sm:$0xf]
        %v1470 = vld [vmem:[%s1455 + $0x38] sm:$0xf]
        %v1471 = vld [vmem:[%s1455 + $0x3c] sm:$0xf]
        %v1488 = vunpack.c.l.b16 %v1456
        %v1489 = vunpack.c.l.b16 %v1457
        %v1490 = vunpack.c.l.b16 %v1458
        %v1491 = vunpack.c.l.b16 %v1459
        %v1492 = vunpack.c.l.b16 %v1460
        %v1493 = vunpack.c.l.b16 %v1461
        %v1494 = vunpack.c.l.b16 %v1462
        %v1495 = vunpack.c.l.b16 %v1463
        %v1496 = vunpack.c.l.b16 %v1464
        %v1497 = vunpack.c.l.b16 %v1465
        %v1498 = vunpack.c.l.b16 %v1466
        %v1499 = vunpack.c.l.b16 %v1467
        %v1500 = vunpack.c.l.b16 %v1468
        %v1501 = vunpack.c.l.b16 %v1469
        %v1502 = vunpack.c.l.b16 %v1470
        %v1503 = vunpack.c.l.b16 %v1471
        %v1504 = vpack.c.b16 %v1489, %v1488
        %v1505 = vpack.c.b16 %v1491, %v1490
        %v1506 = vpack.c.b16 %v1493, %v1492
        %v1507 = vpack.c.b16 %v1495, %v1494
        %v1508 = vpack.c.b16 %v1497, %v1496
        %v1509 = vpack.c.b16 %v1499, %v1498
        %v1510 = vpack.c.b16 %v1501, %v1500
        %v1511 = vpack.c.b16 %v1503, %v1502
        %1520 = vmatprep.subr.bf16.mxu0 0
        %1521 = vmatpush1.bf16.msra.mxu0 %v1504
        %1522 = vmatprep.subr.bf16.mxu0 0
        %1523 = vmatpush1.bf16.msra.mxu0 %v1505
        %1524 = vmatprep.subr.bf16.mxu0 0
        %1525 = vmatpush1.bf16.msra.mxu0 %v1506
        %1526 = vmatprep.subr.bf16.mxu0 0
        %1527 = vmatpush1.bf16.msra.mxu0 %v1507
        %1528 = vmatprep.subr.bf16.mxu0 0
        %1529 = vmatpush1.bf16.msra.mxu0 %v1508
        %1530 = vmatprep.subr.bf16.mxu0 0
        %1531 = vmatpush1.bf16.msra.mxu0 %v1509
        %1532 = vmatprep.subr.bf16.mxu0 0
        %1533 = vmatpush1.bf16.msra.mxu0 %v1510
        %1534 = vmatprep.subr.bf16.mxu0 0
        %1535 = vmatpush1.bf16.msra.mxu0 %v1511
        %1536 = vmatprep.subr.bf16.mxu0 0
        %1537 = vmatpush1.bf16.msra.mxu0 0
        %1538 = vmatprep.subr.bf16.mxu0 0
        %1539 = vmatpush1.bf16.msra.mxu0 0
        %1540 = vmatprep.subr.bf16.mxu0 0
        %1541 = vmatpush1.bf16.msra.mxu0 0
        %1542 = vmatprep.subr.bf16.mxu0 0
        %1543 = vmatpush1.bf16.msra.mxu0 0
        %1544 = vmatprep.subr.bf16.mxu0 0
        %1545 = vmatpush1.bf16.msra.mxu0 0
        %1546 = vmatprep.subr.bf16.mxu0 0
        %1547 = vmatpush1.bf16.msra.mxu0 0
        %1548 = vmatprep.subr.bf16.mxu0 0
        %1549 = vmatpush1.bf16.msra.mxu0 0
        %1550 = vmatprep.subr.bf16.mxu0 0
        %1551 = vmatpush1.bf16.msra.mxu0 0
        %1552 = vmatprep.mubr.bf16.mxu0 0
        %1553 = vmatmul.mubr.bf16.gmra.mrb[0].mxu0 %v650
        %v1554 = vpop.f32.mrb[0].mxu0
        %v1555 = vadd.f32 0.0, %v1554
        %v1556 = vpop.f32.mrb[0].mxu0
        %v1557 = vpop.f32.mrb[0].mxu0
        %v1558 = vadd.f32 0.0, %v1557
        %v1559 = vpop.f32.mrb[0].mxu0
        %1560 = vmatprep.mubr.bf16.mxu0 0
        %1561 = vmatmul.mubr.bf16.gmra.mrb[0].mxu0 %v1454
        %v1562 = vpop.f32.mrb[0].mxu0
        %v1563 = vadd.f32 0.0, %v1562
        %v1564 = vpop.f32.mrb[0].mxu0
        %v1565 = vpop.f32.mrb[0].mxu0
        %v1566 = vadd.f32 0.0, %v1565
        %v1567 = vpop.f32.mrb[0].mxu0
        %1568 = vdwg.mxu0
        %v1569 = vadd.f32 %v1450, %v1555
        %v1570 = vadd.f32 %v1451, %v1558
        %v1571 = vadd.f32 %v1452, %v1563
        %v1572 = vadd.f32 %v1453, %v1566
        %1573 = vst [vmem:[#allocation3] sm:$0xff] %v1569
        %1574 = vst [vmem:[#allocation3 + $0x8] sm:$0xff] %v1570
        %1575 = vst [vmem:[#allocation3 + $0x10] sm:$0xff] %v1571
        %1576 = vst [vmem:[#allocation3 + $0x18] sm:$0xff] %v1572
        %v1578 = vrot.slane %v480, 1
        %v1579 = vrot.slane %v481, 1
        %v1580 = vsel %vm777, %v1578, %v1579
        %v1582 = vld [vmem:[#allocation3] sm:$0xff]
        %v1583 = vld [vmem:[#allocation3 + $0x8] sm:$0xff]
        %v1584 = vld [vmem:[#allocation3 + $0x10] sm:$0xff]
        %v1585 = vld [vmem:[#allocation3 + $0x18] sm:$0xff]
        %v1586 = vpack.c.bf16 %v1580, %v1187
        %s1587 = scalar_lea.vmem %s3, 512
        %v1588 = vld [vmem:[%s1587] sm:$0xf]
        %v1589 = vld [vmem:[%s1587 + $0x4] sm:$0xf]
        %v1590 = vld [vmem:[%s1587 + $0x8] sm:$0xf]
        %v1591 = vld [vmem:[%s1587 + $0xc] sm:$0xf]
        %v1592 = vld [vmem:[%s1587 + $0x10] sm:$0xf]
        %v1593 = vld [vmem:[%s1587 + $0x14] sm:$0xf]
        %v1594 = vld [vmem:[%s1587 + $0x18] sm:$0xf]
        %v1595 = vld [vmem:[%s1587 + $0x1c] sm:$0xf]
        %v1596 = vld [vmem:[%s1587 + $0x20] sm:$0xf]
        %v1597 = vld [vmem:[%s1587 + $0x24] sm:$0xf]
        %v1598 = vld [vmem:[%s1587 + $0x28] sm:$0xf]
        %v1599 = vld [vmem:[%s1587 + $0x2c] sm:$0xf]
        %v1600 = vld [vmem:[%s1587 + $0x30] sm:$0xf]
        %v1601 = vld [vmem:[%s1587 + $0x34] sm:$0xf]
        %v1602 = vld [vmem:[%s1587 + $0x38] sm:$0xf]
        %v1603 = vld [vmem:[%s1587 + $0x3c] sm:$0xf]
        %v1620 = vunpack.c.l.b16 %v1588
        %v1621 = vunpack.c.l.b16 %v1589
        %v1622 = vunpack.c.l.b16 %v1590
        %v1623 = vunpack.c.l.b16 %v1591
        %v1624 = vunpack.c.l.b16 %v1592
        %v1625 = vunpack.c.l.b16 %v1593
        %v1626 = vunpack.c.l.b16 %v1594
        %v1627 = vunpack.c.l.b16 %v1595
        %v1628 = vunpack.c.l.b16 %v1596
        %v1629 = vunpack.c.l.b16 %v1597
        %v1630 = vunpack.c.l.b16 %v1598
        %v1631 = vunpack.c.l.b16 %v1599
        %v1632 = vunpack.c.l.b16 %v1600
        %v1633 = vunpack.c.l.b16 %v1601
        %v1634 = vunpack.c.l.b16 %v1602
        %v1635 = vunpack.c.l.b16 %v1603
        %v1636 = vpack.c.b16 %v1621, %v1620
        %v1637 = vpack.c.b16 %v1623, %v1622
        %v1638 = vpack.c.b16 %v1625, %v1624
        %v1639 = vpack.c.b16 %v1627, %v1626
        %v1640 = vpack.c.b16 %v1629, %v1628
        %v1641 = vpack.c.b16 %v1631, %v1630
        %v1642 = vpack.c.b16 %v1633, %v1632
        %v1643 = vpack.c.b16 %v1635, %v1634
        %1652 = vmatprep.subr.bf16.mxu0 0
        %1653 = vmatpush1.bf16.msra.mxu0 %v1636
        %1654 = vmatprep.subr.bf16.mxu0 0
        %1655 = vmatpush1.bf16.msra.mxu0 %v1637
        %1656 = vmatprep.subr.bf16.mxu0 0
        %1657 = vmatpush1.bf16.msra.mxu0 %v1638
        %1658 = vmatprep.subr.bf16.mxu0 0
        %1659 = vmatpush1.bf16.msra.mxu0 %v1639
        %1660 = vmatprep.subr.bf16.mxu0 0
        %1661 = vmatpush1.bf16.msra.mxu0 %v1640
        %1662 = vmatprep.subr.bf16.mxu0 0
        %1663 = vmatpush1.bf16.msra.mxu0 %v1641
        %1664 = vmatprep.subr.bf16.mxu0 0
        %1665 = vmatpush1.bf16.msra.mxu0 %v1642
        %1666 = vmatprep.subr.bf16.mxu0 0
        %1667 = vmatpush1.bf16.msra.mxu0 %v1643
        %1668 = vmatprep.subr.bf16.mxu0 0
        %1669 = vmatpush1.bf16.msra.mxu0 0
        %1670 = vmatprep.subr.bf16.mxu0 0
        %1671 = vmatpush1.bf16.msra.mxu0 0
        %1672 = vmatprep.subr.bf16.mxu0 0
        %1673 = vmatpush1.bf16.msra.mxu0 0
        %1674 = vmatprep.subr.bf16.mxu0 0
        %1675 = vmatpush1.bf16.msra.mxu0 0
        %1676 = vmatprep.subr.bf16.mxu0 0
        %1677 = vmatpush1.bf16.msra.mxu0 0
        %1678 = vmatprep.subr.bf16.mxu0 0
        %1679 = vmatpush1.bf16.msra.mxu0 0
        %1680 = vmatprep.subr.bf16.mxu0 0
        %1681 = vmatpush1.bf16.msra.mxu0 0
        %1682 = vmatprep.subr.bf16.mxu0 0
        %1683 = vmatpush1.bf16.msra.mxu0 0
        %1684 = vmatprep.mubr.bf16.mxu0 0
        %1685 = vmatmul.mubr.bf16.gmra.mrb[0].mxu0 %v799
        %v1686 = vpop.f32.mrb[0].mxu0
        %v1687 = vadd.f32 0.0, %v1686
        %v1688 = vpop.f32.mrb[0].mxu0
        %v1689 = vpop.f32.mrb[0].mxu0
        %v1690 = vadd.f32 0.0, %v1689
        %v1691 = vpop.f32.mrb[0].mxu0
        %1692 = vmatprep.mubr.bf16.mxu0 0
        %1693 = vmatmul.mubr.bf16.gmra.mrb[0].mxu0 %v1586
        %v1694 = vpop.f32.mrb[0].mxu0
        %v1695 = vadd.f32 0.0, %v1694
        %v1696 = vpop.f32.mrb[0].mxu0
        %v1697 = vpop.f32.mrb[0].mxu0
        %v1698 = vadd.f32 0.0, %v1697
        %v1699 = vpop.f32.mrb[0].mxu0
        %1700 = vdwg.mxu0
        %v1701 = vadd.f32 %v1582, %v1687
        %v1702 = vadd.f32 %v1583, %v1690
        %v1703 = vadd.f32 %v1584, %v1695
        %v1704 = vadd.f32 %v1585, %v1698
        %1705 = vst [vmem:[#allocation3] sm:$0xff] %v1701
        %1706 = vst [vmem:[#allocation3 + $0x8] sm:$0xff] %v1702
        %1707 = vst [vmem:[#allocation3 + $0x10] sm:$0xff] %v1703
        %1708 = vst [vmem:[#allocation3 + $0x18] sm:$0xff] %v1704
        %v1709 = vld [vmem:[#allocation3] sm:$0xff]
        %v1710 = vld [vmem:[#allocation3 + $0x8] sm:$0xff]
        %v1711 = vld [vmem:[#allocation3 + $0x10] sm:$0xff]
        %v1712 = vld [vmem:[#allocation3 + $0x18] sm:$0xff]
        %v1713 = vmax.f32 %v1709, 0.0
        %v1714 = vmax.f32 %v1710, 0.0
        %v1715 = vmax.f32 %v1711, 0.0
        %v1716 = vmax.f32 %v1712, 0.0
        %1717 = vst [vmem:[%s364] sm:$0xff] %v1713
        %1718 = vst [vmem:[%s364 + $0x8] sm:$0xff] %v1714
        %1719 = vst [vmem:[%s364 + $0x10] sm:$0xff] %v1715
        %1720 = vst [vmem:[%s364 + $0x18] sm:$0xff] %v1716
        %s1721 = sand.u32 %s195, 1
        %s1722 = scalar_lea.sflag [#allocation5], %s1721
        %s1723 = sand.u32 %s195, 1
        %s1724 = smul.addr %s1723, 32
        %s1725 = scalar_lea.vmem [#allocation4], %s1724
        // Predicated region
        $region41: #{vgg_feature_extractor.7} parent=39 // pred_check
          %p1726 = pneg %p205
        $region42: #{vgg_feature_extractor.7} parent=39 // pred_check_branch
          %1728 = sbr.rel (%p1726) target = $region44
        $region43: #{vgg_feature_extractor.7} parent=39 // pred_region
          %s1729 = smul.u32 4, %s24
          %s1731 = ssub.s32 512, 512
          %1732 = vsyncadd %s1722, %s1731
          %s1733 = smul.addr %s23, 8
          %s1734 = sadd.s32 %s1729, %s1733
          %s1735 = smul.addr %s1734, 128
          %s1736 = scalar_lea.hbm %s5, %s1735
          %s1737 = sshll.u32 %s1725, 4
          %s1738 = int_to_ptr.vmem [resolvable:$true] %s1737
          %1743 = dma.vmem_to_hbm [thread:$0]  %s1738, 512, %s1736, %s1722, 128, 128, 8
        $region44: #{vgg_feature_extractor.7} parent=39 // pred_fallthru
          _
      $region40: #{vgg_feature_extractor.7} parent=5 // pred_fallthru
        _
      %p1744 = scmp.le.s32.totalorder 2, %s14
      // Predicated region
      $region45: #{vgg_feature_extractor.7} parent=5 // pred_check
        %p1745 = pneg %p1744
      $region46: #{vgg_feature_extractor.7} parent=5 // pred_check_branch
        %1747 = sbr.rel (%p1745) target = $region48
      $region47: #{vgg_feature_extractor.7} parent=5 // pred_region
        %s1748 = ssub.s32 %s14, 2
        // Predicated region
        $region49: #{vgg_feature_extractor.7} parent=47 // pred_check
          %p1749 = pneg %p211
        $region50: #{vgg_feature_extractor.7} parent=47 // pred_check_branch
          %1751 = sbr.rel (%p1749) target = $region52
        $region51: #{vgg_feature_extractor.7} parent=47 // pred_region
          %s1752 = sand.u32 %s196, 1
          %s1753 = scalar_lea.sflag [#allocation5], %s1752
          %s1754 = sand.u32 %s196, 1
          %s1755 = smul.addr %s1754, 32
          %s1756 = scalar_lea.vmem [#allocation4], %s1755
          %1757 = dma.done %s1753, 512
        $region52: #{vgg_feature_extractor.7} parent=47 // pred_fallthru
          _
      $region48: #{vgg_feature_extractor.7} parent=5 // pred_fallthru
        _
    $region6: #{vgg_feature_extractor.7} parent=1 // loop_footer
      %s18 = sadd.s32 1, %s14
    $region7: #{vgg_feature_extractor.7} parent=1 // loop_footer_branch
      %13 = sbr.rel target = $region3
    $region8: #{vgg_feature_extractor.7} parent=1 // loop_exit
      _
    %1758 = vsyncpa [#allocation5], 1
    %s1759 = scalar_lea.sflag [#allocation5], 1
    %1760 = vsyncpa %s1759, 1

</llo_original>
